<compile_context>
chip_gen: v5e
topology: v5e:2x2
jax: 0.10.0
libtpu: 0.0.40
codegen_flags: <defaults>
</compile_context>

<pallas_src>
import functools
import math

import jax
import jax.numpy as jnp
from jax.experimental import pallas as pl
from jax.experimental.pallas import tpu as pltpu


# ----------------------------- in-kernel math helpers -----------------------------

_ERF_CLAMP = 3.832506856900711  # Eigen kErfInvOneMinusHalfULP


def _erf_f32(x):
    """Eigen/XLA float32 rational erf approximation (mul/add/div/clip only)."""
    x = jnp.clip(x, -_ERF_CLAMP, _ERF_CLAMP)
    x2 = x * x
    p = x2 * -2.72614225801306e-10 + 2.77068142495902e-08
    p = x2 * p + -2.10102402082508e-06
    p = x2 * p + -5.69250639462346e-05
    p = x2 * p + -7.34990630326855e-04
    p = x2 * p + -2.95459980854025e-03
    p = x2 * p + -1.60960333262415e-02
    p = x * p
    q = x2 * -1.45660718464996e-05 + -2.13374055278905e-04
    q = x2 * q + -1.68282697438203e-03
    q = x2 * q + -7.37332916720468e-03
    q = x2 * q + -1.42647390514189e-02
    return p / q


def _gelu_erf(x):
    # BertIntermediate 'gelu' (exact / erf form), f32.
    return 0.5 * x * (1.0 + _erf_f32(x * (1.0 / math.sqrt(2.0))))


def _layernorm(y, g, b, eps):
    # Statistics and eps kept in f32 (eps=1e-12 is below bf16 resolution).
    mu = jnp.mean(y, axis=-1, keepdims=True)
    var = jnp.mean(jnp.square(y - mu), axis=-1, keepdims=True)
    return (y - mu) * jax.lax.rsqrt(var + eps) * g + b


def _attn_subblock(x, kv, add_mask, wq, bq, wk, bk, wv, bv, wo, bo, g, b,
                   *, num_heads, scale, eps):
    """One BertAttention block on values (not refs).
       x:[Lq,H] f32, kv:[Lk,H] f32, add_mask:[*,Lk] f32 or None, weights bf16,
       biases/LN f32.  Returns [Lq,H] f32."""
    lq, hdim = x.shape
    dh = hdim // num_heads
    xb = x.astype(jnp.bfloat16)
    kvb = kv.astype(jnp.bfloat16)
    # Full-width projections (bf16 operands, f32 accumulation).
    q = jnp.dot(xb, wq, preferred_element_type=jnp.float32) + bq     # [Lq, H]
    k = jnp.dot(kvb, wk, preferred_element_type=jnp.float32) + bk    # [Lk, H]
    v = jnp.dot(kvb, wv, preferred_element_type=jnp.float32) + bv    # [Lk, H]

    ctx_heads = []
    for h in range(num_heads):   # small static unroll (see TODO for large head counts)
        sl = slice(h * dh, (h + 1) * dh)
        qh = q[:, sl].astype(jnp.bfloat16)
        kh = k[:, sl].astype(jnp.bfloat16)
        vh = v[:, sl].astype(jnp.bfloat16)
        # NT contraction: no kh.T materialization.
        s = jax.lax.dot_general(qh, kh, (((1,), (1,)), ((), ())),
                                preferred_element_type=jnp.float32) * scale
        if add_mask is not None:
            s = s + add_mask
        s = s - jnp.max(s, axis=-1, keepdims=True)
        p = jnp.exp(s)
        p = p * pl.reciprocal(jnp.sum(p, axis=-1, keepdims=True), approx=True)
        ctx_heads.append(jnp.dot(p.astype(jnp.bfloat16), vh,
                                 preferred_element_type=jnp.float32))  # [Lq, dh]
    ctx = jnp.concatenate(ctx_heads, axis=-1).astype(jnp.bfloat16)     # [Lq, H]
    # Single full-width output projection (K = H, not dh).
    y = jnp.dot(ctx, wo, preferred_element_type=jnp.float32) + bo + x
    return _layernorm(y, g, b, eps)


def _ffn_subblock(x, wi, bi, wo, bo, g, b, *, eps):
    xb = x.astype(jnp.bfloat16)
    h = _gelu_erf(jnp.dot(xb, wi, preferred_element_type=jnp.float32) + bi)  # [Lq, I] f32
    y = jnp.dot(h.astype(jnp.bfloat16), wo,
                preferred_element_type=jnp.float32) + bo + x
    return _layernorm(y, g, b, eps)


# ----------------------------- Pallas kernels -----------------------------

def _decoder_layer_kernel(*refs, num_heads, scale, eps, first):
    """Fused DecoderLayer for one batch element: [query LN] -> self-attn ->
       cross-attn(+mask) -> FFN.  All intermediates stay in VMEM/vregs."""
    i = 0
    h_ref = refs[i]; i += 1                    # [Nq, H]
    e_ref = refs[i]; i += 1                    # [Le, H]
    m_ref = refs[i]; i += 1                    # [Nq|1, Le] raw 0/1 mask
    if first:
        qg_ref, qb_ref = refs[i], refs[i + 1]; i += 2
    sa = refs[i:i + 10]; i += 10               # self-attn params
    ca = refs[i:i + 10]; i += 10               # cross-attn params
    ff = refs[i:i + 6]; i += 6                 # ffn params
    o_ref = refs[i]                            # [Nq, H]

    x = h_ref[...].astype(jnp.float32)
    if first:
        # Query-embedding LayerNorm folded here (dropout is identity in eval).
        x = _layernorm(x, qg_ref[...], qb_ref[...], eps)
    enc = e_ref[...].astype(jnp.float32)
    # Additive mask computed in-kernel from the raw 0/1 mask (VPU, never in HBM).
    add_mask = (1.0 - m_ref[...].astype(jnp.float32)) * -10000.0

    def vals(p_refs):
        return tuple(r[...] for r in p_refs)

    x = _attn_subblock(x, x, None, *vals(sa),
                       num_heads=num_heads, scale=scale, eps=eps)
    x = _attn_subblock(x, enc, add_mask, *vals(ca),
                       num_heads=num_heads, scale=scale, eps=eps)
    x = _ffn_subblock(x, *vals(ff), eps=eps)
    o_ref[...] = x.astype(o_ref.dtype)


def _head_kernel(x_ref, e_ref, cw_ref, cb_ref, m1w_ref, m1b_ref,
                 m2w_ref, m2b_ref, w3t_ref, cls_ref, log_ref, m2_sc):
    """Class logits (lane-dense padded) + biaffine metric logits for one
       (batch, q-tile) grid step.  m2 = enc @ W2 computed once per batch."""
    @pl.when(pl.program_id(1) == 0)
    def _():
        eb = e_ref[...].astype(jnp.bfloat16)
        m2_sc[...] = (jnp.dot(eb, m2w_ref[...], preferred_element_type=jnp.float32)
                      + m2b_ref[...])

    x = x_ref[...].astype(jnp.float32)              # [qt, H]
    xb = x.astype(jnp.bfloat16)

    cls_ref[...] = (jnp.dot(xb, cw_ref[...], preferred_element_type=jnp.float32)
                    + cb_ref[...]).astype(cls_ref.dtype)

    m1 = jnp.dot(xb, m1w_ref[...], preferred_element_type=jnp.float32) + m1b_ref[...]
    t = jnp.tanh(m1[:, None, :] + m2_sc[...][None, :, :])   # [qt, Le, 8H] f32
    qt, le, d8 = t.shape
    t2 = t.reshape(qt * le, d8).astype(jnp.bfloat16)
    # NT contraction: w3t [8, 8H] x t2 [qt*Le, 8H] -> [8, qt*Le] (lane-dense block)
    z = jax.lax.dot_general(w3t_ref[...], t2, (((1,), (1,)), ((), ())),
                            preferred_element_type=jnp.float32)
    log_ref[...] = z.astype(log_ref.dtype)


# ----------------------------- pallas_call wrappers -----------------------------

def _clamp_vmem(nbytes):
    # Explicit scoped-VMEM limit; capped at 64 MiB (v7x physical) so the same
    # sizing is valid on v5e/v6e/v7x.
    return int(min(max(nbytes, 4 << 20), 64 << 20))


def fused_decoder_layer(hidden, enc, mask, lp, q_ln, *, num_heads, eps, first):
    """hidden: [Nq,H] (first layer, batch-invariant) or [B,Nq,H]; enc: [B,Le,H];
       mask: [B, Nq|1, Le] raw 0/1."""
    B, Le, H = enc.shape
    if first:
        Nq = hidden.shape[0]
        h_spec = pl.BlockSpec((Nq, H), lambda b: (0, 0))          # invariant block
    else:
        Nq = hidden.shape[1]
        h_spec = pl.BlockSpec((None, Nq, H), lambda b: (b, 0, 0))
    Lm = mask.shape[1]
    dh = H // num_heads
    scale = 1.0 / math.sqrt(dh)

    def wspec(shape):
        return pl.BlockSpec(shape, lambda b: (0, 0))

    in_specs = [h_spec,
                pl.BlockSpec((None, Le, H), lambda b: (b, 0, 0)),
                pl.BlockSpec((None, Lm, Le), lambda b: (b, 0, 0))]
    args = [hidden, enc, mask]
    if first:
        in_specs += [wspec((1, H)), wspec((1, H))]
        args += [q_ln[0], q_ln[1]]

    def attn_specs_args(p):
        specs = [wspec((H, H)), wspec((1, H)),   # wq, bq
                 wspec((H, H)), wspec((1, H)),   # wk, bk
                 wspec((H, H)), wspec((1, H)),   # wv, bv
                 wspec((H, H)), wspec((1, H)),   # wo, bo
                 wspec((1, H)), wspec((1, H))]   # ln gamma, beta
        a = [p['wq'], p['bq'], p['wk'], p['bk'], p['wv'], p['bv'],
             p['wo'], p['bo'], p['ln_g'], p['ln_b']]
        return specs, a

    s_specs, s_args = attn_specs_args(lp['self'])
    c_specs, c_args = attn_specs_args(lp['cross'])
    in_specs += s_specs + c_specs
    args += s_args + c_args

    I = lp['wi'].shape[1]
    in_specs += [wspec((H, I)), wspec((1, I)), wspec((I, H)), wspec((1, H)),
                 wspec((1, H)), wspec((1, H))]
    args += [lp['wi'], lp['bi'], lp['wo'], lp['bo'], lp['ln_g'], lp['ln_b']]

    # VMEM limit sized from the resident blocks (x2 for double buffering + margin).
    weight_bytes = sum(int(a.size) * a.dtype.itemsize for a in args[3:])
    act_bytes = 4 * (Nq * H + Le * H + Lm * Le + Nq * H)
    vmem = _clamp_vmem(2 * (weight_bytes + act_bytes) + (2 << 20))

    return pl.pallas_call(
        functools.partial(_decoder_layer_kernel, num_heads=num_heads,
                          scale=scale, eps=eps, first=first),
        out_shape=jax.ShapeDtypeStruct((B, Nq, H), jnp.float32),
        grid=(B,),
        in_specs=in_specs,
        out_specs=pl.BlockSpec((None, Nq, H), lambda b: (b, 0, 0)),
        compiler_params=pltpu.CompilerParams(
            dimension_semantics=("parallel",),
            vmem_limit_bytes=vmem),
    )(*args)


def _pick_q_tile(Nq, Le):
    # q-tile must be a multiple of 8 (sublane) and q_tile*Le a multiple of 128
    # (lane-dense logits block); otherwise fall back to the full Nq block.
    if Nq % 8 == 0:
        for qt in range(8, Nq + 1, 8):
            if Nq % qt == 0 and (qt * Le) % 128 == 0:
                return qt
    return Nq


def fused_head(hidden, enc, params, *, num_classes):
    B, Nq, H = hidden.shape
    Le = enc.shape[1]
    Cp = params['cls_w'].shape[1]        # padded (lane-dense) class dim
    D8 = params['m1_w'].shape[1]
    q_tile = _pick_q_tile(Nq, Le)
    n_qt = Nq // q_tile

    w_args = (params['cls_w'], params['cls_b'], params['m1_w'], params['m1_b'],
              params['m2_w'], params['m2_b'], params['m3_wt'])
    weight_bytes = sum(int(a.size) * a.dtype.itemsize for a in w_args)
    act_bytes = 4 * (q_tile * H + Le * H + q_tile * Cp + 8 * q_tile * Le
                     + Le * D8 + q_tile * Le * D8)
    vmem = _clamp_vmem(2 * (weight_bytes + act_bytes) + (2 << 20))

    cls_pad, logits_flat = pl.pallas_call(
        _head_kernel,
        out_shape=(jax.ShapeDtypeStruct((B, Nq, Cp), jnp.float32),
                   jax.ShapeDtypeStruct((B, 8, Nq * Le), jnp.float32)),
        grid=(B, n_qt),
        in_specs=[pl.BlockSpec((None, q_tile, H), lambda b, qi: (b, qi, 0)),
                  pl.BlockSpec((None, Le, H), lambda b, qi: (b, 0, 0)),
                  pl.BlockSpec((H, Cp), lambda b, qi: (0, 0)),
                  pl.BlockSpec((1, Cp), lambda b, qi: (0, 0)),
                  pl.BlockSpec((H, D8), lambda b, qi: (0, 0)),
                  pl.BlockSpec((1, D8), lambda b, qi: (0, 0)),
                  pl.BlockSpec((H, D8), lambda b, qi: (0, 0)),
                  pl.BlockSpec((1, D8), lambda b, qi: (0, 0)),
                  pl.BlockSpec((8, D8), lambda b, qi: (0, 0))],
        out_specs=(pl.BlockSpec((None, q_tile, Cp), lambda b, qi: (b, qi, 0)),
                   pl.BlockSpec((None, 8, q_tile * Le), lambda b, qi: (b, 0, qi))),
        scratch_shapes=[pltpu.VMEM((Le, D8), jnp.float32)],
        compiler_params=pltpu.CompilerParams(
            dimension_semantics=("parallel", "arbitrary"),
            vmem_limit_bytes=vmem),
    )(hidden, enc, params['cls_w'], params['cls_b'],
      params['m1_w'], params['m1_b'], params['m2_w'], params['m2_b'],
      params['m3_wt'])

    class_logits = cls_pad[:, :, :num_classes]
    logits = logits_flat.reshape(B, 8, Nq, Le)   # [b, c, q, e] == ref logits[b,q,e,c]
    return class_logits, logits


# ----------------------------- forward pass (glue) -----------------------------

def set_decoder_forward(params, encoder_hidden_states, encoder_attention_mask,
                        *, num_heads, eps, num_classes):
    B, Le, H = encoder_hidden_states.shape
    Nq = params['query_embed'].shape[0]

    # Keep the raw 0/1 mask; (1-m)*-1e4 and the Lq broadcast happen in-kernel.
    if encoder_attention_mask.ndim == 3:
        if encoder_attention_mask.shape[1] not in (1, Nq):
            raise ValueError(
                "encoder_attention_mask dim 1 must broadcast against the "
                f"{Nq} generated-triple queries (got {encoder_attention_mask.shape[1]})")
        mask_in = encoder_attention_mask
    elif encoder_attention_mask.ndim == 2:
        mask_in = encoder_attention_mask.reshape(B, 1, Le)
    else:
        raise ValueError("Wrong shape for encoder_attention_mask")

    # Layer 0 takes the batch-invariant [Nq, H] query embeddings directly
    # (LayerNorm fused into the kernel; dropout identity in eval mode).
    hidden = params['query_embed']
    for li, lp in enumerate(params['layers']):
        hidden = fused_decoder_layer(
            hidden, encoder_hidden_states, mask_in, lp,
            (params['ln_g'], params['ln_b']) if li == 0 else None,
            num_heads=num_heads, eps=eps, first=(li == 0))

    class_logits, logits = fused_head(hidden, encoder_hidden_states, params,
                                      num_classes=num_classes)
    return (class_logits,
            logits[:, 0], logits[:, 1], logits[:, 2], logits[:, 3],
            logits[:, 4], logits[:, 5], logits[:, 6], logits[:, 7])


# ----------------------------- deterministic parameter init -----------------------------

def init_params(key, H, I, num_layers, num_q, num_classes, num_heads):
    del num_heads  # full-width projections; no per-head packing needed
    cnt = [0]

    def nk():
        cnt[0] += 1
        return jax.random.fold_in(key, cnt[0])

    def dense(din, dout, std=0.02):
        w = (jax.random.normal(nk(), (din, dout), jnp.float32) * std).astype(jnp.bfloat16)
        b = jnp.zeros((1, dout), jnp.float32)
        return w, b

    def attn_block():
        wq, bq = dense(H, H)
        wk, bk = dense(H, H)
        wv, bv = dense(H, H)
        wo, bo = dense(H, H)
        return {'wq': wq, 'bq': bq, 'wk': wk, 'bk': bk, 'wv': wv, 'bv': bv,
                'wo': wo, 'bo': bo,
                'ln_g': jnp.ones((1, H), jnp.float32),
                'ln_b': jnp.zeros((1, H), jnp.float32)}

    ortho = jax.nn.initializers.orthogonal()

    layers = []
    for _ in range(num_layers):
        lp = {'self': attn_block(), 'cross': attn_block()}
        wi, bi = dense(H, I)
        wo, bo = dense(I, H)
        lp['wi'], lp['bi'] = wi, bi
        lp['wo'], lp['bo'] = wo, bo
        lp['ln_g'] = jnp.ones((1, H), jnp.float32)
        lp['ln_b'] = jnp.zeros((1, H), jnp.float32)
        layers.append(lp)

    params = {
        'layers': layers,
        'query_embed': ortho(nk(), (num_q, H), jnp.float32),
        'ln_g': jnp.ones((1, H), jnp.float32),
        'ln_b': jnp.zeros((1, H), jnp.float32),
    }

    # Class head, padded to a lane-dense (multiple of 128) output dim.
    Cp = ((num_classes + 127) // 128) * 128
    cw = jax.random.normal(nk(), (H, num_classes), jnp.float32) * 0.02
    params['cls_w'] = (jnp.zeros((H, Cp), jnp.float32)
                       .at[:, :num_classes].set(cw).astype(jnp.bfloat16))
    params['cls_b'] = jnp.zeros((1, Cp), jnp.float32)

    # Biaffine metric head.
    params['m1_w'] = ortho(nk(), (H, 8 * H), jnp.float32).astype(jnp.bfloat16)
    params['m1_b'] = jnp.zeros((1, 8 * H), jnp.float32)
    params['m2_w'] = ortho(nk(), (H, 8 * H), jnp.float32).astype(jnp.bfloat16)
    params['m2_b'] = jnp.zeros((1, 8 * H), jnp.float32)
    params['m3_wt'] = ortho(nk(), (8 * H, 8), jnp.float32).T.astype(jnp.bfloat16)  # [8, 8H]
    return params


# ----------------------------- main -----------------------------

if __name__ == "__main__":
    # small config (hidden=32, heads=4, intermediate=64)
    H, HEADS, INTER, EPS = 32, 4, 64, 1e-12
    B, ENC_LEN, NUM_LAYERS, NUM_CLASSES = 2, 16, 2, 5
    # The reference PyTorch code adds a [B,1,enc_len,enc_len] extended mask to
    # cross-attention scores [B,heads,num_q,enc_len]; that only broadcasts when
    # num_generated_triples == enc_len, so NUM_Q == ENC_LEN here.
    NUM_Q = ENC_LEN

    key = jax.random.PRNGKey(0)
    pkey, xkey, mkey = jax.random.split(key, 3)

    params = init_params(pkey, H, INTER, NUM_LAYERS, NUM_Q, NUM_CLASSES, HEADS)
    encoder_hidden_states = jax.random.normal(xkey, (B, ENC_LEN, H), jnp.float32)
    base = (jax.random.uniform(mkey, (B, 1, ENC_LEN)) > 0.2).astype(jnp.float32)
    base = base.at[:, :, 0].set(1.0)  # keep at least one valid token
    encoder_attention_mask = jnp.broadcast_to(base, (B, ENC_LEN, ENC_LEN))

    fwd = jax.jit(functools.partial(set_decoder_forward, num_heads=HEADS,
                                    eps=EPS, num_classes=NUM_CLASSES))
    outs = fwd(params, encoder_hidden_states, encoder_attention_mask)
    jax.block_until_ready(outs)

    # sanity on shapes
    assert outs[0].shape == (B, NUM_Q, NUM_CLASSES)
    for t in outs[1:]:
        assert t.shape == (B, NUM_Q, ENC_LEN)
    print("KERNEL_OK")
</pallas_src>

<mosaic_0001>
module attributes {stable_mosaic.version = 11 : i64} {
  func.func @_head_kernel(%arg0: i32, %arg1: i32, %arg2: memref<1x8x32xf32, #tpu.memory_space<vmem>>, %arg3: memref<1x16x32xf32, #tpu.memory_space<vmem>>, %arg4: memref<32x128xbf16, #tpu.memory_space<vmem>>, %arg5: memref<1x128xf32, #tpu.memory_space<vmem>>, %arg6: memref<32x256xbf16, #tpu.memory_space<vmem>>, %arg7: memref<1x256xf32, #tpu.memory_space<vmem>>, %arg8: memref<32x256xbf16, #tpu.memory_space<vmem>>, %arg9: memref<1x256xf32, #tpu.memory_space<vmem>>, %arg10: memref<8x256xbf16, #tpu.memory_space<vmem>>, %arg11: memref<1x8x128xf32, #tpu.memory_space<vmem>>, %arg12: memref<1x8x128xf32, #tpu.memory_space<vmem>>, %arg13: memref<16x256xf32, #tpu.memory_space<vmem>>) attributes {dimension_semantics = [#tpu.dimension_semantics<parallel>, #tpu.dimension_semantics<arbitrary>], iteration_bounds = array<i64: 2, 2>, scalar_prefetch = 0 : i64, scratch_operands = 1 : i64, tpu.core_type = #tpu.core_type<tc>, window_params = [{transform_indices = @transform_0, window_bounds = array<i64: 1, 8, 32>}, {transform_indices = @transform_1, window_bounds = array<i64: 1, 16, 32>}, {pipeline_mode = #tpu.pipeline_mode<synchronous>, transform_indices = @transform_2, window_bounds = array<i64: 32, 128>}, {pipeline_mode = #tpu.pipeline_mode<synchronous>, transform_indices = @transform_3, window_bounds = array<i64: 1, 128>}, {pipeline_mode = #tpu.pipeline_mode<synchronous>, transform_indices = @transform_4, window_bounds = array<i64: 32, 256>}, {pipeline_mode = #tpu.pipeline_mode<synchronous>, transform_indices = @transform_5, window_bounds = array<i64: 1, 256>}, {pipeline_mode = #tpu.pipeline_mode<synchronous>, transform_indices = @transform_6, window_bounds = array<i64: 32, 256>}, {pipeline_mode = #tpu.pipeline_mode<synchronous>, transform_indices = @transform_7, window_bounds = array<i64: 1, 256>}, {pipeline_mode = #tpu.pipeline_mode<synchronous>, transform_indices = @transform_8, window_bounds = array<i64: 8, 256>}, {transform_indices = @transform_9, window_bounds = array<i64: 1, 8, 128>}, {transform_indices = @transform_10, window_bounds = array<i64: 1, 8, 128>}]} {
    %c0_i32 = arith.constant 0 : i32
    %0 = arith.cmpi eq, %arg1, %c0_i32 : i32
    %1 = arith.extui %0 : i1 to i32
    %c0_i32_0 = arith.constant 0 : i32
    %2 = arith.cmpi ne, %1, %c0_i32_0 : i32
    scf.if %2 {
      %c0_23 = arith.constant 0 : index
      %c0_24 = arith.constant 0 : index
      %c0_25 = arith.constant 0 : index
      %33 = vector.load %arg3[%c0_23, %c0_24, %c0_25] : memref<1x16x32xf32, #tpu.memory_space<vmem>>, vector<1x16x32xf32>
      %34 = vector.shape_cast %33 : vector<1x16x32xf32> to vector<16x32xf32>
      %35 = arith.truncf %34 : vector<16x32xf32> to vector<16x32xbf16>
      %c0_26 = arith.constant 0 : index
      %c0_27 = arith.constant 0 : index
      %36 = vector.load %arg8[%c0_26, %c0_27] : memref<32x256xbf16, #tpu.memory_space<vmem>>, vector<32x256xbf16>
      %cst_28 = arith.constant dense<0.000000e+00> : vector<16x256xf32>
      %37 = tpu.matmul %35, %36, %cst_28 {dimension_numbers = #tpu.dot_dimension_numbers<[1], [0], [0], [1], [0, 0, 1, 1], [], []>} : vector<16x32xbf16>, vector<32x256xbf16>, vector<16x256xf32> -> vector<16x256xf32>
      %c0_29 = arith.constant 0 : index
      %c0_30 = arith.constant 0 : index
      %38 = vector.load %arg9[%c0_29, %c0_30] : memref<1x256xf32, #tpu.memory_space<vmem>>, vector<1x256xf32>
      %39 = vector.broadcast %38 : vector<1x256xf32> to vector<16x256xf32>
      %40 = arith.addf %37, %39 : vector<16x256xf32>
      %c0_31 = arith.constant 0 : index
      %c0_32 = arith.constant 0 : index
      %41 = vector.load %arg13[%c0_31, %c0_32] : memref<16x256xf32, #tpu.memory_space<vmem>>, vector<16x256xf32>
      tpu.vector_store %arg13[%c0_31, %c0_32], %40 {strides = array<i32>} : memref<16x256xf32, #tpu.memory_space<vmem>>, vector<16x256xf32>,
    } else {
    }
    %c0 = arith.constant 0 : index
    %c0_1 = arith.constant 0 : index
    %c0_2 = arith.constant 0 : index
    %3 = vector.load %arg2[%c0, %c0_1, %c0_2] : memref<1x8x32xf32, #tpu.memory_space<vmem>>, vector<1x8x32xf32>
    %4 = vector.shape_cast %3 : vector<1x8x32xf32> to vector<8x32xf32>
    %5 = arith.truncf %4 : vector<8x32xf32> to vector<8x32xbf16>
    %c0_3 = arith.constant 0 : index
    %c0_4 = arith.constant 0 : index
    %6 = vector.load %arg4[%c0_3, %c0_4] : memref<32x128xbf16, #tpu.memory_space<vmem>>, vector<32x128xbf16>
    %cst = arith.constant dense<0.000000e+00> : vector<8x128xf32>
    %7 = tpu.matmul %5, %6, %cst {dimension_numbers = #tpu.dot_dimension_numbers<[1], [0], [0], [1], [0, 0, 1, 1], [], []>} : vector<8x32xbf16>, vector<32x128xbf16>, vector<8x128xf32> -> vector<8x128xf32>
    %c0_5 = arith.constant 0 : index
    %c0_6 = arith.constant 0 : index
    %8 = vector.load %arg5[%c0_5, %c0_6] : memref<1x128xf32, #tpu.memory_space<vmem>>, vector<1x128xf32>
    %9 = vector.broadcast %8 : vector<1x128xf32> to vector<8x128xf32>
    %10 = arith.addf %7, %9 : vector<8x128xf32>
    %c0_7 = arith.constant 0 : index
    %c0_8 = arith.constant 0 : index
    %c0_9 = arith.constant 0 : index
    %11 = vector.load %arg11[%c0_7, %c0_8, %c0_9] : memref<1x8x128xf32, #tpu.memory_space<vmem>>, vector<1x8x128xf32>
    %12 = vector.shape_cast %11 : vector<1x8x128xf32> to vector<8x128xf32>
    %13 = vector.shape_cast %10 : vector<8x128xf32> to vector<1x8x128xf32>
    tpu.vector_store %arg11[%c0_7, %c0_8, %c0_9], %13 {strides = array<i32>} : memref<1x8x128xf32, #tpu.memory_space<vmem>>, vector<1x8x128xf32>,
    %c0_10 = arith.constant 0 : index
    %c0_11 = arith.constant 0 : index
    %14 = vector.load %arg6[%c0_10, %c0_11] : memref<32x256xbf16, #tpu.memory_space<vmem>>, vector<32x256xbf16>
    %cst_12 = arith.constant dense<0.000000e+00> : vector<8x256xf32>
    %15 = tpu.matmul %5, %14, %cst_12 {dimension_numbers = #tpu.dot_dimension_numbers<[1], [0], [0], [1], [0, 0, 1, 1], [], []>} : vector<8x32xbf16>, vector<32x256xbf16>, vector<8x256xf32> -> vector<8x256xf32>
    %c0_13 = arith.constant 0 : index
    %c0_14 = arith.constant 0 : index
    %16 = vector.load %arg7[%c0_13, %c0_14] : memref<1x256xf32, #tpu.memory_space<vmem>>, vector<1x256xf32>
    %17 = vector.broadcast %16 : vector<1x256xf32> to vector<8x256xf32>
    %18 = arith.addf %15, %17 : vector<8x256xf32>
    %19 = vector.shape_cast %18 : vector<8x256xf32> to vector<8x1x256xf32>
    %c0_15 = arith.constant 0 : index
    %c0_16 = arith.constant 0 : index
    %20 = vector.load %arg13[%c0_15, %c0_16] : memref<16x256xf32, #tpu.memory_space<vmem>>, vector<16x256xf32>
    %21 = vector.shape_cast %20 : vector<16x256xf32> to vector<1x16x256xf32>
    %22 = vector.broadcast %19 : vector<8x1x256xf32> to vector<8x16x256xf32>
    %23 = vector.broadcast %21 : vector<1x16x256xf32> to vector<8x16x256xf32>
    %24 = arith.addf %22, %23 : vector<8x16x256xf32>
    %25 = math.tanh %24 : vector<8x16x256xf32>
    %26 = vector.shape_cast %25 : vector<8x16x256xf32> to vector<128x256xf32>
    %27 = arith.truncf %26 : vector<128x256xf32> to vector<128x256xbf16>
    %c0_17 = arith.constant 0 : index
    %c0_18 = arith.constant 0 : index
    %28 = vector.load %arg10[%c0_17, %c0_18] : memref<8x256xbf16, #tpu.memory_space<vmem>>, vector<8x256xbf16>
    %cst_19 = arith.constant dense<0.000000e+00> : vector<8x128xf32>
    %29 = tpu.matmul %28, %27, %cst_19 {dimension_numbers = #tpu.dot_dimension_numbers<[1], [1], [0], [0], [0, 0, 1, 0], [], []>} : vector<8x256xbf16>, vector<128x256xbf16>, vector<8x128xf32> -> vector<8x128xf32>
    %c0_20 = arith.constant 0 : index
    %c0_21 = arith.constant 0 : index
    %c0_22 = arith.constant 0 : index
    %30 = vector.load %arg12[%c0_20, %c0_21, %c0_22] : memref<1x8x128xf32, #tpu.memory_space<vmem>>, vector<1x8x128xf32>
    %31 = vector.shape_cast %30 : vector<1x8x128xf32> to vector<8x128xf32>
    %32 = vector.shape_cast %29 : vector<8x128xf32> to vector<1x8x128xf32>
    tpu.vector_store %arg12[%c0_20, %c0_21, %c0_22], %32 {strides = array<i32>} : memref<1x8x128xf32, #tpu.memory_space<vmem>>, vector<1x8x128xf32>,
    return
  }
  func.func @transform_0(%arg0: i32, %arg1: i32) -> (i32, i32, i32) {
    %c0_i32 = arith.constant 0 : i32
    %c0_i32_0 = arith.constant 0 : i32
    return %arg0, %arg1, %c0_i32 : i32, i32, i32
  }
  func.func @transform_1(%arg0: i32, %arg1: i32) -> (i32, i32, i32) {
    %c0_i32 = arith.constant 0 : i32
    %c0_i32_0 = arith.constant 0 : i32
    %c0_i32_1 = arith.constant 0 : i32
    return %arg0, %c0_i32, %c0_i32_0 : i32, i32, i32
  }
  func.func @transform_2(%arg0: i32, %arg1: i32) -> (i32, i32) {
    %c0_i32 = arith.constant 0 : i32
    %c0_i32_0 = arith.constant 0 : i32
    %c0_i32_1 = arith.constant 0 : i32
    return %c0_i32, %c0_i32_0 : i32, i32
  }
  func.func @transform_3(%arg0: i32, %arg1: i32) -> (i32, i32) {
    %c0_i32 = arith.constant 0 : i32
    %c0_i32_0 = arith.constant 0 : i32
    %c0_i32_1 = arith.constant 0 : i32
    return %c0_i32, %c0_i32_0 : i32, i32
  }
  func.func @transform_4(%arg0: i32, %arg1: i32) -> (i32, i32) {
    %c0_i32 = arith.constant 0 : i32
    %c0_i32_0 = arith.constant 0 : i32
    %c0_i32_1 = arith.constant 0 : i32
    return %c0_i32, %c0_i32_0 : i32, i32
  }
  func.func @transform_5(%arg0: i32, %arg1: i32) -> (i32, i32) {
    %c0_i32 = arith.constant 0 : i32
    %c0_i32_0 = arith.constant 0 : i32
    %c0_i32_1 = arith.constant 0 : i32
    return %c0_i32, %c0_i32_0 : i32, i32
  }
  func.func @transform_6(%arg0: i32, %arg1: i32) -> (i32, i32) {
    %c0_i32 = arith.constant 0 : i32
    %c0_i32_0 = arith.constant 0 : i32
    %c0_i32_1 = arith.constant 0 : i32
    return %c0_i32, %c0_i32_0 : i32, i32
  }
  func.func @transform_7(%arg0: i32, %arg1: i32) -> (i32, i32) {
    %c0_i32 = arith.constant 0 : i32
    %c0_i32_0 = arith.constant 0 : i32
    %c0_i32_1 = arith.constant 0 : i32
    return %c0_i32, %c0_i32_0 : i32, i32
  }
  func.func @transform_8(%arg0: i32, %arg1: i32) -> (i32, i32) {
    %c0_i32 = arith.constant 0 : i32
    %c0_i32_0 = arith.constant 0 : i32
    %c0_i32_1 = arith.constant 0 : i32
    return %c0_i32, %c0_i32_0 : i32, i32
  }
  func.func @transform_9(%arg0: i32, %arg1: i32) -> (i32, i32, i32) {
    %c0_i32 = arith.constant 0 : i32
    %c0_i32_0 = arith.constant 0 : i32
    return %arg0, %arg1, %c0_i32 : i32, i32, i32
  }
  func.func @transform_10(%arg0: i32, %arg1: i32) -> (i32, i32, i32) {
    %c0_i32 = arith.constant 0 : i32
    %c0_i32_0 = arith.constant 0 : i32
    return %arg0, %c0_i32, %arg1 : i32, i32, i32
  }
}

module attributes {stable_mosaic.version = 11 : i64} {
  func.func @_decoder_layer_kernel(%arg0: i32, %arg1: memref<16x32xf32, #tpu.memory_space<vmem>>, %arg2: memref<1x16x32xf32, #tpu.memory_space<vmem>>, %arg3: memref<1x16x16xf32, #tpu.memory_space<vmem>>, %arg4: memref<1x32xf32, #tpu.memory_space<vmem>>, %arg5: memref<1x32xf32, #tpu.memory_space<vmem>>, %arg6: memref<32x32xbf16, #tpu.memory_space<vmem>>, %arg7: memref<1x32xf32, #tpu.memory_space<vmem>>, %arg8: memref<32x32xbf16, #tpu.memory_space<vmem>>, %arg9: memref<1x32xf32, #tpu.memory_space<vmem>>, %arg10: memref<32x32xbf16, #tpu.memory_space<vmem>>, %arg11: memref<1x32xf32, #tpu.memory_space<vmem>>, %arg12: memref<32x32xbf16, #tpu.memory_space<vmem>>, %arg13: memref<1x32xf32, #tpu.memory_space<vmem>>, %arg14: memref<1x32xf32, #tpu.memory_space<vmem>>, %arg15: memref<1x32xf32, #tpu.memory_space<vmem>>, %arg16: memref<32x32xbf16, #tpu.memory_space<vmem>>, %arg17: memref<1x32xf32, #tpu.memory_space<vmem>>, %arg18: memref<32x32xbf16, #tpu.memory_space<vmem>>, %arg19: memref<1x32xf32, #tpu.memory_space<vmem>>, %arg20: memref<32x32xbf16, #tpu.memory_space<vmem>>, %arg21: memref<1x32xf32, #tpu.memory_space<vmem>>, %arg22: memref<32x32xbf16, #tpu.memory_space<vmem>>, %arg23: memref<1x32xf32, #tpu.memory_space<vmem>>, %arg24: memref<1x32xf32, #tpu.memory_space<vmem>>, %arg25: memref<1x32xf32, #tpu.memory_space<vmem>>, %arg26: memref<32x64xbf16, #tpu.memory_space<vmem>>, %arg27: memref<1x64xf32, #tpu.memory_space<vmem>>, %arg28: memref<64x32xbf16, #tpu.memory_space<vmem>>, %arg29: memref<1x32xf32, #tpu.memory_space<vmem>>, %arg30: memref<1x32xf32, #tpu.memory_space<vmem>>, %arg31: memref<1x32xf32, #tpu.memory_space<vmem>>, %arg32: memref<1x16x32xf32, #tpu.memory_space<vmem>>) attributes {dimension_semantics = [#tpu.dimension_semantics<parallel>], iteration_bounds = array<i64: 2>, scalar_prefetch = 0 : i64, scratch_operands = 0 : i64, tpu.core_type = #tpu.core_type<tc>, window_params = [{pipeline_mode = #tpu.pipeline_mode<synchronous>, transform_indices = @transform_0, window_bounds = array<i64: 16, 32>}, {transform_indices = @transform_1, window_bounds = array<i64: 1, 16, 32>}, {transform_indices = @transform_2, window_bounds = array<i64: 1, 16, 16>}, {pipeline_mode = #tpu.pipeline_mode<synchronous>, transform_indices = @transform_3, window_bounds = array<i64: 1, 32>}, {pipeline_mode = #tpu.pipeline_mode<synchronous>, transform_indices = @transform_4, window_bounds = array<i64: 1, 32>}, {pipeline_mode = #tpu.pipeline_mode<synchronous>, transform_indices = @transform_5, window_bounds = array<i64: 32, 32>}, {pipeline_mode = #tpu.pipeline_mode<synchronous>, transform_indices = @transform_6, window_bounds = array<i64: 1, 32>}, {pipeline_mode = #tpu.pipeline_mode<synchronous>, transform_indices = @transform_7, window_bounds = array<i64: 32, 32>}, {pipeline_mode = #tpu.pipeline_mode<synchronous>, transform_indices = @transform_8, window_bounds = array<i64: 1, 32>}, {pipeline_mode = #tpu.pipeline_mode<synchronous>, transform_indices = @transform_9, window_bounds = array<i64: 32, 32>}, {pipeline_mode = #tpu.pipeline_mode<synchronous>, transform_indices = @transform_10, window_bounds = array<i64: 1, 32>}, {pipeline_mode = #tpu.pipeline_mode<synchronous>, transform_indices = @transform_11, window_bounds = array<i64: 32, 32>}, {pipeline_mode = #tpu.pipeline_mode<synchronous>, transform_indices = @transform_12, window_bounds = array<i64: 1, 32>}, {pipeline_mode = #tpu.pipeline_mode<synchronous>, transform_indices = @transform_13, window_bounds = array<i64: 1, 32>}, {pipeline_mode = #tpu.pipeline_mode<synchronous>, transform_indices = @transform_14, window_bounds = array<i64: 1, 32>}, {pipeline_mode = #tpu.pipeline_mode<synchronous>, transform_indices = @transform_15, window_bounds = array<i64: 32, 32>}, {pipeline_mode = #tpu.pipeline_mode<synchronous>, transform_indices = @transform_16, window_bounds = array<i64: 1, 32>}, {pipeline_mode = #tpu.pipeline_mode<synchronous>, transform_indices = @transform_17, window_bounds = array<i64: 32, 32>}, {pipeline_mode = #tpu.pipeline_mode<synchronous>, transform_indices = @transform_18, window_bounds = array<i64: 1, 32>}, {pipeline_mode = #tpu.pipeline_mode<synchronous>, transform_indices = @transform_19, window_bounds = array<i64: 32, 32>}, {pipeline_mode = #tpu.pipeline_mode<synchronous>, transform_indices = @transform_20, window_bounds = array<i64: 1, 32>}, {pipeline_mode = #tpu.pipeline_mode<synchronous>, transform_indices = @transform_21, window_bounds = array<i64: 32, 32>}, {pipeline_mode = #tpu.pipeline_mode<synchronous>, transform_indices = @transform_22, window_bounds = array<i64: 1, 32>}, {pipeline_mode = #tpu.pipeline_mode<synchronous>, transform_indices = @transform_23, window_bounds = array<i64: 1, 32>}, {pipeline_mode = #tpu.pipeline_mode<synchronous>, transform_indices = @transform_24, window_bounds = array<i64: 1, 32>}, {pipeline_mode = #tpu.pipeline_mode<synchronous>, transform_indices = @transform_25, window_bounds = array<i64: 32, 64>}, {pipeline_mode = #tpu.pipeline_mode<synchronous>, transform_indices = @transform_26, window_bounds = array<i64: 1, 64>}, {pipeline_mode = #tpu.pipeline_mode<synchronous>, transform_indices = @transform_27, window_bounds = array<i64: 64, 32>}, {pipeline_mode = #tpu.pipeline_mode<synchronous>, transform_indices = @transform_28, window_bounds = array<i64: 1, 32>}, {pipeline_mode = #tpu.pipeline_mode<synchronous>, transform_indices = @transform_29, window_bounds = array<i64: 1, 32>}, {pipeline_mode = #tpu.pipeline_mode<synchronous>, transform_indices = @transform_30, window_bounds = array<i64: 1, 32>}, {transform_indices = @transform_31, window_bounds = array<i64: 1, 16, 32>}]} {
    %c0 = arith.constant 0 : index
    %c0_0 = arith.constant 0 : index
    %0 = vector.load %arg1[%c0, %c0_0] : memref<16x32xf32, #tpu.memory_space<vmem>>, vector<16x32xf32>
    %c0_1 = arith.constant 0 : index
    %c0_2 = arith.constant 0 : index
    %1 = vector.load %arg4[%c0_1, %c0_2] : memref<1x32xf32, #tpu.memory_space<vmem>>, vector<1x32xf32>
    %c0_3 = arith.constant 0 : index
    %c0_4 = arith.constant 0 : index
    %2 = vector.load %arg5[%c0_3, %c0_4] : memref<1x32xf32, #tpu.memory_space<vmem>>, vector<1x32xf32>
    %cst = arith.constant dense<0.000000e+00> : vector<16xf32>
    %3 = vector.multi_reduction <add>, %0, %cst [1] : vector<16x32xf32> to vector<16xf32>
    %4 = vector.shape_cast %3 : vector<16xf32> to vector<16x1xf32>
    %cst_5 = arith.constant 3.200000e+01 : f32
    %5 = vector.broadcast %cst_5 : f32 to vector<16x1xf32>
    %6 = arith.divf %4, %5 : vector<16x1xf32>
    %7 = vector.broadcast %6 : vector<16x1xf32> to vector<16x32xf32>
    %8 = arith.subf %0, %7 : vector<16x32xf32>
    %9 = arith.mulf %8, %8 : vector<16x32xf32>
    %cst_6 = arith.constant dense<0.000000e+00> : vector<16xf32>
    %10 = vector.multi_reduction <add>, %9, %cst_6 [1] : vector<16x32xf32> to vector<16xf32>
    %11 = vector.shape_cast %10 : vector<16xf32> to vector<16x1xf32>
    %cst_7 = arith.constant 3.200000e+01 : f32
    %12 = vector.broadcast %cst_7 : f32 to vector<16x1xf32>
    %13 = arith.divf %11, %12 : vector<16x1xf32>
    %14 = vector.broadcast %6 : vector<16x1xf32> to vector<16x32xf32>
    %15 = arith.subf %0, %14 : vector<16x32xf32>
    %cst_8 = arith.constant 9.99999996E-13 : f32
    %16 = vector.broadcast %cst_8 : f32 to vector<16x1xf32>
    %17 = arith.addf %13, %16 : vector<16x1xf32>
    %18 = math.rsqrt %17 : vector<16x1xf32>
    %19 = vector.broadcast %18 : vector<16x1xf32> to vector<16x32xf32>
    %20 = arith.mulf %15, %19 : vector<16x32xf32>
    %21 = vector.broadcast %1 : vector<1x32xf32> to vector<16x32xf32>
    %22 = arith.mulf %20, %21 : vector<16x32xf32>
    %23 = vector.broadcast %2 : vector<1x32xf32> to vector<16x32xf32>
    %24 = arith.addf %22, %23 : vector<16x32xf32>
    %c0_9 = arith.constant 0 : index
    %c0_10 = arith.constant 0 : index
    %c0_11 = arith.constant 0 : index
    %25 = vector.load %arg2[%c0_9, %c0_10, %c0_11] : memref<1x16x32xf32, #tpu.memory_space<vmem>>, vector<1x16x32xf32>
    %26 = vector.shape_cast %25 : vector<1x16x32xf32> to vector<16x32xf32>
    %c0_12 = arith.constant 0 : index
    %c0_13 = arith.constant 0 : index
    %c0_14 = arith.constant 0 : index
    %27 = vector.load %arg3[%c0_12, %c0_13, %c0_14] : memref<1x16x16xf32, #tpu.memory_space<vmem>>, vector<1x16x16xf32>
    %28 = vector.shape_cast %27 : vector<1x16x16xf32> to vector<16x16xf32>
    %cst_15 = arith.constant 1.000000e+00 : f32
    %29 = vector.broadcast %cst_15 : f32 to vector<16x16xf32>
    %30 = arith.subf %29, %28 : vector<16x16xf32>
    %cst_16 = arith.constant -1.000000e+04 : f32
    %31 = vector.broadcast %cst_16 : f32 to vector<16x16xf32>
    %32 = arith.mulf %30, %31 : vector<16x16xf32>
    %c0_17 = arith.constant 0 : index
    %c0_18 = arith.constant 0 : index
    %33 = vector.load %arg6[%c0_17, %c0_18] : memref<32x32xbf16, #tpu.memory_space<vmem>>, vector<32x32xbf16>
    %c0_19 = arith.constant 0 : index
    %c0_20 = arith.constant 0 : index
    %34 = vector.load %arg7[%c0_19, %c0_20] : memref<1x32xf32, #tpu.memory_space<vmem>>, vector<1x32xf32>
    %c0_21 = arith.constant 0 : index
    %c0_22 = arith.constant 0 : index
    %35 = vector.load %arg8[%c0_21, %c0_22] : memref<32x32xbf16, #tpu.memory_space<vmem>>, vector<32x32xbf16>
    %c0_23 = arith.constant 0 : index
    %c0_24 = arith.constant 0 : index
    %36 = vector.load %arg9[%c0_23, %c0_24] : memref<1x32xf32, #tpu.memory_space<vmem>>, vector<1x32xf32>
    %c0_25 = arith.constant 0 : index
    %c0_26 = arith.constant 0 : index
    %37 = vector.load %arg10[%c0_25, %c0_26] : memref<32x32xbf16, #tpu.memory_space<vmem>>, vector<32x32xbf16>
    %c0_27 = arith.constant 0 : index
    %c0_28 = arith.constant 0 : index
    %38 = vector.load %arg11[%c0_27, %c0_28] : memref<1x32xf32, #tpu.memory_space<vmem>>, vector<1x32xf32>
    %c0_29 = arith.constant 0 : index
    %c0_30 = arith.constant 0 : index
    %39 = vector.load %arg12[%c0_29, %c0_30] : memref<32x32xbf16, #tpu.memory_space<vmem>>, vector<32x32xbf16>
    %c0_31 = arith.constant 0 : index
    %c0_32 = arith.constant 0 : index
    %40 = vector.load %arg13[%c0_31, %c0_32] : memref<1x32xf32, #tpu.memory_space<vmem>>, vector<1x32xf32>
    %c0_33 = arith.constant 0 : index
    %c0_34 = arith.constant 0 : index
    %41 = vector.load %arg14[%c0_33, %c0_34] : memref<1x32xf32, #tpu.memory_space<vmem>>, vector<1x32xf32>
    %c0_35 = arith.constant 0 : index
    %c0_36 = arith.constant 0 : index
    %42 = vector.load %arg15[%c0_35, %c0_36] : memref<1x32xf32, #tpu.memory_space<vmem>>, vector<1x32xf32>
    %43 = arith.truncf %24 : vector<16x32xf32> to vector<16x32xbf16>
    %44 = arith.truncf %24 : vector<16x32xf32> to vector<16x32xbf16>
    %cst_37 = arith.constant dense<0.000000e+00> : vector<16x32xf32>
    %45 = tpu.matmul %43, %33, %cst_37 {dimension_numbers = #tpu.dot_dimension_numbers<[1], [0], [0], [1], [0, 0, 1, 1], [], []>} : vector<16x32xbf16>, vector<32x32xbf16>, vector<16x32xf32> -> vector<16x32xf32>
    %46 = vector.broadcast %34 : vector<1x32xf32> to vector<16x32xf32>
    %47 = arith.addf %45, %46 : vector<16x32xf32>
    %cst_38 = arith.constant dense<0.000000e+00> : vector<16x32xf32>
    %48 = tpu.matmul %44, %35, %cst_38 {dimension_numbers = #tpu.dot_dimension_numbers<[1], [0], [0], [1], [0, 0, 1, 1], [], []>} : vector<16x32xbf16>, vector<32x32xbf16>, vector<16x32xf32> -> vector<16x32xf32>
    %49 = vector.broadcast %36 : vector<1x32xf32> to vector<16x32xf32>
    %50 = arith.addf %48, %49 : vector<16x32xf32>
    %cst_39 = arith.constant dense<0.000000e+00> : vector<16x32xf32>
    %51 = tpu.matmul %44, %37, %cst_39 {dimension_numbers = #tpu.dot_dimension_numbers<[1], [0], [0], [1], [0, 0, 1, 1], [], []>} : vector<16x32xbf16>, vector<32x32xbf16>, vector<16x32xf32> -> vector<16x32xf32>
    %52 = vector.broadcast %38 : vector<1x32xf32> to vector<16x32xf32>
    %53 = arith.addf %51, %52 : vector<16x32xf32>
    %54 = vector.extract_strided_slice %47 {offsets = [0, 0], sizes = [16, 8], strides = [1, 1]} : vector<16x32xf32> to vector<16x8xf32>
    %55 = arith.truncf %54 : vector<16x8xf32> to vector<16x8xbf16>
    %56 = vector.extract_strided_slice %50 {offsets = [0, 0], sizes = [16, 8], strides = [1, 1]} : vector<16x32xf32> to vector<16x8xf32>
    %57 = arith.truncf %56 : vector<16x8xf32> to vector<16x8xbf16>
    %58 = vector.extract_strided_slice %53 {offsets = [0, 0], sizes = [16, 8], strides = [1, 1]} : vector<16x32xf32> to vector<16x8xf32>
    %59 = arith.truncf %58 : vector<16x8xf32> to vector<16x8xbf16>
    %cst_40 = arith.constant dense<0.000000e+00> : vector<16x16xf32>
    %60 = tpu.matmul %55, %57, %cst_40 {dimension_numbers = #tpu.dot_dimension_numbers<[1], [1], [0], [0], [0, 0, 1, 0], [], []>} : vector<16x8xbf16>, vector<16x8xbf16>, vector<16x16xf32> -> vector<16x16xf32>
    %cst_41 = arith.constant 0.353553385 : f32
    %61 = vector.broadcast %cst_41 : f32 to vector<16x16xf32>
    %62 = arith.mulf %60, %61 : vector<16x16xf32>
    %cst_42 = arith.constant dense<0xFF800000> : vector<16xf32>
    %63 = vector.multi_reduction <maximumf>, %62, %cst_42 [1] : vector<16x16xf32> to vector<16xf32>
    %64 = vector.shape_cast %63 : vector<16xf32> to vector<16x1xf32>
    %65 = vector.broadcast %64 : vector<16x1xf32> to vector<16x16xf32>
    %66 = arith.subf %62, %65 : vector<16x16xf32>
    %67 = math.exp %66 : vector<16x16xf32>
    %cst_43 = arith.constant dense<0.000000e+00> : vector<16xf32>
    %68 = vector.multi_reduction <add>, %67, %cst_43 [1] : vector<16x16xf32> to vector<16xf32>
    %69 = vector.shape_cast %68 : vector<16xf32> to vector<16x1xf32>
    %70 = tpu.reciprocal %69 {approx = true} : vector<16x1xf32> -> vector<16x1xf32>
    %71 = vector.broadcast %70 : vector<16x1xf32> to vector<16x16xf32>
    %72 = arith.mulf %67, %71 : vector<16x16xf32>
    %73 = arith.truncf %72 : vector<16x16xf32> to vector<16x16xbf16>
    %cst_44 = arith.constant dense<0.000000e+00> : vector<16x8xf32>
    %74 = tpu.matmul %73, %59, %cst_44 {dimension_numbers = #tpu.dot_dimension_numbers<[1], [0], [0], [1], [0, 0, 1, 1], [], []>} : vector<16x16xbf16>, vector<16x8xbf16>, vector<16x8xf32> -> vector<16x8xf32>
    %75 = vector.extract_strided_slice %47 {offsets = [0, 8], sizes = [16, 8], strides = [1, 1]} : vector<16x32xf32> to vector<16x8xf32>
    %76 = arith.truncf %75 : vector<16x8xf32> to vector<16x8xbf16>
    %77 = vector.extract_strided_slice %50 {offsets = [0, 8], sizes = [16, 8], strides = [1, 1]} : vector<16x32xf32> to vector<16x8xf32>
    %78 = arith.truncf %77 : vector<16x8xf32> to vector<16x8xbf16>
    %79 = vector.extract_strided_slice %53 {offsets = [0, 8], sizes = [16, 8], strides = [1, 1]} : vector<16x32xf32> to vector<16x8xf32>
    %80 = arith.truncf %79 : vector<16x8xf32> to vector<16x8xbf16>
    %cst_45 = arith.constant dense<0.000000e+00> : vector<16x16xf32>
    %81 = tpu.matmul %76, %78, %cst_45 {dimension_numbers = #tpu.dot_dimension_numbers<[1], [1], [0], [0], [0, 0, 1, 0], [], []>} : vector<16x8xbf16>, vector<16x8xbf16>, vector<16x16xf32> -> vector<16x16xf32>
    %cst_46 = arith.constant 0.353553385 : f32
    %82 = vector.broadcast %cst_46 : f32 to vector<16x16xf32>
    %83 = arith.mulf %81, %82 : vector<16x16xf32>
    %cst_47 = arith.constant dense<0xFF800000> : vector<16xf32>
    %84 = vector.multi_reduction <maximumf>, %83, %cst_47 [1] : vector<16x16xf32> to vector<16xf32>
    %85 = vector.shape_cast %84 : vector<16xf32> to vector<16x1xf32>
    %86 = vector.broadcast %85 : vector<16x1xf32> to vector<16x16xf32>
    %87 = arith.subf %83, %86 : vector<16x16xf32>
    %88 = math.exp %87 : vector<16x16xf32>
    %cst_48 = arith.constant dense<0.000000e+00> : vector<16xf32>
    %89 = vector.multi_reduction <add>, %88, %cst_48 [1] : vector<16x16xf32> to vector<16xf32>
    %90 = vector.shape_cast %89 : vector<16xf32> to vector<16x1xf32>
    %91 = tpu.reciprocal %90 {approx = true} : vector<16x1xf32> -> vector<16x1xf32>
    %92 = vector.broadcast %91 : vector<16x1xf32> to vector<16x16xf32>
    %93 = arith.mulf %88, %92 : vector<16x16xf32>
    %94 = arith.truncf %93 : vector<16x16xf32> to vector<16x16xbf16>
    %cst_49 = arith.constant dense<0.000000e+00> : vector<16x8xf32>
    %95 = tpu.matmul %94, %80, %cst_49 {dimension_numbers = #tpu.dot_dimension_numbers<[1], [0], [0], [1], [0, 0, 1, 1], [], []>} : vector<16x16xbf16>, vector<16x8xbf16>, vector<16x8xf32> -> vector<16x8xf32>
    %96 = vector.extract_strided_slice %47 {offsets = [0, 16], sizes = [16, 8], strides = [1, 1]} : vector<16x32xf32> to vector<16x8xf32>
    %97 = arith.truncf %96 : vector<16x8xf32> to vector<16x8xbf16>
    %98 = vector.extract_strided_slice %50 {offsets = [0, 16], sizes = [16, 8], strides = [1, 1]} : vector<16x32xf32> to vector<16x8xf32>
    %99 = arith.truncf %98 : vector<16x8xf32> to vector<16x8xbf16>
    %100 = vector.extract_strided_slice %53 {offsets = [0, 16], sizes = [16, 8], strides = [1, 1]} : vector<16x32xf32> to vector<16x8xf32>
    %101 = arith.truncf %100 : vector<16x8xf32> to vector<16x8xbf16>
    %cst_50 = arith.constant dense<0.000000e+00> : vector<16x16xf32>
    %102 = tpu.matmul %97, %99, %cst_50 {dimension_numbers = #tpu.dot_dimension_numbers<[1], [1], [0], [0], [0, 0, 1, 0], [], []>} : vector<16x8xbf16>, vector<16x8xbf16>, vector<16x16xf32> -> vector<16x16xf32>
    %cst_51 = arith.constant 0.353553385 : f32
    %103 = vector.broadcast %cst_51 : f32 to vector<16x16xf32>
    %104 = arith.mulf %102, %103 : vector<16x16xf32>
    %cst_52 = arith.constant dense<0xFF800000> : vector<16xf32>
    %105 = vector.multi_reduction <maximumf>, %104, %cst_52 [1] : vector<16x16xf32> to vector<16xf32>
    %106 = vector.shape_cast %105 : vector<16xf32> to vector<16x1xf32>
    %107 = vector.broadcast %106 : vector<16x1xf32> to vector<16x16xf32>
    %108 = arith.subf %104, %107 : vector<16x16xf32>
    %109 = math.exp %108 : vector<16x16xf32>
    %cst_53 = arith.constant dense<0.000000e+00> : vector<16xf32>
    %110 = vector.multi_reduction <add>, %109, %cst_53 [1] : vector<16x16xf32> to vector<16xf32>
    %111 = vector.shape_cast %110 : vector<16xf32> to vector<16x1xf32>
    %112 = tpu.reciprocal %111 {approx = true} : vector<16x1xf32> -> vector<16x1xf32>
    %113 = vector.broadcast %112 : vector<16x1xf32> to vector<16x16xf32>
    %114 = arith.mulf %109, %113 : vector<16x16xf32>
    %115 = arith.truncf %114 : vector<16x16xf32> to vector<16x16xbf16>
    %cst_54 = arith.constant dense<0.000000e+00> : vector<16x8xf32>
    %116 = tpu.matmul %115, %101, %cst_54 {dimension_numbers = #tpu.dot_dimension_numbers<[1], [0], [0], [1], [0, 0, 1, 1], [], []>} : vector<16x16xbf16>, vector<16x8xbf16>, vector<16x8xf32> -> vector<16x8xf32>
    %117 = vector.extract_strided_slice %47 {offsets = [0, 24], sizes = [16, 8], strides = [1, 1]} : vector<16x32xf32> to vector<16x8xf32>
    %118 = arith.truncf %117 : vector<16x8xf32> to vector<16x8xbf16>
    %119 = vector.extract_strided_slice %50 {offsets = [0, 24], sizes = [16, 8], strides = [1, 1]} : vector<16x32xf32> to vector<16x8xf32>
    %120 = arith.truncf %119 : vector<16x8xf32> to vector<16x8xbf16>
    %121 = vector.extract_strided_slice %53 {offsets = [0, 24], sizes = [16, 8], strides = [1, 1]} : vector<16x32xf32> to vector<16x8xf32>
    %122 = arith.truncf %121 : vector<16x8xf32> to vector<16x8xbf16>
    %cst_55 = arith.constant dense<0.000000e+00> : vector<16x16xf32>
    %123 = tpu.matmul %118, %120, %cst_55 {dimension_numbers = #tpu.dot_dimension_numbers<[1], [1], [0], [0], [0, 0, 1, 0], [], []>} : vector<16x8xbf16>, vector<16x8xbf16>, vector<16x16xf32> -> vector<16x16xf32>
    %cst_56 = arith.constant 0.353553385 : f32
    %124 = vector.broadcast %cst_56 : f32 to vector<16x16xf32>
    %125 = arith.mulf %123, %124 : vector<16x16xf32>
    %cst_57 = arith.constant dense<0xFF800000> : vector<16xf32>
    %126 = vector.multi_reduction <maximumf>, %125, %cst_57 [1] : vector<16x16xf32> to vector<16xf32>
    %127 = vector.shape_cast %126 : vector<16xf32> to vector<16x1xf32>
    %128 = vector.broadcast %127 : vector<16x1xf32> to vector<16x16xf32>
    %129 = arith.subf %125, %128 : vector<16x16xf32>
    %130 = math.exp %129 : vector<16x16xf32>
    %cst_58 = arith.constant dense<0.000000e+00> : vector<16xf32>
    %131 = vector.multi_reduction <add>, %130, %cst_58 [1] : vector<16x16xf32> to vector<16xf32>
    %132 = vector.shape_cast %131 : vector<16xf32> to vector<16x1xf32>
    %133 = tpu.reciprocal %132 {approx = true} : vector<16x1xf32> -> vector<16x1xf32>
    %134 = vector.broadcast %133 : vector<16x1xf32> to vector<16x16xf32>
    %135 = arith.mulf %130, %134 : vector<16x16xf32>
    %136 = arith.truncf %135 : vector<16x16xf32> to vector<16x16xbf16>
    %cst_59 = arith.constant dense<0.000000e+00> : vector<16x8xf32>
    %137 = tpu.matmul %136, %122, %cst_59 {dimension_numbers = #tpu.dot_dimension_numbers<[1], [0], [0], [1], [0, 0, 1, 1], [], []>} : vector<16x16xbf16>, vector<16x8xbf16>, vector<16x8xf32> -> vector<16x8xf32>
    %138 = tpu.concatenate %74, %95, %116, %137 in 1 : vector<16x8xf32>, vector<16x8xf32>, vector<16x8xf32>, vector<16x8xf32> -> vector<16x32xf32>
    %139 = arith.truncf %138 : vector<16x32xf32> to vector<16x32xbf16>
    %cst_60 = arith.constant dense<0.000000e+00> : vector<16x32xf32>
    %140 = tpu.matmul %139, %39, %cst_60 {dimension_numbers = #tpu.dot_dimension_numbers<[1], [0], [0], [1], [0, 0, 1, 1], [], []>} : vector<16x32xbf16>, vector<32x32xbf16>, vector<16x32xf32> -> vector<16x32xf32>
    %141 = vector.broadcast %40 : vector<1x32xf32> to vector<16x32xf32>
    %142 = arith.addf %140, %141 : vector<16x32xf32>
    %143 = arith.addf %142, %24 : vector<16x32xf32>
    %cst_61 = arith.constant dense<0.000000e+00> : vector<16xf32>
    %144 = vector.multi_reduction <add>, %143, %cst_61 [1] : vector<16x32xf32> to vector<16xf32>
    %145 = vector.shape_cast %144 : vector<16xf32> to vector<16x1xf32>
    %cst_62 = arith.constant 3.200000e+01 : f32
    %146 = vector.broadcast %cst_62 : f32 to vector<16x1xf32>
    %147 = arith.divf %145, %146 : vector<16x1xf32>
    %148 = vector.broadcast %147 : vector<16x1xf32> to vector<16x32xf32>
    %149 = arith.subf %143, %148 : vector<16x32xf32>
    %150 = arith.mulf %149, %149 : vector<16x32xf32>
    %cst_63 = arith.constant dense<0.000000e+00> : vector<16xf32>
    %151 = vector.multi_reduction <add>, %150, %cst_63 [1] : vector<16x32xf32> to vector<16xf32>
    %152 = vector.shape_cast %151 : vector<16xf32> to vector<16x1xf32>
    %cst_64 = arith.constant 3.200000e+01 : f32
    %153 = vector.broadcast %cst_64 : f32 to vector<16x1xf32>
    %154 = arith.divf %152, %153 : vector<16x1xf32>
    %155 = vector.broadcast %147 : vector<16x1xf32> to vector<16x32xf32>
    %156 = arith.subf %143, %155 : vector<16x32xf32>
    %cst_65 = arith.constant 9.99999996E-13 : f32
    %157 = vector.broadcast %cst_65 : f32 to vector<16x1xf32>
    %158 = arith.addf %154, %157 : vector<16x1xf32>
    %159 = math.rsqrt %158 : vector<16x1xf32>
    %160 = vector.broadcast %159 : vector<16x1xf32> to vector<16x32xf32>
    %161 = arith.mulf %156, %160 : vector<16x32xf32>
    %162 = vector.broadcast %41 : vector<1x32xf32> to vector<16x32xf32>
    %163 = arith.mulf %161, %162 : vector<16x32xf32>
    %164 = vector.broadcast %42 : vector<1x32xf32> to vector<16x32xf32>
    %165 = arith.addf %163, %164 : vector<16x32xf32>
    %c0_66 = arith.constant 0 : index
    %c0_67 = arith.constant 0 : index
    %166 = vector.load %arg16[%c0_66, %c0_67] : memref<32x32xbf16, #tpu.memory_space<vmem>>, vector<32x32xbf16>
    %c0_68 = arith.constant 0 : index
    %c0_69 = arith.constant 0 : index
    %167 = vector.load %arg17[%c0_68, %c0_69] : memref<1x32xf32, #tpu.memory_space<vmem>>, vector<1x32xf32>
    %c0_70 = arith.constant 0 : index
    %c0_71 = arith.constant 0 : index
    %168 = vector.load %arg18[%c0_70, %c0_71] : memref<32x32xbf16, #tpu.memory_space<vmem>>, vector<32x32xbf16>
    %c0_72 = arith.constant 0 : index
    %c0_73 = arith.constant 0 : index
    %169 = vector.load %arg19[%c0_72, %c0_73] : memref<1x32xf32, #tpu.memory_space<vmem>>, vector<1x32xf32>
    %c0_74 = arith.constant 0 : index
    %c0_75 = arith.constant 0 : index
    %170 = vector.load %arg20[%c0_74, %c0_75] : memref<32x32xbf16, #tpu.memory_space<vmem>>, vector<32x32xbf16>
    %c0_76 = arith.constant 0 : index
    %c0_77 = arith.constant 0 : index
    %171 = vector.load %arg21[%c0_76, %c0_77] : memref<1x32xf32, #tpu.memory_space<vmem>>, vector<1x32xf32>
    %c0_78 = arith.constant 0 : index
    %c0_79 = arith.constant 0 : index
    %172 = vector.load %arg22[%c0_78, %c0_79] : memref<32x32xbf16, #tpu.memory_space<vmem>>, vector<32x32xbf16>
    %c0_80 = arith.constant 0 : index
    %c0_81 = arith.constant 0 : index
    %173 = vector.load %arg23[%c0_80, %c0_81] : memref<1x32xf32, #tpu.memory_space<vmem>>, vector<1x32xf32>
    %c0_82 = arith.constant 0 : index
    %c0_83 = arith.constant 0 : index
    %174 = vector.load %arg24[%c0_82, %c0_83] : memref<1x32xf32, #tpu.memory_space<vmem>>, vector<1x32xf32>
    %c0_84 = arith.constant 0 : index
    %c0_85 = arith.constant 0 : index
    %175 = vector.load %arg25[%c0_84, %c0_85] : memref<1x32xf32, #tpu.memory_space<vmem>>, vector<1x32xf32>
    %176 = arith.truncf %165 : vector<16x32xf32> to vector<16x32xbf16>
    %177 = arith.truncf %26 : vector<16x32xf32> to vector<16x32xbf16>
    %cst_86 = arith.constant dense<0.000000e+00> : vector<16x32xf32>
    %178 = tpu.matmul %176, %166, %cst_86 {dimension_numbers = #tpu.dot_dimension_numbers<[1], [0], [0], [1], [0, 0, 1, 1], [], []>} : vector<16x32xbf16>, vector<32x32xbf16>, vector<16x32xf32> -> vector<16x32xf32>
    %179 = vector.broadcast %167 : vector<1x32xf32> to vector<16x32xf32>
    %180 = arith.addf %178, %179 : vector<16x32xf32>
    %cst_87 = arith.constant dense<0.000000e+00> : vector<16x32xf32>
    %181 = tpu.matmul %177, %168, %cst_87 {dimension_numbers = #tpu.dot_dimension_numbers<[1], [0], [0], [1], [0, 0, 1, 1], [], []>} : vector<16x32xbf16>, vector<32x32xbf16>, vector<16x32xf32> -> vector<16x32xf32>
    %182 = vector.broadcast %169 : vector<1x32xf32> to vector<16x32xf32>
    %183 = arith.addf %181, %182 : vector<16x32xf32>
    %cst_88 = arith.constant dense<0.000000e+00> : vector<16x32xf32>
    %184 = tpu.matmul %177, %170, %cst_88 {dimension_numbers = #tpu.dot_dimension_numbers<[1], [0], [0], [1], [0, 0, 1, 1], [], []>} : vector<16x32xbf16>, vector<32x32xbf16>, vector<16x32xf32> -> vector<16x32xf32>
    %185 = vector.broadcast %171 : vector<1x32xf32> to vector<16x32xf32>
    %186 = arith.addf %184, %185 : vector<16x32xf32>
    %187 = vector.extract_strided_slice %180 {offsets = [0, 0], sizes = [16, 8], strides = [1, 1]} : vector<16x32xf32> to vector<16x8xf32>
    %188 = arith.truncf %187 : vector<16x8xf32> to vector<16x8xbf16>
    %189 = vector.extract_strided_slice %183 {offsets = [0, 0], sizes = [16, 8], strides = [1, 1]} : vector<16x32xf32> to vector<16x8xf32>
    %190 = arith.truncf %189 : vector<16x8xf32> to vector<16x8xbf16>
    %191 = vector.extract_strided_slice %186 {offsets = [0, 0], sizes = [16, 8], strides = [1, 1]} : vector<16x32xf32> to vector<16x8xf32>
    %192 = arith.truncf %191 : vector<16x8xf32> to vector<16x8xbf16>
    %cst_89 = arith.constant dense<0.000000e+00> : vector<16x16xf32>
    %193 = tpu.matmul %188, %190, %cst_89 {dimension_numbers = #tpu.dot_dimension_numbers<[1], [1], [0], [0], [0, 0, 1, 0], [], []>} : vector<16x8xbf16>, vector<16x8xbf16>, vector<16x16xf32> -> vector<16x16xf32>
    %cst_90 = arith.constant 0.353553385 : f32
    %194 = vector.broadcast %cst_90 : f32 to vector<16x16xf32>
    %195 = arith.mulf %193, %194 : vector<16x16xf32>
    %196 = arith.addf %195, %32 : vector<16x16xf32>
    %cst_91 = arith.constant dense<0xFF800000> : vector<16xf32>
    %197 = vector.multi_reduction <maximumf>, %196, %cst_91 [1] : vector<16x16xf32> to vector<16xf32>
    %198 = vector.shape_cast %197 : vector<16xf32> to vector<16x1xf32>
    %199 = vector.broadcast %198 : vector<16x1xf32> to vector<16x16xf32>
    %200 = arith.subf %196, %199 : vector<16x16xf32>
    %201 = math.exp %200 : vector<16x16xf32>
    %cst_92 = arith.constant dense<0.000000e+00> : vector<16xf32>
    %202 = vector.multi_reduction <add>, %201, %cst_92 [1] : vector<16x16xf32> to vector<16xf32>
    %203 = vector.shape_cast %202 : vector<16xf32> to vector<16x1xf32>
    %204 = tpu.reciprocal %203 {approx = true} : vector<16x1xf32> -> vector<16x1xf32>
    %205 = vector.broadcast %204 : vector<16x1xf32> to vector<16x16xf32>
    %206 = arith.mulf %201, %205 : vector<16x16xf32>
    %207 = arith.truncf %206 : vector<16x16xf32> to vector<16x16xbf16>
    %cst_93 = arith.constant dense<0.000000e+00> : vector<16x8xf32>
    %208 = tpu.matmul %207, %192, %cst_93 {dimension_numbers = #tpu.dot_dimension_numbers<[1], [0], [0], [1], [0, 0, 1, 1], [], []>} : vector<16x16xbf16>, vector<16x8xbf16>, vector<16x8xf32> -> vector<16x8xf32>
    %209 = vector.extract_strided_slice %180 {offsets = [0, 8], sizes = [16, 8], strides = [1, 1]} : vector<16x32xf32> to vector<16x8xf32>
    %210 = arith.truncf %209 : vector<16x8xf32> to vector<16x8xbf16>
    %211 = vector.extract_strided_slice %183 {offsets = [0, 8], sizes = [16, 8], strides = [1, 1]} : vector<16x32xf32> to vector<16x8xf32>
    %212 = arith.truncf %211 : vector<16x8xf32> to vector<16x8xbf16>
    %213 = vector.extract_strided_slice %186 {offsets = [0, 8], sizes = [16, 8], strides = [1, 1]} : vector<16x32xf32> to vector<16x8xf32>
    %214 = arith.truncf %213 : vector<16x8xf32> to vector<16x8xbf16>
    %cst_94 = arith.constant dense<0.000000e+00> : vector<16x16xf32>
    %215 = tpu.matmul %210, %212, %cst_94 {dimension_numbers = #tpu.dot_dimension_numbers<[1], [1], [0], [0], [0, 0, 1, 0], [], []>} : vector<16x8xbf16>, vector<16x8xbf16>, vector<16x16xf32> -> vector<16x16xf32>
    %cst_95 = arith.constant 0.353553385 : f32
    %216 = vector.broadcast %cst_95 : f32 to vector<16x16xf32>
    %217 = arith.mulf %215, %216 : vector<16x16xf32>
    %218 = arith.addf %217, %32 : vector<16x16xf32>
    %cst_96 = arith.constant dense<0xFF800000> : vector<16xf32>
    %219 = vector.multi_reduction <maximumf>, %218, %cst_96 [1] : vector<16x16xf32> to vector<16xf32>
    %220 = vector.shape_cast %219 : vector<16xf32> to vector<16x1xf32>
    %221 = vector.broadcast %220 : vector<16x1xf32> to vector<16x16xf32>
    %222 = arith.subf %218, %221 : vector<16x16xf32>
    %223 = math.exp %222 : vector<16x16xf32>
    %cst_97 = arith.constant dense<0.000000e+00> : vector<16xf32>
    %224 = vector.multi_reduction <add>, %223, %cst_97 [1] : vector<16x16xf32> to vector<16xf32>
    %225 = vector.shape_cast %224 : vector<16xf32> to vector<16x1xf32>
    %226 = tpu.reciprocal %225 {approx = true} : vector<16x1xf32> -> vector<16x1xf32>
    %227 = vector.broadcast %226 : vector<16x1xf32> to vector<16x16xf32>
    %228 = arith.mulf %223, %227 : vector<16x16xf32>
    %229 = arith.truncf %228 : vector<16x16xf32> to vector<16x16xbf16>
    %cst_98 = arith.constant dense<0.000000e+00> : vector<16x8xf32>
    %230 = tpu.matmul %229, %214, %cst_98 {dimension_numbers = #tpu.dot_dimension_numbers<[1], [0], [0], [1], [0, 0, 1, 1], [], []>} : vector<16x16xbf16>, vector<16x8xbf16>, vector<16x8xf32> -> vector<16x8xf32>
    %231 = vector.extract_strided_slice %180 {offsets = [0, 16], sizes = [16, 8], strides = [1, 1]} : vector<16x32xf32> to vector<16x8xf32>
    %232 = arith.truncf %231 : vector<16x8xf32> to vector<16x8xbf16>
    %233 = vector.extract_strided_slice %183 {offsets = [0, 16], sizes = [16, 8], strides = [1, 1]} : vector<16x32xf32> to vector<16x8xf32>
    %234 = arith.truncf %233 : vector<16x8xf32> to vector<16x8xbf16>
    %235 = vector.extract_strided_slice %186 {offsets = [0, 16], sizes = [16, 8], strides = [1, 1]} : vector<16x32xf32> to vector<16x8xf32>
    %236 = arith.truncf %235 : vector<16x8xf32> to vector<16x8xbf16>
    %cst_99 = arith.constant dense<0.000000e+00> : vector<16x16xf32>
    %237 = tpu.matmul %232, %234, %cst_99 {dimension_numbers = #tpu.dot_dimension_numbers<[1], [1], [0], [0], [0, 0, 1, 0], [], []>} : vector<16x8xbf16>, vector<16x8xbf16>, vector<16x16xf32> -> vector<16x16xf32>
    %cst_100 = arith.constant 0.353553385 : f32
    %238 = vector.broadcast %cst_100 : f32 to vector<16x16xf32>
    %239 = arith.mulf %237, %238 : vector<16x16xf32>
    %240 = arith.addf %239, %32 : vector<16x16xf32>
    %cst_101 = arith.constant dense<0xFF800000> : vector<16xf32>
    %241 = vector.multi_reduction <maximumf>, %240, %cst_101 [1] : vector<16x16xf32> to vector<16xf32>
    %242 = vector.shape_cast %241 : vector<16xf32> to vector<16x1xf32>
    %243 = vector.broadcast %242 : vector<16x1xf32> to vector<16x16xf32>
    %244 = arith.subf %240, %243 : vector<16x16xf32>
    %245 = math.exp %244 : vector<16x16xf32>
    %cst_102 = arith.constant dense<0.000000e+00> : vector<16xf32>
    %246 = vector.multi_reduction <add>, %245, %cst_102 [1] : vector<16x16xf32> to vector<16xf32>
    %247 = vector.shape_cast %246 : vector<16xf32> to vector<16x1xf32>
    %248 = tpu.reciprocal %247 {approx = true} : vector<16x1xf32> -> vector<16x1xf32>
    %249 = vector.broadcast %248 : vector<16x1xf32> to vector<16x16xf32>
    %250 = arith.mulf %245, %249 : vector<16x16xf32>
    %251 = arith.truncf %250 : vector<16x16xf32> to vector<16x16xbf16>
    %cst_103 = arith.constant dense<0.000000e+00> : vector<16x8xf32>
    %252 = tpu.matmul %251, %236, %cst_103 {dimension_numbers = #tpu.dot_dimension_numbers<[1], [0], [0], [1], [0, 0, 1, 1], [], []>} : vector<16x16xbf16>, vector<16x8xbf16>, vector<16x8xf32> -> vector<16x8xf32>
    %253 = vector.extract_strided_slice %180 {offsets = [0, 24], sizes = [16, 8], strides = [1, 1]} : vector<16x32xf32> to vector<16x8xf32>
    %254 = arith.truncf %253 : vector<16x8xf32> to vector<16x8xbf16>
    %255 = vector.extract_strided_slice %183 {offsets = [0, 24], sizes = [16, 8], strides = [1, 1]} : vector<16x32xf32> to vector<16x8xf32>
    %256 = arith.truncf %255 : vector<16x8xf32> to vector<16x8xbf16>
    %257 = vector.extract_strided_slice %186 {offsets = [0, 24], sizes = [16, 8], strides = [1, 1]} : vector<16x32xf32> to vector<16x8xf32>
    %258 = arith.truncf %257 : vector<16x8xf32> to vector<16x8xbf16>
    %cst_104 = arith.constant dense<0.000000e+00> : vector<16x16xf32>
    %259 = tpu.matmul %254, %256, %cst_104 {dimension_numbers = #tpu.dot_dimension_numbers<[1], [1], [0], [0], [0, 0, 1, 0], [], []>} : vector<16x8xbf16>, vector<16x8xbf16>, vector<16x16xf32> -> vector<16x16xf32>
    %cst_105 = arith.constant 0.353553385 : f32
    %260 = vector.broadcast %cst_105 : f32 to vector<16x16xf32>
    %261 = arith.mulf %259, %260 : vector<16x16xf32>
    %262 = arith.addf %261, %32 : vector<16x16xf32>
    %cst_106 = arith.constant dense<0xFF800000> : vector<16xf32>
    %263 = vector.multi_reduction <maximumf>, %262, %cst_106 [1] : vector<16x16xf32> to vector<16xf32>
    %264 = vector.shape_cast %263 : vector<16xf32> to vector<16x1xf32>
    %265 = vector.broadcast %264 : vector<16x1xf32> to vector<16x16xf32>
    %266 = arith.subf %262, %265 : vector<16x16xf32>
    %267 = math.exp %266 : vector<16x16xf32>
    %cst_107 = arith.constant dense<0.000000e+00> : vector<16xf32>
    %268 = vector.multi_reduction <add>, %267, %cst_107 [1] : vector<16x16xf32> to vector<16xf32>
    %269 = vector.shape_cast %268 : vector<16xf32> to vector<16x1xf32>
    %270 = tpu.reciprocal %269 {approx = true} : vector<16x1xf32> -> vector<16x1xf32>
    %271 = vector.broadcast %270 : vector<16x1xf32> to vector<16x16xf32>
    %272 = arith.mulf %267, %271 : vector<16x16xf32>
    %273 = arith.truncf %272 : vector<16x16xf32> to vector<16x16xbf16>
    %cst_108 = arith.constant dense<0.000000e+00> : vector<16x8xf32>
    %274 = tpu.matmul %273, %258, %cst_108 {dimension_numbers = #tpu.dot_dimension_numbers<[1], [0], [0], [1], [0, 0, 1, 1], [], []>} : vector<16x16xbf16>, vector<16x8xbf16>, vector<16x8xf32> -> vector<16x8xf32>
    %275 = tpu.concatenate %208, %230, %252, %274 in 1 : vector<16x8xf32>, vector<16x8xf32>, vector<16x8xf32>, vector<16x8xf32> -> vector<16x32xf32>
    %276 = arith.truncf %275 : vector<16x32xf32> to vector<16x32xbf16>
    %cst_109 = arith.constant dense<0.000000e+00> : vector<16x32xf32>
    %277 = tpu.matmul %276, %172, %cst_109 {dimension_numbers = #tpu.dot_dimension_numbers<[1], [0], [0], [1], [0, 0, 1, 1], [], []>} : vector<16x32xbf16>, vector<32x32xbf16>, vector<16x32xf32> -> vector<16x32xf32>
    %278 = vector.broadcast %173 : vector<1x32xf32> to vector<16x32xf32>
    %279 = arith.addf %277, %278 : vector<16x32xf32>
    %280 = arith.addf %279, %165 : vector<16x32xf32>
    %cst_110 = arith.constant dense<0.000000e+00> : vector<16xf32>
    %281 = vector.multi_reduction <add>, %280, %cst_110 [1] : vector<16x32xf32> to vector<16xf32>
    %282 = vector.shape_cast %281 : vector<16xf32> to vector<16x1xf32>
    %cst_111 = arith.constant 3.200000e+01 : f32
    %283 = vector.broadcast %cst_111 : f32 to vector<16x1xf32>
    %284 = arith.divf %282, %283 : vector<16x1xf32>
    %285 = vector.broadcast %284 : vector<16x1xf32> to vector<16x32xf32>
    %286 = arith.subf %280, %285 : vector<16x32xf32>
    %287 = arith.mulf %286, %286 : vector<16x32xf32>
    %cst_112 = arith.constant dense<0.000000e+00> : vector<16xf32>
    %288 = vector.multi_reduction <add>, %287, %cst_112 [1] : vector<16x32xf32> to vector<16xf32>
    %289 = vector.shape_cast %288 : vector<16xf32> to vector<16x1xf32>
    %cst_113 = arith.constant 3.200000e+01 : f32
    %290 = vector.broadcast %cst_113 : f32 to vector<16x1xf32>
    %291 = arith.divf %289, %290 : vector<16x1xf32>
    %292 = vector.broadcast %284 : vector<16x1xf32> to vector<16x32xf32>
    %293 = arith.subf %280, %292 : vector<16x32xf32>
    %cst_114 = arith.constant 9.99999996E-13 : f32
    %294 = vector.broadcast %cst_114 : f32 to vector<16x1xf32>
    %295 = arith.addf %291, %294 : vector<16x1xf32>
    %296 = math.rsqrt %295 : vector<16x1xf32>
    %297 = vector.broadcast %296 : vector<16x1xf32> to vector<16x32xf32>
    %298 = arith.mulf %293, %297 : vector<16x32xf32>
    %299 = vector.broadcast %174 : vector<1x32xf32> to vector<16x32xf32>
    %300 = arith.mulf %298, %299 : vector<16x32xf32>
    %301 = vector.broadcast %175 : vector<1x32xf32> to vector<16x32xf32>
    %302 = arith.addf %300, %301 : vector<16x32xf32>
    %c0_115 = arith.constant 0 : index
    %c0_116 = arith.constant 0 : index
    %303 = vector.load %arg26[%c0_115, %c0_116] : memref<32x64xbf16, #tpu.memory_space<vmem>>, vector<32x64xbf16>
    %c0_117 = arith.constant 0 : index
    %c0_118 = arith.constant 0 : index
    %304 = vector.load %arg27[%c0_117, %c0_118] : memref<1x64xf32, #tpu.memory_space<vmem>>, vector<1x64xf32>
    %c0_119 = arith.constant 0 : index
    %c0_120 = arith.constant 0 : index
    %305 = vector.load %arg28[%c0_119, %c0_120] : memref<64x32xbf16, #tpu.memory_space<vmem>>, vector<64x32xbf16>
    %c0_121 = arith.constant 0 : index
    %c0_122 = arith.constant 0 : index
    %306 = vector.load %arg29[%c0_121, %c0_122] : memref<1x32xf32, #tpu.memory_space<vmem>>, vector<1x32xf32>
    %c0_123 = arith.constant 0 : index
    %c0_124 = arith.constant 0 : index
    %307 = vector.load %arg30[%c0_123, %c0_124] : memref<1x32xf32, #tpu.memory_space<vmem>>, vector<1x32xf32>
    %c0_125 = arith.constant 0 : index
    %c0_126 = arith.constant 0 : index
    %308 = vector.load %arg31[%c0_125, %c0_126] : memref<1x32xf32, #tpu.memory_space<vmem>>, vector<1x32xf32>
    %309 = arith.truncf %302 : vector<16x32xf32> to vector<16x32xbf16>
    %cst_127 = arith.constant dense<0.000000e+00> : vector<16x64xf32>
    %310 = tpu.matmul %309, %303, %cst_127 {dimension_numbers = #tpu.dot_dimension_numbers<[1], [0], [0], [1], [0, 0, 1, 1], [], []>} : vector<16x32xbf16>, vector<32x64xbf16>, vector<16x64xf32> -> vector<16x64xf32>
    %311 = vector.broadcast %304 : vector<1x64xf32> to vector<16x64xf32>
    %312 = arith.addf %310, %311 : vector<16x64xf32>
    %cst_128 = arith.constant 5.000000e-01 : f32
    %313 = vector.broadcast %cst_128 : f32 to vector<16x64xf32>
    %314 = arith.mulf %313, %312 : vector<16x64xf32>
    %cst_129 = arith.constant 0.707106769 : f32
    %315 = vector.broadcast %cst_129 : f32 to vector<16x64xf32>
    %316 = arith.mulf %312, %315 : vector<16x64xf32>
    %cst_130 = arith.constant -3.8325069 : f32
    %cst_131 = arith.constant 3.8325069 : f32
    %317 = vector.broadcast %cst_130 : f32 to vector<16x64xf32>
    %318 = arith.maximumf %317, %316 : vector<16x64xf32>
    %319 = vector.broadcast %cst_131 : f32 to vector<16x64xf32>
    %320 = arith.minimumf %319, %318 : vector<16x64xf32>
    %321 = arith.mulf %320, %320 : vector<16x64xf32>
    %cst_132 = arith.constant -2.72614237E-10 : f32
    %322 = vector.broadcast %cst_132 : f32 to vector<16x64xf32>
    %323 = arith.mulf %321, %322 : vector<16x64xf32>
    %cst_133 = arith.constant 2.77068146E-8 : f32
    %324 = vector.broadcast %cst_133 : f32 to vector<16x64xf32>
    %325 = arith.addf %323, %324 : vector<16x64xf32>
    %326 = arith.mulf %321, %325 : vector<16x64xf32>
    %cst_134 = arith.constant -2.10102394E-6 : f32
    %327 = vector.broadcast %cst_134 : f32 to vector<16x64xf32>
    %328 = arith.addf %326, %327 : vector<16x64xf32>
    %329 = arith.mulf %321, %328 : vector<16x64xf32>
    %cst_135 = arith.constant -5.69250624E-5 : f32
    %330 = vector.broadcast %cst_135 : f32 to vector<16x64xf32>
    %331 = arith.addf %329, %330 : vector<16x64xf32>
    %332 = arith.mulf %321, %331 : vector<16x64xf32>
    %cst_136 = arith.constant -7.34990637E-4 : f32
    %333 = vector.broadcast %cst_136 : f32 to vector<16x64xf32>
    %334 = arith.addf %332, %333 : vector<16x64xf32>
    %335 = arith.mulf %321, %334 : vector<16x64xf32>
    %cst_137 = arith.constant -2.954600e-03 : f32
    %336 = vector.broadcast %cst_137 : f32 to vector<16x64xf32>
    %337 = arith.addf %335, %336 : vector<16x64xf32>
    %338 = arith.mulf %321, %337 : vector<16x64xf32>
    %cst_138 = arith.constant -0.0160960332 : f32
    %339 = vector.broadcast %cst_138 : f32 to vector<16x64xf32>
    %340 = arith.addf %338, %339 : vector<16x64xf32>
    %341 = arith.mulf %320, %340 : vector<16x64xf32>
    %cst_139 = arith.constant -1.45660715E-5 : f32
    %342 = vector.broadcast %cst_139 : f32 to vector<16x64xf32>
    %343 = arith.mulf %321, %342 : vector<16x64xf32>
    %cst_140 = arith.constant -2.13374049E-4 : f32
    %344 = vector.broadcast %cst_140 : f32 to vector<16x64xf32>
    %345 = arith.addf %343, %344 : vector<16x64xf32>
    %346 = arith.mulf %321, %345 : vector<16x64xf32>
    %cst_141 = arith.constant -0.00168282702 : f32
    %347 = vector.broadcast %cst_141 : f32 to vector<16x64xf32>
    %348 = arith.addf %346, %347 : vector<16x64xf32>
    %349 = arith.mulf %321, %348 : vector<16x64xf32>
    %cst_142 = arith.constant -0.00737332925 : f32
    %350 = vector.broadcast %cst_142 : f32 to vector<16x64xf32>
    %351 = arith.addf %349, %350 : vector<16x64xf32>
    %352 = arith.mulf %321, %351 : vector<16x64xf32>
    %cst_143 = arith.constant -0.0142647391 : f32
    %353 = vector.broadcast %cst_143 : f32 to vector<16x64xf32>
    %354 = arith.addf %352, %353 : vector<16x64xf32>
    %355 = arith.divf %341, %354 : vector<16x64xf32>
    %cst_144 = arith.constant 1.000000e+00 : f32
    %356 = vector.broadcast %cst_144 : f32 to vector<16x64xf32>
    %357 = arith.addf %356, %355 : vector<16x64xf32>
    %358 = arith.mulf %314, %357 : vector<16x64xf32>
    %359 = arith.truncf %358 : vector<16x64xf32> to vector<16x64xbf16>
    %cst_145 = arith.constant dense<0.000000e+00> : vector<16x32xf32>
    %360 = tpu.matmul %359, %305, %cst_145 {dimension_numbers = #tpu.dot_dimension_numbers<[1], [0], [0], [1], [0, 0, 1, 1], [], []>} : vector<16x64xbf16>, vector<64x32xbf16>, vector<16x32xf32> -> vector<16x32xf32>
    %361 = vector.broadcast %306 : vector<1x32xf32> to vector<16x32xf32>
    %362 = arith.addf %360, %361 : vector<16x32xf32>
    %363 = arith.addf %362, %302 : vector<16x32xf32>
    %cst_146 = arith.constant dense<0.000000e+00> : vector<16xf32>
    %364 = vector.multi_reduction <add>, %363, %cst_146 [1] : vector<16x32xf32> to vector<16xf32>
    %365 = vector.shape_cast %364 : vector<16xf32> to vector<16x1xf32>
    %cst_147 = arith.constant 3.200000e+01 : f32
    %366 = vector.broadcast %cst_147 : f32 to vector<16x1xf32>
    %367 = arith.divf %365, %366 : vector<16x1xf32>
    %368 = vector.broadcast %367 : vector<16x1xf32> to vector<16x32xf32>
    %369 = arith.subf %363, %368 : vector<16x32xf32>
    %370 = arith.mulf %369, %369 : vector<16x32xf32>
    %cst_148 = arith.constant dense<0.000000e+00> : vector<16xf32>
    %371 = vector.multi_reduction <add>, %370, %cst_148 [1] : vector<16x32xf32> to vector<16xf32>
    %372 = vector.shape_cast %371 : vector<16xf32> to vector<16x1xf32>
    %cst_149 = arith.constant 3.200000e+01 : f32
    %373 = vector.broadcast %cst_149 : f32 to vector<16x1xf32>
    %374 = arith.divf %372, %373 : vector<16x1xf32>
    %375 = vector.broadcast %367 : vector<16x1xf32> to vector<16x32xf32>
    %376 = arith.subf %363, %375 : vector<16x32xf32>
    %cst_150 = arith.constant 9.99999996E-13 : f32
    %377 = vector.broadcast %cst_150 : f32 to vector<16x1xf32>
    %378 = arith.addf %374, %377 : vector<16x1xf32>
    %379 = math.rsqrt %378 : vector<16x1xf32>
    %380 = vector.broadcast %379 : vector<16x1xf32> to vector<16x32xf32>
    %381 = arith.mulf %376, %380 : vector<16x32xf32>
    %382 = vector.broadcast %307 : vector<1x32xf32> to vector<16x32xf32>
    %383 = arith.mulf %381, %382 : vector<16x32xf32>
    %384 = vector.broadcast %308 : vector<1x32xf32> to vector<16x32xf32>
    %385 = arith.addf %383, %384 : vector<16x32xf32>
    %c0_151 = arith.constant 0 : index
    %c0_152 = arith.constant 0 : index
    %c0_153 = arith.constant 0 : index
    %386 = vector.load %arg32[%c0_151, %c0_152, %c0_153] : memref<1x16x32xf32, #tpu.memory_space<vmem>>, vector<1x16x32xf32>
    %387 = vector.shape_cast %386 : vector<1x16x32xf32> to vector<16x32xf32>
    %388 = vector.shape_cast %385 : vector<16x32xf32> to vector<1x16x32xf32>
    tpu.vector_store %arg32[%c0_151, %c0_152, %c0_153], %388 {strides = array<i32>} : memref<1x16x32xf32, #tpu.memory_space<vmem>>, vector<1x16x32xf32>,
    return
  }
  func.func @transform_0(%arg0: i32) -> (i32, i32) {
    %c0_i32 = arith.constant 0 : i32
    %c0_i32_0 = arith.constant 0 : i32
    %c0_i32_1 = arith.constant 0 : i32
    return %c0_i32, %c0_i32_0 : i32, i32
  }
  func.func @transform_1(%arg0: i32) -> (i32, i32, i32) {
    %c0_i32 = arith.constant 0 : i32
    %c0_i32_0 = arith.constant 0 : i32
    %c0_i32_1 = arith.constant 0 : i32
    return %arg0, %c0_i32, %c0_i32_0 : i32, i32, i32
  }
  func.func @transform_2(%arg0: i32) -> (i32, i32, i32) {
    %c0_i32 = arith.constant 0 : i32
    %c0_i32_0 = arith.constant 0 : i32
    %c0_i32_1 = arith.constant 0 : i32
    return %arg0, %c0_i32, %c0_i32_0 : i32, i32, i32
  }
  func.func @transform_3(%arg0: i32) -> (i32, i32) {
    %c0_i32 = arith.constant 0 : i32
    %c0_i32_0 = arith.constant 0 : i32
    %c0_i32_1 = arith.constant 0 : i32
    return %c0_i32, %c0_i32_0 : i32, i32
  }
  func.func @transform_4(%arg0: i32) -> (i32, i32) {
    %c0_i32 = arith.constant 0 : i32
    %c0_i32_0 = arith.constant 0 : i32
    %c0_i32_1 = arith.constant 0 : i32
    return %c0_i32, %c0_i32_0 : i32, i32
  }
  func.func @transform_5(%arg0: i32) -> (i32, i32) {
    %c0_i32 = arith.constant 0 : i32
    %c0_i32_0 = arith.constant 0 : i32
    %c0_i32_1 = arith.constant 0 : i32
    return %c0_i32, %c0_i32_0 : i32, i32
  }
  func.func @transform_6(%arg0: i32) -> (i32, i32) {
    %c0_i32 = arith.constant 0 : i32
    %c0_i32_0 = arith.constant 0 : i32
    %c0_i32_1 = arith.constant 0 : i32
    return %c0_i32, %c0_i32_0 : i32, i32
  }
  func.func @transform_7(%arg0: i32) -> (i32, i32) {
    %c0_i32 = arith.constant 0 : i32
    %c0_i32_0 = arith.constant 0 : i32
    %c0_i32_1 = arith.constant 0 : i32
    return %c0_i32, %c0_i32_0 : i32, i32
  }
  func.func @transform_8(%arg0: i32) -> (i32, i32) {
    %c0_i32 = arith.constant 0 : i32
    %c0_i32_0 = arith.constant 0 : i32
    %c0_i32_1 = arith.constant 0 : i32
    return %c0_i32, %c0_i32_0 : i32, i32
  }
  func.func @transform_9(%arg0: i32) -> (i32, i32) {
    %c0_i32 = arith.constant 0 : i32
    %c0_i32_0 = arith.constant 0 : i32
    %c0_i32_1 = arith.constant 0 : i32
    return %c0_i32, %c0_i32_0 : i32, i32
  }
  func.func @transform_10(%arg0: i32) -> (i32, i32) {
    %c0_i32 = arith.constant 0 : i32
    %c0_i32_0 = arith.constant 0 : i32
    %c0_i32_1 = arith.constant 0 : i32
    return %c0_i32, %c0_i32_0 : i32, i32
  }
  func.func @transform_11(%arg0: i32) -> (i32, i32) {
    %c0_i32 = arith.constant 0 : i32
    %c0_i32_0 = arith.constant 0 : i32
    %c0_i32_1 = arith.constant 0 : i32
    return %c0_i32, %c0_i32_0 : i32, i32
  }
  func.func @transform_12(%arg0: i32) -> (i32, i32) {
    %c0_i32 = arith.constant 0 : i32
    %c0_i32_0 = arith.constant 0 : i32
    %c0_i32_1 = arith.constant 0 : i32
    return %c0_i32, %c0_i32_0 : i32, i32
  }
  func.func @transform_13(%arg0: i32) -> (i32, i32) {
    %c0_i32 = arith.constant 0 : i32
    %c0_i32_0 = arith.constant 0 : i32
    %c0_i32_1 = arith.constant 0 : i32
    return %c0_i32, %c0_i32_0 : i32, i32
  }
  func.func @transform_14(%arg0: i32) -> (i32, i32) {
    %c0_i32 = arith.constant 0 : i32
    %c0_i32_0 = arith.constant 0 : i32
    %c0_i32_1 = arith.constant 0 : i32
    return %c0_i32, %c0_i32_0 : i32, i32
  }
  func.func @transform_15(%arg0: i32) -> (i32, i32) {
    %c0_i32 = arith.constant 0 : i32
    %c0_i32_0 = arith.constant 0 : i32
    %c0_i32_1 = arith.constant 0 : i32
    return %c0_i32, %c0_i32_0 : i32, i32
  }
  func.func @transform_16(%arg0: i32) -> (i32, i32) {
    %c0_i32 = arith.constant 0 : i32
    %c0_i32_0 = arith.constant 0 : i32
    %c0_i32_1 = arith.constant 0 : i32
    return %c0_i32, %c0_i32_0 : i32, i32
  }
  func.func @transform_17(%arg0: i32) -> (i32, i32) {
    %c0_i32 = arith.constant 0 : i32
    %c0_i32_0 = arith.constant 0 : i32
    %c0_i32_1 = arith.constant 0 : i32
    return %c0_i32, %c0_i32_0 : i32, i32
  }
  func.func @transform_18(%arg0: i32) -> (i32, i32) {
    %c0_i32 = arith.constant 0 : i32
    %c0_i32_0 = arith.constant 0 : i32
    %c0_i32_1 = arith.constant 0 : i32
    return %c0_i32, %c0_i32_0 : i32, i32
  }
  func.func @transform_19(%arg0: i32) -> (i32, i32) {
    %c0_i32 = arith.constant 0 : i32
    %c0_i32_0 = arith.constant 0 : i32
    %c0_i32_1 = arith.constant 0 : i32
    return %c0_i32, %c0_i32_0 : i32, i32
  }
  func.func @transform_20(%arg0: i32) -> (i32, i32) {
    %c0_i32 = arith.constant 0 : i32
    %c0_i32_0 = arith.constant 0 : i32
    %c0_i32_1 = arith.constant 0 : i32
    return %c0_i32, %c0_i32_0 : i32, i32
  }
  func.func @transform_21(%arg0: i32) -> (i32, i32) {
    %c0_i32 = arith.constant 0 : i32
    %c0_i32_0 = arith.constant 0 : i32
    %c0_i32_1 = arith.constant 0 : i32
    return %c0_i32, %c0_i32_0 : i32, i32
  }
  func.func @transform_22(%arg0: i32) -> (i32, i32) {
    %c0_i32 = arith.constant 0 : i32
    %c0_i32_0 = arith.constant 0 : i32
    %c0_i32_1 = arith.constant 0 : i32
    return %c0_i32, %c0_i32_0 : i32, i32
  }
  func.func @transform_23(%arg0: i32) -> (i32, i32) {
    %c0_i32 = arith.constant 0 : i32
    %c0_i32_0 = arith.constant 0 : i32
    %c0_i32_1 = arith.constant 0 : i32
    return %c0_i32, %c0_i32_0 : i32, i32
  }
  func.func @transform_24(%arg0: i32) -> (i32, i32) {
    %c0_i32 = arith.constant 0 : i32
    %c0_i32_0 = arith.constant 0 : i32
    %c0_i32_1 = arith.constant 0 : i32
    return %c0_i32, %c0_i32_0 : i32, i32
  }
  func.func @transform_25(%arg0: i32) -> (i32, i32) {
    %c0_i32 = arith.constant 0 : i32
    %c0_i32_0 = arith.constant 0 : i32
    %c0_i32_1 = arith.constant 0 : i32
    return %c0_i32, %c0_i32_0 : i32, i32
  }
  func.func @transform_26(%arg0: i32) -> (i32, i32) {
    %c0_i32 = arith.constant 0 : i32
    %c0_i32_0 = arith.constant 0 : i32
    %c0_i32_1 = arith.constant 0 : i32
    return %c0_i32, %c0_i32_0 : i32, i32
  }
  func.func @transform_27(%arg0: i32) -> (i32, i32) {
    %c0_i32 = arith.constant 0 : i32
    %c0_i32_0 = arith.constant 0 : i32
    %c0_i32_1 = arith.constant 0 : i32
    return %c0_i32, %c0_i32_0 : i32, i32
  }
  func.func @transform_28(%arg0: i32) -> (i32, i32) {
    %c0_i32 = arith.constant 0 : i32
    %c0_i32_0 = arith.constant 0 : i32
    %c0_i32_1 = arith.constant 0 : i32
    return %c0_i32, %c0_i32_0 : i32, i32
  }
  func.func @transform_29(%arg0: i32) -> (i32, i32) {
    %c0_i32 = arith.constant 0 : i32
    %c0_i32_0 = arith.constant 0 : i32
    %c0_i32_1 = arith.constant 0 : i32
    return %c0_i32, %c0_i32_0 : i32, i32
  }
  func.func @transform_30(%arg0: i32) -> (i32, i32) {
    %c0_i32 = arith.constant 0 : i32
    %c0_i32_0 = arith.constant 0 : i32
    %c0_i32_1 = arith.constant 0 : i32
    return %c0_i32, %c0_i32_0 : i32, i32
  }
  func.func @transform_31(%arg0: i32) -> (i32, i32, i32) {
    %c0_i32 = arith.constant 0 : i32
    %c0_i32_0 = arith.constant 0 : i32
    %c0_i32_1 = arith.constant 0 : i32
    return %arg0, %c0_i32, %c0_i32_0 : i32, i32, i32
  }
}

module attributes {stable_mosaic.version = 11 : i64} {
  func.func @_decoder_layer_kernel(%arg0: i32, %arg1: memref<1x16x32xf32, #tpu.memory_space<vmem>>, %arg2: memref<1x16x32xf32, #tpu.memory_space<vmem>>, %arg3: memref<1x16x16xf32, #tpu.memory_space<vmem>>, %arg4: memref<32x32xbf16, #tpu.memory_space<vmem>>, %arg5: memref<1x32xf32, #tpu.memory_space<vmem>>, %arg6: memref<32x32xbf16, #tpu.memory_space<vmem>>, %arg7: memref<1x32xf32, #tpu.memory_space<vmem>>, %arg8: memref<32x32xbf16, #tpu.memory_space<vmem>>, %arg9: memref<1x32xf32, #tpu.memory_space<vmem>>, %arg10: memref<32x32xbf16, #tpu.memory_space<vmem>>, %arg11: memref<1x32xf32, #tpu.memory_space<vmem>>, %arg12: memref<1x32xf32, #tpu.memory_space<vmem>>, %arg13: memref<1x32xf32, #tpu.memory_space<vmem>>, %arg14: memref<32x32xbf16, #tpu.memory_space<vmem>>, %arg15: memref<1x32xf32, #tpu.memory_space<vmem>>, %arg16: memref<32x32xbf16, #tpu.memory_space<vmem>>, %arg17: memref<1x32xf32, #tpu.memory_space<vmem>>, %arg18: memref<32x32xbf16, #tpu.memory_space<vmem>>, %arg19: memref<1x32xf32, #tpu.memory_space<vmem>>, %arg20: memref<32x32xbf16, #tpu.memory_space<vmem>>, %arg21: memref<1x32xf32, #tpu.memory_space<vmem>>, %arg22: memref<1x32xf32, #tpu.memory_space<vmem>>, %arg23: memref<1x32xf32, #tpu.memory_space<vmem>>, %arg24: memref<32x64xbf16, #tpu.memory_space<vmem>>, %arg25: memref<1x64xf32, #tpu.memory_space<vmem>>, %arg26: memref<64x32xbf16, #tpu.memory_space<vmem>>, %arg27: memref<1x32xf32, #tpu.memory_space<vmem>>, %arg28: memref<1x32xf32, #tpu.memory_space<vmem>>, %arg29: memref<1x32xf32, #tpu.memory_space<vmem>>, %arg30: memref<1x16x32xf32, #tpu.memory_space<vmem>>) attributes {dimension_semantics = [#tpu.dimension_semantics<parallel>], iteration_bounds = array<i64: 2>, scalar_prefetch = 0 : i64, scratch_operands = 0 : i64, tpu.core_type = #tpu.core_type<tc>, window_params = [{transform_indices = @transform_0, window_bounds = array<i64: 1, 16, 32>}, {transform_indices = @transform_1, window_bounds = array<i64: 1, 16, 32>}, {transform_indices = @transform_2, window_bounds = array<i64: 1, 16, 16>}, {pipeline_mode = #tpu.pipeline_mode<synchronous>, transform_indices = @transform_3, window_bounds = array<i64: 32, 32>}, {pipeline_mode = #tpu.pipeline_mode<synchronous>, transform_indices = @transform_4, window_bounds = array<i64: 1, 32>}, {pipeline_mode = #tpu.pipeline_mode<synchronous>, transform_indices = @transform_5, window_bounds = array<i64: 32, 32>}, {pipeline_mode = #tpu.pipeline_mode<synchronous>, transform_indices = @transform_6, window_bounds = array<i64: 1, 32>}, {pipeline_mode = #tpu.pipeline_mode<synchronous>, transform_indices = @transform_7, window_bounds = array<i64: 32, 32>}, {pipeline_mode = #tpu.pipeline_mode<synchronous>, transform_indices = @transform_8, window_bounds = array<i64: 1, 32>}, {pipeline_mode = #tpu.pipeline_mode<synchronous>, transform_indices = @transform_9, window_bounds = array<i64: 32, 32>}, {pipeline_mode = #tpu.pipeline_mode<synchronous>, transform_indices = @transform_10, window_bounds = array<i64: 1, 32>}, {pipeline_mode = #tpu.pipeline_mode<synchronous>, transform_indices = @transform_11, window_bounds = array<i64: 1, 32>}, {pipeline_mode = #tpu.pipeline_mode<synchronous>, transform_indices = @transform_12, window_bounds = array<i64: 1, 32>}, {pipeline_mode = #tpu.pipeline_mode<synchronous>, transform_indices = @transform_13, window_bounds = array<i64: 32, 32>}, {pipeline_mode = #tpu.pipeline_mode<synchronous>, transform_indices = @transform_14, window_bounds = array<i64: 1, 32>}, {pipeline_mode = #tpu.pipeline_mode<synchronous>, transform_indices = @transform_15, window_bounds = array<i64: 32, 32>}, {pipeline_mode = #tpu.pipeline_mode<synchronous>, transform_indices = @transform_16, window_bounds = array<i64: 1, 32>}, {pipeline_mode = #tpu.pipeline_mode<synchronous>, transform_indices = @transform_17, window_bounds = array<i64: 32, 32>}, {pipeline_mode = #tpu.pipeline_mode<synchronous>, transform_indices = @transform_18, window_bounds = array<i64: 1, 32>}, {pipeline_mode = #tpu.pipeline_mode<synchronous>, transform_indices = @transform_19, window_bounds = array<i64: 32, 32>}, {pipeline_mode = #tpu.pipeline_mode<synchronous>, transform_indices = @transform_20, window_bounds = array<i64: 1, 32>}, {pipeline_mode = #tpu.pipeline_mode<synchronous>, transform_indices = @transform_21, window_bounds = array<i64: 1, 32>}, {pipeline_mode = #tpu.pipeline_mode<synchronous>, transform_indices = @transform_22, window_bounds = array<i64: 1, 32>}, {pipeline_mode = #tpu.pipeline_mode<synchronous>, transform_indices = @transform_23, window_bounds = array<i64: 32, 64>}, {pipeline_mode = #tpu.pipeline_mode<synchronous>, transform_indices = @transform_24, window_bounds = array<i64: 1, 64>}, {pipeline_mode = #tpu.pipeline_mode<synchronous>, transform_indices = @transform_25, window_bounds = array<i64: 64, 32>}, {pipeline_mode = #tpu.pipeline_mode<synchronous>, transform_indices = @transform_26, window_bounds = array<i64: 1, 32>}, {pipeline_mode = #tpu.pipeline_mode<synchronous>, transform_indices = @transform_27, window_bounds = array<i64: 1, 32>}, {pipeline_mode = #tpu.pipeline_mode<synchronous>, transform_indices = @transform_28, window_bounds = array<i64: 1, 32>}, {transform_indices = @transform_29, window_bounds = array<i64: 1, 16, 32>}]} {
    %c0 = arith.constant 0 : index
    %c0_0 = arith.constant 0 : index
    %c0_1 = arith.constant 0 : index
    %0 = vector.load %arg1[%c0, %c0_0, %c0_1] : memref<1x16x32xf32, #tpu.memory_space<vmem>>, vector<1x16x32xf32>
    %1 = vector.shape_cast %0 : vector<1x16x32xf32> to vector<16x32xf32>
    %c0_2 = arith.constant 0 : index
    %c0_3 = arith.constant 0 : index
    %c0_4 = arith.constant 0 : index
    %2 = vector.load %arg2[%c0_2, %c0_3, %c0_4] : memref<1x16x32xf32, #tpu.memory_space<vmem>>, vector<1x16x32xf32>
    %3 = vector.shape_cast %2 : vector<1x16x32xf32> to vector<16x32xf32>
    %c0_5 = arith.constant 0 : index
    %c0_6 = arith.constant 0 : index
    %c0_7 = arith.constant 0 : index
    %4 = vector.load %arg3[%c0_5, %c0_6, %c0_7] : memref<1x16x16xf32, #tpu.memory_space<vmem>>, vector<1x16x16xf32>
    %5 = vector.shape_cast %4 : vector<1x16x16xf32> to vector<16x16xf32>
    %cst = arith.constant 1.000000e+00 : f32
    %6 = vector.broadcast %cst : f32 to vector<16x16xf32>
    %7 = arith.subf %6, %5 : vector<16x16xf32>
    %cst_8 = arith.constant -1.000000e+04 : f32
    %8 = vector.broadcast %cst_8 : f32 to vector<16x16xf32>
    %9 = arith.mulf %7, %8 : vector<16x16xf32>
    %c0_9 = arith.constant 0 : index
    %c0_10 = arith.constant 0 : index
    %10 = vector.load %arg4[%c0_9, %c0_10] : memref<32x32xbf16, #tpu.memory_space<vmem>>, vector<32x32xbf16>
    %c0_11 = arith.constant 0 : index
    %c0_12 = arith.constant 0 : index
    %11 = vector.load %arg5[%c0_11, %c0_12] : memref<1x32xf32, #tpu.memory_space<vmem>>, vector<1x32xf32>
    %c0_13 = arith.constant 0 : index
    %c0_14 = arith.constant 0 : index
    %12 = vector.load %arg6[%c0_13, %c0_14] : memref<32x32xbf16, #tpu.memory_space<vmem>>, vector<32x32xbf16>
    %c0_15 = arith.constant 0 : index
    %c0_16 = arith.constant 0 : index
    %13 = vector.load %arg7[%c0_15, %c0_16] : memref<1x32xf32, #tpu.memory_space<vmem>>, vector<1x32xf32>
    %c0_17 = arith.constant 0 : index
    %c0_18 = arith.constant 0 : index
    %14 = vector.load %arg8[%c0_17, %c0_18] : memref<32x32xbf16, #tpu.memory_space<vmem>>, vector<32x32xbf16>
    %c0_19 = arith.constant 0 : index
    %c0_20 = arith.constant 0 : index
    %15 = vector.load %arg9[%c0_19, %c0_20] : memref<1x32xf32, #tpu.memory_space<vmem>>, vector<1x32xf32>
    %c0_21 = arith.constant 0 : index
    %c0_22 = arith.constant 0 : index
    %16 = vector.load %arg10[%c0_21, %c0_22] : memref<32x32xbf16, #tpu.memory_space<vmem>>, vector<32x32xbf16>
    %c0_23 = arith.constant 0 : index
    %c0_24 = arith.constant 0 : index
    %17 = vector.load %arg11[%c0_23, %c0_24] : memref<1x32xf32, #tpu.memory_space<vmem>>, vector<1x32xf32>
    %c0_25 = arith.constant 0 : index
    %c0_26 = arith.constant 0 : index
    %18 = vector.load %arg12[%c0_25, %c0_26] : memref<1x32xf32, #tpu.memory_space<vmem>>, vector<1x32xf32>
    %c0_27 = arith.constant 0 : index
    %c0_28 = arith.constant 0 : index
    %19 = vector.load %arg13[%c0_27, %c0_28] : memref<1x32xf32, #tpu.memory_space<vmem>>, vector<1x32xf32>
    %20 = arith.truncf %1 : vector<16x32xf32> to vector<16x32xbf16>
    %21 = arith.truncf %1 : vector<16x32xf32> to vector<16x32xbf16>
    %cst_29 = arith.constant dense<0.000000e+00> : vector<16x32xf32>
    %22 = tpu.matmul %20, %10, %cst_29 {dimension_numbers = #tpu.dot_dimension_numbers<[1], [0], [0], [1], [0, 0, 1, 1], [], []>} : vector<16x32xbf16>, vector<32x32xbf16>, vector<16x32xf32> -> vector<16x32xf32>
    %23 = vector.broadcast %11 : vector<1x32xf32> to vector<16x32xf32>
    %24 = arith.addf %22, %23 : vector<16x32xf32>
    %cst_30 = arith.constant dense<0.000000e+00> : vector<16x32xf32>
    %25 = tpu.matmul %21, %12, %cst_30 {dimension_numbers = #tpu.dot_dimension_numbers<[1], [0], [0], [1], [0, 0, 1, 1], [], []>} : vector<16x32xbf16>, vector<32x32xbf16>, vector<16x32xf32> -> vector<16x32xf32>
    %26 = vector.broadcast %13 : vector<1x32xf32> to vector<16x32xf32>
    %27 = arith.addf %25, %26 : vector<16x32xf32>
    %cst_31 = arith.constant dense<0.000000e+00> : vector<16x32xf32>
    %28 = tpu.matmul %21, %14, %cst_31 {dimension_numbers = #tpu.dot_dimension_numbers<[1], [0], [0], [1], [0, 0, 1, 1], [], []>} : vector<16x32xbf16>, vector<32x32xbf16>, vector<16x32xf32> -> vector<16x32xf32>
    %29 = vector.broadcast %15 : vector<1x32xf32> to vector<16x32xf32>
    %30 = arith.addf %28, %29 : vector<16x32xf32>
    %31 = vector.extract_strided_slice %24 {offsets = [0, 0], sizes = [16, 8], strides = [1, 1]} : vector<16x32xf32> to vector<16x8xf32>
    %32 = arith.truncf %31 : vector<16x8xf32> to vector<16x8xbf16>
    %33 = vector.extract_strided_slice %27 {offsets = [0, 0], sizes = [16, 8], strides = [1, 1]} : vector<16x32xf32> to vector<16x8xf32>
    %34 = arith.truncf %33 : vector<16x8xf32> to vector<16x8xbf16>
    %35 = vector.extract_strided_slice %30 {offsets = [0, 0], sizes = [16, 8], strides = [1, 1]} : vector<16x32xf32> to vector<16x8xf32>
    %36 = arith.truncf %35 : vector<16x8xf32> to vector<16x8xbf16>
    %cst_32 = arith.constant dense<0.000000e+00> : vector<16x16xf32>
    %37 = tpu.matmul %32, %34, %cst_32 {dimension_numbers = #tpu.dot_dimension_numbers<[1], [1], [0], [0], [0, 0, 1, 0], [], []>} : vector<16x8xbf16>, vector<16x8xbf16>, vector<16x16xf32> -> vector<16x16xf32>
    %cst_33 = arith.constant 0.353553385 : f32
    %38 = vector.broadcast %cst_33 : f32 to vector<16x16xf32>
    %39 = arith.mulf %37, %38 : vector<16x16xf32>
    %cst_34 = arith.constant dense<0xFF800000> : vector<16xf32>
    %40 = vector.multi_reduction <maximumf>, %39, %cst_34 [1] : vector<16x16xf32> to vector<16xf32>
    %41 = vector.shape_cast %40 : vector<16xf32> to vector<16x1xf32>
    %42 = vector.broadcast %41 : vector<16x1xf32> to vector<16x16xf32>
    %43 = arith.subf %39, %42 : vector<16x16xf32>
    %44 = math.exp %43 : vector<16x16xf32>
    %cst_35 = arith.constant dense<0.000000e+00> : vector<16xf32>
    %45 = vector.multi_reduction <add>, %44, %cst_35 [1] : vector<16x16xf32> to vector<16xf32>
    %46 = vector.shape_cast %45 : vector<16xf32> to vector<16x1xf32>
    %47 = tpu.reciprocal %46 {approx = true} : vector<16x1xf32> -> vector<16x1xf32>
    %48 = vector.broadcast %47 : vector<16x1xf32> to vector<16x16xf32>
    %49 = arith.mulf %44, %48 : vector<16x16xf32>
    %50 = arith.truncf %49 : vector<16x16xf32> to vector<16x16xbf16>
    %cst_36 = arith.constant dense<0.000000e+00> : vector<16x8xf32>
    %51 = tpu.matmul %50, %36, %cst_36 {dimension_numbers = #tpu.dot_dimension_numbers<[1], [0], [0], [1], [0, 0, 1, 1], [], []>} : vector<16x16xbf16>, vector<16x8xbf16>, vector<16x8xf32> -> vector<16x8xf32>
    %52 = vector.extract_strided_slice %24 {offsets = [0, 8], sizes = [16, 8], strides = [1, 1]} : vector<16x32xf32> to vector<16x8xf32>
    %53 = arith.truncf %52 : vector<16x8xf32> to vector<16x8xbf16>
    %54 = vector.extract_strided_slice %27 {offsets = [0, 8], sizes = [16, 8], strides = [1, 1]} : vector<16x32xf32> to vector<16x8xf32>
    %55 = arith.truncf %54 : vector<16x8xf32> to vector<16x8xbf16>
    %56 = vector.extract_strided_slice %30 {offsets = [0, 8], sizes = [16, 8], strides = [1, 1]} : vector<16x32xf32> to vector<16x8xf32>
    %57 = arith.truncf %56 : vector<16x8xf32> to vector<16x8xbf16>
    %cst_37 = arith.constant dense<0.000000e+00> : vector<16x16xf32>
    %58 = tpu.matmul %53, %55, %cst_37 {dimension_numbers = #tpu.dot_dimension_numbers<[1], [1], [0], [0], [0, 0, 1, 0], [], []>} : vector<16x8xbf16>, vector<16x8xbf16>, vector<16x16xf32> -> vector<16x16xf32>
    %cst_38 = arith.constant 0.353553385 : f32
    %59 = vector.broadcast %cst_38 : f32 to vector<16x16xf32>
    %60 = arith.mulf %58, %59 : vector<16x16xf32>
    %cst_39 = arith.constant dense<0xFF800000> : vector<16xf32>
    %61 = vector.multi_reduction <maximumf>, %60, %cst_39 [1] : vector<16x16xf32> to vector<16xf32>
    %62 = vector.shape_cast %61 : vector<16xf32> to vector<16x1xf32>
    %63 = vector.broadcast %62 : vector<16x1xf32> to vector<16x16xf32>
    %64 = arith.subf %60, %63 : vector<16x16xf32>
    %65 = math.exp %64 : vector<16x16xf32>
    %cst_40 = arith.constant dense<0.000000e+00> : vector<16xf32>
    %66 = vector.multi_reduction <add>, %65, %cst_40 [1] : vector<16x16xf32> to vector<16xf32>
    %67 = vector.shape_cast %66 : vector<16xf32> to vector<16x1xf32>
    %68 = tpu.reciprocal %67 {approx = true} : vector<16x1xf32> -> vector<16x1xf32>
    %69 = vector.broadcast %68 : vector<16x1xf32> to vector<16x16xf32>
    %70 = arith.mulf %65, %69 : vector<16x16xf32>
    %71 = arith.truncf %70 : vector<16x16xf32> to vector<16x16xbf16>
    %cst_41 = arith.constant dense<0.000000e+00> : vector<16x8xf32>
    %72 = tpu.matmul %71, %57, %cst_41 {dimension_numbers = #tpu.dot_dimension_numbers<[1], [0], [0], [1], [0, 0, 1, 1], [], []>} : vector<16x16xbf16>, vector<16x8xbf16>, vector<16x8xf32> -> vector<16x8xf32>
    %73 = vector.extract_strided_slice %24 {offsets = [0, 16], sizes = [16, 8], strides = [1, 1]} : vector<16x32xf32> to vector<16x8xf32>
    %74 = arith.truncf %73 : vector<16x8xf32> to vector<16x8xbf16>
    %75 = vector.extract_strided_slice %27 {offsets = [0, 16], sizes = [16, 8], strides = [1, 1]} : vector<16x32xf32> to vector<16x8xf32>
    %76 = arith.truncf %75 : vector<16x8xf32> to vector<16x8xbf16>
    %77 = vector.extract_strided_slice %30 {offsets = [0, 16], sizes = [16, 8], strides = [1, 1]} : vector<16x32xf32> to vector<16x8xf32>
    %78 = arith.truncf %77 : vector<16x8xf32> to vector<16x8xbf16>
    %cst_42 = arith.constant dense<0.000000e+00> : vector<16x16xf32>
    %79 = tpu.matmul %74, %76, %cst_42 {dimension_numbers = #tpu.dot_dimension_numbers<[1], [1], [0], [0], [0, 0, 1, 0], [], []>} : vector<16x8xbf16>, vector<16x8xbf16>, vector<16x16xf32> -> vector<16x16xf32>
    %cst_43 = arith.constant 0.353553385 : f32
    %80 = vector.broadcast %cst_43 : f32 to vector<16x16xf32>
    %81 = arith.mulf %79, %80 : vector<16x16xf32>
    %cst_44 = arith.constant dense<0xFF800000> : vector<16xf32>
    %82 = vector.multi_reduction <maximumf>, %81, %cst_44 [1] : vector<16x16xf32> to vector<16xf32>
    %83 = vector.shape_cast %82 : vector<16xf32> to vector<16x1xf32>
    %84 = vector.broadcast %83 : vector<16x1xf32> to vector<16x16xf32>
    %85 = arith.subf %81, %84 : vector<16x16xf32>
    %86 = math.exp %85 : vector<16x16xf32>
    %cst_45 = arith.constant dense<0.000000e+00> : vector<16xf32>
    %87 = vector.multi_reduction <add>, %86, %cst_45 [1] : vector<16x16xf32> to vector<16xf32>
    %88 = vector.shape_cast %87 : vector<16xf32> to vector<16x1xf32>
    %89 = tpu.reciprocal %88 {approx = true} : vector<16x1xf32> -> vector<16x1xf32>
    %90 = vector.broadcast %89 : vector<16x1xf32> to vector<16x16xf32>
    %91 = arith.mulf %86, %90 : vector<16x16xf32>
    %92 = arith.truncf %91 : vector<16x16xf32> to vector<16x16xbf16>
    %cst_46 = arith.constant dense<0.000000e+00> : vector<16x8xf32>
    %93 = tpu.matmul %92, %78, %cst_46 {dimension_numbers = #tpu.dot_dimension_numbers<[1], [0], [0], [1], [0, 0, 1, 1], [], []>} : vector<16x16xbf16>, vector<16x8xbf16>, vector<16x8xf32> -> vector<16x8xf32>
    %94 = vector.extract_strided_slice %24 {offsets = [0, 24], sizes = [16, 8], strides = [1, 1]} : vector<16x32xf32> to vector<16x8xf32>
    %95 = arith.truncf %94 : vector<16x8xf32> to vector<16x8xbf16>
    %96 = vector.extract_strided_slice %27 {offsets = [0, 24], sizes = [16, 8], strides = [1, 1]} : vector<16x32xf32> to vector<16x8xf32>
    %97 = arith.truncf %96 : vector<16x8xf32> to vector<16x8xbf16>
    %98 = vector.extract_strided_slice %30 {offsets = [0, 24], sizes = [16, 8], strides = [1, 1]} : vector<16x32xf32> to vector<16x8xf32>
    %99 = arith.truncf %98 : vector<16x8xf32> to vector<16x8xbf16>
    %cst_47 = arith.constant dense<0.000000e+00> : vector<16x16xf32>
    %100 = tpu.matmul %95, %97, %cst_47 {dimension_numbers = #tpu.dot_dimension_numbers<[1], [1], [0], [0], [0, 0, 1, 0], [], []>} : vector<16x8xbf16>, vector<16x8xbf16>, vector<16x16xf32> -> vector<16x16xf32>
    %cst_48 = arith.constant 0.353553385 : f32
    %101 = vector.broadcast %cst_48 : f32 to vector<16x16xf32>
    %102 = arith.mulf %100, %101 : vector<16x16xf32>
    %cst_49 = arith.constant dense<0xFF800000> : vector<16xf32>
    %103 = vector.multi_reduction <maximumf>, %102, %cst_49 [1] : vector<16x16xf32> to vector<16xf32>
    %104 = vector.shape_cast %103 : vector<16xf32> to vector<16x1xf32>
    %105 = vector.broadcast %104 : vector<16x1xf32> to vector<16x16xf32>
    %106 = arith.subf %102, %105 : vector<16x16xf32>
    %107 = math.exp %106 : vector<16x16xf32>
    %cst_50 = arith.constant dense<0.000000e+00> : vector<16xf32>
    %108 = vector.multi_reduction <add>, %107, %cst_50 [1] : vector<16x16xf32> to vector<16xf32>
    %109 = vector.shape_cast %108 : vector<16xf32> to vector<16x1xf32>
    %110 = tpu.reciprocal %109 {approx = true} : vector<16x1xf32> -> vector<16x1xf32>
    %111 = vector.broadcast %110 : vector<16x1xf32> to vector<16x16xf32>
    %112 = arith.mulf %107, %111 : vector<16x16xf32>
    %113 = arith.truncf %112 : vector<16x16xf32> to vector<16x16xbf16>
    %cst_51 = arith.constant dense<0.000000e+00> : vector<16x8xf32>
    %114 = tpu.matmul %113, %99, %cst_51 {dimension_numbers = #tpu.dot_dimension_numbers<[1], [0], [0], [1], [0, 0, 1, 1], [], []>} : vector<16x16xbf16>, vector<16x8xbf16>, vector<16x8xf32> -> vector<16x8xf32>
    %115 = tpu.concatenate %51, %72, %93, %114 in 1 : vector<16x8xf32>, vector<16x8xf32>, vector<16x8xf32>, vector<16x8xf32> -> vector<16x32xf32>
    %116 = arith.truncf %115 : vector<16x32xf32> to vector<16x32xbf16>
    %cst_52 = arith.constant dense<0.000000e+00> : vector<16x32xf32>
    %117 = tpu.matmul %116, %16, %cst_52 {dimension_numbers = #tpu.dot_dimension_numbers<[1], [0], [0], [1], [0, 0, 1, 1], [], []>} : vector<16x32xbf16>, vector<32x32xbf16>, vector<16x32xf32> -> vector<16x32xf32>
    %118 = vector.broadcast %17 : vector<1x32xf32> to vector<16x32xf32>
    %119 = arith.addf %117, %118 : vector<16x32xf32>
    %120 = arith.addf %119, %1 : vector<16x32xf32>
    %cst_53 = arith.constant dense<0.000000e+00> : vector<16xf32>
    %121 = vector.multi_reduction <add>, %120, %cst_53 [1] : vector<16x32xf32> to vector<16xf32>
    %122 = vector.shape_cast %121 : vector<16xf32> to vector<16x1xf32>
    %cst_54 = arith.constant 3.200000e+01 : f32
    %123 = vector.broadcast %cst_54 : f32 to vector<16x1xf32>
    %124 = arith.divf %122, %123 : vector<16x1xf32>
    %125 = vector.broadcast %124 : vector<16x1xf32> to vector<16x32xf32>
    %126 = arith.subf %120, %125 : vector<16x32xf32>
    %127 = arith.mulf %126, %126 : vector<16x32xf32>
    %cst_55 = arith.constant dense<0.000000e+00> : vector<16xf32>
    %128 = vector.multi_reduction <add>, %127, %cst_55 [1] : vector<16x32xf32> to vector<16xf32>
    %129 = vector.shape_cast %128 : vector<16xf32> to vector<16x1xf32>
    %cst_56 = arith.constant 3.200000e+01 : f32
    %130 = vector.broadcast %cst_56 : f32 to vector<16x1xf32>
    %131 = arith.divf %129, %130 : vector<16x1xf32>
    %132 = vector.broadcast %124 : vector<16x1xf32> to vector<16x32xf32>
    %133 = arith.subf %120, %132 : vector<16x32xf32>
    %cst_57 = arith.constant 9.99999996E-13 : f32
    %134 = vector.broadcast %cst_57 : f32 to vector<16x1xf32>
    %135 = arith.addf %131, %134 : vector<16x1xf32>
    %136 = math.rsqrt %135 : vector<16x1xf32>
    %137 = vector.broadcast %136 : vector<16x1xf32> to vector<16x32xf32>
    %138 = arith.mulf %133, %137 : vector<16x32xf32>
    %139 = vector.broadcast %18 : vector<1x32xf32> to vector<16x32xf32>
    %140 = arith.mulf %138, %139 : vector<16x32xf32>
    %141 = vector.broadcast %19 : vector<1x32xf32> to vector<16x32xf32>
    %142 = arith.addf %140, %141 : vector<16x32xf32>
    %c0_58 = arith.constant 0 : index
    %c0_59 = arith.constant 0 : index
    %143 = vector.load %arg14[%c0_58, %c0_59] : memref<32x32xbf16, #tpu.memory_space<vmem>>, vector<32x32xbf16>
    %c0_60 = arith.constant 0 : index
    %c0_61 = arith.constant 0 : index
    %144 = vector.load %arg15[%c0_60, %c0_61] : memref<1x32xf32, #tpu.memory_space<vmem>>, vector<1x32xf32>
    %c0_62 = arith.constant 0 : index
    %c0_63 = arith.constant 0 : index
    %145 = vector.load %arg16[%c0_62, %c0_63] : memref<32x32xbf16, #tpu.memory_space<vmem>>, vector<32x32xbf16>
    %c0_64 = arith.constant 0 : index
    %c0_65 = arith.constant 0 : index
    %146 = vector.load %arg17[%c0_64, %c0_65] : memref<1x32xf32, #tpu.memory_space<vmem>>, vector<1x32xf32>
    %c0_66 = arith.constant 0 : index
    %c0_67 = arith.constant 0 : index
    %147 = vector.load %arg18[%c0_66, %c0_67] : memref<32x32xbf16, #tpu.memory_space<vmem>>, vector<32x32xbf16>
    %c0_68 = arith.constant 0 : index
    %c0_69 = arith.constant 0 : index
    %148 = vector.load %arg19[%c0_68, %c0_69] : memref<1x32xf32, #tpu.memory_space<vmem>>, vector<1x32xf32>
    %c0_70 = arith.constant 0 : index
    %c0_71 = arith.constant 0 : index
    %149 = vector.load %arg20[%c0_70, %c0_71] : memref<32x32xbf16, #tpu.memory_space<vmem>>, vector<32x32xbf16>
    %c0_72 = arith.constant 0 : index
    %c0_73 = arith.constant 0 : index
    %150 = vector.load %arg21[%c0_72, %c0_73] : memref<1x32xf32, #tpu.memory_space<vmem>>, vector<1x32xf32>
    %c0_74 = arith.constant 0 : index
    %c0_75 = arith.constant 0 : index
    %151 = vector.load %arg22[%c0_74, %c0_75] : memref<1x32xf32, #tpu.memory_space<vmem>>, vector<1x32xf32>
    %c0_76 = arith.constant 0 : index
    %c0_77 = arith.constant 0 : index
    %152 = vector.load %arg23[%c0_76, %c0_77] : memref<1x32xf32, #tpu.memory_space<vmem>>, vector<1x32xf32>
    %153 = arith.truncf %142 : vector<16x32xf32> to vector<16x32xbf16>
    %154 = arith.truncf %3 : vector<16x32xf32> to vector<16x32xbf16>
    %cst_78 = arith.constant dense<0.000000e+00> : vector<16x32xf32>
    %155 = tpu.matmul %153, %143, %cst_78 {dimension_numbers = #tpu.dot_dimension_numbers<[1], [0], [0], [1], [0, 0, 1, 1], [], []>} : vector<16x32xbf16>, vector<32x32xbf16>, vector<16x32xf32> -> vector<16x32xf32>
    %156 = vector.broadcast %144 : vector<1x32xf32> to vector<16x32xf32>
    %157 = arith.addf %155, %156 : vector<16x32xf32>
    %cst_79 = arith.constant dense<0.000000e+00> : vector<16x32xf32>
    %158 = tpu.matmul %154, %145, %cst_79 {dimension_numbers = #tpu.dot_dimension_numbers<[1], [0], [0], [1], [0, 0, 1, 1], [], []>} : vector<16x32xbf16>, vector<32x32xbf16>, vector<16x32xf32> -> vector<16x32xf32>
    %159 = vector.broadcast %146 : vector<1x32xf32> to vector<16x32xf32>
    %160 = arith.addf %158, %159 : vector<16x32xf32>
    %cst_80 = arith.constant dense<0.000000e+00> : vector<16x32xf32>
    %161 = tpu.matmul %154, %147, %cst_80 {dimension_numbers = #tpu.dot_dimension_numbers<[1], [0], [0], [1], [0, 0, 1, 1], [], []>} : vector<16x32xbf16>, vector<32x32xbf16>, vector<16x32xf32> -> vector<16x32xf32>
    %162 = vector.broadcast %148 : vector<1x32xf32> to vector<16x32xf32>
    %163 = arith.addf %161, %162 : vector<16x32xf32>
    %164 = vector.extract_strided_slice %157 {offsets = [0, 0], sizes = [16, 8], strides = [1, 1]} : vector<16x32xf32> to vector<16x8xf32>
    %165 = arith.truncf %164 : vector<16x8xf32> to vector<16x8xbf16>
    %166 = vector.extract_strided_slice %160 {offsets = [0, 0], sizes = [16, 8], strides = [1, 1]} : vector<16x32xf32> to vector<16x8xf32>
    %167 = arith.truncf %166 : vector<16x8xf32> to vector<16x8xbf16>
    %168 = vector.extract_strided_slice %163 {offsets = [0, 0], sizes = [16, 8], strides = [1, 1]} : vector<16x32xf32> to vector<16x8xf32>
    %169 = arith.truncf %168 : vector<16x8xf32> to vector<16x8xbf16>
    %cst_81 = arith.constant dense<0.000000e+00> : vector<16x16xf32>
    %170 = tpu.matmul %165, %167, %cst_81 {dimension_numbers = #tpu.dot_dimension_numbers<[1], [1], [0], [0], [0, 0, 1, 0], [], []>} : vector<16x8xbf16>, vector<16x8xbf16>, vector<16x16xf32> -> vector<16x16xf32>
    %cst_82 = arith.constant 0.353553385 : f32
    %171 = vector.broadcast %cst_82 : f32 to vector<16x16xf32>
    %172 = arith.mulf %170, %171 : vector<16x16xf32>
    %173 = arith.addf %172, %9 : vector<16x16xf32>
    %cst_83 = arith.constant dense<0xFF800000> : vector<16xf32>
    %174 = vector.multi_reduction <maximumf>, %173, %cst_83 [1] : vector<16x16xf32> to vector<16xf32>
    %175 = vector.shape_cast %174 : vector<16xf32> to vector<16x1xf32>
    %176 = vector.broadcast %175 : vector<16x1xf32> to vector<16x16xf32>
    %177 = arith.subf %173, %176 : vector<16x16xf32>
    %178 = math.exp %177 : vector<16x16xf32>
    %cst_84 = arith.constant dense<0.000000e+00> : vector<16xf32>
    %179 = vector.multi_reduction <add>, %178, %cst_84 [1] : vector<16x16xf32> to vector<16xf32>
    %180 = vector.shape_cast %179 : vector<16xf32> to vector<16x1xf32>
    %181 = tpu.reciprocal %180 {approx = true} : vector<16x1xf32> -> vector<16x1xf32>
    %182 = vector.broadcast %181 : vector<16x1xf32> to vector<16x16xf32>
    %183 = arith.mulf %178, %182 : vector<16x16xf32>
    %184 = arith.truncf %183 : vector<16x16xf32> to vector<16x16xbf16>
    %cst_85 = arith.constant dense<0.000000e+00> : vector<16x8xf32>
    %185 = tpu.matmul %184, %169, %cst_85 {dimension_numbers = #tpu.dot_dimension_numbers<[1], [0], [0], [1], [0, 0, 1, 1], [], []>} : vector<16x16xbf16>, vector<16x8xbf16>, vector<16x8xf32> -> vector<16x8xf32>
    %186 = vector.extract_strided_slice %157 {offsets = [0, 8], sizes = [16, 8], strides = [1, 1]} : vector<16x32xf32> to vector<16x8xf32>
    %187 = arith.truncf %186 : vector<16x8xf32> to vector<16x8xbf16>
    %188 = vector.extract_strided_slice %160 {offsets = [0, 8], sizes = [16, 8], strides = [1, 1]} : vector<16x32xf32> to vector<16x8xf32>
    %189 = arith.truncf %188 : vector<16x8xf32> to vector<16x8xbf16>
    %190 = vector.extract_strided_slice %163 {offsets = [0, 8], sizes = [16, 8], strides = [1, 1]} : vector<16x32xf32> to vector<16x8xf32>
    %191 = arith.truncf %190 : vector<16x8xf32> to vector<16x8xbf16>
    %cst_86 = arith.constant dense<0.000000e+00> : vector<16x16xf32>
    %192 = tpu.matmul %187, %189, %cst_86 {dimension_numbers = #tpu.dot_dimension_numbers<[1], [1], [0], [0], [0, 0, 1, 0], [], []>} : vector<16x8xbf16>, vector<16x8xbf16>, vector<16x16xf32> -> vector<16x16xf32>
    %cst_87 = arith.constant 0.353553385 : f32
    %193 = vector.broadcast %cst_87 : f32 to vector<16x16xf32>
    %194 = arith.mulf %192, %193 : vector<16x16xf32>
    %195 = arith.addf %194, %9 : vector<16x16xf32>
    %cst_88 = arith.constant dense<0xFF800000> : vector<16xf32>
    %196 = vector.multi_reduction <maximumf>, %195, %cst_88 [1] : vector<16x16xf32> to vector<16xf32>
    %197 = vector.shape_cast %196 : vector<16xf32> to vector<16x1xf32>
    %198 = vector.broadcast %197 : vector<16x1xf32> to vector<16x16xf32>
    %199 = arith.subf %195, %198 : vector<16x16xf32>
    %200 = math.exp %199 : vector<16x16xf32>
    %cst_89 = arith.constant dense<0.000000e+00> : vector<16xf32>
    %201 = vector.multi_reduction <add>, %200, %cst_89 [1] : vector<16x16xf32> to vector<16xf32>
    %202 = vector.shape_cast %201 : vector<16xf32> to vector<16x1xf32>
    %203 = tpu.reciprocal %202 {approx = true} : vector<16x1xf32> -> vector<16x1xf32>
    %204 = vector.broadcast %203 : vector<16x1xf32> to vector<16x16xf32>
    %205 = arith.mulf %200, %204 : vector<16x16xf32>
    %206 = arith.truncf %205 : vector<16x16xf32> to vector<16x16xbf16>
    %cst_90 = arith.constant dense<0.000000e+00> : vector<16x8xf32>
    %207 = tpu.matmul %206, %191, %cst_90 {dimension_numbers = #tpu.dot_dimension_numbers<[1], [0], [0], [1], [0, 0, 1, 1], [], []>} : vector<16x16xbf16>, vector<16x8xbf16>, vector<16x8xf32> -> vector<16x8xf32>
    %208 = vector.extract_strided_slice %157 {offsets = [0, 16], sizes = [16, 8], strides = [1, 1]} : vector<16x32xf32> to vector<16x8xf32>
    %209 = arith.truncf %208 : vector<16x8xf32> to vector<16x8xbf16>
    %210 = vector.extract_strided_slice %160 {offsets = [0, 16], sizes = [16, 8], strides = [1, 1]} : vector<16x32xf32> to vector<16x8xf32>
    %211 = arith.truncf %210 : vector<16x8xf32> to vector<16x8xbf16>
    %212 = vector.extract_strided_slice %163 {offsets = [0, 16], sizes = [16, 8], strides = [1, 1]} : vector<16x32xf32> to vector<16x8xf32>
    %213 = arith.truncf %212 : vector<16x8xf32> to vector<16x8xbf16>
    %cst_91 = arith.constant dense<0.000000e+00> : vector<16x16xf32>
    %214 = tpu.matmul %209, %211, %cst_91 {dimension_numbers = #tpu.dot_dimension_numbers<[1], [1], [0], [0], [0, 0, 1, 0], [], []>} : vector<16x8xbf16>, vector<16x8xbf16>, vector<16x16xf32> -> vector<16x16xf32>
    %cst_92 = arith.constant 0.353553385 : f32
    %215 = vector.broadcast %cst_92 : f32 to vector<16x16xf32>
    %216 = arith.mulf %214, %215 : vector<16x16xf32>
    %217 = arith.addf %216, %9 : vector<16x16xf32>
    %cst_93 = arith.constant dense<0xFF800000> : vector<16xf32>
    %218 = vector.multi_reduction <maximumf>, %217, %cst_93 [1] : vector<16x16xf32> to vector<16xf32>
    %219 = vector.shape_cast %218 : vector<16xf32> to vector<16x1xf32>
    %220 = vector.broadcast %219 : vector<16x1xf32> to vector<16x16xf32>
    %221 = arith.subf %217, %220 : vector<16x16xf32>
    %222 = math.exp %221 : vector<16x16xf32>
    %cst_94 = arith.constant dense<0.000000e+00> : vector<16xf32>
    %223 = vector.multi_reduction <add>, %222, %cst_94 [1] : vector<16x16xf32> to vector<16xf32>
    %224 = vector.shape_cast %223 : vector<16xf32> to vector<16x1xf32>
    %225 = tpu.reciprocal %224 {approx = true} : vector<16x1xf32> -> vector<16x1xf32>
    %226 = vector.broadcast %225 : vector<16x1xf32> to vector<16x16xf32>
    %227 = arith.mulf %222, %226 : vector<16x16xf32>
    %228 = arith.truncf %227 : vector<16x16xf32> to vector<16x16xbf16>
    %cst_95 = arith.constant dense<0.000000e+00> : vector<16x8xf32>
    %229 = tpu.matmul %228, %213, %cst_95 {dimension_numbers = #tpu.dot_dimension_numbers<[1], [0], [0], [1], [0, 0, 1, 1], [], []>} : vector<16x16xbf16>, vector<16x8xbf16>, vector<16x8xf32> -> vector<16x8xf32>
    %230 = vector.extract_strided_slice %157 {offsets = [0, 24], sizes = [16, 8], strides = [1, 1]} : vector<16x32xf32> to vector<16x8xf32>
    %231 = arith.truncf %230 : vector<16x8xf32> to vector<16x8xbf16>
    %232 = vector.extract_strided_slice %160 {offsets = [0, 24], sizes = [16, 8], strides = [1, 1]} : vector<16x32xf32> to vector<16x8xf32>
    %233 = arith.truncf %232 : vector<16x8xf32> to vector<16x8xbf16>
    %234 = vector.extract_strided_slice %163 {offsets = [0, 24], sizes = [16, 8], strides = [1, 1]} : vector<16x32xf32> to vector<16x8xf32>
    %235 = arith.truncf %234 : vector<16x8xf32> to vector<16x8xbf16>
    %cst_96 = arith.constant dense<0.000000e+00> : vector<16x16xf32>
    %236 = tpu.matmul %231, %233, %cst_96 {dimension_numbers = #tpu.dot_dimension_numbers<[1], [1], [0], [0], [0, 0, 1, 0], [], []>} : vector<16x8xbf16>, vector<16x8xbf16>, vector<16x16xf32> -> vector<16x16xf32>
    %cst_97 = arith.constant 0.353553385 : f32
    %237 = vector.broadcast %cst_97 : f32 to vector<16x16xf32>
    %238 = arith.mulf %236, %237 : vector<16x16xf32>
    %239 = arith.addf %238, %9 : vector<16x16xf32>
    %cst_98 = arith.constant dense<0xFF800000> : vector<16xf32>
    %240 = vector.multi_reduction <maximumf>, %239, %cst_98 [1] : vector<16x16xf32> to vector<16xf32>
    %241 = vector.shape_cast %240 : vector<16xf32> to vector<16x1xf32>
    %242 = vector.broadcast %241 : vector<16x1xf32> to vector<16x16xf32>
    %243 = arith.subf %239, %242 : vector<16x16xf32>
    %244 = math.exp %243 : vector<16x16xf32>
    %cst_99 = arith.constant dense<0.000000e+00> : vector<16xf32>
    %245 = vector.multi_reduction <add>, %244, %cst_99 [1] : vector<16x16xf32> to vector<16xf32>
    %246 = vector.shape_cast %245 : vector<16xf32> to vector<16x1xf32>
    %247 = tpu.reciprocal %246 {approx = true} : vector<16x1xf32> -> vector<16x1xf32>
    %248 = vector.broadcast %247 : vector<16x1xf32> to vector<16x16xf32>
    %249 = arith.mulf %244, %248 : vector<16x16xf32>
    %250 = arith.truncf %249 : vector<16x16xf32> to vector<16x16xbf16>
    %cst_100 = arith.constant dense<0.000000e+00> : vector<16x8xf32>
    %251 = tpu.matmul %250, %235, %cst_100 {dimension_numbers = #tpu.dot_dimension_numbers<[1], [0], [0], [1], [0, 0, 1, 1], [], []>} : vector<16x16xbf16>, vector<16x8xbf16>, vector<16x8xf32> -> vector<16x8xf32>
    %252 = tpu.concatenate %185, %207, %229, %251 in 1 : vector<16x8xf32>, vector<16x8xf32>, vector<16x8xf32>, vector<16x8xf32> -> vector<16x32xf32>
    %253 = arith.truncf %252 : vector<16x32xf32> to vector<16x32xbf16>
    %cst_101 = arith.constant dense<0.000000e+00> : vector<16x32xf32>
    %254 = tpu.matmul %253, %149, %cst_101 {dimension_numbers = #tpu.dot_dimension_numbers<[1], [0], [0], [1], [0, 0, 1, 1], [], []>} : vector<16x32xbf16>, vector<32x32xbf16>, vector<16x32xf32> -> vector<16x32xf32>
    %255 = vector.broadcast %150 : vector<1x32xf32> to vector<16x32xf32>
    %256 = arith.addf %254, %255 : vector<16x32xf32>
    %257 = arith.addf %256, %142 : vector<16x32xf32>
    %cst_102 = arith.constant dense<0.000000e+00> : vector<16xf32>
    %258 = vector.multi_reduction <add>, %257, %cst_102 [1] : vector<16x32xf32> to vector<16xf32>
    %259 = vector.shape_cast %258 : vector<16xf32> to vector<16x1xf32>
    %cst_103 = arith.constant 3.200000e+01 : f32
    %260 = vector.broadcast %cst_103 : f32 to vector<16x1xf32>
    %261 = arith.divf %259, %260 : vector<16x1xf32>
    %262 = vector.broadcast %261 : vector<16x1xf32> to vector<16x32xf32>
    %263 = arith.subf %257, %262 : vector<16x32xf32>
    %264 = arith.mulf %263, %263 : vector<16x32xf32>
    %cst_104 = arith.constant dense<0.000000e+00> : vector<16xf32>
    %265 = vector.multi_reduction <add>, %264, %cst_104 [1] : vector<16x32xf32> to vector<16xf32>
    %266 = vector.shape_cast %265 : vector<16xf32> to vector<16x1xf32>
    %cst_105 = arith.constant 3.200000e+01 : f32
    %267 = vector.broadcast %cst_105 : f32 to vector<16x1xf32>
    %268 = arith.divf %266, %267 : vector<16x1xf32>
    %269 = vector.broadcast %261 : vector<16x1xf32> to vector<16x32xf32>
    %270 = arith.subf %257, %269 : vector<16x32xf32>
    %cst_106 = arith.constant 9.99999996E-13 : f32
    %271 = vector.broadcast %cst_106 : f32 to vector<16x1xf32>
    %272 = arith.addf %268, %271 : vector<16x1xf32>
    %273 = math.rsqrt %272 : vector<16x1xf32>
    %274 = vector.broadcast %273 : vector<16x1xf32> to vector<16x32xf32>
    %275 = arith.mulf %270, %274 : vector<16x32xf32>
    %276 = vector.broadcast %151 : vector<1x32xf32> to vector<16x32xf32>
    %277 = arith.mulf %275, %276 : vector<16x32xf32>
    %278 = vector.broadcast %152 : vector<1x32xf32> to vector<16x32xf32>
    %279 = arith.addf %277, %278 : vector<16x32xf32>
    %c0_107 = arith.constant 0 : index
    %c0_108 = arith.constant 0 : index
    %280 = vector.load %arg24[%c0_107, %c0_108] : memref<32x64xbf16, #tpu.memory_space<vmem>>, vector<32x64xbf16>
    %c0_109 = arith.constant 0 : index
    %c0_110 = arith.constant 0 : index
    %281 = vector.load %arg25[%c0_109, %c0_110] : memref<1x64xf32, #tpu.memory_space<vmem>>, vector<1x64xf32>
    %c0_111 = arith.constant 0 : index
    %c0_112 = arith.constant 0 : index
    %282 = vector.load %arg26[%c0_111, %c0_112] : memref<64x32xbf16, #tpu.memory_space<vmem>>, vector<64x32xbf16>
    %c0_113 = arith.constant 0 : index
    %c0_114 = arith.constant 0 : index
    %283 = vector.load %arg27[%c0_113, %c0_114] : memref<1x32xf32, #tpu.memory_space<vmem>>, vector<1x32xf32>
    %c0_115 = arith.constant 0 : index
    %c0_116 = arith.constant 0 : index
    %284 = vector.load %arg28[%c0_115, %c0_116] : memref<1x32xf32, #tpu.memory_space<vmem>>, vector<1x32xf32>
    %c0_117 = arith.constant 0 : index
    %c0_118 = arith.constant 0 : index
    %285 = vector.load %arg29[%c0_117, %c0_118] : memref<1x32xf32, #tpu.memory_space<vmem>>, vector<1x32xf32>
    %286 = arith.truncf %279 : vector<16x32xf32> to vector<16x32xbf16>
    %cst_119 = arith.constant dense<0.000000e+00> : vector<16x64xf32>
    %287 = tpu.matmul %286, %280, %cst_119 {dimension_numbers = #tpu.dot_dimension_numbers<[1], [0], [0], [1], [0, 0, 1, 1], [], []>} : vector<16x32xbf16>, vector<32x64xbf16>, vector<16x64xf32> -> vector<16x64xf32>
    %288 = vector.broadcast %281 : vector<1x64xf32> to vector<16x64xf32>
    %289 = arith.addf %287, %288 : vector<16x64xf32>
    %cst_120 = arith.constant 5.000000e-01 : f32
    %290 = vector.broadcast %cst_120 : f32 to vector<16x64xf32>
    %291 = arith.mulf %290, %289 : vector<16x64xf32>
    %cst_121 = arith.constant 0.707106769 : f32
    %292 = vector.broadcast %cst_121 : f32 to vector<16x64xf32>
    %293 = arith.mulf %289, %292 : vector<16x64xf32>
    %cst_122 = arith.constant -3.8325069 : f32
    %cst_123 = arith.constant 3.8325069 : f32
    %294 = vector.broadcast %cst_122 : f32 to vector<16x64xf32>
    %295 = arith.maximumf %294, %293 : vector<16x64xf32>
    %296 = vector.broadcast %cst_123 : f32 to vector<16x64xf32>
    %297 = arith.minimumf %296, %295 : vector<16x64xf32>
    %298 = arith.mulf %297, %297 : vector<16x64xf32>
    %cst_124 = arith.constant -2.72614237E-10 : f32
    %299 = vector.broadcast %cst_124 : f32 to vector<16x64xf32>
    %300 = arith.mulf %298, %299 : vector<16x64xf32>
    %cst_125 = arith.constant 2.77068146E-8 : f32
    %301 = vector.broadcast %cst_125 : f32 to vector<16x64xf32>
    %302 = arith.addf %300, %301 : vector<16x64xf32>
    %303 = arith.mulf %298, %302 : vector<16x64xf32>
    %cst_126 = arith.constant -2.10102394E-6 : f32
    %304 = vector.broadcast %cst_126 : f32 to vector<16x64xf32>
    %305 = arith.addf %303, %304 : vector<16x64xf32>
    %306 = arith.mulf %298, %305 : vector<16x64xf32>
    %cst_127 = arith.constant -5.69250624E-5 : f32
    %307 = vector.broadcast %cst_127 : f32 to vector<16x64xf32>
    %308 = arith.addf %306, %307 : vector<16x64xf32>
    %309 = arith.mulf %298, %308 : vector<16x64xf32>
    %cst_128 = arith.constant -7.34990637E-4 : f32
    %310 = vector.broadcast %cst_128 : f32 to vector<16x64xf32>
    %311 = arith.addf %309, %310 : vector<16x64xf32>
    %312 = arith.mulf %298, %311 : vector<16x64xf32>
    %cst_129 = arith.constant -2.954600e-03 : f32
    %313 = vector.broadcast %cst_129 : f32 to vector<16x64xf32>
    %314 = arith.addf %312, %313 : vector<16x64xf32>
    %315 = arith.mulf %298, %314 : vector<16x64xf32>
    %cst_130 = arith.constant -0.0160960332 : f32
    %316 = vector.broadcast %cst_130 : f32 to vector<16x64xf32>
    %317 = arith.addf %315, %316 : vector<16x64xf32>
    %318 = arith.mulf %297, %317 : vector<16x64xf32>
    %cst_131 = arith.constant -1.45660715E-5 : f32
    %319 = vector.broadcast %cst_131 : f32 to vector<16x64xf32>
    %320 = arith.mulf %298, %319 : vector<16x64xf32>
    %cst_132 = arith.constant -2.13374049E-4 : f32
    %321 = vector.broadcast %cst_132 : f32 to vector<16x64xf32>
    %322 = arith.addf %320, %321 : vector<16x64xf32>
    %323 = arith.mulf %298, %322 : vector<16x64xf32>
    %cst_133 = arith.constant -0.00168282702 : f32
    %324 = vector.broadcast %cst_133 : f32 to vector<16x64xf32>
    %325 = arith.addf %323, %324 : vector<16x64xf32>
    %326 = arith.mulf %298, %325 : vector<16x64xf32>
    %cst_134 = arith.constant -0.00737332925 : f32
    %327 = vector.broadcast %cst_134 : f32 to vector<16x64xf32>
    %328 = arith.addf %326, %327 : vector<16x64xf32>
    %329 = arith.mulf %298, %328 : vector<16x64xf32>
    %cst_135 = arith.constant -0.0142647391 : f32
    %330 = vector.broadcast %cst_135 : f32 to vector<16x64xf32>
    %331 = arith.addf %329, %330 : vector<16x64xf32>
    %332 = arith.divf %318, %331 : vector<16x64xf32>
    %cst_136 = arith.constant 1.000000e+00 : f32
    %333 = vector.broadcast %cst_136 : f32 to vector<16x64xf32>
    %334 = arith.addf %333, %332 : vector<16x64xf32>
    %335 = arith.mulf %291, %334 : vector<16x64xf32>
    %336 = arith.truncf %335 : vector<16x64xf32> to vector<16x64xbf16>
    %cst_137 = arith.constant dense<0.000000e+00> : vector<16x32xf32>
    %337 = tpu.matmul %336, %282, %cst_137 {dimension_numbers = #tpu.dot_dimension_numbers<[1], [0], [0], [1], [0, 0, 1, 1], [], []>} : vector<16x64xbf16>, vector<64x32xbf16>, vector<16x32xf32> -> vector<16x32xf32>
    %338 = vector.broadcast %283 : vector<1x32xf32> to vector<16x32xf32>
    %339 = arith.addf %337, %338 : vector<16x32xf32>
    %340 = arith.addf %339, %279 : vector<16x32xf32>
    %cst_138 = arith.constant dense<0.000000e+00> : vector<16xf32>
    %341 = vector.multi_reduction <add>, %340, %cst_138 [1] : vector<16x32xf32> to vector<16xf32>
    %342 = vector.shape_cast %341 : vector<16xf32> to vector<16x1xf32>
    %cst_139 = arith.constant 3.200000e+01 : f32
    %343 = vector.broadcast %cst_139 : f32 to vector<16x1xf32>
    %344 = arith.divf %342, %343 : vector<16x1xf32>
    %345 = vector.broadcast %344 : vector<16x1xf32> to vector<16x32xf32>
    %346 = arith.subf %340, %345 : vector<16x32xf32>
    %347 = arith.mulf %346, %346 : vector<16x32xf32>
    %cst_140 = arith.constant dense<0.000000e+00> : vector<16xf32>
    %348 = vector.multi_reduction <add>, %347, %cst_140 [1] : vector<16x32xf32> to vector<16xf32>
    %349 = vector.shape_cast %348 : vector<16xf32> to vector<16x1xf32>
    %cst_141 = arith.constant 3.200000e+01 : f32
    %350 = vector.broadcast %cst_141 : f32 to vector<16x1xf32>
    %351 = arith.divf %349, %350 : vector<16x1xf32>
    %352 = vector.broadcast %344 : vector<16x1xf32> to vector<16x32xf32>
    %353 = arith.subf %340, %352 : vector<16x32xf32>
    %cst_142 = arith.constant 9.99999996E-13 : f32
    %354 = vector.broadcast %cst_142 : f32 to vector<16x1xf32>
    %355 = arith.addf %351, %354 : vector<16x1xf32>
    %356 = math.rsqrt %355 : vector<16x1xf32>
    %357 = vector.broadcast %356 : vector<16x1xf32> to vector<16x32xf32>
    %358 = arith.mulf %353, %357 : vector<16x32xf32>
    %359 = vector.broadcast %284 : vector<1x32xf32> to vector<16x32xf32>
    %360 = arith.mulf %358, %359 : vector<16x32xf32>
    %361 = vector.broadcast %285 : vector<1x32xf32> to vector<16x32xf32>
    %362 = arith.addf %360, %361 : vector<16x32xf32>
    %c0_143 = arith.constant 0 : index
    %c0_144 = arith.constant 0 : index
    %c0_145 = arith.constant 0 : index
    %363 = vector.load %arg30[%c0_143, %c0_144, %c0_145] : memref<1x16x32xf32, #tpu.memory_space<vmem>>, vector<1x16x32xf32>
    %364 = vector.shape_cast %363 : vector<1x16x32xf32> to vector<16x32xf32>
    %365 = vector.shape_cast %362 : vector<16x32xf32> to vector<1x16x32xf32>
    tpu.vector_store %arg30[%c0_143, %c0_144, %c0_145], %365 {strides = array<i32>} : memref<1x16x32xf32, #tpu.memory_space<vmem>>, vector<1x16x32xf32>,
    return
  }
  func.func @transform_0(%arg0: i32) -> (i32, i32, i32) {
    %c0_i32 = arith.constant 0 : i32
    %c0_i32_0 = arith.constant 0 : i32
    %c0_i32_1 = arith.constant 0 : i32
    return %arg0, %c0_i32, %c0_i32_0 : i32, i32, i32
  }
  func.func @transform_1(%arg0: i32) -> (i32, i32, i32) {
    %c0_i32 = arith.constant 0 : i32
    %c0_i32_0 = arith.constant 0 : i32
    %c0_i32_1 = arith.constant 0 : i32
    return %arg0, %c0_i32, %c0_i32_0 : i32, i32, i32
  }
  func.func @transform_2(%arg0: i32) -> (i32, i32, i32) {
    %c0_i32 = arith.constant 0 : i32
    %c0_i32_0 = arith.constant 0 : i32
    %c0_i32_1 = arith.constant 0 : i32
    return %arg0, %c0_i32, %c0_i32_0 : i32, i32, i32
  }
  func.func @transform_3(%arg0: i32) -> (i32, i32) {
    %c0_i32 = arith.constant 0 : i32
    %c0_i32_0 = arith.constant 0 : i32
    %c0_i32_1 = arith.constant 0 : i32
    return %c0_i32, %c0_i32_0 : i32, i32
  }
  func.func @transform_4(%arg0: i32) -> (i32, i32) {
    %c0_i32 = arith.constant 0 : i32
    %c0_i32_0 = arith.constant 0 : i32
    %c0_i32_1 = arith.constant 0 : i32
    return %c0_i32, %c0_i32_0 : i32, i32
  }
  func.func @transform_5(%arg0: i32) -> (i32, i32) {
    %c0_i32 = arith.constant 0 : i32
    %c0_i32_0 = arith.constant 0 : i32
    %c0_i32_1 = arith.constant 0 : i32
    return %c0_i32, %c0_i32_0 : i32, i32
  }
  func.func @transform_6(%arg0: i32) -> (i32, i32) {
    %c0_i32 = arith.constant 0 : i32
    %c0_i32_0 = arith.constant 0 : i32
    %c0_i32_1 = arith.constant 0 : i32
    return %c0_i32, %c0_i32_0 : i32, i32
  }
  func.func @transform_7(%arg0: i32) -> (i32, i32) {
    %c0_i32 = arith.constant 0 : i32
    %c0_i32_0 = arith.constant 0 : i32
    %c0_i32_1 = arith.constant 0 : i32
    return %c0_i32, %c0_i32_0 : i32, i32
  }
  func.func @transform_8(%arg0: i32) -> (i32, i32) {
    %c0_i32 = arith.constant 0 : i32
    %c0_i32_0 = arith.constant 0 : i32
    %c0_i32_1 = arith.constant 0 : i32
    return %c0_i32, %c0_i32_0 : i32, i32
  }
  func.func @transform_9(%arg0: i32) -> (i32, i32) {
    %c0_i32 = arith.constant 0 : i32
    %c0_i32_0 = arith.constant 0 : i32
    %c0_i32_1 = arith.constant 0 : i32
    return %c0_i32, %c0_i32_0 : i32, i32
  }
  func.func @transform_10(%arg0: i32) -> (i32, i32) {
    %c0_i32 = arith.constant 0 : i32
    %c0_i32_0 = arith.constant 0 : i32
    %c0_i32_1 = arith.constant 0 : i32
    return %c0_i32, %c0_i32_0 : i32, i32
  }
  func.func @transform_11(%arg0: i32) -> (i32, i32) {
    %c0_i32 = arith.constant 0 : i32
    %c0_i32_0 = arith.constant 0 : i32
    %c0_i32_1 = arith.constant 0 : i32
    return %c0_i32, %c0_i32_0 : i32, i32
  }
  func.func @transform_12(%arg0: i32) -> (i32, i32) {
    %c0_i32 = arith.constant 0 : i32
    %c0_i32_0 = arith.constant 0 : i32
    %c0_i32_1 = arith.constant 0 : i32
    return %c0_i32, %c0_i32_0 : i32, i32
  }
  func.func @transform_13(%arg0: i32) -> (i32, i32) {
    %c0_i32 = arith.constant 0 : i32
    %c0_i32_0 = arith.constant 0 : i32
    %c0_i32_1 = arith.constant 0 : i32
    return %c0_i32, %c0_i32_0 : i32, i32
  }
  func.func @transform_14(%arg0: i32) -> (i32, i32) {
    %c0_i32 = arith.constant 0 : i32
    %c0_i32_0 = arith.constant 0 : i32
    %c0_i32_1 = arith.constant 0 : i32
    return %c0_i32, %c0_i32_0 : i32, i32
  }
  func.func @transform_15(%arg0: i32) -> (i32, i32) {
    %c0_i32 = arith.constant 0 : i32
    %c0_i32_0 = arith.constant 0 : i32
    %c0_i32_1 = arith.constant 0 : i32
    return %c0_i32, %c0_i32_0 : i32, i32
  }
  func.func @transform_16(%arg0: i32) -> (i32, i32) {
    %c0_i32 = arith.constant 0 : i32
    %c0_i32_0 = arith.constant 0 : i32
    %c0_i32_1 = arith.constant 0 : i32
    return %c0_i32, %c0_i32_0 : i32, i32
  }
  func.func @transform_17(%arg0: i32) -> (i32, i32) {
    %c0_i32 = arith.constant 0 : i32
    %c0_i32_0 = arith.constant 0 : i32
    %c0_i32_1 = arith.constant 0 : i32
    return %c0_i32, %c0_i32_0 : i32, i32
  }
  func.func @transform_18(%arg0: i32) -> (i32, i32) {
    %c0_i32 = arith.constant 0 : i32
    %c0_i32_0 = arith.constant 0 : i32
    %c0_i32_1 = arith.constant 0 : i32
    return %c0_i32, %c0_i32_0 : i32, i32
  }
  func.func @transform_19(%arg0: i32) -> (i32, i32) {
    %c0_i32 = arith.constant 0 : i32
    %c0_i32_0 = arith.constant 0 : i32
    %c0_i32_1 = arith.constant 0 : i32
    return %c0_i32, %c0_i32_0 : i32, i32
  }
  func.func @transform_20(%arg0: i32) -> (i32, i32) {
    %c0_i32 = arith.constant 0 : i32
    %c0_i32_0 = arith.constant 0 : i32
    %c0_i32_1 = arith.constant 0 : i32
    return %c0_i32, %c0_i32_0 : i32, i32
  }
  func.func @transform_21(%arg0: i32) -> (i32, i32) {
    %c0_i32 = arith.constant 0 : i32
    %c0_i32_0 = arith.constant 0 : i32
    %c0_i32_1 = arith.constant 0 : i32
    return %c0_i32, %c0_i32_0 : i32, i32
  }
  func.func @transform_22(%arg0: i32) -> (i32, i32) {
    %c0_i32 = arith.constant 0 : i32
    %c0_i32_0 = arith.constant 0 : i32
    %c0_i32_1 = arith.constant 0 : i32
    return %c0_i32, %c0_i32_0 : i32, i32
  }
  func.func @transform_23(%arg0: i32) -> (i32, i32) {
    %c0_i32 = arith.constant 0 : i32
    %c0_i32_0 = arith.constant 0 : i32
    %c0_i32_1 = arith.constant 0 : i32
    return %c0_i32, %c0_i32_0 : i32, i32
  }
  func.func @transform_24(%arg0: i32) -> (i32, i32) {
    %c0_i32 = arith.constant 0 : i32
    %c0_i32_0 = arith.constant 0 : i32
    %c0_i32_1 = arith.constant 0 : i32
    return %c0_i32, %c0_i32_0 : i32, i32
  }
  func.func @transform_25(%arg0: i32) -> (i32, i32) {
    %c0_i32 = arith.constant 0 : i32
    %c0_i32_0 = arith.constant 0 : i32
    %c0_i32_1 = arith.constant 0 : i32
    return %c0_i32, %c0_i32_0 : i32, i32
  }
  func.func @transform_26(%arg0: i32) -> (i32, i32) {
    %c0_i32 = arith.constant 0 : i32
    %c0_i32_0 = arith.constant 0 : i32
    %c0_i32_1 = arith.constant 0 : i32
    return %c0_i32, %c0_i32_0 : i32, i32
  }
  func.func @transform_27(%arg0: i32) -> (i32, i32) {
    %c0_i32 = arith.constant 0 : i32
    %c0_i32_0 = arith.constant 0 : i32
    %c0_i32_1 = arith.constant 0 : i32
    return %c0_i32, %c0_i32_0 : i32, i32
  }
  func.func @transform_28(%arg0: i32) -> (i32, i32) {
    %c0_i32 = arith.constant 0 : i32
    %c0_i32_0 = arith.constant 0 : i32
    %c0_i32_1 = arith.constant 0 : i32
    return %c0_i32, %c0_i32_0 : i32, i32
  }
  func.func @transform_29(%arg0: i32) -> (i32, i32, i32) {
    %c0_i32 = arith.constant 0 : i32
    %c0_i32_0 = arith.constant 0 : i32
    %c0_i32_1 = arith.constant 0 : i32
    return %arg0, %c0_i32, %c0_i32_0 : i32, i32, i32
  }
}

</mosaic_0001>

<llo_original>
// kernel: set_decoder_forward.5
$region0: #{set_decoder_forward.5}
  #allocation0 [shape = 'u32[]', space=smem, size = 0x4, offset = 0x4, fixed_abs, tag = 'smem constant byte address 0x4 - core index']
  #allocation1 [shape = 'u32[72,128]{1,0:T(1,128)}', space=vmem, size = 0x9000, scoped, tag = 'internal scratch']
  #allocation2 [shape = 'f32[16,256]{1,0:T(8,128)}', space=vmem, size = 0x4000, scoped, tag = 'scratch operand']
  %s0 = inlined_call_operand.vmem [shape: f32[2,16,32], index: 0, kind: input, shape index: {}]
  %s1 = inlined_call_operand.vmem [shape: f32[2,16,32], index: 1, kind: input, shape index: {}]
  %s2 = inlined_call_operand.hbm [shape: bf16[32,128], index: 2, kind: input, shape index: {}]
  %s3 = inlined_call_operand.vmem [shape: f32[1,128], index: 3, kind: input, shape index: {}]
  %s4 = inlined_call_operand.vmem [shape: bf16[32,256], index: 4, kind: input, shape index: {}]
  %s5 = inlined_call_operand.hbm [shape: f32[1,256], index: 5, kind: input, shape index: {}]
  %s6 = inlined_call_operand.hbm [shape: bf16[32,256], index: 6, kind: input, shape index: {}]
  %s7 = inlined_call_operand.hbm [shape: f32[1,256], index: 7, kind: input, shape index: {}]
  %s8 = inlined_call_operand.vmem [shape: bf16[8,256], index: 8, kind: input, shape index: {}]
  %s9 = inlined_call_operand.vmem [shape: f32[2,16,128], index: 9, kind: output, shape index: {0}]
  %s10 = inlined_call_operand.vmem [shape: f32[2,8,256], index: 10, kind: output, shape index: {1}]
  %11 = xla_tuple %s9, %s10
  %s12 = sld [smem:[#allocation0]]
  $region97: #{set_decoder_forward.5} parent=0
    _
  %s14 = ssub.s32 1, %s12
  %s15 = scalar_select 0, %s14, %s12
  $region1: #{set_decoder_forward.5} parent=0
    #allocation3 [shape = 'u8[8192]{0}', space=vmem, size = 0x2000, scoped, tag = 'input window, operand 2, single buffered']
    #allocation4 [shape = 's32[2]{0}', space=sflag, size = 0x8, scoped, tag = 'scoped memory for set_decoder_forward.5']
    #allocation5 [shape = 'u8[1024]{0}', space=vmem, size = 0x400, scoped, tag = 'input window, operand 5, single buffered']
    #allocation6 [shape = 's32[1]{0}', space=sflag, size = 0x4, scoped, tag = 'scoped memory for set_decoder_forward.5']
    #allocation7 [shape = 'u8[16384]{0}', space=vmem, size = 0x4000, scoped, tag = 'input window, operand 6, single buffered']
    #allocation8 [shape = 'u8[1024]{0}', space=vmem, size = 0x400, scoped, tag = 'input window, operand 7, single buffered']
    #allocation9 [shape = 's32[1]{0}', space=sflag, size = 0x4, scoped, tag = 'scoped memory for set_decoder_forward.5']
    %16 = vsyncpa [#allocation4], 0
    %17 = vsyncpa [#allocation6], 0
    %18 = vsyncpa [#allocation9], 0
    loop: start=0, step=1, limit=6
    $region2: #{set_decoder_forward.5} parent=1 // loop_pre_header
      _
    $region3: #{set_decoder_forward.5} parent=1 // loop_header
      %s20 = sphi 0, %s24
      %p21 = scmp.ge.s32.totalorder %s20, 6
      %s27 = sphi 0, %s39
      %s28 = sphi 0, %s35
      %s29 = sphi 0, %s27
      %s30 = sphi 0, %s28
      %s31 = sphi 0, %s29
      %s32 = sphi 0, %s30
      %s44 = sphi 0, %s46
      %s47 = sphi 0, %s44
      %s48 = sphi 0, %s47
      %s64 = sphi 0, %s48
      %s70 = sphi 0, %s72
      %s73 = sphi 0, %s70
      %s74 = sphi 0, %s73
      %s90 = sphi 0, %s74
      %s94 = sphi 0, %s94
      %s96 = sphi 0, %s94
      %s97 = sphi 0, %s96
      %s111 = sphi 0, %s97
      %s115 = sphi 0, %s115
      %s117 = sphi 0, %s115
      %s118 = sphi 0, %s117
      %s132 = sphi 0, %s118
      %s136 = sphi 0, %s136
      %s138 = sphi 0, %s136
      %s139 = sphi 0, %s138
      %s153 = sphi 0, %s139
      %s157 = sphi 0, %s157
      %s159 = sphi 0, %s157
      %s160 = sphi 0, %s159
      %s174 = sphi 0, %s160
      %s178 = sphi 0, %s178
      %s180 = sphi 0, %s178
      %s181 = sphi 0, %s180
      %s195 = sphi 0, %s181
      %s199 = sphi 0, %s199
      %s201 = sphi 0, %s199
      %s202 = sphi 0, %s201
      %s216 = sphi 0, %s202
      %s220 = sphi 0, %s220
      %s222 = sphi 0, %s220
      %s223 = sphi 0, %s222
      %s237 = sphi 0, %s223
      %s245 = sphi 0, %s247
      %s248 = sphi 0, %s245
      %s249 = sphi 0, %s248
      %s265 = sphi 0, %s249
      %s273 = sphi 0, %s275
      %s276 = sphi 0, %s273
      %s277 = sphi 0, %s276
      %s293 = sphi 0, %s277
    $region4: #{set_decoder_forward.5} parent=1 // loop_header_branch
      %23 = sbr.rel (%p21) target = $region8
    $region5: #{set_decoder_forward.5} parent=1 // loop_body
      %s25 = ssub.s32 %s20, 1
      %s26 = ssub.s32 %s20, 2
      %s33 = sadd.s32 1, %s28
      %p34 = scmp.ge.s32.totalorder %s33, 2
      %s35 = scalar_select %p34, 0, %s33
      %s36 = sadd.s32 1, %s27
      %s37 = scalar_select %p34, %s36, %s27
      %p38 = scmp.ge.s32.totalorder %s37, 2
      %s39 = scalar_select %p38, 0, %s37
      %s40 = ssub.s32 %s27, %s39
      %s41 = ssub.s32 %s28, %s35
      %s42 = sor.u32 %s40, %s41
      %p43 = scmp.eq.s32.totalorder %s42, 0
      %s45 = sadd.s32 %s44, 1
      %s46 = scalar_select %p43, %s44, %s45
      %p49 = pneg %p43
      %p50 = scmp.eq.s32.totalorder %s20, 3
      %p51 = por %p49, %p50
      %p52 = scmp.ne.s32.totalorder %s44, %s47
      %p53 = scmp.eq.s32.totalorder %s20, 0
      %p54 = por %p52, %p53
      %p55 = scmp.ne.s32.totalorder %s44, %s47
      %p56 = scmp.eq.s32.totalorder %s25, 3
      %p57 = por %p55, %p56
      %p58 = scmp.ne.s32.totalorder %s47, %s48
      %p59 = scmp.eq.s32.totalorder %s25, 0
      %p60 = por %p58, %p59
      %p61 = scmp.ne.s32.totalorder %s47, %s48
      %p62 = scmp.eq.s32.totalorder %s26, 3
      %p63 = por %p61, %p62
      %p65 = scmp.ne.s32.totalorder %s48, %s64
      %p66 = scmp.eq.s32.totalorder %s26, 0
      %p67 = por %p65, %p66
      %s68 = ssub.s32 %s27, %s39
      %p69 = scmp.eq.s32.totalorder %s68, 0
      %s71 = sadd.s32 %s70, 1
      %s72 = scalar_select %p69, %s70, %s71
      %p75 = pneg %p69
      %p76 = scmp.eq.s32.totalorder %s20, 3
      %p77 = por %p75, %p76
      %p78 = scmp.ne.s32.totalorder %s70, %s73
      %p79 = scmp.eq.s32.totalorder %s20, 0
      %p80 = por %p78, %p79
      %p81 = scmp.ne.s32.totalorder %s70, %s73
      %p82 = scmp.eq.s32.totalorder %s25, 3
      %p83 = por %p81, %p82
      %p84 = scmp.ne.s32.totalorder %s73, %s74
      %p85 = scmp.eq.s32.totalorder %s25, 0
      %p86 = por %p84, %p85
      %p87 = scmp.ne.s32.totalorder %s73, %s74
      %p88 = scmp.eq.s32.totalorder %s26, 3
      %p89 = por %p87, %p88
      %p91 = scmp.ne.s32.totalorder %s74, %s90
      %p92 = scmp.eq.s32.totalorder %s26, 0
      %p93 = por %p91, %p92
      %s95 = sadd.s32 %s94, 1
      %p98 = scmp.eq.s32.totalorder %s20, 3
      %p99 = scmp.ne.s32.totalorder %s94, %s96
      %p100 = scmp.eq.s32.totalorder %s20, 0
      %p101 = por %p99, %p100
      %p102 = scmp.ne.s32.totalorder %s94, %s96
      %p103 = scmp.eq.s32.totalorder %s25, 3
      %p104 = por %p102, %p103
      %p105 = scmp.ne.s32.totalorder %s96, %s97
      %p106 = scmp.eq.s32.totalorder %s25, 0
      %p107 = por %p105, %p106
      %p108 = scmp.ne.s32.totalorder %s96, %s97
      %p109 = scmp.eq.s32.totalorder %s26, 3
      %p110 = por %p108, %p109
      %p112 = scmp.ne.s32.totalorder %s97, %s111
      %p113 = scmp.eq.s32.totalorder %s26, 0
      %p114 = por %p112, %p113
      %s116 = sadd.s32 %s115, 1
      %p119 = scmp.eq.s32.totalorder %s20, 3
      %p120 = scmp.ne.s32.totalorder %s115, %s117
      %p121 = scmp.eq.s32.totalorder %s20, 0
      %p122 = por %p120, %p121
      %p123 = scmp.ne.s32.totalorder %s115, %s117
      %p124 = scmp.eq.s32.totalorder %s25, 3
      %p125 = por %p123, %p124
      %p126 = scmp.ne.s32.totalorder %s117, %s118
      %p127 = scmp.eq.s32.totalorder %s25, 0
      %p128 = por %p126, %p127
      %p129 = scmp.ne.s32.totalorder %s117, %s118
      %p130 = scmp.eq.s32.totalorder %s26, 3
      %p131 = por %p129, %p130
      %p133 = scmp.ne.s32.totalorder %s118, %s132
      %p134 = scmp.eq.s32.totalorder %s26, 0
      %p135 = por %p133, %p134
      %s137 = sadd.s32 %s136, 1
      %p140 = scmp.eq.s32.totalorder %s20, 3
      %p141 = scmp.ne.s32.totalorder %s136, %s138
      %p142 = scmp.eq.s32.totalorder %s20, 0
      %p143 = por %p141, %p142
      %p144 = scmp.ne.s32.totalorder %s136, %s138
      %p145 = scmp.eq.s32.totalorder %s25, 3
      %p146 = por %p144, %p145
      %p147 = scmp.ne.s32.totalorder %s138, %s139
      %p148 = scmp.eq.s32.totalorder %s25, 0
      %p149 = por %p147, %p148
      %p150 = scmp.ne.s32.totalorder %s138, %s139
      %p151 = scmp.eq.s32.totalorder %s26, 3
      %p152 = por %p150, %p151
      %p154 = scmp.ne.s32.totalorder %s139, %s153
      %p155 = scmp.eq.s32.totalorder %s26, 0
      %p156 = por %p154, %p155
      %s158 = sadd.s32 %s157, 1
      %p161 = scmp.eq.s32.totalorder %s20, 3
      %p162 = scmp.ne.s32.totalorder %s157, %s159
      %p163 = scmp.eq.s32.totalorder %s20, 0
      %p164 = por %p162, %p163
      %p165 = scmp.ne.s32.totalorder %s157, %s159
      %p166 = scmp.eq.s32.totalorder %s25, 3
      %p167 = por %p165, %p166
      %p168 = scmp.ne.s32.totalorder %s159, %s160
      %p169 = scmp.eq.s32.totalorder %s25, 0
      %p170 = por %p168, %p169
      %p171 = scmp.ne.s32.totalorder %s159, %s160
      %p172 = scmp.eq.s32.totalorder %s26, 3
      %p173 = por %p171, %p172
      %p175 = scmp.ne.s32.totalorder %s160, %s174
      %p176 = scmp.eq.s32.totalorder %s26, 0
      %p177 = por %p175, %p176
      %s179 = sadd.s32 %s178, 1
      %p182 = scmp.eq.s32.totalorder %s20, 3
      %p183 = scmp.ne.s32.totalorder %s178, %s180
      %p184 = scmp.eq.s32.totalorder %s20, 0
      %p185 = por %p183, %p184
      %p186 = scmp.ne.s32.totalorder %s178, %s180
      %p187 = scmp.eq.s32.totalorder %s25, 3
      %p188 = por %p186, %p187
      %p189 = scmp.ne.s32.totalorder %s180, %s181
      %p190 = scmp.eq.s32.totalorder %s25, 0
      %p191 = por %p189, %p190
      %p192 = scmp.ne.s32.totalorder %s180, %s181
      %p193 = scmp.eq.s32.totalorder %s26, 3
      %p194 = por %p192, %p193
      %p196 = scmp.ne.s32.totalorder %s181, %s195
      %p197 = scmp.eq.s32.totalorder %s26, 0
      %p198 = por %p196, %p197
      %s200 = sadd.s32 %s199, 1
      %p203 = scmp.eq.s32.totalorder %s20, 3
      %p204 = scmp.ne.s32.totalorder %s199, %s201
      %p205 = scmp.eq.s32.totalorder %s20, 0
      %p206 = por %p204, %p205
      %p207 = scmp.ne.s32.totalorder %s199, %s201
      %p208 = scmp.eq.s32.totalorder %s25, 3
      %p209 = por %p207, %p208
      %p210 = scmp.ne.s32.totalorder %s201, %s202
      %p211 = scmp.eq.s32.totalorder %s25, 0
      %p212 = por %p210, %p211
      %p213 = scmp.ne.s32.totalorder %s201, %s202
      %p214 = scmp.eq.s32.totalorder %s26, 3
      %p215 = por %p213, %p214
      %p217 = scmp.ne.s32.totalorder %s202, %s216
      %p218 = scmp.eq.s32.totalorder %s26, 0
      %p219 = por %p217, %p218
      %s221 = sadd.s32 %s220, 1
      %p224 = scmp.eq.s32.totalorder %s20, 3
      %p225 = scmp.ne.s32.totalorder %s220, %s222
      %p226 = scmp.eq.s32.totalorder %s20, 0
      %p227 = por %p225, %p226
      %p228 = scmp.ne.s32.totalorder %s220, %s222
      %p229 = scmp.eq.s32.totalorder %s25, 3
      %p230 = por %p228, %p229
      %p231 = scmp.ne.s32.totalorder %s222, %s223
      %p232 = scmp.eq.s32.totalorder %s25, 0
      %p233 = por %p231, %p232
      %p234 = scmp.ne.s32.totalorder %s222, %s223
      %p235 = scmp.eq.s32.totalorder %s26, 3
      %p236 = por %p234, %p235
      %p238 = scmp.ne.s32.totalorder %s223, %s237
      %p239 = scmp.eq.s32.totalorder %s26, 0
      %p240 = por %p238, %p239
      %s241 = ssub.s32 %s27, %s39
      %s242 = ssub.s32 %s28, %s35
      %s243 = sor.u32 %s241, %s242
      %p244 = scmp.eq.s32.totalorder %s243, 0
      %s246 = sadd.s32 %s245, 1
      %s247 = scalar_select %p244, %s245, %s246
      %p250 = pneg %p244
      %p251 = scmp.eq.s32.totalorder %s20, 3
      %p252 = por %p250, %p251
      %p253 = scmp.ne.s32.totalorder %s245, %s248
      %p254 = scmp.eq.s32.totalorder %s20, 0
      %p255 = por %p253, %p254
      %p256 = scmp.ne.s32.totalorder %s245, %s248
      %p257 = scmp.eq.s32.totalorder %s25, 3
      %p258 = por %p256, %p257
      %p259 = scmp.ne.s32.totalorder %s248, %s249
      %p260 = scmp.eq.s32.totalorder %s25, 0
      %p261 = por %p259, %p260
      %p262 = scmp.ne.s32.totalorder %s248, %s249
      %p263 = scmp.eq.s32.totalorder %s26, 3
      %p264 = por %p262, %p263
      %p266 = scmp.ne.s32.totalorder %s249, %s265
      %p267 = scmp.eq.s32.totalorder %s26, 0
      %p268 = por %p266, %p267
      %s269 = ssub.s32 %s27, %s39
      %s270 = ssub.s32 %s28, %s35
      %s271 = sor.u32 %s269, %s270
      %p272 = scmp.eq.s32.totalorder %s271, 0
      %s274 = sadd.s32 %s273, 1
      %s275 = scalar_select %p272, %s273, %s274
      %p278 = pneg %p272
      %p279 = scmp.eq.s32.totalorder %s20, 3
      %p280 = por %p278, %p279
      %p281 = scmp.ne.s32.totalorder %s273, %s276
      %p282 = scmp.eq.s32.totalorder %s20, 0
      %p283 = por %p281, %p282
      %p284 = scmp.ne.s32.totalorder %s273, %s276
      %p285 = scmp.eq.s32.totalorder %s25, 3
      %p286 = por %p284, %p285
      %p287 = scmp.ne.s32.totalorder %s276, %s277
      %p288 = scmp.eq.s32.totalorder %s25, 0
      %p289 = por %p287, %p288
      %p290 = scmp.ne.s32.totalorder %s276, %s277
      %p291 = scmp.eq.s32.totalorder %s26, 3
      %p292 = por %p290, %p291
      %p294 = scmp.ne.s32.totalorder %s277, %s293
      %p295 = scmp.eq.s32.totalorder %s26, 0
      %p296 = por %p294, %p295
      %p297 = scmp.le.s32.totalorder 1, %s20
      %p298 = scmp.lt.s32.totalorder %s20, 5
      %p299 = pnand %p297, %p298
      %p300 = pneg %p299
      // Predicated region
      $region9: #{set_decoder_forward.5} parent=5 // pred_check
        _
      $region10: #{set_decoder_forward.5} parent=5 // pred_check_branch
        %302 = sbr.rel (%p299) target = $region12
      $region11: #{set_decoder_forward.5} parent=5 // pred_region
        %s303 = ssub.s32 %s20, 1
        // Predicated region
        $region13: #{set_decoder_forward.5} parent=11 // pred_check
          %p304 = pneg %p107
        $region14: #{set_decoder_forward.5} parent=11 // pred_check_branch
          %306 = sbr.rel (%p304) target = $region16
        $region15: #{set_decoder_forward.5} parent=11 // pred_region
          %308 = vsyncadd [#allocation4], 0
          %s309 = sshll.u32 %s2, 4
          %s310 = int_to_ptr.hbm [resolvable:$true] %s309
          %s311 = sshll.u32 [#allocation3], 4
          %s312 = int_to_ptr.vmem [resolvable:$true] %s311
          %317 = dma.hbm_to_vmem [thread:$0]  %s310, 256, %s312, [#allocation4], 64, 64, 4
        $region16: #{set_decoder_forward.5} parent=11 // pred_fallthru
          _
        // Predicated region
        $region17: #{set_decoder_forward.5} parent=11 // pred_check
          %p318 = pneg %p128
        $region18: #{set_decoder_forward.5} parent=11 // pred_check_branch
          %320 = sbr.rel (%p318) target = $region20
        $region19: #{set_decoder_forward.5} parent=11 // pred_region
          _
        $region20: #{set_decoder_forward.5} parent=11 // pred_fallthru
          _
        // Predicated region
        $region21: #{set_decoder_forward.5} parent=11 // pred_check
          %p321 = pneg %p149
        $region22: #{set_decoder_forward.5} parent=11 // pred_check_branch
          %323 = sbr.rel (%p321) target = $region24
        $region23: #{set_decoder_forward.5} parent=11 // pred_region
          _
        $region24: #{set_decoder_forward.5} parent=11 // pred_fallthru
          _
        // Predicated region
        $region25: #{set_decoder_forward.5} parent=11 // pred_check
          %p324 = pneg %p170
        $region26: #{set_decoder_forward.5} parent=11 // pred_check_branch
          %326 = sbr.rel (%p324) target = $region28
        $region27: #{set_decoder_forward.5} parent=11 // pred_region
          %328 = vsyncadd [#allocation6], 0
          %s330 = sshll.u32 %s5, 4
          %s331 = int_to_ptr.hbm [resolvable:$true] %s330
          %s332 = sshll.u32 [#allocation5], 4
          %s333 = int_to_ptr.vmem [resolvable:$true] %s332
          %335 = dma.hbm_to_vmem [thread:$0]  %s331, 32, %s333, [#allocation6]
        $region28: #{set_decoder_forward.5} parent=11 // pred_fallthru
          _
        // Predicated region
        $region29: #{set_decoder_forward.5} parent=11 // pred_check
          %p336 = pneg %p191
        $region30: #{set_decoder_forward.5} parent=11 // pred_check_branch
          %338 = sbr.rel (%p336) target = $region32
        $region31: #{set_decoder_forward.5} parent=11 // pred_region
          %340 = vsyncadd [#allocation6], 0
          %s341 = sshll.u32 %s6, 4
          %s342 = int_to_ptr.hbm [resolvable:$true] %s341
          %s343 = sshll.u32 [#allocation7], 4
          %s344 = int_to_ptr.vmem [resolvable:$true] %s343
          %349 = dma.hbm_to_vmem [thread:$0]  %s342, 512, %s344, [#allocation6], 128, 128, 8
        $region32: #{set_decoder_forward.5} parent=11 // pred_fallthru
          _
        // Predicated region
        $region33: #{set_decoder_forward.5} parent=11 // pred_check
          %p350 = pneg %p212
        $region34: #{set_decoder_forward.5} parent=11 // pred_check_branch
          %352 = sbr.rel (%p350) target = $region36
        $region35: #{set_decoder_forward.5} parent=11 // pred_region
          %354 = vsyncadd [#allocation9], 0
          %s356 = sshll.u32 %s7, 4
          %s357 = int_to_ptr.hbm [resolvable:$true] %s356
          %s358 = sshll.u32 [#allocation8], 4
          %s359 = int_to_ptr.vmem [resolvable:$true] %s358
          %361 = dma.hbm_to_vmem [thread:$0]  %s357, 32, %s359, [#allocation9]
        $region36: #{set_decoder_forward.5} parent=11 // pred_fallthru
          _
        // Predicated region
        $region37: #{set_decoder_forward.5} parent=11 // pred_check
          %p362 = pneg %p233
        $region38: #{set_decoder_forward.5} parent=11 // pred_check_branch
          %364 = sbr.rel (%p362) target = $region40
        $region39: #{set_decoder_forward.5} parent=11 // pred_region
          _
        $region40: #{set_decoder_forward.5} parent=11 // pred_fallthru
          _
      $region12: #{set_decoder_forward.5} parent=5 // pred_fallthru
        _
      %p365 = scmp.lt.s32.totalorder %s20, 4
      // Predicated region
      $region41: #{set_decoder_forward.5} parent=5 // pred_check
        %p366 = pneg %p365
      $region42: #{set_decoder_forward.5} parent=5 // pred_check_branch
        %368 = sbr.rel (%p366) target = $region44
      $region43: #{set_decoder_forward.5} parent=5 // pred_region
        // Predicated region
        $region45: #{set_decoder_forward.5} parent=43 // pred_check
          %p369 = pneg %p54
        $region46: #{set_decoder_forward.5} parent=43 // pred_check_branch
          %371 = sbr.rel (%p369) target = $region48
        $region47: #{set_decoder_forward.5} parent=43 // pred_region
          %p372 = scmp.lt.s32.totalorder %s27, 1
          %s373 = scalar_select %p372, %s27, 1
          %p374 = scmp.lt.s32.totalorder %s28, 1
          %s375 = scalar_select %p374, %s28, 1
          %s376 = smul.addr %s373, 2
          %s377 = sadd.s32 %s375, %s376
          %s378 = smul.addr %s377, 8
          %s379 = scalar_lea.vmem %s0, %s378
        $region48: #{set_decoder_forward.5} parent=43 // pred_fallthru
          _
        // Predicated region
        $region49: #{set_decoder_forward.5} parent=43 // pred_check
          %p380 = pneg %p80
        $region50: #{set_decoder_forward.5} parent=43 // pred_check_branch
          %382 = sbr.rel (%p380) target = $region52
        $region51: #{set_decoder_forward.5} parent=43 // pred_region
          %p383 = scmp.lt.s32.totalorder %s27, 1
          %s384 = scalar_select %p383, %s27, 1
          %s385 = smul.addr %s384, 2
          %s386 = smul.addr %s385, 8
          %s387 = scalar_lea.vmem %s1, %s386
        $region52: #{set_decoder_forward.5} parent=43 // pred_fallthru
          _
      $region44: #{set_decoder_forward.5} parent=5 // pred_fallthru
        _
      %p388 = scmp.le.s32.totalorder 1, %s20
      %p389 = scmp.lt.s32.totalorder %s20, 5
      %p390 = pnand %p388, %p389
      %p391 = pneg %p390
      // Predicated region
      $region53: #{set_decoder_forward.5} parent=5 // pred_check
        _
      $region54: #{set_decoder_forward.5} parent=5 // pred_check_branch
        %393 = sbr.rel (%p390) target = $region56
      $region55: #{set_decoder_forward.5} parent=5 // pred_region
        %s394 = ssub.s32 %s20, 1
        // Predicated region
        $region57: #{set_decoder_forward.5} parent=55 // pred_check
          %p395 = pneg %p107
        $region58: #{set_decoder_forward.5} parent=55 // pred_check_branch
          %397 = sbr.rel (%p395) target = $region60
        $region59: #{set_decoder_forward.5} parent=55 // pred_region
          %399 = dma.done [#allocation4], 256
        $region60: #{set_decoder_forward.5} parent=55 // pred_fallthru
          _
        // Predicated region
        $region61: #{set_decoder_forward.5} parent=55 // pred_check
          %p400 = pneg %p170
        $region62: #{set_decoder_forward.5} parent=55 // pred_check_branch
          %402 = sbr.rel (%p400) target = $region64
        $region63: #{set_decoder_forward.5} parent=55 // pred_region
          %404 = dma.done [#allocation6], 32
        $region64: #{set_decoder_forward.5} parent=55 // pred_fallthru
          _
        // Predicated region
        $region65: #{set_decoder_forward.5} parent=55 // pred_check
          %p405 = pneg %p191
        $region66: #{set_decoder_forward.5} parent=55 // pred_check_branch
          %407 = sbr.rel (%p405) target = $region68
        $region67: #{set_decoder_forward.5} parent=55 // pred_region
          %409 = dma.done [#allocation6], 512
        $region68: #{set_decoder_forward.5} parent=55 // pred_fallthru
          _
        // Predicated region
        $region69: #{set_decoder_forward.5} parent=55 // pred_check
          %p410 = pneg %p212
        $region70: #{set_decoder_forward.5} parent=55 // pred_check_branch
          %412 = sbr.rel (%p410) target = $region72
        $region71: #{set_decoder_forward.5} parent=55 // pred_region
          %414 = dma.done [#allocation9], 32
        $region72: #{set_decoder_forward.5} parent=55 // pred_fallthru
          _
        %p415 = scmp.lt.s32.totalorder %s29, 1
        %s416 = scalar_select %p415, %s29, 1
        %p417 = scmp.lt.s32.totalorder %s30, 1
        %s418 = scalar_select %p417, %s30, 1
        %s419 = smul.addr %s416, 2
        %s420 = sadd.s32 %s418, %s419
        %s421 = smul.addr %s420, 8
        %s422 = scalar_lea.vmem %s0, %s421
        %p423 = pneg %p60
        %p424 = pneg %p57
        %p425 = scmp.lt.s32.totalorder %s29, 1
        %s426 = scalar_select %p425, %s29, 1
        %s427 = smul.addr %s426, 2
        %s428 = smul.addr %s427, 8
        %s429 = scalar_lea.vmem %s1, %s428
        %p430 = pneg %p86
        %p431 = pneg %p83
        %p432 = pneg %p107
        %p433 = pneg %p104
        %p434 = pneg %p128
        %p435 = pneg %p125
        %p436 = pneg %p149
        %p437 = pneg %p146
        %p438 = pneg %p170
        %p439 = pneg %p167
        %p440 = pneg %p191
        %p441 = pneg %p188
        %p442 = pneg %p212
        %p443 = pneg %p209
        %p444 = pneg %p233
        %p445 = pneg %p230
        %p446 = pneg %p261
        %p447 = pneg %p258
        %p448 = scmp.lt.s32.totalorder %s29, 1
        %s449 = scalar_select %p448, %s29, 1
        %p450 = scmp.lt.s32.totalorder %s30, 1
        %s451 = scalar_select %p450, %s30, 1
        %s452 = smul.addr %s449, 2
        %s453 = sadd.s32 %s451, %s452
        %s454 = smul.addr %s453, 8
        %s455 = scalar_lea.vmem %s9, %s454
        %p456 = pneg %p289
        %p457 = pneg %p286
        %p458 = scmp.lt.s32.totalorder %s29, 1
        %s459 = scalar_select %p458, %s29, 1
        %p460 = scmp.lt.s32.totalorder %s30, 1
        %s461 = scalar_select %p460, %s30, 1
        %s462 = smul.addr %s459, 2
        %s463 = sadd.s32 %s461, %s462
        %s464 = smul.addr %s463, 8
        %s465 = scalar_lea.vmem %s10, %s464
        %p466 = scmp.lt.s32.totalorder %s29, 1
        %s467 = scalar_select %p466, %s29, 1
        %p468 = scmp.lt.s32.totalorder %s30, 1
        %s469 = scalar_select %p468, %s30, 1
        %s470 = smul.addr %s467, 2
        %s471 = sadd.s32 %s469, %s470
        %s472 = smul.addr %s471, 8
        %s473 = scalar_lea.vmem %s0, %s472
        %p474 = scmp.lt.s32.totalorder %s29, 1
        %s475 = scalar_select %p474, %s29, 1
        %s476 = smul.addr %s475, 2
        %s477 = smul.addr %s476, 8
        %s478 = scalar_lea.vmem %s1, %s477
        %p479 = scmp.lt.s32.totalorder %s29, 1
        %s480 = scalar_select %p479, %s29, 1
        %p481 = scmp.lt.s32.totalorder %s30, 1
        %s482 = scalar_select %p481, %s30, 1
        %s483 = smul.addr %s480, 2
        %s484 = sadd.s32 %s482, %s483
        %s485 = smul.addr %s484, 8
        %s486 = scalar_lea.vmem %s9, %s485
        %p487 = scmp.lt.s32.totalorder %s29, 1
        %s488 = scalar_select %p487, %s29, 1
        %p489 = scmp.lt.s32.totalorder %s30, 1
        %s490 = scalar_select %p489, %s30, 1
        %s491 = smul.addr %s488, 2
        %s492 = sadd.s32 %s490, %s491
        %s493 = smul.addr %s492, 8
        %s494 = scalar_lea.vmem %s10, %s493
        %p496 = scmp.eq.s32.totalorder %s30, 0
        // Predicated region
        $region73: #{set_decoder_forward.5} parent=55 // pred_check
          %p497 = pneg %p496
        $region74: #{set_decoder_forward.5} parent=55 // pred_check_branch
          %499 = sbr.rel (%p497) target = $region76
        $region75: #{set_decoder_forward.5} parent=55 // pred_region
          %v500 = vld [vmem:[%s478] sm:$0xff]
          %v501 = vld [vmem:[%s478 + $0x8] sm:$0xff]
          %v502 = vpack.c.bf16 %v501, %v500
          %v503 = vld [vmem:[#allocation7] sm:$0xff]
          %v504 = vld [vmem:[#allocation7 + $0x8] sm:$0xff]
          %v505 = vld [vmem:[#allocation7 + $0x10] sm:$0xff]
          %v506 = vld [vmem:[#allocation7 + $0x18] sm:$0xff]
          %v507 = vld [vmem:[#allocation8] sm:$0x3]
          %v509 = vperm.slane %v507, 0
          %v510 = vperm.slane %v507, 1
          %v517 = vunpack.c.l.b16 %v503
          %v518 = vunpack.c.h.b16 %v503
          %v519 = vunpack.c.l.b16 %v504
          %v520 = vunpack.c.h.b16 %v504
          %v521 = vunpack.c.l.b16 %v505
          %v522 = vunpack.c.h.b16 %v505
          %v523 = vunpack.c.l.b16 %v506
          %v524 = vunpack.c.h.b16 %v506
          %v525 = vpack.c.b16 %v519, %v517
          %v526 = vpack.c.b16 %v520, %v518
          %v527 = vpack.c.b16 %v523, %v521
          %v528 = vpack.c.b16 %v524, %v522
          %vm533 = vcmask 261120
          %v535 = vsel %vm533, %v502, 0
          %537 = vmatpush.bf16.msra.mxu0 0
          %538 = vmatpush.bf16.msra.mxu0 0
          %539 = vmatpush.bf16.msra.mxu0 0
          %540 = vmatpush.bf16.msra.mxu0 0
          %541 = vmatpush.bf16.msra.mxu0 0
          %542 = vmatpush.bf16.msra.mxu0 0
          %543 = vmatpush.bf16.msra.mxu0 %v527
          %544 = vmatpush.bf16.msra.mxu0 %v525
          %545 = vmatmul.bf16.gmra.mxu0 %v535
          %v546 = vpop.f32.mrf.mxu0
          %v547 = vadd.f32 %v509, %v546
          %v548 = vpop.f32.mrf.mxu0
          %v549 = vadd.f32 %v509, %v548
          %550 = vdwg.mxu0
          %551 = vmatpush.bf16.msra.mxu0 0
          %552 = vmatpush.bf16.msra.mxu0 0
          %553 = vmatpush.bf16.msra.mxu0 0
          %554 = vmatpush.bf16.msra.mxu0 0
          %555 = vmatpush.bf16.msra.mxu0 0
          %556 = vmatpush.bf16.msra.mxu0 0
          %557 = vmatpush.bf16.msra.mxu0 %v528
          %558 = vmatpush.bf16.msra.mxu0 %v526
          %559 = vmatmul.bf16.gmra.mxu0 %v535
          %v560 = vpop.f32.mrf.mxu0
          %v561 = vadd.f32 %v510, %v560
          %v562 = vpop.f32.mrf.mxu0
          %v563 = vadd.f32 %v510, %v562
          %564 = vdwg.mxu0
          %565 = vst [vmem:[#allocation2] sm:$0xff] %v547
          %566 = vst [vmem:[#allocation2 + $0x8] sm:$0xff] %v561
          %567 = vst [vmem:[#allocation2 + $0x10] sm:$0xff] %v549
          %568 = vst [vmem:[#allocation2 + $0x18] sm:$0xff] %v563
        $region76: #{set_decoder_forward.5} parent=55 // pred_fallthru
          _
        %v569 = vld [vmem:[%s473] sm:$0xff]
        %v570 = vpack.c.bf16 %v569, %v569
        %v571 = vld [vmem:[#allocation3] sm:$0xf]
        %v572 = vld [vmem:[#allocation3 + $0x4] sm:$0xf]
        %v573 = vld [vmem:[#allocation3 + $0x8] sm:$0xf]
        %v574 = vld [vmem:[#allocation3 + $0xc] sm:$0xf]
        %v575 = vld [vmem:[%s3] sm:$0x1]
        %v577 = vperm.slane %v575, 0
        %v583 = vunpack.c.l.b16 %v571
        %v584 = vunpack.c.l.b16 %v572
        %v585 = vunpack.c.l.b16 %v573
        %v586 = vunpack.c.l.b16 %v574
        %v587 = vpack.c.b16 %v584, %v583
        %v588 = vpack.c.b16 %v586, %v585
        %vm591 = vcmask 261120
        %v593 = vsel %vm591, %v570, 0
        %595 = vmatpush.bf16.msra.mxu0 0
        %596 = vmatpush.bf16.msra.mxu0 0
        %597 = vmatpush.bf16.msra.mxu0 0
        %598 = vmatpush.bf16.msra.mxu0 0
        %599 = vmatpush.bf16.msra.mxu0 0
        %600 = vmatpush.bf16.msra.mxu0 0
        %601 = vmatpush.bf16.msra.mxu0 %v588
        %602 = vmatpush.bf16.msra.mxu0 %v587
        %603 = vmatmul.bf16.gmra.mxu0 %v593
        %v604 = vpop.f32.mrf.mxu0
        %v605 = vadd.f32 %v577, %v604
        %v606 = vpop.f32.mrf.mxu0
        %607 = vdwg.mxu0
        %608 = vst [vmem:[%s486] sm:$0xff] %v605
        %v609 = vld [vmem:[%s4] sm:$0xff]
        %v610 = vld [vmem:[%s4 + $0x8] sm:$0xff]
        %v611 = vld [vmem:[%s4 + $0x10] sm:$0xff]
        %v612 = vld [vmem:[%s4 + $0x18] sm:$0xff]
        %v613 = vld [vmem:[#allocation5] sm:$0x3]
        %v615 = vperm.slane %v613, 0
        %v616 = vperm.slane %v613, 1
        %v623 = vunpack.c.l.b16 %v609
        %v624 = vunpack.c.h.b16 %v609
        %v625 = vunpack.c.l.b16 %v610
        %v626 = vunpack.c.h.b16 %v610
        %v627 = vunpack.c.l.b16 %v611
        %v628 = vunpack.c.h.b16 %v611
        %v629 = vunpack.c.l.b16 %v612
        %v630 = vunpack.c.h.b16 %v612
        %v631 = vpack.c.b16 %v625, %v623
        %v632 = vpack.c.b16 %v626, %v624
        %v633 = vpack.c.b16 %v629, %v627
        %v634 = vpack.c.b16 %v630, %v628
        %639 = vmatpush.bf16.msra.mxu0 0
        %640 = vmatpush.bf16.msra.mxu0 0
        %641 = vmatpush.bf16.msra.mxu0 0
        %642 = vmatpush.bf16.msra.mxu0 0
        %643 = vmatpush.bf16.msra.mxu0 0
        %644 = vmatpush.bf16.msra.mxu0 0
        %645 = vmatpush.bf16.msra.mxu0 %v633
        %646 = vmatpush.bf16.msra.mxu0 %v631
        %647 = vmatmul.bf16.gmra.mxu0 %v593
        %v648 = vpop.f32.mrf.mxu0
        %v649 = vadd.f32 %v615, %v648
        %v650 = vpop.f32.mrf.mxu0
        %651 = vdwg.mxu0
        %652 = vmatpush.bf16.msra.mxu0 0
        %653 = vmatpush.bf16.msra.mxu0 0
        %654 = vmatpush.bf16.msra.mxu0 0
        %655 = vmatpush.bf16.msra.mxu0 0
        %656 = vmatpush.bf16.msra.mxu0 0
        %657 = vmatpush.bf16.msra.mxu0 0
        %658 = vmatpush.bf16.msra.mxu0 %v634
        %659 = vmatpush.bf16.msra.mxu0 %v632
        %660 = vmatmul.bf16.gmra.mxu0 %v593
        %v661 = vpop.f32.mrf.mxu0
        %v662 = vadd.f32 %v616, %v661
        %v663 = vpop.f32.mrf.mxu0
        %664 = vdwg.mxu0
        %v667 = vrot.slane %v662, 7
        %vm668 = vcmask 1040384
        %v669 = vsel %vm668, %v649, %v667
        %vm670 = vcmask 1041409
        %v671 = vsel %vm670, %v649, %v667
        %v672 = vrot.slane %v671, 1
        %vm673 = vcmask 1042434
        %v674 = vsel %vm673, %v649, %v667
        %v675 = vrot.slane %v674, 2
        %vm676 = vcmask 1043459
        %v677 = vsel %vm676, %v649, %v667
        %v678 = vrot.slane %v677, 3
        %vm679 = vcmask 1044484
        %v680 = vsel %vm679, %v649, %v667
        %v681 = vrot.slane %v680, 4
        %vm682 = vcmask 1045509
        %v683 = vsel %vm682, %v649, %v667
        %v684 = vrot.slane %v683, 5
        %vm685 = vcmask 1046534
        %v686 = vsel %vm685, %v649, %v667
        %v687 = vrot.slane %v686, 6
        %vm688 = vcmask 1046528
        %v689 = vsel %vm688, %v667, %v649
        %v690 = vrot.slane %v689, 7
        %v691 = vld [vmem:[#allocation2] sm:$0xff]
        %v692 = vld [vmem:[#allocation2 + $0x8] sm:$0xff]
        %v693 = vld [vmem:[#allocation2 + $0x10] sm:$0xff]
        %v694 = vld [vmem:[#allocation2 + $0x18] sm:$0xff]
        %v695 = vperm.slane %v669, 0
        %v696 = vperm.slane %v669, 1
        %v697 = vperm.slane %v672, 0
        %v698 = vperm.slane %v672, 1
        %v699 = vperm.slane %v675, 0
        %v700 = vperm.slane %v675, 1
        %v701 = vperm.slane %v678, 0
        %v702 = vperm.slane %v678, 1
        %v703 = vperm.slane %v681, 0
        %v704 = vperm.slane %v681, 1
        %v705 = vperm.slane %v684, 0
        %v706 = vperm.slane %v684, 1
        %v707 = vperm.slane %v687, 0
        %v708 = vperm.slane %v687, 1
        %v709 = vperm.slane %v690, 0
        %v710 = vperm.slane %v690, 1
        %v727 = vadd.f32 %v695, %v691
        %v728 = vadd.f32 %v696, %v692
        %v729 = vadd.f32 %v695, %v693
        %v730 = vadd.f32 %v696, %v694
        %v731 = vadd.f32 %v697, %v691
        %v732 = vadd.f32 %v698, %v692
        %v733 = vadd.f32 %v697, %v693
        %v734 = vadd.f32 %v698, %v694
        %v735 = vadd.f32 %v699, %v691
        %v736 = vadd.f32 %v700, %v692
        %v737 = vadd.f32 %v699, %v693
        %v738 = vadd.f32 %v700, %v694
        %v739 = vadd.f32 %v701, %v691
        %v740 = vadd.f32 %v702, %v692
        %v741 = vadd.f32 %v701, %v693
        %v742 = vadd.f32 %v702, %v694
        %v743 = vadd.f32 %v703, %v691
        %v744 = vadd.f32 %v704, %v692
        %v745 = vadd.f32 %v703, %v693
        %v746 = vadd.f32 %v704, %v694
        %v747 = vadd.f32 %v705, %v691
        %v748 = vadd.f32 %v706, %v692
        %v749 = vadd.f32 %v705, %v693
        %v750 = vadd.f32 %v706, %v694
        %v751 = vadd.f32 %v707, %v691
        %v752 = vadd.f32 %v708, %v692
        %v753 = vadd.f32 %v707, %v693
        %v754 = vadd.f32 %v708, %v694
        %v755 = vadd.f32 %v709, %v691
        %v756 = vadd.f32 %v710, %v692
        %v757 = vadd.f32 %v709, %v693
        %v758 = vadd.f32 %v710, %v694
        %v759 = vtanh.pop %v727
        %v760 = vtanh.pop %v728
        %v761 = vtanh.pop %v729
        %v762 = vtanh.pop %v730
        %v763 = vtanh.pop %v731
        %v764 = vtanh.pop %v732
        %v765 = vtanh.pop %v733
        %v766 = vtanh.pop %v734
        %v767 = vtanh.pop %v735
        %v768 = vtanh.pop %v736
        %v769 = vtanh.pop %v737
        %v770 = vtanh.pop %v738
        %v771 = vtanh.pop %v739
        %v772 = vtanh.pop %v740
        %v773 = vtanh.pop %v741
        %v774 = vtanh.pop %v742
        %v775 = vtanh.pop %v743
        %v776 = vtanh.pop %v744
        %v777 = vtanh.pop %v745
        %v778 = vtanh.pop %v746
        %v779 = vtanh.pop %v747
        %v780 = vtanh.pop %v748
        %v781 = vtanh.pop %v749
        %v782 = vtanh.pop %v750
        %v783 = vtanh.pop %v751
        %v784 = vtanh.pop %v752
        %v785 = vtanh.pop %v753
        %v786 = vtanh.pop %v754
        %v787 = vtanh.pop %v755
        %v788 = vtanh.pop %v756
        %v789 = vtanh.pop %v757
        %v790 = vtanh.pop %v758
        %v791 = vpack.c.bf16 %v761, %v759
        %v792 = vpack.c.bf16 %v762, %v760
        %v793 = vpack.c.bf16 %v765, %v763
        %v794 = vpack.c.bf16 %v766, %v764
        %v795 = vpack.c.bf16 %v769, %v767
        %v796 = vpack.c.bf16 %v770, %v768
        %v797 = vpack.c.bf16 %v773, %v771
        %v798 = vpack.c.bf16 %v774, %v772
        %v799 = vpack.c.bf16 %v777, %v775
        %v800 = vpack.c.bf16 %v778, %v776
        %v801 = vpack.c.bf16 %v781, %v779
        %v802 = vpack.c.bf16 %v782, %v780
        %v803 = vpack.c.bf16 %v785, %v783
        %v804 = vpack.c.bf16 %v786, %v784
        %v805 = vpack.c.bf16 %v789, %v787
        %v806 = vpack.c.bf16 %v790, %v788
        %v807 = vld [vmem:[%s8] sm:$0xff]
        %v809 = vunpack.c.l.b16 %v807
        %v810 = vunpack.c.h.b16 %v807
        %v811 = vpack.c.b16 %v809, %v809
        %v812 = vpack.c.b16 %v810, %v810
        %815 = vmatpush.bf16.xpose.msra.mxu0 %v805
        %816 = vmatpush.bf16.xpose.msra.mxu0 %v803
        %817 = vmatpush.bf16.xpose.msra.mxu0 %v801
        %818 = vmatpush.bf16.xpose.msra.mxu0 %v799
        %819 = vmatpush.bf16.xpose.msra.mxu0 %v797
        %820 = vmatpush.bf16.xpose.msra.mxu0 %v795
        %821 = vmatpush.bf16.xpose.msra.mxu0 %v793
        %822 = vmatpush.bf16.xpose.msra.mxu0 %v791
        %823 = vmatmul.bf16.gmra.mxu0 %v811
        %v824 = vpop.f32.mrf.mxu0
        %v825 = vadd.f32 0.0, %v824
        %v826 = vpop.f32.mrf.mxu0
        %827 = vdwg.mxu0
        %828 = vmatpush.bf16.xpose.msra.mxu0 %v806
        %829 = vmatpush.bf16.xpose.msra.mxu0 %v804
        %830 = vmatpush.bf16.xpose.msra.mxu0 %v802
        %831 = vmatpush.bf16.xpose.msra.mxu0 %v800
        %832 = vmatpush.bf16.xpose.msra.mxu0 %v798
        %833 = vmatpush.bf16.xpose.msra.mxu0 %v796
        %834 = vmatpush.bf16.xpose.msra.mxu0 %v794
        %835 = vmatpush.bf16.xpose.msra.mxu0 %v792
        %836 = vmatmul.bf16.gmra.mxu0 %v812
        %v837 = vpop.f32.mrf.mxu0
        %v838 = vadd.f32 %v825, %v837
        %v839 = vpop.f32.mrf.mxu0
        %840 = vdwg.mxu0
        %841 = vst [vmem:[%s494] sm:$0xff] %v838
        %p842 = scmp.lt.s32.totalorder %s29, 1
        %s843 = scalar_select %p842, %s29, 1
        %p844 = scmp.lt.s32.totalorder %s30, 1
        %s845 = scalar_select %p844, %s30, 1
        %s846 = smul.addr %s843, 2
        %s847 = sadd.s32 %s845, %s846
        %s848 = smul.addr %s847, 8
        %s849 = scalar_lea.vmem %s9, %s848
        %p850 = scmp.lt.s32.totalorder %s29, 1
        %s851 = scalar_select %p850, %s29, 1
        %p852 = scmp.lt.s32.totalorder %s30, 1
        %s853 = scalar_select %p852, %s30, 1
        %s854 = smul.addr %s851, 2
        %s855 = sadd.s32 %s853, %s854
        %s856 = smul.addr %s855, 8
        %s857 = scalar_lea.vmem %s10, %s856
        // Predicated region
        $region77: #{set_decoder_forward.5} parent=55 // pred_check
          %p858 = pneg %p258
        $region78: #{set_decoder_forward.5} parent=55 // pred_check_branch
          %860 = sbr.rel (%p858) target = $region80
        $region79: #{set_decoder_forward.5} parent=55 // pred_region
          _
        $region80: #{set_decoder_forward.5} parent=55 // pred_fallthru
          _
        // Predicated region
        $region81: #{set_decoder_forward.5} parent=55 // pred_check
          %p861 = pneg %p286
        $region82: #{set_decoder_forward.5} parent=55 // pred_check_branch
          %863 = sbr.rel (%p861) target = $region84
        $region83: #{set_decoder_forward.5} parent=55 // pred_region
          _
        $region84: #{set_decoder_forward.5} parent=55 // pred_fallthru
          _
      $region56: #{set_decoder_forward.5} parent=5 // pred_fallthru
        _
      %p864 = scmp.le.s32.totalorder 2, %s20
      // Predicated region
      $region85: #{set_decoder_forward.5} parent=5 // pred_check
        %p865 = pneg %p864
      $region86: #{set_decoder_forward.5} parent=5 // pred_check_branch
        %867 = sbr.rel (%p865) target = $region88
      $region87: #{set_decoder_forward.5} parent=5 // pred_region
        %s868 = ssub.s32 %s20, 2
        // Predicated region
        $region89: #{set_decoder_forward.5} parent=87 // pred_check
          %p869 = pneg %p264
        $region90: #{set_decoder_forward.5} parent=87 // pred_check_branch
          %871 = sbr.rel (%p869) target = $region92
        $region91: #{set_decoder_forward.5} parent=87 // pred_region
          %p872 = scmp.lt.s32.totalorder %s31, 1
          %s873 = scalar_select %p872, %s31, 1
          %p874 = scmp.lt.s32.totalorder %s32, 1
          %s875 = scalar_select %p874, %s32, 1
          %s876 = smul.addr %s873, 2
          %s877 = sadd.s32 %s875, %s876
          %s878 = smul.addr %s877, 8
          %s879 = scalar_lea.vmem %s9, %s878
        $region92: #{set_decoder_forward.5} parent=87 // pred_fallthru
          _
        // Predicated region
        $region93: #{set_decoder_forward.5} parent=87 // pred_check
          %p880 = pneg %p292
        $region94: #{set_decoder_forward.5} parent=87 // pred_check_branch
          %882 = sbr.rel (%p880) target = $region96
        $region95: #{set_decoder_forward.5} parent=87 // pred_region
          %p883 = scmp.lt.s32.totalorder %s31, 1
          %s884 = scalar_select %p883, %s31, 1
          %p885 = scmp.lt.s32.totalorder %s32, 1
          %s886 = scalar_select %p885, %s32, 1
          %s887 = smul.addr %s884, 2
          %s888 = sadd.s32 %s886, %s887
          %s889 = smul.addr %s888, 8
          %s890 = scalar_lea.vmem %s10, %s889
        $region96: #{set_decoder_forward.5} parent=87 // pred_fallthru
          _
      $region88: #{set_decoder_forward.5} parent=5 // pred_fallthru
        _
    $region6: #{set_decoder_forward.5} parent=1 // loop_footer
      %s24 = sadd.s32 1, %s20
    $region7: #{set_decoder_forward.5} parent=1 // loop_footer_branch
      %19 = sbr.rel target = $region3
    $region8: #{set_decoder_forward.5} parent=1 // loop_exit
      _
    %891 = vsyncpa [#allocation4], 1
    %s892 = scalar_lea.sflag [#allocation4], 1
    %893 = vsyncpa %s892, 1
    %894 = vsyncpa [#allocation6], 1
    %895 = vsyncpa [#allocation9], 1

// kernel: set_decoder_forward.4
$region0: #{set_decoder_forward.4}
  #allocation0 [shape = 'u32[]', space=smem, size = 0x4, offset = 0x4, fixed_abs, tag = 'smem constant byte address 0x4 - core index']
  #allocation1 [shape = 'u32[72,128]{1,0:T(1,128)}', space=vmem, size = 0x9000, scoped, tag = 'internal scratch']
  %s0 = inlined_call_operand.smem [shape: u32[30], index: -1, kind: input, shape index: {}]
  %s1 = sld [smem:[%s0]]
  %s2 = scalar_lea.smem %s0, 1
  %s3 = sld [smem:[%s2]]
  %s4 = scalar_lea.smem %s0, 2
  %s5 = sld [smem:[%s4]]
  %s6 = scalar_lea.smem %s0, 3
  %s7 = sld [smem:[%s6]]
  %s8 = scalar_lea.smem %s0, 4
  %s9 = sld [smem:[%s8]]
  %s10 = scalar_lea.smem %s0, 5
  %s11 = sld [smem:[%s10]]
  %s12 = scalar_lea.smem %s0, 6
  %s13 = sld [smem:[%s12]]
  %s14 = scalar_lea.smem %s0, 7
  %s15 = sld [smem:[%s14]]
  %s16 = scalar_lea.smem %s0, 8
  %s17 = sld [smem:[%s16]]
  %s18 = scalar_lea.smem %s0, 9
  %s19 = sld [smem:[%s18]]
  %s20 = scalar_lea.smem %s0, 10
  %s21 = sld [smem:[%s20]]
  %s22 = scalar_lea.smem %s0, 11
  %s23 = sld [smem:[%s22]]
  %s24 = scalar_lea.smem %s0, 12
  %s25 = sld [smem:[%s24]]
  %s26 = scalar_lea.smem %s0, 13
  %s27 = sld [smem:[%s26]]
  %s28 = scalar_lea.smem %s0, 14
  %s29 = sld [smem:[%s28]]
  %s30 = scalar_lea.smem %s0, 15
  %s31 = sld [smem:[%s30]]
  %s32 = scalar_lea.smem %s0, 16
  %s33 = sld [smem:[%s32]]
  %s34 = scalar_lea.smem %s0, 17
  %s35 = sld [smem:[%s34]]
  %s36 = scalar_lea.smem %s0, 18
  %s37 = sld [smem:[%s36]]
  %s38 = scalar_lea.smem %s0, 19
  %s39 = sld [smem:[%s38]]
  %s40 = scalar_lea.smem %s0, 20
  %s41 = sld [smem:[%s40]]
  %s42 = scalar_lea.smem %s0, 21
  %s43 = sld [smem:[%s42]]
  %s44 = scalar_lea.smem %s0, 22
  %s45 = sld [smem:[%s44]]
  %s46 = scalar_lea.smem %s0, 23
  %s47 = sld [smem:[%s46]]
  %s48 = scalar_lea.smem %s0, 24
  %s49 = sld [smem:[%s48]]
  %s50 = scalar_lea.smem %s0, 25
  %s51 = sld [smem:[%s50]]
  %s52 = scalar_lea.smem %s0, 26
  %s53 = sld [smem:[%s52]]
  %s54 = scalar_lea.smem %s0, 27
  %s55 = sld [smem:[%s54]]
  %s56 = scalar_lea.smem %s0, 28
  %s57 = sld [smem:[%s56]]
  %s58 = scalar_lea.smem %s0, 29
  %s59 = sld [smem:[%s58]]
  %s60 = sld [smem:[#allocation0]]
  $region245: #{set_decoder_forward.4} parent=0
    _
  %s62 = ssub.s32 1, %s60
  %s63 = scalar_select 0, %s62, %s60
  $region1: #{set_decoder_forward.4} parent=0
    #allocation2 [shape = 'u8[512]{0}', space=vmem, size = 0x400, scoped, tag = 'input window, operand 4, single buffered']
    #allocation3 [shape = 's32[2]{0}', space=sflag, size = 0x8, scoped, tag = 'scoped memory for set_decoder_forward.4']
    #allocation4 [shape = 'u8[8192]{0}', space=vmem, size = 0x2000, scoped, tag = 'input window, operand 5, single buffered']
    #allocation5 [shape = 's32[1]{0}', space=sflag, size = 0x4, scoped, tag = 'scoped memory for set_decoder_forward.4']
    #allocation6 [shape = 'u8[512]{0}', space=vmem, size = 0x400, scoped, tag = 'input window, operand 6, single buffered']
    #allocation7 [shape = 'u8[8192]{0}', space=vmem, size = 0x2000, scoped, tag = 'input window, operand 7, single buffered']
    #allocation8 [shape = 's32[1]{0}', space=sflag, size = 0x4, scoped, tag = 'scoped memory for set_decoder_forward.4']
    #allocation9 [shape = 'u8[512]{0}', space=vmem, size = 0x400, scoped, tag = 'input window, operand 8, single buffered']
    #allocation10 [shape = 'u8[8192]{0}', space=vmem, size = 0x2000, scoped, tag = 'input window, operand 9, single buffered']
    #allocation11 [shape = 's32[1]{0}', space=sflag, size = 0x4, scoped, tag = 'scoped memory for set_decoder_forward.4']
    #allocation12 [shape = 'u8[512]{0}', space=vmem, size = 0x400, scoped, tag = 'input window, operand 10, single buffered']
    #allocation13 [shape = 'u8[512]{0}', space=vmem, size = 0x400, scoped, tag = 'input window, operand 11, single buffered']
    #allocation14 [shape = 's32[1]{0}', space=sflag, size = 0x4, scoped, tag = 'scoped memory for set_decoder_forward.4']
    #allocation15 [shape = 'u8[512]{0}', space=vmem, size = 0x400, scoped, tag = 'input window, operand 12, single buffered']
    #allocation16 [shape = 'u8[8192]{0}', space=vmem, size = 0x2000, scoped, tag = 'input window, operand 13, single buffered']
    #allocation17 [shape = 's32[1]{0}', space=sflag, size = 0x4, scoped, tag = 'scoped memory for set_decoder_forward.4']
    #allocation18 [shape = 'u8[512]{0}', space=vmem, size = 0x400, scoped, tag = 'input window, operand 14, single buffered']
    #allocation19 [shape = 'u8[8192]{0}', space=vmem, size = 0x2000, scoped, tag = 'input window, operand 15, single buffered']
    #allocation20 [shape = 's32[1]{0}', space=sflag, size = 0x4, scoped, tag = 'scoped memory for set_decoder_forward.4']
    #allocation21 [shape = 'u8[512]{0}', space=vmem, size = 0x400, scoped, tag = 'input window, operand 16, single buffered']
    #allocation22 [shape = 'u8[8192]{0}', space=vmem, size = 0x2000, scoped, tag = 'input window, operand 17, single buffered']
    #allocation23 [shape = 's32[1]{0}', space=sflag, size = 0x4, scoped, tag = 'scoped memory for set_decoder_forward.4']
    #allocation24 [shape = 'u8[512]{0}', space=vmem, size = 0x400, scoped, tag = 'input window, operand 18, single buffered']
    #allocation25 [shape = 'u8[8192]{0}', space=vmem, size = 0x2000, scoped, tag = 'input window, operand 19, single buffered']
    #allocation26 [shape = 's32[1]{0}', space=sflag, size = 0x4, scoped, tag = 'scoped memory for set_decoder_forward.4']
    #allocation27 [shape = 'u8[512]{0}', space=vmem, size = 0x400, scoped, tag = 'input window, operand 20, single buffered']
    #allocation28 [shape = 'u8[512]{0}', space=vmem, size = 0x400, scoped, tag = 'input window, operand 21, single buffered']
    #allocation29 [shape = 's32[1]{0}', space=sflag, size = 0x4, scoped, tag = 'scoped memory for set_decoder_forward.4']
    #allocation30 [shape = 'u8[512]{0}', space=vmem, size = 0x400, scoped, tag = 'input window, operand 22, single buffered']
    #allocation31 [shape = 'u8[8192]{0}', space=vmem, size = 0x2000, scoped, tag = 'input window, operand 23, single buffered']
    #allocation32 [shape = 's32[1]{0}', space=sflag, size = 0x4, scoped, tag = 'scoped memory for set_decoder_forward.4']
    #allocation33 [shape = 'u8[512]{0}', space=vmem, size = 0x400, scoped, tag = 'input window, operand 24, single buffered']
    #allocation34 [shape = 'u8[512]{0}', space=vmem, size = 0x400, scoped, tag = 'input window, operand 26, single buffered']
    #allocation35 [shape = 's32[1]{0}', space=sflag, size = 0x4, scoped, tag = 'scoped memory for set_decoder_forward.4']
    #allocation36 [shape = 'u8[512]{0}', space=vmem, size = 0x400, scoped, tag = 'input window, operand 27, single buffered']
    #allocation37 [shape = 'u8[512]{0}', space=vmem, size = 0x400, scoped, tag = 'input window, operand 28, single buffered']
    #allocation38 [shape = 's32[1]{0}', space=sflag, size = 0x4, scoped, tag = 'scoped memory for set_decoder_forward.4']
    %64 = vsyncpa [#allocation3], 0
    %65 = vsyncpa [#allocation5], 0
    %66 = vsyncpa [#allocation8], 0
    %67 = vsyncpa [#allocation11], 0
    %68 = vsyncpa [#allocation14], 0
    %69 = vsyncpa [#allocation17], 0
    %70 = vsyncpa [#allocation20], 0
    %71 = vsyncpa [#allocation23], 0
    %72 = vsyncpa [#allocation26], 0
    %73 = vsyncpa [#allocation29], 0
    %74 = vsyncpa [#allocation32], 0
    %75 = vsyncpa [#allocation35], 0
    %76 = vsyncpa [#allocation38], 0
    loop: start=0, step=1, limit=4
    $region2: #{set_decoder_forward.4} parent=1 // loop_pre_header
      _
    $region3: #{set_decoder_forward.4} parent=1 // loop_header
      %s78 = sphi 0, %s82
      %p79 = scmp.ge.s32.totalorder %s78, 4
      %s88 = sphi 0, %s90
      %s91 = sphi 0, %s88
      %s92 = sphi 0, %s91
      %s108 = sphi 0, %s92
      %s114 = sphi 0, %s116
      %s117 = sphi 0, %s114
      %s118 = sphi 0, %s117
      %s134 = sphi 0, %s118
      %s140 = sphi 0, %s142
      %s143 = sphi 0, %s140
      %s144 = sphi 0, %s143
      %s160 = sphi 0, %s144
      %s164 = sphi 0, %s164
      %s166 = sphi 0, %s164
      %s167 = sphi 0, %s166
      %s181 = sphi 0, %s167
      %s185 = sphi 0, %s185
      %s187 = sphi 0, %s185
      %s188 = sphi 0, %s187
      %s202 = sphi 0, %s188
      %s206 = sphi 0, %s206
      %s208 = sphi 0, %s206
      %s209 = sphi 0, %s208
      %s223 = sphi 0, %s209
      %s227 = sphi 0, %s227
      %s229 = sphi 0, %s227
      %s230 = sphi 0, %s229
      %s244 = sphi 0, %s230
      %s248 = sphi 0, %s248
      %s250 = sphi 0, %s248
      %s251 = sphi 0, %s250
      %s265 = sphi 0, %s251
      %s269 = sphi 0, %s269
      %s271 = sphi 0, %s269
      %s272 = sphi 0, %s271
      %s286 = sphi 0, %s272
      %s290 = sphi 0, %s290
      %s292 = sphi 0, %s290
      %s293 = sphi 0, %s292
      %s307 = sphi 0, %s293
      %s311 = sphi 0, %s311
      %s313 = sphi 0, %s311
      %s314 = sphi 0, %s313
      %s328 = sphi 0, %s314
      %s332 = sphi 0, %s332
      %s334 = sphi 0, %s332
      %s335 = sphi 0, %s334
      %s349 = sphi 0, %s335
      %s353 = sphi 0, %s353
      %s355 = sphi 0, %s353
      %s356 = sphi 0, %s355
      %s370 = sphi 0, %s356
      %s374 = sphi 0, %s374
      %s376 = sphi 0, %s374
      %s377 = sphi 0, %s376
      %s391 = sphi 0, %s377
      %s395 = sphi 0, %s395
      %s397 = sphi 0, %s395
      %s398 = sphi 0, %s397
      %s412 = sphi 0, %s398
      %s416 = sphi 0, %s416
      %s418 = sphi 0, %s416
      %s419 = sphi 0, %s418
      %s433 = sphi 0, %s419
      %s437 = sphi 0, %s437
      %s439 = sphi 0, %s437
      %s440 = sphi 0, %s439
      %s454 = sphi 0, %s440
      %s458 = sphi 0, %s458
      %s460 = sphi 0, %s458
      %s461 = sphi 0, %s460
      %s475 = sphi 0, %s461
      %s479 = sphi 0, %s479
      %s481 = sphi 0, %s479
      %s482 = sphi 0, %s481
      %s496 = sphi 0, %s482
      %s500 = sphi 0, %s500
      %s502 = sphi 0, %s500
      %s503 = sphi 0, %s502
      %s517 = sphi 0, %s503
      %s521 = sphi 0, %s521
      %s523 = sphi 0, %s521
      %s524 = sphi 0, %s523
      %s538 = sphi 0, %s524
      %s542 = sphi 0, %s542
      %s544 = sphi 0, %s542
      %s545 = sphi 0, %s544
      %s559 = sphi 0, %s545
      %s563 = sphi 0, %s563
      %s565 = sphi 0, %s563
      %s566 = sphi 0, %s565
      %s580 = sphi 0, %s566
      %s584 = sphi 0, %s584
      %s586 = sphi 0, %s584
      %s587 = sphi 0, %s586
      %s601 = sphi 0, %s587
      %s605 = sphi 0, %s605
      %s607 = sphi 0, %s605
      %s608 = sphi 0, %s607
      %s622 = sphi 0, %s608
      %s626 = sphi 0, %s626
      %s628 = sphi 0, %s626
      %s629 = sphi 0, %s628
      %s643 = sphi 0, %s629
      %s647 = sphi 0, %s647
      %s649 = sphi 0, %s647
      %s650 = sphi 0, %s649
      %s664 = sphi 0, %s650
      %s668 = sphi 0, %s668
      %s670 = sphi 0, %s668
      %s671 = sphi 0, %s670
      %s685 = sphi 0, %s671
      %s689 = sphi 0, %s689
      %s691 = sphi 0, %s689
      %s692 = sphi 0, %s691
      %s706 = sphi 0, %s692
      %s712 = sphi 0, %s714
      %s715 = sphi 0, %s712
      %s716 = sphi 0, %s715
      %s732 = sphi 0, %s716
    $region4: #{set_decoder_forward.4} parent=1 // loop_header_branch
      %81 = sbr.rel (%p79) target = $region8
    $region5: #{set_decoder_forward.4} parent=1 // loop_body
      %s83 = ssub.s32 %s78, 1
      %s84 = ssub.s32 %s78, 2
      %s85 = sadd.s32 %s78, 1
      %s86 = ssub.s32 %s78, %s85
      %p87 = scmp.eq.s32.totalorder %s86, 0
      %s89 = sadd.s32 %s88, 1
      %s90 = scalar_select %p87, %s88, %s89
      %p93 = pneg %p87
      %p94 = scmp.eq.s32.totalorder %s78, 1
      %p95 = por %p93, %p94
      %p96 = scmp.ne.s32.totalorder %s88, %s91
      %p97 = scmp.eq.s32.totalorder %s78, 0
      %p98 = por %p96, %p97
      %p99 = scmp.ne.s32.totalorder %s88, %s91
      %p100 = scmp.eq.s32.totalorder %s83, 1
      %p101 = por %p99, %p100
      %p102 = scmp.ne.s32.totalorder %s91, %s92
      %p103 = scmp.eq.s32.totalorder %s83, 0
      %p104 = por %p102, %p103
      %p105 = scmp.ne.s32.totalorder %s91, %s92
      %p106 = scmp.eq.s32.totalorder %s84, 1
      %p107 = por %p105, %p106
      %p109 = scmp.ne.s32.totalorder %s92, %s108
      %p110 = scmp.eq.s32.totalorder %s84, 0
      %p111 = por %p109, %p110
      %s112 = ssub.s32 %s78, %s85
      %p113 = scmp.eq.s32.totalorder %s112, 0
      %s115 = sadd.s32 %s114, 1
      %s116 = scalar_select %p113, %s114, %s115
      %p119 = pneg %p113
      %p120 = scmp.eq.s32.totalorder %s78, 1
      %p121 = por %p119, %p120
      %p122 = scmp.ne.s32.totalorder %s114, %s117
      %p123 = scmp.eq.s32.totalorder %s78, 0
      %p124 = por %p122, %p123
      %p125 = scmp.ne.s32.totalorder %s114, %s117
      %p126 = scmp.eq.s32.totalorder %s83, 1
      %p127 = por %p125, %p126
      %p128 = scmp.ne.s32.totalorder %s117, %s118
      %p129 = scmp.eq.s32.totalorder %s83, 0
      %p130 = por %p128, %p129
      %p131 = scmp.ne.s32.totalorder %s117, %s118
      %p132 = scmp.eq.s32.totalorder %s84, 1
      %p133 = por %p131, %p132
      %p135 = scmp.ne.s32.totalorder %s118, %s134
      %p136 = scmp.eq.s32.totalorder %s84, 0
      %p137 = por %p135, %p136
      %s138 = ssub.s32 %s78, %s85
      %p139 = scmp.eq.s32.totalorder %s138, 0
      %s141 = sadd.s32 %s140, 1
      %s142 = scalar_select %p139, %s140, %s141
      %p145 = pneg %p139
      %p146 = scmp.eq.s32.totalorder %s78, 1
      %p147 = por %p145, %p146
      %p148 = scmp.ne.s32.totalorder %s140, %s143
      %p149 = scmp.eq.s32.totalorder %s78, 0
      %p150 = por %p148, %p149
      %p151 = scmp.ne.s32.totalorder %s140, %s143
      %p152 = scmp.eq.s32.totalorder %s83, 1
      %p153 = por %p151, %p152
      %p154 = scmp.ne.s32.totalorder %s143, %s144
      %p155 = scmp.eq.s32.totalorder %s83, 0
      %p156 = por %p154, %p155
      %p157 = scmp.ne.s32.totalorder %s143, %s144
      %p158 = scmp.eq.s32.totalorder %s84, 1
      %p159 = por %p157, %p158
      %p161 = scmp.ne.s32.totalorder %s144, %s160
      %p162 = scmp.eq.s32.totalorder %s84, 0
      %p163 = por %p161, %p162
      %s165 = sadd.s32 %s164, 1
      %p168 = scmp.eq.s32.totalorder %s78, 1
      %p169 = scmp.ne.s32.totalorder %s164, %s166
      %p170 = scmp.eq.s32.totalorder %s78, 0
      %p171 = por %p169, %p170
      %p172 = scmp.ne.s32.totalorder %s164, %s166
      %p173 = scmp.eq.s32.totalorder %s83, 1
      %p174 = por %p172, %p173
      %p175 = scmp.ne.s32.totalorder %s166, %s167
      %p176 = scmp.eq.s32.totalorder %s83, 0
      %p177 = por %p175, %p176
      %p178 = scmp.ne.s32.totalorder %s166, %s167
      %p179 = scmp.eq.s32.totalorder %s84, 1
      %p180 = por %p178, %p179
      %p182 = scmp.ne.s32.totalorder %s167, %s181
      %p183 = scmp.eq.s32.totalorder %s84, 0
      %p184 = por %p182, %p183
      %s186 = sadd.s32 %s185, 1
      %p189 = scmp.eq.s32.totalorder %s78, 1
      %p190 = scmp.ne.s32.totalorder %s185, %s187
      %p191 = scmp.eq.s32.totalorder %s78, 0
      %p192 = por %p190, %p191
      %p193 = scmp.ne.s32.totalorder %s185, %s187
      %p194 = scmp.eq.s32.totalorder %s83, 1
      %p195 = por %p193, %p194
      %p196 = scmp.ne.s32.totalorder %s187, %s188
      %p197 = scmp.eq.s32.totalorder %s83, 0
      %p198 = por %p196, %p197
      %p199 = scmp.ne.s32.totalorder %s187, %s188
      %p200 = scmp.eq.s32.totalorder %s84, 1
      %p201 = por %p199, %p200
      %p203 = scmp.ne.s32.totalorder %s188, %s202
      %p204 = scmp.eq.s32.totalorder %s84, 0
      %p205 = por %p203, %p204
      %s207 = sadd.s32 %s206, 1
      %p210 = scmp.eq.s32.totalorder %s78, 1
      %p211 = scmp.ne.s32.totalorder %s206, %s208
      %p212 = scmp.eq.s32.totalorder %s78, 0
      %p213 = por %p211, %p212
      %p214 = scmp.ne.s32.totalorder %s206, %s208
      %p215 = scmp.eq.s32.totalorder %s83, 1
      %p216 = por %p214, %p215
      %p217 = scmp.ne.s32.totalorder %s208, %s209
      %p218 = scmp.eq.s32.totalorder %s83, 0
      %p219 = por %p217, %p218
      %p220 = scmp.ne.s32.totalorder %s208, %s209
      %p221 = scmp.eq.s32.totalorder %s84, 1
      %p222 = por %p220, %p221
      %p224 = scmp.ne.s32.totalorder %s209, %s223
      %p225 = scmp.eq.s32.totalorder %s84, 0
      %p226 = por %p224, %p225
      %s228 = sadd.s32 %s227, 1
      %p231 = scmp.eq.s32.totalorder %s78, 1
      %p232 = scmp.ne.s32.totalorder %s227, %s229
      %p233 = scmp.eq.s32.totalorder %s78, 0
      %p234 = por %p232, %p233
      %p235 = scmp.ne.s32.totalorder %s227, %s229
      %p236 = scmp.eq.s32.totalorder %s83, 1
      %p237 = por %p235, %p236
      %p238 = scmp.ne.s32.totalorder %s229, %s230
      %p239 = scmp.eq.s32.totalorder %s83, 0
      %p240 = por %p238, %p239
      %p241 = scmp.ne.s32.totalorder %s229, %s230
      %p242 = scmp.eq.s32.totalorder %s84, 1
      %p243 = por %p241, %p242
      %p245 = scmp.ne.s32.totalorder %s230, %s244
      %p246 = scmp.eq.s32.totalorder %s84, 0
      %p247 = por %p245, %p246
      %s249 = sadd.s32 %s248, 1
      %p252 = scmp.eq.s32.totalorder %s78, 1
      %p253 = scmp.ne.s32.totalorder %s248, %s250
      %p254 = scmp.eq.s32.totalorder %s78, 0
      %p255 = por %p253, %p254
      %p256 = scmp.ne.s32.totalorder %s248, %s250
      %p257 = scmp.eq.s32.totalorder %s83, 1
      %p258 = por %p256, %p257
      %p259 = scmp.ne.s32.totalorder %s250, %s251
      %p260 = scmp.eq.s32.totalorder %s83, 0
      %p261 = por %p259, %p260
      %p262 = scmp.ne.s32.totalorder %s250, %s251
      %p263 = scmp.eq.s32.totalorder %s84, 1
      %p264 = por %p262, %p263
      %p266 = scmp.ne.s32.totalorder %s251, %s265
      %p267 = scmp.eq.s32.totalorder %s84, 0
      %p268 = por %p266, %p267
      %s270 = sadd.s32 %s269, 1
      %p273 = scmp.eq.s32.totalorder %s78, 1
      %p274 = scmp.ne.s32.totalorder %s269, %s271
      %p275 = scmp.eq.s32.totalorder %s78, 0
      %p276 = por %p274, %p275
      %p277 = scmp.ne.s32.totalorder %s269, %s271
      %p278 = scmp.eq.s32.totalorder %s83, 1
      %p279 = por %p277, %p278
      %p280 = scmp.ne.s32.totalorder %s271, %s272
      %p281 = scmp.eq.s32.totalorder %s83, 0
      %p282 = por %p280, %p281
      %p283 = scmp.ne.s32.totalorder %s271, %s272
      %p284 = scmp.eq.s32.totalorder %s84, 1
      %p285 = por %p283, %p284
      %p287 = scmp.ne.s32.totalorder %s272, %s286
      %p288 = scmp.eq.s32.totalorder %s84, 0
      %p289 = por %p287, %p288
      %s291 = sadd.s32 %s290, 1
      %p294 = scmp.eq.s32.totalorder %s78, 1
      %p295 = scmp.ne.s32.totalorder %s290, %s292
      %p296 = scmp.eq.s32.totalorder %s78, 0
      %p297 = por %p295, %p296
      %p298 = scmp.ne.s32.totalorder %s290, %s292
      %p299 = scmp.eq.s32.totalorder %s83, 1
      %p300 = por %p298, %p299
      %p301 = scmp.ne.s32.totalorder %s292, %s293
      %p302 = scmp.eq.s32.totalorder %s83, 0
      %p303 = por %p301, %p302
      %p304 = scmp.ne.s32.totalorder %s292, %s293
      %p305 = scmp.eq.s32.totalorder %s84, 1
      %p306 = por %p304, %p305
      %p308 = scmp.ne.s32.totalorder %s293, %s307
      %p309 = scmp.eq.s32.totalorder %s84, 0
      %p310 = por %p308, %p309
      %s312 = sadd.s32 %s311, 1
      %p315 = scmp.eq.s32.totalorder %s78, 1
      %p316 = scmp.ne.s32.totalorder %s311, %s313
      %p317 = scmp.eq.s32.totalorder %s78, 0
      %p318 = por %p316, %p317
      %p319 = scmp.ne.s32.totalorder %s311, %s313
      %p320 = scmp.eq.s32.totalorder %s83, 1
      %p321 = por %p319, %p320
      %p322 = scmp.ne.s32.totalorder %s313, %s314
      %p323 = scmp.eq.s32.totalorder %s83, 0
      %p324 = por %p322, %p323
      %p325 = scmp.ne.s32.totalorder %s313, %s314
      %p326 = scmp.eq.s32.totalorder %s84, 1
      %p327 = por %p325, %p326
      %p329 = scmp.ne.s32.totalorder %s314, %s328
      %p330 = scmp.eq.s32.totalorder %s84, 0
      %p331 = por %p329, %p330
      %s333 = sadd.s32 %s332, 1
      %p336 = scmp.eq.s32.totalorder %s78, 1
      %p337 = scmp.ne.s32.totalorder %s332, %s334
      %p338 = scmp.eq.s32.totalorder %s78, 0
      %p339 = por %p337, %p338
      %p340 = scmp.ne.s32.totalorder %s332, %s334
      %p341 = scmp.eq.s32.totalorder %s83, 1
      %p342 = por %p340, %p341
      %p343 = scmp.ne.s32.totalorder %s334, %s335
      %p344 = scmp.eq.s32.totalorder %s83, 0
      %p345 = por %p343, %p344
      %p346 = scmp.ne.s32.totalorder %s334, %s335
      %p347 = scmp.eq.s32.totalorder %s84, 1
      %p348 = por %p346, %p347
      %p350 = scmp.ne.s32.totalorder %s335, %s349
      %p351 = scmp.eq.s32.totalorder %s84, 0
      %p352 = por %p350, %p351
      %s354 = sadd.s32 %s353, 1
      %p357 = scmp.eq.s32.totalorder %s78, 1
      %p358 = scmp.ne.s32.totalorder %s353, %s355
      %p359 = scmp.eq.s32.totalorder %s78, 0
      %p360 = por %p358, %p359
      %p361 = scmp.ne.s32.totalorder %s353, %s355
      %p362 = scmp.eq.s32.totalorder %s83, 1
      %p363 = por %p361, %p362
      %p364 = scmp.ne.s32.totalorder %s355, %s356
      %p365 = scmp.eq.s32.totalorder %s83, 0
      %p366 = por %p364, %p365
      %p367 = scmp.ne.s32.totalorder %s355, %s356
      %p368 = scmp.eq.s32.totalorder %s84, 1
      %p369 = por %p367, %p368
      %p371 = scmp.ne.s32.totalorder %s356, %s370
      %p372 = scmp.eq.s32.totalorder %s84, 0
      %p373 = por %p371, %p372
      %s375 = sadd.s32 %s374, 1
      %p378 = scmp.eq.s32.totalorder %s78, 1
      %p379 = scmp.ne.s32.totalorder %s374, %s376
      %p380 = scmp.eq.s32.totalorder %s78, 0
      %p381 = por %p379, %p380
      %p382 = scmp.ne.s32.totalorder %s374, %s376
      %p383 = scmp.eq.s32.totalorder %s83, 1
      %p384 = por %p382, %p383
      %p385 = scmp.ne.s32.totalorder %s376, %s377
      %p386 = scmp.eq.s32.totalorder %s83, 0
      %p387 = por %p385, %p386
      %p388 = scmp.ne.s32.totalorder %s376, %s377
      %p389 = scmp.eq.s32.totalorder %s84, 1
      %p390 = por %p388, %p389
      %p392 = scmp.ne.s32.totalorder %s377, %s391
      %p393 = scmp.eq.s32.totalorder %s84, 0
      %p394 = por %p392, %p393
      %s396 = sadd.s32 %s395, 1
      %p399 = scmp.eq.s32.totalorder %s78, 1
      %p400 = scmp.ne.s32.totalorder %s395, %s397
      %p401 = scmp.eq.s32.totalorder %s78, 0
      %p402 = por %p400, %p401
      %p403 = scmp.ne.s32.totalorder %s395, %s397
      %p404 = scmp.eq.s32.totalorder %s83, 1
      %p405 = por %p403, %p404
      %p406 = scmp.ne.s32.totalorder %s397, %s398
      %p407 = scmp.eq.s32.totalorder %s83, 0
      %p408 = por %p406, %p407
      %p409 = scmp.ne.s32.totalorder %s397, %s398
      %p410 = scmp.eq.s32.totalorder %s84, 1
      %p411 = por %p409, %p410
      %p413 = scmp.ne.s32.totalorder %s398, %s412
      %p414 = scmp.eq.s32.totalorder %s84, 0
      %p415 = por %p413, %p414
      %s417 = sadd.s32 %s416, 1
      %p420 = scmp.eq.s32.totalorder %s78, 1
      %p421 = scmp.ne.s32.totalorder %s416, %s418
      %p422 = scmp.eq.s32.totalorder %s78, 0
      %p423 = por %p421, %p422
      %p424 = scmp.ne.s32.totalorder %s416, %s418
      %p425 = scmp.eq.s32.totalorder %s83, 1
      %p426 = por %p424, %p425
      %p427 = scmp.ne.s32.totalorder %s418, %s419
      %p428 = scmp.eq.s32.totalorder %s83, 0
      %p429 = por %p427, %p428
      %p430 = scmp.ne.s32.totalorder %s418, %s419
      %p431 = scmp.eq.s32.totalorder %s84, 1
      %p432 = por %p430, %p431
      %p434 = scmp.ne.s32.totalorder %s419, %s433
      %p435 = scmp.eq.s32.totalorder %s84, 0
      %p436 = por %p434, %p435
      %s438 = sadd.s32 %s437, 1
      %p441 = scmp.eq.s32.totalorder %s78, 1
      %p442 = scmp.ne.s32.totalorder %s437, %s439
      %p443 = scmp.eq.s32.totalorder %s78, 0
      %p444 = por %p442, %p443
      %p445 = scmp.ne.s32.totalorder %s437, %s439
      %p446 = scmp.eq.s32.totalorder %s83, 1
      %p447 = por %p445, %p446
      %p448 = scmp.ne.s32.totalorder %s439, %s440
      %p449 = scmp.eq.s32.totalorder %s83, 0
      %p450 = por %p448, %p449
      %p451 = scmp.ne.s32.totalorder %s439, %s440
      %p452 = scmp.eq.s32.totalorder %s84, 1
      %p453 = por %p451, %p452
      %p455 = scmp.ne.s32.totalorder %s440, %s454
      %p456 = scmp.eq.s32.totalorder %s84, 0
      %p457 = por %p455, %p456
      %s459 = sadd.s32 %s458, 1
      %p462 = scmp.eq.s32.totalorder %s78, 1
      %p463 = scmp.ne.s32.totalorder %s458, %s460
      %p464 = scmp.eq.s32.totalorder %s78, 0
      %p465 = por %p463, %p464
      %p466 = scmp.ne.s32.totalorder %s458, %s460
      %p467 = scmp.eq.s32.totalorder %s83, 1
      %p468 = por %p466, %p467
      %p469 = scmp.ne.s32.totalorder %s460, %s461
      %p470 = scmp.eq.s32.totalorder %s83, 0
      %p471 = por %p469, %p470
      %p472 = scmp.ne.s32.totalorder %s460, %s461
      %p473 = scmp.eq.s32.totalorder %s84, 1
      %p474 = por %p472, %p473
      %p476 = scmp.ne.s32.totalorder %s461, %s475
      %p477 = scmp.eq.s32.totalorder %s84, 0
      %p478 = por %p476, %p477
      %s480 = sadd.s32 %s479, 1
      %p483 = scmp.eq.s32.totalorder %s78, 1
      %p484 = scmp.ne.s32.totalorder %s479, %s481
      %p485 = scmp.eq.s32.totalorder %s78, 0
      %p486 = por %p484, %p485
      %p487 = scmp.ne.s32.totalorder %s479, %s481
      %p488 = scmp.eq.s32.totalorder %s83, 1
      %p489 = por %p487, %p488
      %p490 = scmp.ne.s32.totalorder %s481, %s482
      %p491 = scmp.eq.s32.totalorder %s83, 0
      %p492 = por %p490, %p491
      %p493 = scmp.ne.s32.totalorder %s481, %s482
      %p494 = scmp.eq.s32.totalorder %s84, 1
      %p495 = por %p493, %p494
      %p497 = scmp.ne.s32.totalorder %s482, %s496
      %p498 = scmp.eq.s32.totalorder %s84, 0
      %p499 = por %p497, %p498
      %s501 = sadd.s32 %s500, 1
      %p504 = scmp.eq.s32.totalorder %s78, 1
      %p505 = scmp.ne.s32.totalorder %s500, %s502
      %p506 = scmp.eq.s32.totalorder %s78, 0
      %p507 = por %p505, %p506
      %p508 = scmp.ne.s32.totalorder %s500, %s502
      %p509 = scmp.eq.s32.totalorder %s83, 1
      %p510 = por %p508, %p509
      %p511 = scmp.ne.s32.totalorder %s502, %s503
      %p512 = scmp.eq.s32.totalorder %s83, 0
      %p513 = por %p511, %p512
      %p514 = scmp.ne.s32.totalorder %s502, %s503
      %p515 = scmp.eq.s32.totalorder %s84, 1
      %p516 = por %p514, %p515
      %p518 = scmp.ne.s32.totalorder %s503, %s517
      %p519 = scmp.eq.s32.totalorder %s84, 0
      %p520 = por %p518, %p519
      %s522 = sadd.s32 %s521, 1
      %p525 = scmp.eq.s32.totalorder %s78, 1
      %p526 = scmp.ne.s32.totalorder %s521, %s523
      %p527 = scmp.eq.s32.totalorder %s78, 0
      %p528 = por %p526, %p527
      %p529 = scmp.ne.s32.totalorder %s521, %s523
      %p530 = scmp.eq.s32.totalorder %s83, 1
      %p531 = por %p529, %p530
      %p532 = scmp.ne.s32.totalorder %s523, %s524
      %p533 = scmp.eq.s32.totalorder %s83, 0
      %p534 = por %p532, %p533
      %p535 = scmp.ne.s32.totalorder %s523, %s524
      %p536 = scmp.eq.s32.totalorder %s84, 1
      %p537 = por %p535, %p536
      %p539 = scmp.ne.s32.totalorder %s524, %s538
      %p540 = scmp.eq.s32.totalorder %s84, 0
      %p541 = por %p539, %p540
      %s543 = sadd.s32 %s542, 1
      %p546 = scmp.eq.s32.totalorder %s78, 1
      %p547 = scmp.ne.s32.totalorder %s542, %s544
      %p548 = scmp.eq.s32.totalorder %s78, 0
      %p549 = por %p547, %p548
      %p550 = scmp.ne.s32.totalorder %s542, %s544
      %p551 = scmp.eq.s32.totalorder %s83, 1
      %p552 = por %p550, %p551
      %p553 = scmp.ne.s32.totalorder %s544, %s545
      %p554 = scmp.eq.s32.totalorder %s83, 0
      %p555 = por %p553, %p554
      %p556 = scmp.ne.s32.totalorder %s544, %s545
      %p557 = scmp.eq.s32.totalorder %s84, 1
      %p558 = por %p556, %p557
      %p560 = scmp.ne.s32.totalorder %s545, %s559
      %p561 = scmp.eq.s32.totalorder %s84, 0
      %p562 = por %p560, %p561
      %s564 = sadd.s32 %s563, 1
      %p567 = scmp.eq.s32.totalorder %s78, 1
      %p568 = scmp.ne.s32.totalorder %s563, %s565
      %p569 = scmp.eq.s32.totalorder %s78, 0
      %p570 = por %p568, %p569
      %p571 = scmp.ne.s32.totalorder %s563, %s565
      %p572 = scmp.eq.s32.totalorder %s83, 1
      %p573 = por %p571, %p572
      %p574 = scmp.ne.s32.totalorder %s565, %s566
      %p575 = scmp.eq.s32.totalorder %s83, 0
      %p576 = por %p574, %p575
      %p577 = scmp.ne.s32.totalorder %s565, %s566
      %p578 = scmp.eq.s32.totalorder %s84, 1
      %p579 = por %p577, %p578
      %p581 = scmp.ne.s32.totalorder %s566, %s580
      %p582 = scmp.eq.s32.totalorder %s84, 0
      %p583 = por %p581, %p582
      %s585 = sadd.s32 %s584, 1
      %p588 = scmp.eq.s32.totalorder %s78, 1
      %p589 = scmp.ne.s32.totalorder %s584, %s586
      %p590 = scmp.eq.s32.totalorder %s78, 0
      %p591 = por %p589, %p590
      %p592 = scmp.ne.s32.totalorder %s584, %s586
      %p593 = scmp.eq.s32.totalorder %s83, 1
      %p594 = por %p592, %p593
      %p595 = scmp.ne.s32.totalorder %s586, %s587
      %p596 = scmp.eq.s32.totalorder %s83, 0
      %p597 = por %p595, %p596
      %p598 = scmp.ne.s32.totalorder %s586, %s587
      %p599 = scmp.eq.s32.totalorder %s84, 1
      %p600 = por %p598, %p599
      %p602 = scmp.ne.s32.totalorder %s587, %s601
      %p603 = scmp.eq.s32.totalorder %s84, 0
      %p604 = por %p602, %p603
      %s606 = sadd.s32 %s605, 1
      %p609 = scmp.eq.s32.totalorder %s78, 1
      %p610 = scmp.ne.s32.totalorder %s605, %s607
      %p611 = scmp.eq.s32.totalorder %s78, 0
      %p612 = por %p610, %p611
      %p613 = scmp.ne.s32.totalorder %s605, %s607
      %p614 = scmp.eq.s32.totalorder %s83, 1
      %p615 = por %p613, %p614
      %p616 = scmp.ne.s32.totalorder %s607, %s608
      %p617 = scmp.eq.s32.totalorder %s83, 0
      %p618 = por %p616, %p617
      %p619 = scmp.ne.s32.totalorder %s607, %s608
      %p620 = scmp.eq.s32.totalorder %s84, 1
      %p621 = por %p619, %p620
      %p623 = scmp.ne.s32.totalorder %s608, %s622
      %p624 = scmp.eq.s32.totalorder %s84, 0
      %p625 = por %p623, %p624
      %s627 = sadd.s32 %s626, 1
      %p630 = scmp.eq.s32.totalorder %s78, 1
      %p631 = scmp.ne.s32.totalorder %s626, %s628
      %p632 = scmp.eq.s32.totalorder %s78, 0
      %p633 = por %p631, %p632
      %p634 = scmp.ne.s32.totalorder %s626, %s628
      %p635 = scmp.eq.s32.totalorder %s83, 1
      %p636 = por %p634, %p635
      %p637 = scmp.ne.s32.totalorder %s628, %s629
      %p638 = scmp.eq.s32.totalorder %s83, 0
      %p639 = por %p637, %p638
      %p640 = scmp.ne.s32.totalorder %s628, %s629
      %p641 = scmp.eq.s32.totalorder %s84, 1
      %p642 = por %p640, %p641
      %p644 = scmp.ne.s32.totalorder %s629, %s643
      %p645 = scmp.eq.s32.totalorder %s84, 0
      %p646 = por %p644, %p645
      %s648 = sadd.s32 %s647, 1
      %p651 = scmp.eq.s32.totalorder %s78, 1
      %p652 = scmp.ne.s32.totalorder %s647, %s649
      %p653 = scmp.eq.s32.totalorder %s78, 0
      %p654 = por %p652, %p653
      %p655 = scmp.ne.s32.totalorder %s647, %s649
      %p656 = scmp.eq.s32.totalorder %s83, 1
      %p657 = por %p655, %p656
      %p658 = scmp.ne.s32.totalorder %s649, %s650
      %p659 = scmp.eq.s32.totalorder %s83, 0
      %p660 = por %p658, %p659
      %p661 = scmp.ne.s32.totalorder %s649, %s650
      %p662 = scmp.eq.s32.totalorder %s84, 1
      %p663 = por %p661, %p662
      %p665 = scmp.ne.s32.totalorder %s650, %s664
      %p666 = scmp.eq.s32.totalorder %s84, 0
      %p667 = por %p665, %p666
      %s669 = sadd.s32 %s668, 1
      %p672 = scmp.eq.s32.totalorder %s78, 1
      %p673 = scmp.ne.s32.totalorder %s668, %s670
      %p674 = scmp.eq.s32.totalorder %s78, 0
      %p675 = por %p673, %p674
      %p676 = scmp.ne.s32.totalorder %s668, %s670
      %p677 = scmp.eq.s32.totalorder %s83, 1
      %p678 = por %p676, %p677
      %p679 = scmp.ne.s32.totalorder %s670, %s671
      %p680 = scmp.eq.s32.totalorder %s83, 0
      %p681 = por %p679, %p680
      %p682 = scmp.ne.s32.totalorder %s670, %s671
      %p683 = scmp.eq.s32.totalorder %s84, 1
      %p684 = por %p682, %p683
      %p686 = scmp.ne.s32.totalorder %s671, %s685
      %p687 = scmp.eq.s32.totalorder %s84, 0
      %p688 = por %p686, %p687
      %s690 = sadd.s32 %s689, 1
      %p693 = scmp.eq.s32.totalorder %s78, 1
      %p694 = scmp.ne.s32.totalorder %s689, %s691
      %p695 = scmp.eq.s32.totalorder %s78, 0
      %p696 = por %p694, %p695
      %p697 = scmp.ne.s32.totalorder %s689, %s691
      %p698 = scmp.eq.s32.totalorder %s83, 1
      %p699 = por %p697, %p698
      %p700 = scmp.ne.s32.totalorder %s691, %s692
      %p701 = scmp.eq.s32.totalorder %s83, 0
      %p702 = por %p700, %p701
      %p703 = scmp.ne.s32.totalorder %s691, %s692
      %p704 = scmp.eq.s32.totalorder %s84, 1
      %p705 = por %p703, %p704
      %p707 = scmp.ne.s32.totalorder %s692, %s706
      %p708 = scmp.eq.s32.totalorder %s84, 0
      %p709 = por %p707, %p708
      %s710 = ssub.s32 %s78, %s85
      %p711 = scmp.eq.s32.totalorder %s710, 0
      %s713 = sadd.s32 %s712, 1
      %s714 = scalar_select %p711, %s712, %s713
      %p717 = pneg %p711
      %p718 = scmp.eq.s32.totalorder %s78, 1
      %p719 = por %p717, %p718
      %p720 = scmp.ne.s32.totalorder %s712, %s715
      %p721 = scmp.eq.s32.totalorder %s78, 0
      %p722 = por %p720, %p721
      %p723 = scmp.ne.s32.totalorder %s712, %s715
      %p724 = scmp.eq.s32.totalorder %s83, 1
      %p725 = por %p723, %p724
      %p726 = scmp.ne.s32.totalorder %s715, %s716
      %p727 = scmp.eq.s32.totalorder %s83, 0
      %p728 = por %p726, %p727
      %p729 = scmp.ne.s32.totalorder %s715, %s716
      %p730 = scmp.eq.s32.totalorder %s84, 1
      %p731 = por %p729, %p730
      %p733 = scmp.ne.s32.totalorder %s716, %s732
      %p734 = scmp.eq.s32.totalorder %s84, 0
      %p735 = por %p733, %p734
      %p736 = scmp.le.s32.totalorder 1, %s78
      %p737 = scmp.lt.s32.totalorder %s78, 3
      %p738 = pnand %p736, %p737
      %p739 = pneg %p738
      // Predicated region
      $region9: #{set_decoder_forward.4} parent=5 // pred_check
        _
      $region10: #{set_decoder_forward.4} parent=5 // pred_check_branch
        %741 = sbr.rel (%p738) target = $region12
      $region11: #{set_decoder_forward.4} parent=5 // pred_region
        %s742 = ssub.s32 %s78, 1
        // Predicated region
        $region13: #{set_decoder_forward.4} parent=11 // pred_check
          %p743 = pneg %p177
        $region14: #{set_decoder_forward.4} parent=11 // pred_check_branch
          %745 = sbr.rel (%p743) target = $region16
        $region15: #{set_decoder_forward.4} parent=11 // pred_region
          _
        $region16: #{set_decoder_forward.4} parent=11 // pred_fallthru
          _
        // Predicated region
        $region17: #{set_decoder_forward.4} parent=11 // pred_check
          %p746 = pneg %p198
        $region18: #{set_decoder_forward.4} parent=11 // pred_check_branch
          %748 = sbr.rel (%p746) target = $region20
        $region19: #{set_decoder_forward.4} parent=11 // pred_region
          %750 = vsyncadd [#allocation3], 0
          %s752 = sshll.u32 %s9, 4
          %s753 = int_to_ptr.hbm [resolvable:$true] %s752
          %s754 = sshll.u32 [#allocation2], 4
          %s755 = int_to_ptr.vmem [resolvable:$true] %s754
          %757 = dma.hbm_to_vmem [thread:$0]  %s753, 16, %s755, [#allocation3]
        $region20: #{set_decoder_forward.4} parent=11 // pred_fallthru
          _
        // Predicated region
        $region21: #{set_decoder_forward.4} parent=11 // pred_check
          %p758 = pneg %p219
        $region22: #{set_decoder_forward.4} parent=11 // pred_check_branch
          %760 = sbr.rel (%p758) target = $region24
        $region23: #{set_decoder_forward.4} parent=11 // pred_region
          %762 = vsyncadd [#allocation5], 0
          %s763 = sshll.u32 %s11, 4
          %s764 = int_to_ptr.hbm [resolvable:$true] %s763
          %s765 = sshll.u32 [#allocation4], 4
          %s766 = int_to_ptr.vmem [resolvable:$true] %s765
          %771 = dma.hbm_to_vmem [thread:$0]  %s764, 256, %s766, [#allocation5], 64, 64, 4
        $region24: #{set_decoder_forward.4} parent=11 // pred_fallthru
          _
        // Predicated region
        $region25: #{set_decoder_forward.4} parent=11 // pred_check
          %p772 = pneg %p240
        $region26: #{set_decoder_forward.4} parent=11 // pred_check_branch
          %774 = sbr.rel (%p772) target = $region28
        $region27: #{set_decoder_forward.4} parent=11 // pred_region
          %776 = vsyncadd [#allocation5], 0
          %s778 = sshll.u32 %s13, 4
          %s779 = int_to_ptr.hbm [resolvable:$true] %s778
          %s780 = sshll.u32 [#allocation6], 4
          %s781 = int_to_ptr.vmem [resolvable:$true] %s780
          %783 = dma.hbm_to_vmem [thread:$0]  %s779, 16, %s781, [#allocation5]
        $region28: #{set_decoder_forward.4} parent=11 // pred_fallthru
          _
        // Predicated region
        $region29: #{set_decoder_forward.4} parent=11 // pred_check
          %p784 = pneg %p261
        $region30: #{set_decoder_forward.4} parent=11 // pred_check_branch
          %786 = sbr.rel (%p784) target = $region32
        $region31: #{set_decoder_forward.4} parent=11 // pred_region
          %788 = vsyncadd [#allocation8], 0
          %s789 = sshll.u32 %s15, 4
          %s790 = int_to_ptr.hbm [resolvable:$true] %s789
          %s791 = sshll.u32 [#allocation7], 4
          %s792 = int_to_ptr.vmem [resolvable:$true] %s791
          %797 = dma.hbm_to_vmem [thread:$0]  %s790, 256, %s792, [#allocation8], 64, 64, 4
        $region32: #{set_decoder_forward.4} parent=11 // pred_fallthru
          _
        // Predicated region
        $region33: #{set_decoder_forward.4} parent=11 // pred_check
          %p798 = pneg %p282
        $region34: #{set_decoder_forward.4} parent=11 // pred_check_branch
          %800 = sbr.rel (%p798) target = $region36
        $region35: #{set_decoder_forward.4} parent=11 // pred_region
          %802 = vsyncadd [#allocation8], 0
          %s804 = sshll.u32 %s17, 4
          %s805 = int_to_ptr.hbm [resolvable:$true] %s804
          %s806 = sshll.u32 [#allocation9], 4
          %s807 = int_to_ptr.vmem [resolvable:$true] %s806
          %809 = dma.hbm_to_vmem [thread:$0]  %s805, 16, %s807, [#allocation8]
        $region36: #{set_decoder_forward.4} parent=11 // pred_fallthru
          _
        // Predicated region
        $region37: #{set_decoder_forward.4} parent=11 // pred_check
          %p810 = pneg %p303
        $region38: #{set_decoder_forward.4} parent=11 // pred_check_branch
          %812 = sbr.rel (%p810) target = $region40
        $region39: #{set_decoder_forward.4} parent=11 // pred_region
          %814 = vsyncadd [#allocation11], 0
          %s815 = sshll.u32 %s19, 4
          %s816 = int_to_ptr.hbm [resolvable:$true] %s815
          %s817 = sshll.u32 [#allocation10], 4
          %s818 = int_to_ptr.vmem [resolvable:$true] %s817
          %823 = dma.hbm_to_vmem [thread:$0]  %s816, 256, %s818, [#allocation11], 64, 64, 4
        $region40: #{set_decoder_forward.4} parent=11 // pred_fallthru
          _
        // Predicated region
        $region41: #{set_decoder_forward.4} parent=11 // pred_check
          %p824 = pneg %p324
        $region42: #{set_decoder_forward.4} parent=11 // pred_check_branch
          %826 = sbr.rel (%p824) target = $region44
        $region43: #{set_decoder_forward.4} parent=11 // pred_region
          %828 = vsyncadd [#allocation11], 0
          %s830 = sshll.u32 %s21, 4
          %s831 = int_to_ptr.hbm [resolvable:$true] %s830
          %s832 = sshll.u32 [#allocation12], 4
          %s833 = int_to_ptr.vmem [resolvable:$true] %s832
          %835 = dma.hbm_to_vmem [thread:$0]  %s831, 16, %s833, [#allocation11]
        $region44: #{set_decoder_forward.4} parent=11 // pred_fallthru
          _
        // Predicated region
        $region45: #{set_decoder_forward.4} parent=11 // pred_check
          %p836 = pneg %p345
        $region46: #{set_decoder_forward.4} parent=11 // pred_check_branch
          %838 = sbr.rel (%p836) target = $region48
        $region47: #{set_decoder_forward.4} parent=11 // pred_region
          %840 = vsyncadd [#allocation14], 0
          %s842 = sshll.u32 %s23, 4
          %s843 = int_to_ptr.hbm [resolvable:$true] %s842
          %s844 = sshll.u32 [#allocation13], 4
          %s845 = int_to_ptr.vmem [resolvable:$true] %s844
          %847 = dma.hbm_to_vmem [thread:$0]  %s843, 16, %s845, [#allocation14]
        $region48: #{set_decoder_forward.4} parent=11 // pred_fallthru
          _
        // Predicated region
        $region49: #{set_decoder_forward.4} parent=11 // pred_check
          %p848 = pneg %p366
        $region50: #{set_decoder_forward.4} parent=11 // pred_check_branch
          %850 = sbr.rel (%p848) target = $region52
        $region51: #{set_decoder_forward.4} parent=11 // pred_region
          %852 = vsyncadd [#allocation14], 0
          %s854 = sshll.u32 %s25, 4
          %s855 = int_to_ptr.hbm [resolvable:$true] %s854
          %s856 = sshll.u32 [#allocation15], 4
          %s857 = int_to_ptr.vmem [resolvable:$true] %s856
          %859 = dma.hbm_to_vmem [thread:$0]  %s855, 16, %s857, [#allocation14]
        $region52: #{set_decoder_forward.4} parent=11 // pred_fallthru
          _
        // Predicated region
        $region53: #{set_decoder_forward.4} parent=11 // pred_check
          %p860 = pneg %p387
        $region54: #{set_decoder_forward.4} parent=11 // pred_check_branch
          %862 = sbr.rel (%p860) target = $region56
        $region55: #{set_decoder_forward.4} parent=11 // pred_region
          %864 = vsyncadd [#allocation17], 0
          %s865 = sshll.u32 %s27, 4
          %s866 = int_to_ptr.hbm [resolvable:$true] %s865
          %s867 = sshll.u32 [#allocation16], 4
          %s868 = int_to_ptr.vmem [resolvable:$true] %s867
          %873 = dma.hbm_to_vmem [thread:$0]  %s866, 256, %s868, [#allocation17], 64, 64, 4
        $region56: #{set_decoder_forward.4} parent=11 // pred_fallthru
          _
        // Predicated region
        $region57: #{set_decoder_forward.4} parent=11 // pred_check
          %p874 = pneg %p408
        $region58: #{set_decoder_forward.4} parent=11 // pred_check_branch
          %876 = sbr.rel (%p874) target = $region60
        $region59: #{set_decoder_forward.4} parent=11 // pred_region
          %878 = vsyncadd [#allocation17], 0
          %s880 = sshll.u32 %s29, 4
          %s881 = int_to_ptr.hbm [resolvable:$true] %s880
          %s882 = sshll.u32 [#allocation18], 4
          %s883 = int_to_ptr.vmem [resolvable:$true] %s882
          %885 = dma.hbm_to_vmem [thread:$0]  %s881, 16, %s883, [#allocation17]
        $region60: #{set_decoder_forward.4} parent=11 // pred_fallthru
          _
        // Predicated region
        $region61: #{set_decoder_forward.4} parent=11 // pred_check
          %p886 = pneg %p429
        $region62: #{set_decoder_forward.4} parent=11 // pred_check_branch
          %888 = sbr.rel (%p886) target = $region64
        $region63: #{set_decoder_forward.4} parent=11 // pred_region
          %890 = vsyncadd [#allocation20], 0
          %s891 = sshll.u32 %s31, 4
          %s892 = int_to_ptr.hbm [resolvable:$true] %s891
          %s893 = sshll.u32 [#allocation19], 4
          %s894 = int_to_ptr.vmem [resolvable:$true] %s893
          %899 = dma.hbm_to_vmem [thread:$0]  %s892, 256, %s894, [#allocation20], 64, 64, 4
        $region64: #{set_decoder_forward.4} parent=11 // pred_fallthru
          _
        // Predicated region
        $region65: #{set_decoder_forward.4} parent=11 // pred_check
          %p900 = pneg %p450
        $region66: #{set_decoder_forward.4} parent=11 // pred_check_branch
          %902 = sbr.rel (%p900) target = $region68
        $region67: #{set_decoder_forward.4} parent=11 // pred_region
          %904 = vsyncadd [#allocation20], 0
          %s906 = sshll.u32 %s33, 4
          %s907 = int_to_ptr.hbm [resolvable:$true] %s906
          %s908 = sshll.u32 [#allocation21], 4
          %s909 = int_to_ptr.vmem [resolvable:$true] %s908
          %911 = dma.hbm_to_vmem [thread:$0]  %s907, 16, %s909, [#allocation20]
        $region68: #{set_decoder_forward.4} parent=11 // pred_fallthru
          _
        // Predicated region
        $region69: #{set_decoder_forward.4} parent=11 // pred_check
          %p912 = pneg %p471
        $region70: #{set_decoder_forward.4} parent=11 // pred_check_branch
          %914 = sbr.rel (%p912) target = $region72
        $region71: #{set_decoder_forward.4} parent=11 // pred_region
          %916 = vsyncadd [#allocation23], 0
          %s917 = sshll.u32 %s35, 4
          %s918 = int_to_ptr.hbm [resolvable:$true] %s917
          %s919 = sshll.u32 [#allocation22], 4
          %s920 = int_to_ptr.vmem [resolvable:$true] %s919
          %925 = dma.hbm_to_vmem [thread:$0]  %s918, 256, %s920, [#allocation23], 64, 64, 4
        $region72: #{set_decoder_forward.4} parent=11 // pred_fallthru
          _
        // Predicated region
        $region73: #{set_decoder_forward.4} parent=11 // pred_check
          %p926 = pneg %p492
        $region74: #{set_decoder_forward.4} parent=11 // pred_check_branch
          %928 = sbr.rel (%p926) target = $region76
        $region75: #{set_decoder_forward.4} parent=11 // pred_region
          %930 = vsyncadd [#allocation23], 0
          %s932 = sshll.u32 %s37, 4
          %s933 = int_to_ptr.hbm [resolvable:$true] %s932
          %s934 = sshll.u32 [#allocation24], 4
          %s935 = int_to_ptr.vmem [resolvable:$true] %s934
          %937 = dma.hbm_to_vmem [thread:$0]  %s933, 16, %s935, [#allocation23]
        $region76: #{set_decoder_forward.4} parent=11 // pred_fallthru
          _
        // Predicated region
        $region77: #{set_decoder_forward.4} parent=11 // pred_check
          %p938 = pneg %p513
        $region78: #{set_decoder_forward.4} parent=11 // pred_check_branch
          %940 = sbr.rel (%p938) target = $region80
        $region79: #{set_decoder_forward.4} parent=11 // pred_region
          %942 = vsyncadd [#allocation26], 0
          %s943 = sshll.u32 %s39, 4
          %s944 = int_to_ptr.hbm [resolvable:$true] %s943
          %s945 = sshll.u32 [#allocation25], 4
          %s946 = int_to_ptr.vmem [resolvable:$true] %s945
          %951 = dma.hbm_to_vmem [thread:$0]  %s944, 256, %s946, [#allocation26], 64, 64, 4
        $region80: #{set_decoder_forward.4} parent=11 // pred_fallthru
          _
        // Predicated region
        $region81: #{set_decoder_forward.4} parent=11 // pred_check
          %p952 = pneg %p534
        $region82: #{set_decoder_forward.4} parent=11 // pred_check_branch
          %954 = sbr.rel (%p952) target = $region84
        $region83: #{set_decoder_forward.4} parent=11 // pred_region
          %956 = vsyncadd [#allocation26], 0
          %s958 = sshll.u32 %s41, 4
          %s959 = int_to_ptr.hbm [resolvable:$true] %s958
          %s960 = sshll.u32 [#allocation27], 4
          %s961 = int_to_ptr.vmem [resolvable:$true] %s960
          %963 = dma.hbm_to_vmem [thread:$0]  %s959, 16, %s961, [#allocation26]
        $region84: #{set_decoder_forward.4} parent=11 // pred_fallthru
          _
        // Predicated region
        $region85: #{set_decoder_forward.4} parent=11 // pred_check
          %p964 = pneg %p555
        $region86: #{set_decoder_forward.4} parent=11 // pred_check_branch
          %966 = sbr.rel (%p964) target = $region88
        $region87: #{set_decoder_forward.4} parent=11 // pred_region
          %968 = vsyncadd [#allocation29], 0
          %s970 = sshll.u32 %s43, 4
          %s971 = int_to_ptr.hbm [resolvable:$true] %s970
          %s972 = sshll.u32 [#allocation28], 4
          %s973 = int_to_ptr.vmem [resolvable:$true] %s972
          %975 = dma.hbm_to_vmem [thread:$0]  %s971, 16, %s973, [#allocation29]
        $region88: #{set_decoder_forward.4} parent=11 // pred_fallthru
          _
        // Predicated region
        $region89: #{set_decoder_forward.4} parent=11 // pred_check
          %p976 = pneg %p576
        $region90: #{set_decoder_forward.4} parent=11 // pred_check_branch
          %978 = sbr.rel (%p976) target = $region92
        $region91: #{set_decoder_forward.4} parent=11 // pred_region
          %980 = vsyncadd [#allocation29], 0
          %s982 = sshll.u32 %s45, 4
          %s983 = int_to_ptr.hbm [resolvable:$true] %s982
          %s984 = sshll.u32 [#allocation30], 4
          %s985 = int_to_ptr.vmem [resolvable:$true] %s984
          %987 = dma.hbm_to_vmem [thread:$0]  %s983, 16, %s985, [#allocation29]
        $region92: #{set_decoder_forward.4} parent=11 // pred_fallthru
          _
        // Predicated region
        $region93: #{set_decoder_forward.4} parent=11 // pred_check
          %p988 = pneg %p597
        $region94: #{set_decoder_forward.4} parent=11 // pred_check_branch
          %990 = sbr.rel (%p988) target = $region96
        $region95: #{set_decoder_forward.4} parent=11 // pred_region
          %992 = vsyncadd [#allocation32], 0
          %s993 = sshll.u32 %s47, 4
          %s994 = int_to_ptr.hbm [resolvable:$true] %s993
          %s995 = sshll.u32 [#allocation31], 4
          %s996 = int_to_ptr.vmem [resolvable:$true] %s995
          %1001 = dma.hbm_to_vmem [thread:$0]  %s994, 256, %s996, [#allocation32], 64, 64, 4
        $region96: #{set_decoder_forward.4} parent=11 // pred_fallthru
          _
        // Predicated region
        $region97: #{set_decoder_forward.4} parent=11 // pred_check
          %p1002 = pneg %p618
        $region98: #{set_decoder_forward.4} parent=11 // pred_check_branch
          %1004 = sbr.rel (%p1002) target = $region100
        $region99: #{set_decoder_forward.4} parent=11 // pred_region
          %1006 = vsyncadd [#allocation32], 0
          %s1008 = sshll.u32 %s49, 4
          %s1009 = int_to_ptr.hbm [resolvable:$true] %s1008
          %s1010 = sshll.u32 [#allocation33], 4
          %s1011 = int_to_ptr.vmem [resolvable:$true] %s1010
          %1013 = dma.hbm_to_vmem [thread:$0]  %s1009, 16, %s1011, [#allocation32]
        $region100: #{set_decoder_forward.4} parent=11 // pred_fallthru
          _
        // Predicated region
        $region101: #{set_decoder_forward.4} parent=11 // pred_check
          %p1014 = pneg %p639
        $region102: #{set_decoder_forward.4} parent=11 // pred_check_branch
          %1016 = sbr.rel (%p1014) target = $region104
        $region103: #{set_decoder_forward.4} parent=11 // pred_region
          _
        $region104: #{set_decoder_forward.4} parent=11 // pred_fallthru
          _
        // Predicated region
        $region105: #{set_decoder_forward.4} parent=11 // pred_check
          %p1017 = pneg %p660
        $region106: #{set_decoder_forward.4} parent=11 // pred_check_branch
          %1019 = sbr.rel (%p1017) target = $region108
        $region107: #{set_decoder_forward.4} parent=11 // pred_region
          %1021 = vsyncadd [#allocation35], 0
          %s1023 = sshll.u32 %s53, 4
          %s1024 = int_to_ptr.hbm [resolvable:$true] %s1023
          %s1025 = sshll.u32 [#allocation34], 4
          %s1026 = int_to_ptr.vmem [resolvable:$true] %s1025
          %1028 = dma.hbm_to_vmem [thread:$0]  %s1024, 16, %s1026, [#allocation35]
        $region108: #{set_decoder_forward.4} parent=11 // pred_fallthru
          _
        // Predicated region
        $region109: #{set_decoder_forward.4} parent=11 // pred_check
          %p1029 = pneg %p681
        $region110: #{set_decoder_forward.4} parent=11 // pred_check_branch
          %1031 = sbr.rel (%p1029) target = $region112
        $region111: #{set_decoder_forward.4} parent=11 // pred_region
          %1033 = vsyncadd [#allocation35], 0
          %s1035 = sshll.u32 %s55, 4
          %s1036 = int_to_ptr.hbm [resolvable:$true] %s1035
          %s1037 = sshll.u32 [#allocation36], 4
          %s1038 = int_to_ptr.vmem [resolvable:$true] %s1037
          %1040 = dma.hbm_to_vmem [thread:$0]  %s1036, 16, %s1038, [#allocation35]
        $region112: #{set_decoder_forward.4} parent=11 // pred_fallthru
          _
        // Predicated region
        $region113: #{set_decoder_forward.4} parent=11 // pred_check
          %p1041 = pneg %p702
        $region114: #{set_decoder_forward.4} parent=11 // pred_check_branch
          %1043 = sbr.rel (%p1041) target = $region116
        $region115: #{set_decoder_forward.4} parent=11 // pred_region
          %1045 = vsyncadd [#allocation38], 0
          %s1047 = sshll.u32 %s57, 4
          %s1048 = int_to_ptr.hbm [resolvable:$true] %s1047
          %s1049 = sshll.u32 [#allocation37], 4
          %s1050 = int_to_ptr.vmem [resolvable:$true] %s1049
          %1052 = dma.hbm_to_vmem [thread:$0]  %s1048, 16, %s1050, [#allocation38]
        $region116: #{set_decoder_forward.4} parent=11 // pred_fallthru
          _
      $region12: #{set_decoder_forward.4} parent=5 // pred_fallthru
        _
      %p1053 = scmp.lt.s32.totalorder %s78, 2
      // Predicated region
      $region117: #{set_decoder_forward.4} parent=5 // pred_check
        %p1054 = pneg %p1053
      $region118: #{set_decoder_forward.4} parent=5 // pred_check_branch
        %1056 = sbr.rel (%p1054) target = $region120
      $region119: #{set_decoder_forward.4} parent=5 // pred_region
        // Predicated region
        $region121: #{set_decoder_forward.4} parent=119 // pred_check
          %p1057 = pneg %p98
        $region122: #{set_decoder_forward.4} parent=119 // pred_check_branch
          %1059 = sbr.rel (%p1057) target = $region124
        $region123: #{set_decoder_forward.4} parent=119 // pred_region
          %p1060 = scmp.lt.s32.totalorder %s78, 1
          %s1061 = scalar_select %p1060, %s78, 1
          %s1062 = smul.addr %s1061, 2
          %s1063 = smul.addr %s1062, 8
          %s1064 = scalar_lea.vmem %s1, %s1063
        $region124: #{set_decoder_forward.4} parent=119 // pred_fallthru
          _
        // Predicated region
        $region125: #{set_decoder_forward.4} parent=119 // pred_check
          %p1065 = pneg %p124
        $region126: #{set_decoder_forward.4} parent=119 // pred_check_branch
          %1067 = sbr.rel (%p1065) target = $region128
        $region127: #{set_decoder_forward.4} parent=119 // pred_region
          %p1068 = scmp.lt.s32.totalorder %s78, 1
          %s1069 = scalar_select %p1068, %s78, 1
          %s1070 = smul.addr %s1069, 2
          %s1071 = smul.addr %s1070, 8
          %s1072 = scalar_lea.vmem %s3, %s1071
        $region128: #{set_decoder_forward.4} parent=119 // pred_fallthru
          _
        // Predicated region
        $region129: #{set_decoder_forward.4} parent=119 // pred_check
          %p1073 = pneg %p150
        $region130: #{set_decoder_forward.4} parent=119 // pred_check_branch
          %1075 = sbr.rel (%p1073) target = $region132
        $region131: #{set_decoder_forward.4} parent=119 // pred_region
          %p1076 = scmp.lt.s32.totalorder %s78, 1
          %s1077 = scalar_select %p1076, %s78, 1
          %s1078 = smul.addr %s1077, 2
          %s1079 = smul.addr %s1078, 8
          %s1080 = scalar_lea.vmem %s5, %s1079
        $region132: #{set_decoder_forward.4} parent=119 // pred_fallthru
          _
      $region120: #{set_decoder_forward.4} parent=5 // pred_fallthru
        _
      %p1081 = scmp.le.s32.totalorder 1, %s78
      %p1082 = scmp.lt.s32.totalorder %s78, 3
      %p1083 = pnand %p1081, %p1082
      %p1084 = pneg %p1083
      // Predicated region
      $region133: #{set_decoder_forward.4} parent=5 // pred_check
        _
      $region134: #{set_decoder_forward.4} parent=5 // pred_check_branch
        %1086 = sbr.rel (%p1083) target = $region136
      $region135: #{set_decoder_forward.4} parent=5 // pred_region
        %s1087 = ssub.s32 %s78, 1
        // Predicated region
        $region137: #{set_decoder_forward.4} parent=135 // pred_check
          %p1088 = pneg %p198
        $region138: #{set_decoder_forward.4} parent=135 // pred_check_branch
          %1090 = sbr.rel (%p1088) target = $region140
        $region139: #{set_decoder_forward.4} parent=135 // pred_region
          %1092 = dma.done [#allocation3], 16
        $region140: #{set_decoder_forward.4} parent=135 // pred_fallthru
          _
        // Predicated region
        $region141: #{set_decoder_forward.4} parent=135 // pred_check
          %p1093 = pneg %p219
        $region142: #{set_decoder_forward.4} parent=135 // pred_check_branch
          %1095 = sbr.rel (%p1093) target = $region144
        $region143: #{set_decoder_forward.4} parent=135 // pred_region
          %1097 = dma.done [#allocation5], 256
        $region144: #{set_decoder_forward.4} parent=135 // pred_fallthru
          _
        // Predicated region
        $region145: #{set_decoder_forward.4} parent=135 // pred_check
          %p1098 = pneg %p240
        $region146: #{set_decoder_forward.4} parent=135 // pred_check_branch
          %1100 = sbr.rel (%p1098) target = $region148
        $region147: #{set_decoder_forward.4} parent=135 // pred_region
          %1102 = dma.done [#allocation5], 16
        $region148: #{set_decoder_forward.4} parent=135 // pred_fallthru
          _
        // Predicated region
        $region149: #{set_decoder_forward.4} parent=135 // pred_check
          %p1103 = pneg %p261
        $region150: #{set_decoder_forward.4} parent=135 // pred_check_branch
          %1105 = sbr.rel (%p1103) target = $region152
        $region151: #{set_decoder_forward.4} parent=135 // pred_region
          %1107 = dma.done [#allocation8], 256
        $region152: #{set_decoder_forward.4} parent=135 // pred_fallthru
          _
        // Predicated region
        $region153: #{set_decoder_forward.4} parent=135 // pred_check
          %p1108 = pneg %p282
        $region154: #{set_decoder_forward.4} parent=135 // pred_check_branch
          %1110 = sbr.rel (%p1108) target = $region156
        $region155: #{set_decoder_forward.4} parent=135 // pred_region
          %1112 = dma.done [#allocation8], 16
        $region156: #{set_decoder_forward.4} parent=135 // pred_fallthru
          _
        // Predicated region
        $region157: #{set_decoder_forward.4} parent=135 // pred_check
          %p1113 = pneg %p303
        $region158: #{set_decoder_forward.4} parent=135 // pred_check_branch
          %1115 = sbr.rel (%p1113) target = $region160
        $region159: #{set_decoder_forward.4} parent=135 // pred_region
          %1117 = dma.done [#allocation11], 256
        $region160: #{set_decoder_forward.4} parent=135 // pred_fallthru
          _
        // Predicated region
        $region161: #{set_decoder_forward.4} parent=135 // pred_check
          %p1118 = pneg %p324
        $region162: #{set_decoder_forward.4} parent=135 // pred_check_branch
          %1120 = sbr.rel (%p1118) target = $region164
        $region163: #{set_decoder_forward.4} parent=135 // pred_region
          %1122 = dma.done [#allocation11], 16
        $region164: #{set_decoder_forward.4} parent=135 // pred_fallthru
          _
        // Predicated region
        $region165: #{set_decoder_forward.4} parent=135 // pred_check
          %p1123 = pneg %p345
        $region166: #{set_decoder_forward.4} parent=135 // pred_check_branch
          %1125 = sbr.rel (%p1123) target = $region168
        $region167: #{set_decoder_forward.4} parent=135 // pred_region
          %1127 = dma.done [#allocation14], 16
        $region168: #{set_decoder_forward.4} parent=135 // pred_fallthru
          _
        // Predicated region
        $region169: #{set_decoder_forward.4} parent=135 // pred_check
          %p1128 = pneg %p366
        $region170: #{set_decoder_forward.4} parent=135 // pred_check_branch
          %1130 = sbr.rel (%p1128) target = $region172
        $region171: #{set_decoder_forward.4} parent=135 // pred_region
          %1132 = dma.done [#allocation14], 16
        $region172: #{set_decoder_forward.4} parent=135 // pred_fallthru
          _
        // Predicated region
        $region173: #{set_decoder_forward.4} parent=135 // pred_check
          %p1133 = pneg %p387
        $region174: #{set_decoder_forward.4} parent=135 // pred_check_branch
          %1135 = sbr.rel (%p1133) target = $region176
        $region175: #{set_decoder_forward.4} parent=135 // pred_region
          %1137 = dma.done [#allocation17], 256
        $region176: #{set_decoder_forward.4} parent=135 // pred_fallthru
          _
        // Predicated region
        $region177: #{set_decoder_forward.4} parent=135 // pred_check
          %p1138 = pneg %p408
        $region178: #{set_decoder_forward.4} parent=135 // pred_check_branch
          %1140 = sbr.rel (%p1138) target = $region180
        $region179: #{set_decoder_forward.4} parent=135 // pred_region
          %1142 = dma.done [#allocation17], 16
        $region180: #{set_decoder_forward.4} parent=135 // pred_fallthru
          _
        // Predicated region
        $region181: #{set_decoder_forward.4} parent=135 // pred_check
          %p1143 = pneg %p429
        $region182: #{set_decoder_forward.4} parent=135 // pred_check_branch
          %1145 = sbr.rel (%p1143) target = $region184
        $region183: #{set_decoder_forward.4} parent=135 // pred_region
          %1147 = dma.done [#allocation20], 256
        $region184: #{set_decoder_forward.4} parent=135 // pred_fallthru
          _
        // Predicated region
        $region185: #{set_decoder_forward.4} parent=135 // pred_check
          %p1148 = pneg %p450
        $region186: #{set_decoder_forward.4} parent=135 // pred_check_branch
          %1150 = sbr.rel (%p1148) target = $region188
        $region187: #{set_decoder_forward.4} parent=135 // pred_region
          %1152 = dma.done [#allocation20], 16
        $region188: #{set_decoder_forward.4} parent=135 // pred_fallthru
          _
        // Predicated region
        $region189: #{set_decoder_forward.4} parent=135 // pred_check
          %p1153 = pneg %p471
        $region190: #{set_decoder_forward.4} parent=135 // pred_check_branch
          %1155 = sbr.rel (%p1153) target = $region192
        $region191: #{set_decoder_forward.4} parent=135 // pred_region
          %1157 = dma.done [#allocation23], 256
        $region192: #{set_decoder_forward.4} parent=135 // pred_fallthru
          _
        // Predicated region
        $region193: #{set_decoder_forward.4} parent=135 // pred_check
          %p1158 = pneg %p492
        $region194: #{set_decoder_forward.4} parent=135 // pred_check_branch
          %1160 = sbr.rel (%p1158) target = $region196
        $region195: #{set_decoder_forward.4} parent=135 // pred_region
          %1162 = dma.done [#allocation23], 16
        $region196: #{set_decoder_forward.4} parent=135 // pred_fallthru
          _
        // Predicated region
        $region197: #{set_decoder_forward.4} parent=135 // pred_check
          %p1163 = pneg %p513
        $region198: #{set_decoder_forward.4} parent=135 // pred_check_branch
          %1165 = sbr.rel (%p1163) target = $region200
        $region199: #{set_decoder_forward.4} parent=135 // pred_region
          %1167 = dma.done [#allocation26], 256
        $region200: #{set_decoder_forward.4} parent=135 // pred_fallthru
          _
        // Predicated region
        $region201: #{set_decoder_forward.4} parent=135 // pred_check
          %p1168 = pneg %p534
        $region202: #{set_decoder_forward.4} parent=135 // pred_check_branch
          %1170 = sbr.rel (%p1168) target = $region204
        $region203: #{set_decoder_forward.4} parent=135 // pred_region
          %1172 = dma.done [#allocation26], 16
        $region204: #{set_decoder_forward.4} parent=135 // pred_fallthru
          _
        // Predicated region
        $region205: #{set_decoder_forward.4} parent=135 // pred_check
          %p1173 = pneg %p555
        $region206: #{set_decoder_forward.4} parent=135 // pred_check_branch
          %1175 = sbr.rel (%p1173) target = $region208
        $region207: #{set_decoder_forward.4} parent=135 // pred_region
          %1177 = dma.done [#allocation29], 16
        $region208: #{set_decoder_forward.4} parent=135 // pred_fallthru
          _
        // Predicated region
        $region209: #{set_decoder_forward.4} parent=135 // pred_check
          %p1178 = pneg %p576
        $region210: #{set_decoder_forward.4} parent=135 // pred_check_branch
          %1180 = sbr.rel (%p1178) target = $region212
        $region211: #{set_decoder_forward.4} parent=135 // pred_region
          %1182 = dma.done [#allocation29], 16
        $region212: #{set_decoder_forward.4} parent=135 // pred_fallthru
          _
        // Predicated region
        $region213: #{set_decoder_forward.4} parent=135 // pred_check
          %p1183 = pneg %p597
        $region214: #{set_decoder_forward.4} parent=135 // pred_check_branch
          %1185 = sbr.rel (%p1183) target = $region216
        $region215: #{set_decoder_forward.4} parent=135 // pred_region
          %1187 = dma.done [#allocation32], 256
        $region216: #{set_decoder_forward.4} parent=135 // pred_fallthru
          _
        // Predicated region
        $region217: #{set_decoder_forward.4} parent=135 // pred_check
          %p1188 = pneg %p618
        $region218: #{set_decoder_forward.4} parent=135 // pred_check_branch
          %1190 = sbr.rel (%p1188) target = $region220
        $region219: #{set_decoder_forward.4} parent=135 // pred_region
          %1192 = dma.done [#allocation32], 16
        $region220: #{set_decoder_forward.4} parent=135 // pred_fallthru
          _
        // Predicated region
        $region221: #{set_decoder_forward.4} parent=135 // pred_check
          %p1193 = pneg %p660
        $region222: #{set_decoder_forward.4} parent=135 // pred_check_branch
          %1195 = sbr.rel (%p1193) target = $region224
        $region223: #{set_decoder_forward.4} parent=135 // pred_region
          %1197 = dma.done [#allocation35], 16
        $region224: #{set_decoder_forward.4} parent=135 // pred_fallthru
          _
        // Predicated region
        $region225: #{set_decoder_forward.4} parent=135 // pred_check
          %p1198 = pneg %p681
        $region226: #{set_decoder_forward.4} parent=135 // pred_check_branch
          %1200 = sbr.rel (%p1198) target = $region228
        $region227: #{set_decoder_forward.4} parent=135 // pred_region
          %1202 = dma.done [#allocation35], 16
        $region228: #{set_decoder_forward.4} parent=135 // pred_fallthru
          _
        // Predicated region
        $region229: #{set_decoder_forward.4} parent=135 // pred_check
          %p1203 = pneg %p702
        $region230: #{set_decoder_forward.4} parent=135 // pred_check_branch
          %1205 = sbr.rel (%p1203) target = $region232
        $region231: #{set_decoder_forward.4} parent=135 // pred_region
          %1207 = dma.done [#allocation38], 16
        $region232: #{set_decoder_forward.4} parent=135 // pred_fallthru
          _
        %p1208 = scmp.lt.s32.totalorder %s83, 1
        %s1209 = scalar_select %p1208, %s83, 1
        %s1210 = smul.addr %s1209, 2
        %s1211 = smul.addr %s1210, 8
        %s1212 = scalar_lea.vmem %s1, %s1211
        %p1213 = pneg %p104
        %p1214 = pneg %p101
        %p1215 = scmp.lt.s32.totalorder %s83, 1
        %s1216 = scalar_select %p1215, %s83, 1
        %s1217 = smul.addr %s1216, 2
        %s1218 = smul.addr %s1217, 8
        %s1219 = scalar_lea.vmem %s3, %s1218
        %p1220 = pneg %p130
        %p1221 = pneg %p127
        %p1222 = scmp.lt.s32.totalorder %s83, 1
        %s1223 = scalar_select %p1222, %s83, 1
        %s1224 = smul.addr %s1223, 2
        %s1225 = smul.addr %s1224, 8
        %s1226 = scalar_lea.vmem %s5, %s1225
        %p1227 = pneg %p156
        %p1228 = pneg %p153
        %p1229 = pneg %p177
        %p1230 = pneg %p174
        %p1231 = pneg %p198
        %p1232 = pneg %p195
        %p1233 = pneg %p219
        %p1234 = pneg %p216
        %p1235 = pneg %p240
        %p1236 = pneg %p237
        %p1237 = pneg %p261
        %p1238 = pneg %p258
        %p1239 = pneg %p282
        %p1240 = pneg %p279
        %p1241 = pneg %p303
        %p1242 = pneg %p300
        %p1243 = pneg %p324
        %p1244 = pneg %p321
        %p1245 = pneg %p345
        %p1246 = pneg %p342
        %p1247 = pneg %p366
        %p1248 = pneg %p363
        %p1249 = pneg %p387
        %p1250 = pneg %p384
        %p1251 = pneg %p408
        %p1252 = pneg %p405
        %p1253 = pneg %p429
        %p1254 = pneg %p426
        %p1255 = pneg %p450
        %p1256 = pneg %p447
        %p1257 = pneg %p471
        %p1258 = pneg %p468
        %p1259 = pneg %p492
        %p1260 = pneg %p489
        %p1261 = pneg %p513
        %p1262 = pneg %p510
        %p1263 = pneg %p534
        %p1264 = pneg %p531
        %p1265 = pneg %p555
        %p1266 = pneg %p552
        %p1267 = pneg %p576
        %p1268 = pneg %p573
        %p1269 = pneg %p597
        %p1270 = pneg %p594
        %p1271 = pneg %p618
        %p1272 = pneg %p615
        %p1273 = pneg %p639
        %p1274 = pneg %p636
        %p1275 = pneg %p660
        %p1276 = pneg %p657
        %p1277 = pneg %p681
        %p1278 = pneg %p678
        %p1279 = pneg %p702
        %p1280 = pneg %p699
        %p1281 = pneg %p728
        %p1282 = pneg %p725
        %p1283 = scmp.lt.s32.totalorder %s83, 1
        %s1284 = scalar_select %p1283, %s83, 1
        %s1285 = smul.addr %s1284, 2
        %s1286 = smul.addr %s1285, 8
        %s1287 = scalar_lea.vmem %s59, %s1286
        %p1288 = scmp.lt.s32.totalorder %s83, 1
        %s1289 = scalar_select %p1288, %s83, 1
        %s1290 = smul.addr %s1289, 2
        %s1291 = smul.addr %s1290, 8
        %s1292 = scalar_lea.vmem %s1, %s1291
        %p1293 = scmp.lt.s32.totalorder %s83, 1
        %s1294 = scalar_select %p1293, %s83, 1
        %s1295 = smul.addr %s1294, 2
        %s1296 = smul.addr %s1295, 8
        %s1297 = scalar_lea.vmem %s3, %s1296
        %p1298 = scmp.lt.s32.totalorder %s83, 1
        %s1299 = scalar_select %p1298, %s83, 1
        %s1300 = smul.addr %s1299, 2
        %s1301 = smul.addr %s1300, 8
        %s1302 = scalar_lea.vmem %s5, %s1301
        %p1303 = scmp.lt.s32.totalorder %s83, 1
        %s1304 = scalar_select %p1303, %s83, 1
        %s1305 = smul.addr %s1304, 2
        %s1306 = smul.addr %s1305, 8
        %s1307 = scalar_lea.vmem %s59, %s1306
        %v1309 = vld [vmem:[%s1292] sm:$0xff]
        %v1310 = vld [vmem:[%s1292 + $0x8] sm:$0xff]
        %v1311 = vld [vmem:[%s1297] sm:$0xff]
        %v1312 = vld [vmem:[%s1297 + $0x8] sm:$0xff]
        %v1313 = vld [vmem:[%s1302] sm:$0xff]
        %v1314 = vld [vmem:[%s1302 + $0x8] sm:$0xff]
        %v1315 = vsub.f32 1.0, %v1313
        %v1316 = vsub.f32 1.0, %v1314
        %v1317 = vmul.f32 %v1315, -10000.0
        %v1318 = vmul.f32 %v1316, -10000.0
        %v1319 = vld [vmem:[%s7] sm:$0xf]
        %v1320 = vld [vmem:[%s7 + $0x4] sm:$0xf]
        %v1321 = vld [vmem:[%s7 + $0x8] sm:$0xf]
        %v1322 = vld [vmem:[%s7 + $0xc] sm:$0xf]
        %v1323 = vld [vmem:[#allocation2] sm:$0x1]
        %v1324 = vld [vmem:[#allocation4] sm:$0xf]
        %v1325 = vld [vmem:[#allocation4 + $0x4] sm:$0xf]
        %v1326 = vld [vmem:[#allocation4 + $0x8] sm:$0xf]
        %v1327 = vld [vmem:[#allocation4 + $0xc] sm:$0xf]
        %v1328 = vld [vmem:[#allocation6] sm:$0x1]
        %v1329 = vld [vmem:[#allocation7] sm:$0xf]
        %v1330 = vld [vmem:[#allocation7 + $0x4] sm:$0xf]
        %v1331 = vld [vmem:[#allocation7 + $0x8] sm:$0xf]
        %v1332 = vld [vmem:[#allocation7 + $0xc] sm:$0xf]
        %v1333 = vld [vmem:[#allocation9] sm:$0x1]
        %v1334 = vld [vmem:[#allocation10] sm:$0xf]
        %v1335 = vld [vmem:[#allocation10 + $0x4] sm:$0xf]
        %v1336 = vld [vmem:[#allocation10 + $0x8] sm:$0xf]
        %v1337 = vld [vmem:[#allocation10 + $0xc] sm:$0xf]
        %v1338 = vld [vmem:[#allocation12] sm:$0x1]
        %v1339 = vld [vmem:[#allocation13] sm:$0x1]
        %v1340 = vld [vmem:[#allocation15] sm:$0x1]
        %v1341 = vpack.c.bf16 %v1310, %v1309
        %v1343 = vperm.slane %v1323, 0
        %v1349 = vunpack.c.l.b16 %v1319
        %v1350 = vunpack.c.l.b16 %v1320
        %v1351 = vunpack.c.l.b16 %v1321
        %v1352 = vunpack.c.l.b16 %v1322
        %v1353 = vpack.c.b16 %v1350, %v1349
        %v1354 = vpack.c.b16 %v1352, %v1351
        %vm1357 = vcmask 261120
        %v1359 = vsel %vm1357, %v1341, 0
        %1361 = vmatpush.bf16.msra.mxu0 0
        %1362 = vmatpush.bf16.msra.mxu0 0
        %1363 = vmatpush.bf16.msra.mxu0 0
        %1364 = vmatpush.bf16.msra.mxu0 0
        %1365 = vmatpush.bf16.msra.mxu0 0
        %1366 = vmatpush.bf16.msra.mxu0 0
        %1367 = vmatpush.bf16.msra.mxu0 %v1354
        %1368 = vmatpush.bf16.msra.mxu0 %v1353
        %1369 = vmatmul.bf16.gmra.mxu0 %v1359
        %v1370 = vpop.f32.mrf.mxu0
        %v1371 = vadd.f32 %v1343, %v1370
        %v1372 = vpop.f32.mrf.mxu0
        %v1373 = vadd.f32 %v1343, %v1372
        %1374 = vdwg.mxu0
        %v1376 = vperm.slane %v1328, 0
        %v1382 = vunpack.c.l.b16 %v1324
        %v1383 = vunpack.c.l.b16 %v1325
        %v1384 = vunpack.c.l.b16 %v1326
        %v1385 = vunpack.c.l.b16 %v1327
        %v1386 = vpack.c.b16 %v1383, %v1382
        %v1387 = vpack.c.b16 %v1385, %v1384
        %1390 = vmatpush.bf16.msra.mxu0 0
        %1391 = vmatpush.bf16.msra.mxu0 0
        %1392 = vmatpush.bf16.msra.mxu0 0
        %1393 = vmatpush.bf16.msra.mxu0 0
        %1394 = vmatpush.bf16.msra.mxu0 0
        %1395 = vmatpush.bf16.msra.mxu0 0
        %1396 = vmatpush.bf16.msra.mxu0 %v1387
        %1397 = vmatpush.bf16.msra.mxu0 %v1386
        %1398 = vmatmul.bf16.gmra.mxu0 %v1359
        %v1399 = vpop.f32.mrf.mxu0
        %v1400 = vadd.f32 %v1376, %v1399
        %v1401 = vpop.f32.mrf.mxu0
        %v1402 = vadd.f32 %v1376, %v1401
        %1403 = vdwg.mxu0
        %v1405 = vperm.slane %v1333, 0
        %v1411 = vunpack.c.l.b16 %v1329
        %v1412 = vunpack.c.l.b16 %v1330
        %v1413 = vunpack.c.l.b16 %v1331
        %v1414 = vunpack.c.l.b16 %v1332
        %v1415 = vpack.c.b16 %v1412, %v1411
        %v1416 = vpack.c.b16 %v1414, %v1413
        %1419 = vmatpush.bf16.msra.mxu0 0
        %1420 = vmatpush.bf16.msra.mxu0 0
        %1421 = vmatpush.bf16.msra.mxu0 0
        %1422 = vmatpush.bf16.msra.mxu0 0
        %1423 = vmatpush.bf16.msra.mxu0 0
        %1424 = vmatpush.bf16.msra.mxu0 0
        %1425 = vmatpush.bf16.msra.mxu0 %v1416
        %1426 = vmatpush.bf16.msra.mxu0 %v1415
        %1427 = vmatmul.bf16.gmra.mxu0 %v1359
        %v1428 = vpop.f32.mrf.mxu0
        %v1429 = vadd.f32 %v1405, %v1428
        %v1430 = vpop.f32.mrf.mxu0
        %v1431 = vadd.f32 %v1405, %v1430
        %1432 = vdwg.mxu0
        %v1433 = vpack.c.bf16 %v1373, %v1371
        %v1434 = vpack.c.bf16 %v1402, %v1400
        %v1435 = vpack.c.bf16 %v1431, %v1429
        %vm1436 = vcmask 64512
        %v1438 = vsel %vm1436, %v1433, 0
        %v1441 = vsel %vm1436, %v1434, 0
        %1443 = vmatpush.bf16.xpose.msra.mxu0 0
        %1444 = vmatpush.bf16.xpose.msra.mxu0 0
        %1445 = vmatpush.bf16.xpose.msra.mxu0 0
        %1446 = vmatpush.bf16.xpose.msra.mxu0 0
        %1447 = vmatpush.bf16.xpose.msra.mxu0 0
        %1448 = vmatpush.bf16.xpose.msra.mxu0 0
        %1449 = vmatpush.bf16.xpose.msra.mxu0 0
        %1450 = vmatpush.bf16.xpose.msra.mxu0 %v1441
        %1451 = vmatmul.bf16.gmra.mxu0 %v1438
        %v1452 = vpop.f32.mrf.mxu0
        %v1453 = vadd.f32 0.0, %v1452
        %v1454 = vpop.f32.mrf.mxu0
        %v1455 = vadd.f32 0.0, %v1454
        %1456 = vdwg.mxu0
        %v1457 = vmul.f32 %v1453, 0.35355338
        %v1458 = vmul.f32 %v1455, 0.35355338
        %vm1459 = vcmask 130048
        %v1460 = vsel %vm1459, %v1457, -inf
        %1461 = vmax.xlane.f32.xlu0 %v1460
        %v1462 = vpop.xlane.xlu0 %1461
        %v1463 = vsel %vm1459, %v1458, -inf
        %1464 = vmax.xlane.f32.xlu0 %v1463
        %v1465 = vpop.xlane.xlu0 %1464
        %v1466 = vsub.f32 %v1457, %v1462
        %v1467 = vsub.f32 %v1458, %v1465
        %v1468 = vmul.f32 %v1466, 1.442695
        %v1469 = vpow.pop %v1468
        %v1470 = vmul.f32 %v1467, 1.442695
        %v1471 = vpow.pop %v1470
        %v1472 = vsel %vm1459, %v1469, 0.0
        %1473 = vadd.xlane.f32.xlu0 %v1472
        %v1474 = vpop.xlane.xlu0 %1473
        %v1475 = vsel %vm1459, %v1471, 0.0
        %1476 = vadd.xlane.f32.xlu0 %v1475
        %v1477 = vpop.xlane.xlu0 %1476
        %v1478 = vrcp.pop %v1474
        %v1479 = vrcp.pop %v1477
        %v1480 = vmul.f32 %v1469, %v1478
        %v1481 = vmul.f32 %v1471, %v1479
        %v1482 = vpack.c.bf16 %v1481, %v1480
        %v1484 = vsel %vm1459, %v1482, 0
        %1486 = vmatpush.bf16.msra.mxu0 0
        %1487 = vmatpush.bf16.msra.mxu0 0
        %1488 = vmatpush.bf16.msra.mxu0 0
        %1489 = vmatpush.bf16.msra.mxu0 0
        %1490 = vmatpush.bf16.msra.mxu0 0
        %1491 = vmatpush.bf16.msra.mxu0 0
        %1492 = vmatpush.bf16.msra.mxu0 0
        %1493 = vmatpush.bf16.msra.mxu0 %v1435
        %1494 = vmatmul.bf16.gmra.mxu0 %v1484
        %v1495 = vpop.f32.mrf.mxu0
        %v1496 = vadd.f32 0.0, %v1495
        %v1497 = vpop.f32.mrf.mxu0
        %v1498 = vadd.f32 0.0, %v1497
        %1499 = vdwg.mxu0
        %1501 = vrot.lane.b32.xlu0 %v1433, 120
        %v1502 = vpop.permute.xlu0 %1501
        %1504 = vrot.lane.b32.xlu0 %v1434, 120
        %v1505 = vpop.permute.xlu0 %1504
        %v1507 = vsel %vm1436, %v1502, 0
        %v1510 = vsel %vm1436, %v1505, 0
        %1512 = vmatpush.bf16.xpose.msra.mxu0 0
        %1513 = vmatpush.bf16.xpose.msra.mxu0 0
        %1514 = vmatpush.bf16.xpose.msra.mxu0 0
        %1515 = vmatpush.bf16.xpose.msra.mxu0 0
        %1516 = vmatpush.bf16.xpose.msra.mxu0 0
        %1517 = vmatpush.bf16.xpose.msra.mxu0 0
        %1518 = vmatpush.bf16.xpose.msra.mxu0 0
        %1519 = vmatpush.bf16.xpose.msra.mxu0 %v1510
        %1520 = vmatmul.bf16.gmra.mxu0 %v1507
        %v1521 = vpop.f32.mrf.mxu0
        %v1522 = vadd.f32 0.0, %v1521
        %v1523 = vpop.f32.mrf.mxu0
        %v1524 = vadd.f32 0.0, %v1523
        %1525 = vdwg.mxu0
        %v1526 = vmul.f32 %v1522, 0.35355338
        %v1527 = vmul.f32 %v1524, 0.35355338
        %v1528 = vsel %vm1459, %v1526, -inf
        %1529 = vmax.xlane.f32.xlu0 %v1528
        %v1530 = vpop.xlane.xlu0 %1529
        %v1531 = vsel %vm1459, %v1527, -inf
        %1532 = vmax.xlane.f32.xlu0 %v1531
        %v1533 = vpop.xlane.xlu0 %1532
        %v1534 = vsub.f32 %v1526, %v1530
        %v1535 = vsub.f32 %v1527, %v1533
        %v1536 = vmul.f32 %v1534, 1.442695
        %v1537 = vpow.pop %v1536
        %v1538 = vmul.f32 %v1535, 1.442695
        %v1539 = vpow.pop %v1538
        %v1540 = vsel %vm1459, %v1537, 0.0
        %1541 = vadd.xlane.f32.xlu0 %v1540
        %v1542 = vpop.xlane.xlu0 %1541
        %v1543 = vsel %vm1459, %v1539, 0.0
        %1544 = vadd.xlane.f32.xlu0 %v1543
        %v1545 = vpop.xlane.xlu0 %1544
        %v1546 = vrcp.pop %v1542
        %v1547 = vrcp.pop %v1545
        %v1548 = vmul.f32 %v1537, %v1546
        %v1549 = vmul.f32 %v1539, %v1547
        %v1550 = vpack.c.bf16 %v1549, %v1548
        %1552 = vrot.lane.b32.xlu0 %v1435, 120
        %v1553 = vpop.permute.xlu0 %1552
        %v1556 = vsel %vm1459, %v1550, 0
        %1558 = vmatpush.bf16.msra.mxu0 0
        %1559 = vmatpush.bf16.msra.mxu0 0
        %1560 = vmatpush.bf16.msra.mxu0 0
        %1561 = vmatpush.bf16.msra.mxu0 0
        %1562 = vmatpush.bf16.msra.mxu0 0
        %1563 = vmatpush.bf16.msra.mxu0 0
        %1564 = vmatpush.bf16.msra.mxu0 0
        %1565 = vmatpush.bf16.msra.mxu0 %v1553
        %1566 = vmatmul.bf16.gmra.mxu0 %v1556
        %v1567 = vpop.f32.mrf.mxu0
        %v1568 = vadd.f32 0.0, %v1567
        %v1569 = vpop.f32.mrf.mxu0
        %v1570 = vadd.f32 0.0, %v1569
        %1571 = vdwg.mxu0
        %1572 = vrot.lane.b32.xlu0 %v1433, 112
        %v1573 = vpop.permute.xlu0 %1572
        %1574 = vrot.lane.b32.xlu0 %v1434, 112
        %v1575 = vpop.permute.xlu0 %1574
        %v1577 = vsel %vm1436, %v1573, 0
        %v1580 = vsel %vm1436, %v1575, 0
        %1582 = vmatpush.bf16.xpose.msra.mxu0 0
        %1583 = vmatpush.bf16.xpose.msra.mxu0 0
        %1584 = vmatpush.bf16.xpose.msra.mxu0 0
        %1585 = vmatpush.bf16.xpose.msra.mxu0 0
        %1586 = vmatpush.bf16.xpose.msra.mxu0 0
        %1587 = vmatpush.bf16.xpose.msra.mxu0 0
        %1588 = vmatpush.bf16.xpose.msra.mxu0 0
        %1589 = vmatpush.bf16.xpose.msra.mxu0 %v1580
        %1590 = vmatmul.bf16.gmra.mxu0 %v1577
        %v1591 = vpop.f32.mrf.mxu0
        %v1592 = vadd.f32 0.0, %v1591
        %v1593 = vpop.f32.mrf.mxu0
        %v1594 = vadd.f32 0.0, %v1593
        %1595 = vdwg.mxu0
        %v1596 = vmul.f32 %v1592, 0.35355338
        %v1597 = vmul.f32 %v1594, 0.35355338
        %v1598 = vsel %vm1459, %v1596, -inf
        %1599 = vmax.xlane.f32.xlu0 %v1598
        %v1600 = vpop.xlane.xlu0 %1599
        %v1601 = vsel %vm1459, %v1597, -inf
        %1602 = vmax.xlane.f32.xlu0 %v1601
        %v1603 = vpop.xlane.xlu0 %1602
        %v1604 = vsub.f32 %v1596, %v1600
        %v1605 = vsub.f32 %v1597, %v1603
        %v1606 = vmul.f32 %v1604, 1.442695
        %v1607 = vpow.pop %v1606
        %v1608 = vmul.f32 %v1605, 1.442695
        %v1609 = vpow.pop %v1608
        %v1610 = vsel %vm1459, %v1607, 0.0
        %1611 = vadd.xlane.f32.xlu0 %v1610
        %v1612 = vpop.xlane.xlu0 %1611
        %v1613 = vsel %vm1459, %v1609, 0.0
        %1614 = vadd.xlane.f32.xlu0 %v1613
        %v1615 = vpop.xlane.xlu0 %1614
        %v1616 = vrcp.pop %v1612
        %v1617 = vrcp.pop %v1615
        %v1618 = vmul.f32 %v1607, %v1616
        %v1619 = vmul.f32 %v1609, %v1617
        %v1620 = vpack.c.bf16 %v1619, %v1618
        %1621 = vrot.lane.b32.xlu0 %v1435, 112
        %v1622 = vpop.permute.xlu0 %1621
        %v1625 = vsel %vm1459, %v1620, 0
        %1627 = vmatpush.bf16.msra.mxu0 0
        %1628 = vmatpush.bf16.msra.mxu0 0
        %1629 = vmatpush.bf16.msra.mxu0 0
        %1630 = vmatpush.bf16.msra.mxu0 0
        %1631 = vmatpush.bf16.msra.mxu0 0
        %1632 = vmatpush.bf16.msra.mxu0 0
        %1633 = vmatpush.bf16.msra.mxu0 0
        %1634 = vmatpush.bf16.msra.mxu0 %v1622
        %1635 = vmatmul.bf16.gmra.mxu0 %v1625
        %v1636 = vpop.f32.mrf.mxu0
        %v1637 = vadd.f32 0.0, %v1636
        %v1638 = vpop.f32.mrf.mxu0
        %v1639 = vadd.f32 0.0, %v1638
        %1640 = vdwg.mxu0
        %1641 = vrot.lane.b32.xlu0 %v1433, 104
        %v1642 = vpop.permute.xlu0 %1641
        %1643 = vrot.lane.b32.xlu0 %v1434, 104
        %v1644 = vpop.permute.xlu0 %1643
        %v1646 = vsel %vm1436, %v1642, 0
        %v1649 = vsel %vm1436, %v1644, 0
        %1651 = vmatpush.bf16.xpose.msra.mxu0 0
        %1652 = vmatpush.bf16.xpose.msra.mxu0 0
        %1653 = vmatpush.bf16.xpose.msra.mxu0 0
        %1654 = vmatpush.bf16.xpose.msra.mxu0 0
        %1655 = vmatpush.bf16.xpose.msra.mxu0 0
        %1656 = vmatpush.bf16.xpose.msra.mxu0 0
        %1657 = vmatpush.bf16.xpose.msra.mxu0 0
        %1658 = vmatpush.bf16.xpose.msra.mxu0 %v1649
        %1659 = vmatmul.bf16.gmra.mxu0 %v1646
        %v1660 = vpop.f32.mrf.mxu0
        %v1661 = vadd.f32 0.0, %v1660
        %v1662 = vpop.f32.mrf.mxu0
        %v1663 = vadd.f32 0.0, %v1662
        %1664 = vdwg.mxu0
        %v1665 = vmul.f32 %v1661, 0.35355338
        %v1666 = vmul.f32 %v1663, 0.35355338
        %v1667 = vsel %vm1459, %v1665, -inf
        %1668 = vmax.xlane.f32.xlu0 %v1667
        %v1669 = vpop.xlane.xlu0 %1668
        %v1670 = vsel %vm1459, %v1666, -inf
        %1671 = vmax.xlane.f32.xlu0 %v1670
        %v1672 = vpop.xlane.xlu0 %1671
        %v1673 = vsub.f32 %v1665, %v1669
        %v1674 = vsub.f32 %v1666, %v1672
        %v1675 = vmul.f32 %v1673, 1.442695
        %v1676 = vpow.pop %v1675
        %v1677 = vmul.f32 %v1674, 1.442695
        %v1678 = vpow.pop %v1677
        %v1679 = vsel %vm1459, %v1676, 0.0
        %1680 = vadd.xlane.f32.xlu0 %v1679
        %v1681 = vpop.xlane.xlu0 %1680
        %v1682 = vsel %vm1459, %v1678, 0.0
        %1683 = vadd.xlane.f32.xlu0 %v1682
        %v1684 = vpop.xlane.xlu0 %1683
        %v1685 = vrcp.pop %v1681
        %v1686 = vrcp.pop %v1684
        %v1687 = vmul.f32 %v1676, %v1685
        %v1688 = vmul.f32 %v1678, %v1686
        %v1689 = vpack.c.bf16 %v1688, %v1687
        %1690 = vrot.lane.b32.xlu0 %v1435, 104
        %v1691 = vpop.permute.xlu0 %1690
        %v1694 = vsel %vm1459, %v1689, 0
        %1696 = vmatpush.bf16.msra.mxu0 0
        %1697 = vmatpush.bf16.msra.mxu0 0
        %1698 = vmatpush.bf16.msra.mxu0 0
        %1699 = vmatpush.bf16.msra.mxu0 0
        %1700 = vmatpush.bf16.msra.mxu0 0
        %1701 = vmatpush.bf16.msra.mxu0 0
        %1702 = vmatpush.bf16.msra.mxu0 0
        %1703 = vmatpush.bf16.msra.mxu0 %v1691
        %1704 = vmatmul.bf16.gmra.mxu0 %v1694
        %v1705 = vpop.f32.mrf.mxu0
        %v1706 = vadd.f32 0.0, %v1705
        %v1707 = vpop.f32.mrf.mxu0
        %v1708 = vadd.f32 0.0, %v1707
        %1709 = vdwg.mxu0
        %1712 = vrot.lane.b32.xlu0 %v1568, 8
        %v1713 = vpop.permute.xlu0 %1712
        %1714 = vrot.lane.b32.xlu0 %v1570, 8
        %v1715 = vpop.permute.xlu0 %1714
        %1720 = vrot.lane.b32.xlu0 %v1637, 16
        %v1721 = vpop.permute.xlu0 %1720
        %1722 = vrot.lane.b32.xlu0 %v1639, 16
        %v1723 = vpop.permute.xlu0 %1722
        %1728 = vrot.lane.b32.xlu0 %v1706, 24
        %v1729 = vpop.permute.xlu0 %1728
        %1730 = vrot.lane.b32.xlu0 %v1708, 24
        %v1731 = vpop.permute.xlu0 %1730
        %v1734 = vsel %vm1436, %v1496, %v1713
        %v1735 = vsel %vm1436, %v1498, %v1715
        %v1736 = vsel %vm1459, %v1734, %v1721
        %v1737 = vsel %vm1459, %v1735, %v1723
        %vm1738 = vcmask 195584
        %v1739 = vsel %vm1738, %v1736, %v1729
        %v1740 = vsel %vm1738, %v1737, %v1731
        %v1741 = vpack.c.bf16 %v1740, %v1739
        %v1743 = vperm.slane %v1338, 0
        %v1749 = vunpack.c.l.b16 %v1334
        %v1750 = vunpack.c.l.b16 %v1335
        %v1751 = vunpack.c.l.b16 %v1336
        %v1752 = vunpack.c.l.b16 %v1337
        %v1753 = vpack.c.b16 %v1750, %v1749
        %v1754 = vpack.c.b16 %v1752, %v1751
        %v1758 = vsel %vm1357, %v1741, 0
        %1760 = vmatpush.bf16.msra.mxu0 0
        %1761 = vmatpush.bf16.msra.mxu0 0
        %1762 = vmatpush.bf16.msra.mxu0 0
        %1763 = vmatpush.bf16.msra.mxu0 0
        %1764 = vmatpush.bf16.msra.mxu0 0
        %1765 = vmatpush.bf16.msra.mxu0 0
        %1766 = vmatpush.bf16.msra.mxu0 %v1754
        %1767 = vmatpush.bf16.msra.mxu0 %v1753
        %1768 = vmatmul.bf16.gmra.mxu0 %v1758
        %v1769 = vpop.f32.mrf.mxu0
        %v1770 = vadd.f32 %v1743, %v1769
        %v1771 = vpop.f32.mrf.mxu0
        %v1772 = vadd.f32 %v1743, %v1771
        %1773 = vdwg.mxu0
        %v1774 = vadd.f32 %v1770, %v1309
        %v1775 = vadd.f32 %v1772, %v1310
        %v1776 = vsel %vm1357, %v1774, 0.0
        %1777 = vadd.xlane.f32.xlu0 %v1776
        %v1778 = vpop.xlane.xlu0 %1777
        %v1779 = vsel %vm1357, %v1775, 0.0
        %1780 = vadd.xlane.f32.xlu0 %v1779
        %v1781 = vpop.xlane.xlu0 %1780
        %v1782 = vrcp.pop 32.0
        %v1783 = vmul.f32 32.0, %v1782
        %v1784 = vsub.f32 1.0, %v1783
        %v1785 = vmul.f32 %v1782, %v1784
        %v1786 = vadd.f32 %v1782, %v1785
        %vm1787 = vweird.f32 %v1782
        %v1788 = vsel %vm1787, %v1782, %v1786
        %v1789 = vmul.f32 %v1778, %v1788
        %v1790 = vmul.f32 %v1781, %v1788
        %v1791 = vsub.f32 %v1774, %v1789
        %v1792 = vsub.f32 %v1775, %v1790
        %v1793 = vmul.f32 %v1791, %v1791
        %v1794 = vmul.f32 %v1792, %v1792
        %v1795 = vsel %vm1357, %v1793, 0.0
        %1796 = vadd.xlane.f32.xlu0 %v1795
        %v1797 = vpop.xlane.xlu0 %1796
        %v1798 = vsel %vm1357, %v1794, 0.0
        %1799 = vadd.xlane.f32.xlu0 %v1798
        %v1800 = vpop.xlane.xlu0 %1799
        %v1801 = vmul.f32 %v1797, %v1788
        %v1802 = vmul.f32 %v1800, %v1788
        %v1803 = vadd.f32 %v1801, 1e-12
        %v1804 = vadd.f32 %v1802, 1e-12
        %v1805 = vrsqrt.pop %v1803
        %v1806 = vmul.f32 %v1805, %v1803
        %v1807 = vmul.f32 %v1806, %v1805
        %v1808 = vmul.f32 0.5, %v1807
        %v1809 = vsub.f32 1.5, %v1808
        %v1810 = vmul.f32 %v1805, %v1809
        %vm1811 = vweird.f32 %v1803
        %vm1812 = vweird.f32 %v1805
        %vm1813 = vmor %vm1811, %vm1812
        %v1814 = vsel %vm1813, %v1805, %v1810
        %v1815 = vrsqrt.pop %v1804
        %v1816 = vmul.f32 %v1815, %v1804
        %v1817 = vmul.f32 %v1816, %v1815
        %v1818 = vmul.f32 0.5, %v1817
        %v1819 = vsub.f32 1.5, %v1818
        %v1820 = vmul.f32 %v1815, %v1819
        %vm1821 = vweird.f32 %v1804
        %vm1822 = vweird.f32 %v1815
        %vm1823 = vmor %vm1821, %vm1822
        %v1824 = vsel %vm1823, %v1815, %v1820
        %v1825 = vmul.f32 %v1791, %v1814
        %v1826 = vmul.f32 %v1792, %v1824
        %v1828 = vperm.slane %v1339, 0
        %v1830 = vmul.f32 %v1825, %v1828
        %v1831 = vmul.f32 %v1826, %v1828
        %v1833 = vperm.slane %v1340, 0
        %v1835 = vadd.f32 %v1830, %v1833
        %v1836 = vadd.f32 %v1831, %v1833
        %v1837 = vld [vmem:[#allocation16] sm:$0xf]
        %v1838 = vld [vmem:[#allocation16 + $0x4] sm:$0xf]
        %v1839 = vld [vmem:[#allocation16 + $0x8] sm:$0xf]
        %v1840 = vld [vmem:[#allocation16 + $0xc] sm:$0xf]
        %v1841 = vld [vmem:[#allocation18] sm:$0x1]
        %v1842 = vld [vmem:[#allocation19] sm:$0xf]
        %v1843 = vld [vmem:[#allocation19 + $0x4] sm:$0xf]
        %v1844 = vld [vmem:[#allocation19 + $0x8] sm:$0xf]
        %v1845 = vld [vmem:[#allocation19 + $0xc] sm:$0xf]
        %v1846 = vld [vmem:[#allocation21] sm:$0x1]
        %v1847 = vld [vmem:[#allocation22] sm:$0xf]
        %v1848 = vld [vmem:[#allocation22 + $0x4] sm:$0xf]
        %v1849 = vld [vmem:[#allocation22 + $0x8] sm:$0xf]
        %v1850 = vld [vmem:[#allocation22 + $0xc] sm:$0xf]
        %v1851 = vld [vmem:[#allocation24] sm:$0x1]
        %v1852 = vld [vmem:[#allocation25] sm:$0xf]
        %v1853 = vld [vmem:[#allocation25 + $0x4] sm:$0xf]
        %v1854 = vld [vmem:[#allocation25 + $0x8] sm:$0xf]
        %v1855 = vld [vmem:[#allocation25 + $0xc] sm:$0xf]
        %v1856 = vld [vmem:[#allocation27] sm:$0x1]
        %v1857 = vld [vmem:[#allocation28] sm:$0x1]
        %v1858 = vld [vmem:[#allocation30] sm:$0x1]
        %v1859 = vpack.c.bf16 %v1836, %v1835
        %v1860 = vpack.c.bf16 %v1312, %v1311
        %v1862 = vperm.slane %v1841, 0
        %v1868 = vunpack.c.l.b16 %v1837
        %v1869 = vunpack.c.l.b16 %v1838
        %v1870 = vunpack.c.l.b16 %v1839
        %v1871 = vunpack.c.l.b16 %v1840
        %v1872 = vpack.c.b16 %v1869, %v1868
        %v1873 = vpack.c.b16 %v1871, %v1870
        %v1877 = vsel %vm1357, %v1859, 0
        %1879 = vmatpush.bf16.msra.mxu0 0
        %1880 = vmatpush.bf16.msra.mxu0 0
        %1881 = vmatpush.bf16.msra.mxu0 0
        %1882 = vmatpush.bf16.msra.mxu0 0
        %1883 = vmatpush.bf16.msra.mxu0 0
        %1884 = vmatpush.bf16.msra.mxu0 0
        %1885 = vmatpush.bf16.msra.mxu0 %v1873
        %1886 = vmatpush.bf16.msra.mxu0 %v1872
        %1887 = vmatmul.bf16.gmra.mxu0 %v1877
        %v1888 = vpop.f32.mrf.mxu0
        %v1889 = vadd.f32 %v1862, %v1888
        %v1890 = vpop.f32.mrf.mxu0
        %v1891 = vadd.f32 %v1862, %v1890
        %1892 = vdwg.mxu0
        %v1894 = vperm.slane %v1846, 0
        %v1900 = vunpack.c.l.b16 %v1842
        %v1901 = vunpack.c.l.b16 %v1843
        %v1902 = vunpack.c.l.b16 %v1844
        %v1903 = vunpack.c.l.b16 %v1845
        %v1904 = vpack.c.b16 %v1901, %v1900
        %v1905 = vpack.c.b16 %v1903, %v1902
        %v1909 = vsel %vm1357, %v1860, 0
        %1911 = vmatpush.bf16.msra.mxu0 0
        %1912 = vmatpush.bf16.msra.mxu0 0
        %1913 = vmatpush.bf16.msra.mxu0 0
        %1914 = vmatpush.bf16.msra.mxu0 0
        %1915 = vmatpush.bf16.msra.mxu0 0
        %1916 = vmatpush.bf16.msra.mxu0 0
        %1917 = vmatpush.bf16.msra.mxu0 %v1905
        %1918 = vmatpush.bf16.msra.mxu0 %v1904
        %1919 = vmatmul.bf16.gmra.mxu0 %v1909
        %v1920 = vpop.f32.mrf.mxu0
        %v1921 = vadd.f32 %v1894, %v1920
        %v1922 = vpop.f32.mrf.mxu0
        %v1923 = vadd.f32 %v1894, %v1922
        %1924 = vdwg.mxu0
        %v1926 = vperm.slane %v1851, 0
        %v1932 = vunpack.c.l.b16 %v1847
        %v1933 = vunpack.c.l.b16 %v1848
        %v1934 = vunpack.c.l.b16 %v1849
        %v1935 = vunpack.c.l.b16 %v1850
        %v1936 = vpack.c.b16 %v1933, %v1932
        %v1937 = vpack.c.b16 %v1935, %v1934
        %1940 = vmatpush.bf16.msra.mxu0 0
        %1941 = vmatpush.bf16.msra.mxu0 0
        %1942 = vmatpush.bf16.msra.mxu0 0
        %1943 = vmatpush.bf16.msra.mxu0 0
        %1944 = vmatpush.bf16.msra.mxu0 0
        %1945 = vmatpush.bf16.msra.mxu0 0
        %1946 = vmatpush.bf16.msra.mxu0 %v1937
        %1947 = vmatpush.bf16.msra.mxu0 %v1936
        %1948 = vmatmul.bf16.gmra.mxu0 %v1909
        %v1949 = vpop.f32.mrf.mxu0
        %v1950 = vadd.f32 %v1926, %v1949
        %v1951 = vpop.f32.mrf.mxu0
        %v1952 = vadd.f32 %v1926, %v1951
        %1953 = vdwg.mxu0
        %v1954 = vpack.c.bf16 %v1891, %v1889
        %v1955 = vpack.c.bf16 %v1923, %v1921
        %v1956 = vpack.c.bf16 %v1952, %v1950
        %v1958 = vsel %vm1436, %v1954, 0
        %v1961 = vsel %vm1436, %v1955, 0
        %1963 = vmatpush.bf16.xpose.msra.mxu0 0
        %1964 = vmatpush.bf16.xpose.msra.mxu0 0
        %1965 = vmatpush.bf16.xpose.msra.mxu0 0
        %1966 = vmatpush.bf16.xpose.msra.mxu0 0
        %1967 = vmatpush.bf16.xpose.msra.mxu0 0
        %1968 = vmatpush.bf16.xpose.msra.mxu0 0
        %1969 = vmatpush.bf16.xpose.msra.mxu0 0
        %1970 = vmatpush.bf16.xpose.msra.mxu0 %v1961
        %1971 = vmatmul.bf16.gmra.mxu0 %v1958
        %v1972 = vpop.f32.mrf.mxu0
        %v1973 = vadd.f32 0.0, %v1972
        %v1974 = vpop.f32.mrf.mxu0
        %v1975 = vadd.f32 0.0, %v1974
        %1976 = vdwg.mxu0
        %v1977 = vmul.f32 %v1973, 0.35355338
        %v1978 = vmul.f32 %v1975, 0.35355338
        %v1979 = vadd.f32 %v1977, %v1317
        %v1980 = vadd.f32 %v1978, %v1318
        %v1981 = vsel %vm1459, %v1979, -inf
        %1982 = vmax.xlane.f32.xlu0 %v1981
        %v1983 = vpop.xlane.xlu0 %1982
        %v1984 = vsel %vm1459, %v1980, -inf
        %1985 = vmax.xlane.f32.xlu0 %v1984
        %v1986 = vpop.xlane.xlu0 %1985
        %v1987 = vsub.f32 %v1979, %v1983
        %v1988 = vsub.f32 %v1980, %v1986
        %v1989 = vmul.f32 %v1987, 1.442695
        %v1990 = vpow.pop %v1989
        %v1991 = vmul.f32 %v1988, 1.442695
        %v1992 = vpow.pop %v1991
        %v1993 = vsel %vm1459, %v1990, 0.0
        %1994 = vadd.xlane.f32.xlu0 %v1993
        %v1995 = vpop.xlane.xlu0 %1994
        %v1996 = vsel %vm1459, %v1992, 0.0
        %1997 = vadd.xlane.f32.xlu0 %v1996
        %v1998 = vpop.xlane.xlu0 %1997
        %v1999 = vrcp.pop %v1995
        %v2000 = vrcp.pop %v1998
        %v2001 = vmul.f32 %v1990, %v1999
        %v2002 = vmul.f32 %v1992, %v2000
        %v2003 = vpack.c.bf16 %v2002, %v2001
        %v2005 = vsel %vm1459, %v2003, 0
        %2007 = vmatpush.bf16.msra.mxu0 0
        %2008 = vmatpush.bf16.msra.mxu0 0
        %2009 = vmatpush.bf16.msra.mxu0 0
        %2010 = vmatpush.bf16.msra.mxu0 0
        %2011 = vmatpush.bf16.msra.mxu0 0
        %2012 = vmatpush.bf16.msra.mxu0 0
        %2013 = vmatpush.bf16.msra.mxu0 0
        %2014 = vmatpush.bf16.msra.mxu0 %v1956
        %2015 = vmatmul.bf16.gmra.mxu0 %v2005
        %v2016 = vpop.f32.mrf.mxu0
        %v2017 = vadd.f32 0.0, %v2016
        %v2018 = vpop.f32.mrf.mxu0
        %v2019 = vadd.f32 0.0, %v2018
        %2020 = vdwg.mxu0
        %2022 = vrot.lane.b32.xlu0 %v1954, 120
        %v2023 = vpop.permute.xlu0 %2022
        %2025 = vrot.lane.b32.xlu0 %v1955, 120
        %v2026 = vpop.permute.xlu0 %2025
        %v2028 = vsel %vm1436, %v2023, 0
        %v2031 = vsel %vm1436, %v2026, 0
        %2033 = vmatpush.bf16.xpose.msra.mxu0 0
        %2034 = vmatpush.bf16.xpose.msra.mxu0 0
        %2035 = vmatpush.bf16.xpose.msra.mxu0 0
        %2036 = vmatpush.bf16.xpose.msra.mxu0 0
        %2037 = vmatpush.bf16.xpose.msra.mxu0 0
        %2038 = vmatpush.bf16.xpose.msra.mxu0 0
        %2039 = vmatpush.bf16.xpose.msra.mxu0 0
        %2040 = vmatpush.bf16.xpose.msra.mxu0 %v2031
        %2041 = vmatmul.bf16.gmra.mxu0 %v2028
        %v2042 = vpop.f32.mrf.mxu0
        %v2043 = vadd.f32 0.0, %v2042
        %v2044 = vpop.f32.mrf.mxu0
        %v2045 = vadd.f32 0.0, %v2044
        %2046 = vdwg.mxu0
        %v2047 = vmul.f32 %v2043, 0.35355338
        %v2048 = vmul.f32 %v2045, 0.35355338
        %v2049 = vadd.f32 %v2047, %v1317
        %v2050 = vadd.f32 %v2048, %v1318
        %v2051 = vsel %vm1459, %v2049, -inf
        %2052 = vmax.xlane.f32.xlu0 %v2051
        %v2053 = vpop.xlane.xlu0 %2052
        %v2054 = vsel %vm1459, %v2050, -inf
        %2055 = vmax.xlane.f32.xlu0 %v2054
        %v2056 = vpop.xlane.xlu0 %2055
        %v2057 = vsub.f32 %v2049, %v2053
        %v2058 = vsub.f32 %v2050, %v2056
        %v2059 = vmul.f32 %v2057, 1.442695
        %v2060 = vpow.pop %v2059
        %v2061 = vmul.f32 %v2058, 1.442695
        %v2062 = vpow.pop %v2061
        %v2063 = vsel %vm1459, %v2060, 0.0
        %2064 = vadd.xlane.f32.xlu0 %v2063
        %v2065 = vpop.xlane.xlu0 %2064
        %v2066 = vsel %vm1459, %v2062, 0.0
        %2067 = vadd.xlane.f32.xlu0 %v2066
        %v2068 = vpop.xlane.xlu0 %2067
        %v2069 = vrcp.pop %v2065
        %v2070 = vrcp.pop %v2068
        %v2071 = vmul.f32 %v2060, %v2069
        %v2072 = vmul.f32 %v2062, %v2070
        %v2073 = vpack.c.bf16 %v2072, %v2071
        %2075 = vrot.lane.b32.xlu0 %v1956, 120
        %v2076 = vpop.permute.xlu0 %2075
        %v2079 = vsel %vm1459, %v2073, 0
        %2081 = vmatpush.bf16.msra.mxu0 0
        %2082 = vmatpush.bf16.msra.mxu0 0
        %2083 = vmatpush.bf16.msra.mxu0 0
        %2084 = vmatpush.bf16.msra.mxu0 0
        %2085 = vmatpush.bf16.msra.mxu0 0
        %2086 = vmatpush.bf16.msra.mxu0 0
        %2087 = vmatpush.bf16.msra.mxu0 0
        %2088 = vmatpush.bf16.msra.mxu0 %v2076
        %2089 = vmatmul.bf16.gmra.mxu0 %v2079
        %v2090 = vpop.f32.mrf.mxu0
        %v2091 = vadd.f32 0.0, %v2090
        %v2092 = vpop.f32.mrf.mxu0
        %v2093 = vadd.f32 0.0, %v2092
        %2094 = vdwg.mxu0
        %2095 = vrot.lane.b32.xlu0 %v1954, 112
        %v2096 = vpop.permute.xlu0 %2095
        %2097 = vrot.lane.b32.xlu0 %v1955, 112
        %v2098 = vpop.permute.xlu0 %2097
        %v2100 = vsel %vm1436, %v2096, 0
        %v2103 = vsel %vm1436, %v2098, 0
        %2105 = vmatpush.bf16.xpose.msra.mxu0 0
        %2106 = vmatpush.bf16.xpose.msra.mxu0 0
        %2107 = vmatpush.bf16.xpose.msra.mxu0 0
        %2108 = vmatpush.bf16.xpose.msra.mxu0 0
        %2109 = vmatpush.bf16.xpose.msra.mxu0 0
        %2110 = vmatpush.bf16.xpose.msra.mxu0 0
        %2111 = vmatpush.bf16.xpose.msra.mxu0 0
        %2112 = vmatpush.bf16.xpose.msra.mxu0 %v2103
        %2113 = vmatmul.bf16.gmra.mxu0 %v2100
        %v2114 = vpop.f32.mrf.mxu0
        %v2115 = vadd.f32 0.0, %v2114
        %v2116 = vpop.f32.mrf.mxu0
        %v2117 = vadd.f32 0.0, %v2116
        %2118 = vdwg.mxu0
        %v2119 = vmul.f32 %v2115, 0.35355338
        %v2120 = vmul.f32 %v2117, 0.35355338
        %v2121 = vadd.f32 %v2119, %v1317
        %v2122 = vadd.f32 %v2120, %v1318
        %v2123 = vsel %vm1459, %v2121, -inf
        %2124 = vmax.xlane.f32.xlu0 %v2123
        %v2125 = vpop.xlane.xlu0 %2124
        %v2126 = vsel %vm1459, %v2122, -inf
        %2127 = vmax.xlane.f32.xlu0 %v2126
        %v2128 = vpop.xlane.xlu0 %2127
        %v2129 = vsub.f32 %v2121, %v2125
        %v2130 = vsub.f32 %v2122, %v2128
        %v2131 = vmul.f32 %v2129, 1.442695
        %v2132 = vpow.pop %v2131
        %v2133 = vmul.f32 %v2130, 1.442695
        %v2134 = vpow.pop %v2133
        %v2135 = vsel %vm1459, %v2132, 0.0
        %2136 = vadd.xlane.f32.xlu0 %v2135
        %v2137 = vpop.xlane.xlu0 %2136
        %v2138 = vsel %vm1459, %v2134, 0.0
        %2139 = vadd.xlane.f32.xlu0 %v2138
        %v2140 = vpop.xlane.xlu0 %2139
        %v2141 = vrcp.pop %v2137
        %v2142 = vrcp.pop %v2140
        %v2143 = vmul.f32 %v2132, %v2141
        %v2144 = vmul.f32 %v2134, %v2142
        %v2145 = vpack.c.bf16 %v2144, %v2143
        %2146 = vrot.lane.b32.xlu0 %v1956, 112
        %v2147 = vpop.permute.xlu0 %2146
        %v2150 = vsel %vm1459, %v2145, 0
        %2152 = vmatpush.bf16.msra.mxu0 0
        %2153 = vmatpush.bf16.msra.mxu0 0
        %2154 = vmatpush.bf16.msra.mxu0 0
        %2155 = vmatpush.bf16.msra.mxu0 0
        %2156 = vmatpush.bf16.msra.mxu0 0
        %2157 = vmatpush.bf16.msra.mxu0 0
        %2158 = vmatpush.bf16.msra.mxu0 0
        %2159 = vmatpush.bf16.msra.mxu0 %v2147
        %2160 = vmatmul.bf16.gmra.mxu0 %v2150
        %v2161 = vpop.f32.mrf.mxu0
        %v2162 = vadd.f32 0.0, %v2161
        %v2163 = vpop.f32.mrf.mxu0
        %v2164 = vadd.f32 0.0, %v2163
        %2165 = vdwg.mxu0
        %2166 = vrot.lane.b32.xlu0 %v1954, 104
        %v2167 = vpop.permute.xlu0 %2166
        %2168 = vrot.lane.b32.xlu0 %v1955, 104
        %v2169 = vpop.permute.xlu0 %2168
        %v2171 = vsel %vm1436, %v2167, 0
        %v2174 = vsel %vm1436, %v2169, 0
        %2176 = vmatpush.bf16.xpose.msra.mxu0 0
        %2177 = vmatpush.bf16.xpose.msra.mxu0 0
        %2178 = vmatpush.bf16.xpose.msra.mxu0 0
        %2179 = vmatpush.bf16.xpose.msra.mxu0 0
        %2180 = vmatpush.bf16.xpose.msra.mxu0 0
        %2181 = vmatpush.bf16.xpose.msra.mxu0 0
        %2182 = vmatpush.bf16.xpose.msra.mxu0 0
        %2183 = vmatpush.bf16.xpose.msra.mxu0 %v2174
        %2184 = vmatmul.bf16.gmra.mxu0 %v2171
        %v2185 = vpop.f32.mrf.mxu0
        %v2186 = vadd.f32 0.0, %v2185
        %v2187 = vpop.f32.mrf.mxu0
        %v2188 = vadd.f32 0.0, %v2187
        %2189 = vdwg.mxu0
        %v2190 = vmul.f32 %v2186, 0.35355338
        %v2191 = vmul.f32 %v2188, 0.35355338
        %v2192 = vadd.f32 %v2190, %v1317
        %v2193 = vadd.f32 %v2191, %v1318
        %v2194 = vsel %vm1459, %v2192, -inf
        %2195 = vmax.xlane.f32.xlu0 %v2194
        %v2196 = vpop.xlane.xlu0 %2195
        %v2197 = vsel %vm1459, %v2193, -inf
        %2198 = vmax.xlane.f32.xlu0 %v2197
        %v2199 = vpop.xlane.xlu0 %2198
        %v2200 = vsub.f32 %v2192, %v2196
        %v2201 = vsub.f32 %v2193, %v2199
        %v2202 = vmul.f32 %v2200, 1.442695
        %v2203 = vpow.pop %v2202
        %v2204 = vmul.f32 %v2201, 1.442695
        %v2205 = vpow.pop %v2204
        %v2206 = vsel %vm1459, %v2203, 0.0
        %2207 = vadd.xlane.f32.xlu0 %v2206
        %v2208 = vpop.xlane.xlu0 %2207
        %v2209 = vsel %vm1459, %v2205, 0.0
        %2210 = vadd.xlane.f32.xlu0 %v2209
        %v2211 = vpop.xlane.xlu0 %2210
        %v2212 = vrcp.pop %v2208
        %v2213 = vrcp.pop %v2211
        %v2214 = vmul.f32 %v2203, %v2212
        %v2215 = vmul.f32 %v2205, %v2213
        %v2216 = vpack.c.bf16 %v2215, %v2214
        %2217 = vrot.lane.b32.xlu0 %v1956, 104
        %v2218 = vpop.permute.xlu0 %2217
        %v2221 = vsel %vm1459, %v2216, 0
        %2223 = vmatpush.bf16.msra.mxu0 0
        %2224 = vmatpush.bf16.msra.mxu0 0
        %2225 = vmatpush.bf16.msra.mxu0 0
        %2226 = vmatpush.bf16.msra.mxu0 0
        %2227 = vmatpush.bf16.msra.mxu0 0
        %2228 = vmatpush.bf16.msra.mxu0 0
        %2229 = vmatpush.bf16.msra.mxu0 0
        %2230 = vmatpush.bf16.msra.mxu0 %v2218
        %2231 = vmatmul.bf16.gmra.mxu0 %v2221
        %v2232 = vpop.f32.mrf.mxu0
        %v2233 = vadd.f32 0.0, %v2232
        %v2234 = vpop.f32.mrf.mxu0
        %v2235 = vadd.f32 0.0, %v2234
        %2236 = vdwg.mxu0
        %2239 = vrot.lane.b32.xlu0 %v2091, 8
        %v2240 = vpop.permute.xlu0 %2239
        %2241 = vrot.lane.b32.xlu0 %v2093, 8
        %v2242 = vpop.permute.xlu0 %2241
        %2247 = vrot.lane.b32.xlu0 %v2162, 16
        %v2248 = vpop.permute.xlu0 %2247
        %2249 = vrot.lane.b32.xlu0 %v2164, 16
        %v2250 = vpop.permute.xlu0 %2249
        %2255 = vrot.lane.b32.xlu0 %v2233, 24
        %v2256 = vpop.permute.xlu0 %2255
        %2257 = vrot.lane.b32.xlu0 %v2235, 24
        %v2258 = vpop.permute.xlu0 %2257
        %v2261 = vsel %vm1436, %v2017, %v2240
        %v2262 = vsel %vm1436, %v2019, %v2242
        %v2263 = vsel %vm1459, %v2261, %v2248
        %v2264 = vsel %vm1459, %v2262, %v2250
        %v2265 = vsel %vm1738, %v2263, %v2256
        %v2266 = vsel %vm1738, %v2264, %v2258
        %v2267 = vpack.c.bf16 %v2266, %v2265
        %v2269 = vperm.slane %v1856, 0
        %v2275 = vunpack.c.l.b16 %v1852
        %v2276 = vunpack.c.l.b16 %v1853
        %v2277 = vunpack.c.l.b16 %v1854
        %v2278 = vunpack.c.l.b16 %v1855
        %v2279 = vpack.c.b16 %v2276, %v2275
        %v2280 = vpack.c.b16 %v2278, %v2277
        %v2284 = vsel %vm1357, %v2267, 0
        %2286 = vmatpush.bf16.msra.mxu0 0
        %2287 = vmatpush.bf16.msra.mxu0 0
        %2288 = vmatpush.bf16.msra.mxu0 0
        %2289 = vmatpush.bf16.msra.mxu0 0
        %2290 = vmatpush.bf16.msra.mxu0 0
        %2291 = vmatpush.bf16.msra.mxu0 0
        %2292 = vmatpush.bf16.msra.mxu0 %v2280
        %2293 = vmatpush.bf16.msra.mxu0 %v2279
        %2294 = vmatmul.bf16.gmra.mxu0 %v2284
        %v2295 = vpop.f32.mrf.mxu0
        %v2296 = vadd.f32 %v2269, %v2295
        %v2297 = vpop.f32.mrf.mxu0
        %v2298 = vadd.f32 %v2269, %v2297
        %2299 = vdwg.mxu0
        %v2300 = vadd.f32 %v2296, %v1835
        %v2301 = vadd.f32 %v2298, %v1836
        %v2302 = vsel %vm1357, %v2300, 0.0
        %2303 = vadd.xlane.f32.xlu0 %v2302
        %v2304 = vpop.xlane.xlu0 %2303
        %v2305 = vsel %vm1357, %v2301, 0.0
        %2306 = vadd.xlane.f32.xlu0 %v2305
        %v2307 = vpop.xlane.xlu0 %2306
        %v2308 = vmul.f32 %v2304, %v1788
        %v2309 = vmul.f32 %v2307, %v1788
        %v2310 = vsub.f32 %v2300, %v2308
        %v2311 = vsub.f32 %v2301, %v2309
        %v2312 = vmul.f32 %v2310, %v2310
        %v2313 = vmul.f32 %v2311, %v2311
        %v2314 = vsel %vm1357, %v2312, 0.0
        %2315 = vadd.xlane.f32.xlu0 %v2314
        %v2316 = vpop.xlane.xlu0 %2315
        %v2317 = vsel %vm1357, %v2313, 0.0
        %2318 = vadd.xlane.f32.xlu0 %v2317
        %v2319 = vpop.xlane.xlu0 %2318
        %v2320 = vmul.f32 %v2316, %v1788
        %v2321 = vmul.f32 %v2319, %v1788
        %v2322 = vadd.f32 %v2320, 1e-12
        %v2323 = vadd.f32 %v2321, 1e-12
        %v2324 = vrsqrt.pop %v2322
        %v2325 = vmul.f32 %v2324, %v2322
        %v2326 = vmul.f32 %v2325, %v2324
        %v2327 = vmul.f32 0.5, %v2326
        %v2328 = vsub.f32 1.5, %v2327
        %v2329 = vmul.f32 %v2324, %v2328
        %vm2330 = vweird.f32 %v2322
        %vm2331 = vweird.f32 %v2324
        %vm2332 = vmor %vm2330, %vm2331
        %v2333 = vsel %vm2332, %v2324, %v2329
        %v2334 = vrsqrt.pop %v2323
        %v2335 = vmul.f32 %v2334, %v2323
        %v2336 = vmul.f32 %v2335, %v2334
        %v2337 = vmul.f32 0.5, %v2336
        %v2338 = vsub.f32 1.5, %v2337
        %v2339 = vmul.f32 %v2334, %v2338
        %vm2340 = vweird.f32 %v2323
        %vm2341 = vweird.f32 %v2334
        %vm2342 = vmor %vm2340, %vm2341
        %v2343 = vsel %vm2342, %v2334, %v2339
        %v2344 = vmul.f32 %v2310, %v2333
        %v2345 = vmul.f32 %v2311, %v2343
        %v2347 = vperm.slane %v1857, 0
        %v2349 = vmul.f32 %v2344, %v2347
        %v2350 = vmul.f32 %v2345, %v2347
        %v2352 = vperm.slane %v1858, 0
        %v2354 = vadd.f32 %v2349, %v2352
        %v2355 = vadd.f32 %v2350, %v2352
        %v2356 = vld [vmem:[#allocation31] sm:$0xf]
        %v2357 = vld [vmem:[#allocation31 + $0x4] sm:$0xf]
        %v2358 = vld [vmem:[#allocation31 + $0x8] sm:$0xf]
        %v2359 = vld [vmem:[#allocation31 + $0xc] sm:$0xf]
        %v2360 = vld [vmem:[#allocation33] sm:$0x1]
        %v2361 = vld [vmem:[%s51] sm:$0xf]
        %v2362 = vld [vmem:[%s51 + $0x4] sm:$0xf]
        %v2363 = vld [vmem:[%s51 + $0x8] sm:$0xf]
        %v2364 = vld [vmem:[%s51 + $0xc] sm:$0xf]
        %v2365 = vld [vmem:[%s51 + $0x10] sm:$0xf]
        %v2366 = vld [vmem:[%s51 + $0x14] sm:$0xf]
        %v2367 = vld [vmem:[%s51 + $0x18] sm:$0xf]
        %v2368 = vld [vmem:[%s51 + $0x1c] sm:$0xf]
        %v2369 = vld [vmem:[#allocation34] sm:$0x1]
        %v2370 = vld [vmem:[#allocation36] sm:$0x1]
        %v2371 = vld [vmem:[#allocation37] sm:$0x1]
        %v2372 = vpack.c.bf16 %v2355, %v2354
        %v2374 = vperm.slane %v2360, 0
        %v2380 = vunpack.c.l.b16 %v2356
        %v2381 = vunpack.c.l.b16 %v2357
        %v2382 = vunpack.c.l.b16 %v2358
        %v2383 = vunpack.c.l.b16 %v2359
        %v2384 = vpack.c.b16 %v2381, %v2380
        %v2385 = vpack.c.b16 %v2383, %v2382
        %v2389 = vsel %vm1357, %v2372, 0
        %2391 = vmatpush.bf16.msra.mxu0 0
        %2392 = vmatpush.bf16.msra.mxu0 0
        %2393 = vmatpush.bf16.msra.mxu0 0
        %2394 = vmatpush.bf16.msra.mxu0 0
        %2395 = vmatpush.bf16.msra.mxu0 0
        %2396 = vmatpush.bf16.msra.mxu0 0
        %2397 = vmatpush.bf16.msra.mxu0 %v2385
        %2398 = vmatpush.bf16.msra.mxu0 %v2384
        %2399 = vmatmul.bf16.gmra.mxu0 %v2389
        %v2400 = vpop.f32.mrf.mxu0
        %v2401 = vadd.f32 %v2374, %v2400
        %v2402 = vpop.f32.mrf.mxu0
        %v2403 = vadd.f32 %v2374, %v2402
        %2404 = vdwg.mxu0
        %v2405 = vmul.f32 %v2401, 0.5
        %v2406 = vmul.f32 %v2403, 0.5
        %v2407 = vmul.f32 %v2401, 0.70710677
        %v2408 = vmul.f32 %v2403, 0.70710677
        %v2409 = vmax.f32 %v2407, -3.832507
        %v2410 = vmax.f32 %v2408, -3.832507
        %v2411 = vmin.f32 %v2409, 3.832507
        %v2412 = vmin.f32 %v2410, 3.832507
        %v2413 = vmul.f32 %v2411, %v2411
        %v2414 = vmul.f32 %v2412, %v2412
        %v2415 = vmul.f32 %v2413, -2.7261424e-10
        %v2416 = vmul.f32 %v2414, -2.7261424e-10
        %v2417 = vadd.f32 %v2415, 2.7706815e-08
        %v2418 = vadd.f32 %v2416, 2.7706815e-08
        %v2419 = vmul.f32 %v2413, %v2417
        %v2420 = vmul.f32 %v2414, %v2418
        %v2421 = vadd.f32 %v2419, -2.101024e-06
        %v2422 = vadd.f32 %v2420, -2.101024e-06
        %v2423 = vmul.f32 %v2413, %v2421
        %v2424 = vmul.f32 %v2414, %v2422
        %v2425 = vadd.f32 %v2423, -5.6925062e-05
        %v2426 = vadd.f32 %v2424, -5.6925062e-05
        %v2427 = vmul.f32 %v2413, %v2425
        %v2428 = vmul.f32 %v2414, %v2426
        %v2429 = vadd.f32 %v2427, -0.00073499064
        %v2430 = vadd.f32 %v2428, -0.00073499064
        %v2431 = vmul.f32 %v2413, %v2429
        %v2432 = vmul.f32 %v2414, %v2430
        %v2433 = vadd.f32 %v2431, -0.0029546
        %v2434 = vadd.f32 %v2432, -0.0029546
        %v2435 = vmul.f32 %v2413, %v2433
        %v2436 = vmul.f32 %v2414, %v2434
        %v2437 = vadd.f32 %v2435, -0.016096033
        %v2438 = vadd.f32 %v2436, -0.016096033
        %v2439 = vmul.f32 %v2411, %v2437
        %v2440 = vmul.f32 %v2412, %v2438
        %v2441 = vmul.f32 %v2413, -1.45660715e-05
        %v2442 = vmul.f32 %v2414, -1.45660715e-05
        %v2443 = vadd.f32 %v2441, -0.00021337405
        %v2444 = vadd.f32 %v2442, -0.00021337405
        %v2445 = vmul.f32 %v2413, %v2443
        %v2446 = vmul.f32 %v2414, %v2444
        %v2447 = vadd.f32 %v2445, -0.001682827
        %v2448 = vadd.f32 %v2446, -0.001682827
        %v2449 = vmul.f32 %v2413, %v2447
        %v2450 = vmul.f32 %v2414, %v2448
        %v2451 = vadd.f32 %v2449, -0.0073733293
        %v2452 = vadd.f32 %v2450, -0.0073733293
        %v2453 = vmul.f32 %v2413, %v2451
        %v2454 = vmul.f32 %v2414, %v2452
        %v2455 = vadd.f32 %v2453, -0.014264739
        %v2456 = vadd.f32 %v2454, -0.014264739
        %v2457 = vrcp.pop %v2455
        %v2458 = vmul.f32 %v2455, %v2457
        %v2459 = vsub.f32 1.0, %v2458
        %v2460 = vmul.f32 %v2457, %v2459
        %v2461 = vadd.f32 %v2457, %v2460
        %vm2462 = vweird.f32 %v2455
        %vm2463 = vweird.f32 %v2457
        %vm2464 = vmor %vm2462, %vm2463
        %v2465 = vsel %vm2464, %v2457, %v2461
        %v2466 = vand.u32 2147483647, %v2455
        %vm2467 = vcmp.eq.f32.partialorder %v2466, 8.507059e+37
        %v2468 = vand.u32 %v2455, 2147483648
        %v2469 = vor.u32 1.1754944e-38, %v2468
        %v2470 = vsel %vm2467, %v2469, %v2465
        %v2471 = vmul.f32 %v2439, %v2470
        %v2472 = vrcp.pop %v2456
        %v2473 = vmul.f32 %v2456, %v2472
        %v2474 = vsub.f32 1.0, %v2473
        %v2475 = vmul.f32 %v2472, %v2474
        %v2476 = vadd.f32 %v2472, %v2475
        %vm2477 = vweird.f32 %v2456
        %vm2478 = vweird.f32 %v2472
        %vm2479 = vmor %vm2477, %vm2478
        %v2480 = vsel %vm2479, %v2472, %v2476
        %v2481 = vand.u32 2147483647, %v2456
        %vm2482 = vcmp.eq.f32.partialorder %v2481, 8.507059e+37
        %v2483 = vand.u32 %v2456, 2147483648
        %v2484 = vor.u32 1.1754944e-38, %v2483
        %v2485 = vsel %vm2482, %v2484, %v2480
        %v2486 = vmul.f32 %v2440, %v2485
        %v2487 = vadd.f32 %v2471, 1.0
        %v2488 = vadd.f32 %v2486, 1.0
        %v2489 = vmul.f32 %v2405, %v2487
        %v2490 = vmul.f32 %v2406, %v2488
        %v2491 = vpack.c.bf16 %v2490, %v2489
        %v2493 = vperm.slane %v2369, 0
        %v2503 = vunpack.c.l.b16 %v2361
        %v2504 = vunpack.c.l.b16 %v2362
        %v2505 = vunpack.c.l.b16 %v2363
        %v2506 = vunpack.c.l.b16 %v2364
        %v2507 = vunpack.c.l.b16 %v2365
        %v2508 = vunpack.c.l.b16 %v2366
        %v2509 = vunpack.c.l.b16 %v2367
        %v2510 = vunpack.c.l.b16 %v2368
        %v2511 = vpack.c.b16 %v2504, %v2503
        %v2512 = vpack.c.b16 %v2506, %v2505
        %v2513 = vpack.c.b16 %v2508, %v2507
        %v2514 = vpack.c.b16 %v2510, %v2509
        %vm2519 = vcmask 523264
        %v2521 = vsel %vm2519, %v2491, 0
        %2523 = vmatpush.bf16.msra.mxu0 0
        %2524 = vmatpush.bf16.msra.mxu0 0
        %2525 = vmatpush.bf16.msra.mxu0 0
        %2526 = vmatpush.bf16.msra.mxu0 0
        %2527 = vmatpush.bf16.msra.mxu0 %v2514
        %2528 = vmatpush.bf16.msra.mxu0 %v2513
        %2529 = vmatpush.bf16.msra.mxu0 %v2512
        %2530 = vmatpush.bf16.msra.mxu0 %v2511
        %2531 = vmatmul.bf16.gmra.mxu0 %v2521
        %v2532 = vpop.f32.mrf.mxu0
        %v2533 = vadd.f32 %v2493, %v2532
        %v2534 = vpop.f32.mrf.mxu0
        %v2535 = vadd.f32 %v2493, %v2534
        %2536 = vdwg.mxu0
        %v2537 = vadd.f32 %v2533, %v2354
        %v2538 = vadd.f32 %v2535, %v2355
        %v2539 = vsel %vm1357, %v2537, 0.0
        %2540 = vadd.xlane.f32.xlu0 %v2539
        %v2541 = vpop.xlane.xlu0 %2540
        %v2542 = vsel %vm1357, %v2538, 0.0
        %2543 = vadd.xlane.f32.xlu0 %v2542
        %v2544 = vpop.xlane.xlu0 %2543
        %v2545 = vmul.f32 %v2541, %v1788
        %v2546 = vmul.f32 %v2544, %v1788
        %v2547 = vsub.f32 %v2537, %v2545
        %v2548 = vsub.f32 %v2538, %v2546
        %v2549 = vmul.f32 %v2547, %v2547
        %v2550 = vmul.f32 %v2548, %v2548
        %v2551 = vsel %vm1357, %v2549, 0.0
        %2552 = vadd.xlane.f32.xlu0 %v2551
        %v2553 = vpop.xlane.xlu0 %2552
        %v2554 = vsel %vm1357, %v2550, 0.0
        %2555 = vadd.xlane.f32.xlu0 %v2554
        %v2556 = vpop.xlane.xlu0 %2555
        %v2557 = vmul.f32 %v2553, %v1788
        %v2558 = vmul.f32 %v2556, %v1788
        %v2559 = vadd.f32 %v2557, 1e-12
        %v2560 = vadd.f32 %v2558, 1e-12
        %v2561 = vrsqrt.pop %v2559
        %v2562 = vmul.f32 %v2561, %v2559
        %v2563 = vmul.f32 %v2562, %v2561
        %v2564 = vmul.f32 0.5, %v2563
        %v2565 = vsub.f32 1.5, %v2564
        %v2566 = vmul.f32 %v2561, %v2565
        %vm2567 = vweird.f32 %v2559
        %vm2568 = vweird.f32 %v2561
        %vm2569 = vmor %vm2567, %vm2568
        %v2570 = vsel %vm2569, %v2561, %v2566
        %v2571 = vrsqrt.pop %v2560
        %v2572 = vmul.f32 %v2571, %v2560
        %v2573 = vmul.f32 %v2572, %v2571
        %v2574 = vmul.f32 0.5, %v2573
        %v2575 = vsub.f32 1.5, %v2574
        %v2576 = vmul.f32 %v2571, %v2575
        %vm2577 = vweird.f32 %v2560
        %vm2578 = vweird.f32 %v2571
        %vm2579 = vmor %vm2577, %vm2578
        %v2580 = vsel %vm2579, %v2571, %v2576
        %v2581 = vmul.f32 %v2547, %v2570
        %v2582 = vmul.f32 %v2548, %v2580
        %v2584 = vperm.slane %v2370, 0
        %v2586 = vmul.f32 %v2581, %v2584
        %v2587 = vmul.f32 %v2582, %v2584
        %v2589 = vperm.slane %v2371, 0
        %v2591 = vadd.f32 %v2586, %v2589
        %v2592 = vadd.f32 %v2587, %v2589
        %2593 = vst.msk [vmem:[%s1307] sm:$0xff] %vm1357, %v2591
        %2594 = vst.msk [vmem:[%s1307 + $0x8] sm:$0xff] %vm1357, %v2592
        %p2595 = scmp.lt.s32.totalorder %s83, 1
        %s2596 = scalar_select %p2595, %s83, 1
        %s2597 = smul.addr %s2596, 2
        %s2598 = smul.addr %s2597, 8
        %s2599 = scalar_lea.vmem %s59, %s2598
        // Predicated region
        $region233: #{set_decoder_forward.4} parent=135 // pred_check
          %p2600 = pneg %p725
        $region234: #{set_decoder_forward.4} parent=135 // pred_check_branch
          %2602 = sbr.rel (%p2600) target = $region236
        $region235: #{set_decoder_forward.4} parent=135 // pred_region
          _
        $region236: #{set_decoder_forward.4} parent=135 // pred_fallthru
          _
      $region136: #{set_decoder_forward.4} parent=5 // pred_fallthru
        _
      %p2603 = scmp.le.s32.totalorder 2, %s78
      // Predicated region
      $region237: #{set_decoder_forward.4} parent=5 // pred_check
        %p2604 = pneg %p2603
      $region238: #{set_decoder_forward.4} parent=5 // pred_check_branch
        %2606 = sbr.rel (%p2604) target = $region240
      $region239: #{set_decoder_forward.4} parent=5 // pred_region
        %s2607 = ssub.s32 %s78, 2
        // Predicated region
        $region241: #{set_decoder_forward.4} parent=239 // pred_check
          %p2608 = pneg %p731
        $region242: #{set_decoder_forward.4} parent=239 // pred_check_branch
          %2610 = sbr.rel (%p2608) target = $region244
        $region243: #{set_decoder_forward.4} parent=239 // pred_region
          %p2611 = scmp.lt.s32.totalorder %s84, 1
          %s2612 = scalar_select %p2611, %s84, 1
          %s2613 = smul.addr %s2612, 2
          %s2614 = smul.addr %s2613, 8
          %s2615 = scalar_lea.vmem %s59, %s2614
        $region244: #{set_decoder_forward.4} parent=239 // pred_fallthru
          _
      $region240: #{set_decoder_forward.4} parent=5 // pred_fallthru
        _
    $region6: #{set_decoder_forward.4} parent=1 // loop_footer
      %s82 = sadd.s32 1, %s78
    $region7: #{set_decoder_forward.4} parent=1 // loop_footer_branch
      %77 = sbr.rel target = $region3
    $region8: #{set_decoder_forward.4} parent=1 // loop_exit
      _
    %2616 = vsyncpa [#allocation3], 1
    %s2617 = scalar_lea.sflag [#allocation3], 1
    %2618 = vsyncpa %s2617, 1
    %2619 = vsyncpa [#allocation5], 1
    %2620 = vsyncpa [#allocation8], 1
    %2621 = vsyncpa [#allocation11], 1
    %2622 = vsyncpa [#allocation14], 1
    %2623 = vsyncpa [#allocation17], 1
    %2624 = vsyncpa [#allocation20], 1
    %2625 = vsyncpa [#allocation23], 1
    %2626 = vsyncpa [#allocation26], 1
    %2627 = vsyncpa [#allocation29], 1
    %2628 = vsyncpa [#allocation32], 1
    %2629 = vsyncpa [#allocation35], 1
    %2630 = vsyncpa [#allocation38], 1

// kernel: set_decoder_forward.3
$region0: #{set_decoder_forward.3}
  #allocation0 [shape = 'u32[]', space=smem, size = 0x4, offset = 0x4, fixed_abs, tag = 'smem constant byte address 0x4 - core index']
  #allocation1 [shape = 'u32[72,128]{1,0:T(1,128)}', space=vmem, size = 0x9000, scoped, tag = 'internal scratch']
  %s0 = inlined_call_operand.smem [shape: u32[32], index: -1, kind: input, shape index: {}]
  %s1 = sld [smem:[%s0]]
  %s2 = scalar_lea.smem %s0, 1
  %s3 = sld [smem:[%s2]]
  %s4 = scalar_lea.smem %s0, 2
  %s5 = sld [smem:[%s4]]
  %s6 = scalar_lea.smem %s0, 3
  %s7 = sld [smem:[%s6]]
  %s8 = scalar_lea.smem %s0, 4
  %s9 = sld [smem:[%s8]]
  %s10 = scalar_lea.smem %s0, 5
  %s11 = sld [smem:[%s10]]
  %s12 = scalar_lea.smem %s0, 6
  %s13 = sld [smem:[%s12]]
  %s14 = scalar_lea.smem %s0, 7
  %s15 = sld [smem:[%s14]]
  %s16 = scalar_lea.smem %s0, 8
  %s17 = sld [smem:[%s16]]
  %s18 = scalar_lea.smem %s0, 9
  %s19 = sld [smem:[%s18]]
  %s20 = scalar_lea.smem %s0, 10
  %s21 = sld [smem:[%s20]]
  %s22 = scalar_lea.smem %s0, 11
  %s23 = sld [smem:[%s22]]
  %s24 = scalar_lea.smem %s0, 12
  %s25 = sld [smem:[%s24]]
  %s26 = scalar_lea.smem %s0, 13
  %s27 = sld [smem:[%s26]]
  %s28 = scalar_lea.smem %s0, 14
  %s29 = sld [smem:[%s28]]
  %s30 = scalar_lea.smem %s0, 15
  %s31 = sld [smem:[%s30]]
  %s32 = scalar_lea.smem %s0, 16
  %s33 = sld [smem:[%s32]]
  %s34 = scalar_lea.smem %s0, 17
  %s35 = sld [smem:[%s34]]
  %s36 = scalar_lea.smem %s0, 18
  %s37 = sld [smem:[%s36]]
  %s38 = scalar_lea.smem %s0, 19
  %s39 = sld [smem:[%s38]]
  %s40 = scalar_lea.smem %s0, 20
  %s41 = sld [smem:[%s40]]
  %s42 = scalar_lea.smem %s0, 21
  %s43 = sld [smem:[%s42]]
  %s44 = scalar_lea.smem %s0, 22
  %s45 = sld [smem:[%s44]]
  %s46 = scalar_lea.smem %s0, 23
  %s47 = sld [smem:[%s46]]
  %s48 = scalar_lea.smem %s0, 24
  %s49 = sld [smem:[%s48]]
  %s50 = scalar_lea.smem %s0, 25
  %s51 = sld [smem:[%s50]]
  %s52 = scalar_lea.smem %s0, 26
  %s53 = sld [smem:[%s52]]
  %s54 = scalar_lea.smem %s0, 27
  %s55 = sld [smem:[%s54]]
  %s56 = scalar_lea.smem %s0, 28
  %s57 = sld [smem:[%s56]]
  %s58 = scalar_lea.smem %s0, 29
  %s59 = sld [smem:[%s58]]
  %s60 = scalar_lea.smem %s0, 30
  %s61 = sld [smem:[%s60]]
  %s62 = scalar_lea.smem %s0, 31
  %s63 = sld [smem:[%s62]]
  %s64 = sld [smem:[#allocation0]]
  $region265: #{set_decoder_forward.3} parent=0
    _
  %s66 = ssub.s32 1, %s64
  %s67 = scalar_select 0, %s66, %s64
  $region1: #{set_decoder_forward.3} parent=0
    #allocation2 [shape = 'u8[8192]{0}', space=vmem, size = 0x2000, scoped, tag = 'input window, operand 0, single buffered']
    #allocation3 [shape = 's32[2]{0}', space=sflag, size = 0x8, scoped, tag = 'scoped memory for set_decoder_forward.3']
    #allocation4 [shape = 'u8[512]{0}', space=vmem, size = 0x400, scoped, tag = 'input window, operand 4, single buffered']
    #allocation5 [shape = 's32[1]{0}', space=sflag, size = 0x4, scoped, tag = 'scoped memory for set_decoder_forward.3']
    #allocation6 [shape = 'u8[8192]{0}', space=vmem, size = 0x2000, scoped, tag = 'input window, operand 5, single buffered']
    #allocation7 [shape = 'u8[512]{0}', space=vmem, size = 0x400, scoped, tag = 'input window, operand 6, single buffered']
    #allocation8 [shape = 's32[1]{0}', space=sflag, size = 0x4, scoped, tag = 'scoped memory for set_decoder_forward.3']
    #allocation9 [shape = 'u8[8192]{0}', space=vmem, size = 0x2000, scoped, tag = 'input window, operand 7, single buffered']
    #allocation10 [shape = 'u8[512]{0}', space=vmem, size = 0x400, scoped, tag = 'input window, operand 8, single buffered']
    #allocation11 [shape = 's32[1]{0}', space=sflag, size = 0x4, scoped, tag = 'scoped memory for set_decoder_forward.3']
    #allocation12 [shape = 'u8[8192]{0}', space=vmem, size = 0x2000, scoped, tag = 'input window, operand 9, single buffered']
    #allocation13 [shape = 'u8[512]{0}', space=vmem, size = 0x400, scoped, tag = 'input window, operand 10, single buffered']
    #allocation14 [shape = 's32[1]{0}', space=sflag, size = 0x4, scoped, tag = 'scoped memory for set_decoder_forward.3']
    #allocation15 [shape = 'u8[8192]{0}', space=vmem, size = 0x2000, scoped, tag = 'input window, operand 11, single buffered']
    #allocation16 [shape = 'u8[512]{0}', space=vmem, size = 0x400, scoped, tag = 'input window, operand 12, single buffered']
    #allocation17 [shape = 's32[1]{0}', space=sflag, size = 0x4, scoped, tag = 'scoped memory for set_decoder_forward.3']
    #allocation18 [shape = 'u8[512]{0}', space=vmem, size = 0x400, scoped, tag = 'input window, operand 13, single buffered']
    #allocation19 [shape = 'u8[512]{0}', space=vmem, size = 0x400, scoped, tag = 'input window, operand 14, single buffered']
    #allocation20 [shape = 's32[1]{0}', space=sflag, size = 0x4, scoped, tag = 'scoped memory for set_decoder_forward.3']
    #allocation21 [shape = 'u8[8192]{0}', space=vmem, size = 0x2000, scoped, tag = 'input window, operand 15, single buffered']
    #allocation22 [shape = 'u8[512]{0}', space=vmem, size = 0x400, scoped, tag = 'input window, operand 16, single buffered']
    #allocation23 [shape = 's32[1]{0}', space=sflag, size = 0x4, scoped, tag = 'scoped memory for set_decoder_forward.3']
    #allocation24 [shape = 'u8[8192]{0}', space=vmem, size = 0x2000, scoped, tag = 'input window, operand 17, single buffered']
    #allocation25 [shape = 'u8[512]{0}', space=vmem, size = 0x400, scoped, tag = 'input window, operand 18, single buffered']
    #allocation26 [shape = 's32[1]{0}', space=sflag, size = 0x4, scoped, tag = 'scoped memory for set_decoder_forward.3']
    #allocation27 [shape = 'u8[8192]{0}', space=vmem, size = 0x2000, scoped, tag = 'input window, operand 19, single buffered']
    #allocation28 [shape = 'u8[512]{0}', space=vmem, size = 0x400, scoped, tag = 'input window, operand 20, single buffered']
    #allocation29 [shape = 's32[1]{0}', space=sflag, size = 0x4, scoped, tag = 'scoped memory for set_decoder_forward.3']
    #allocation30 [shape = 'u8[8192]{0}', space=vmem, size = 0x2000, scoped, tag = 'input window, operand 21, single buffered']
    #allocation31 [shape = 'u8[512]{0}', space=vmem, size = 0x400, scoped, tag = 'input window, operand 22, single buffered']
    #allocation32 [shape = 's32[1]{0}', space=sflag, size = 0x4, scoped, tag = 'scoped memory for set_decoder_forward.3']
    #allocation33 [shape = 'u8[512]{0}', space=vmem, size = 0x400, scoped, tag = 'input window, operand 23, single buffered']
    #allocation34 [shape = 'u8[512]{0}', space=vmem, size = 0x400, scoped, tag = 'input window, operand 24, single buffered']
    #allocation35 [shape = 's32[1]{0}', space=sflag, size = 0x4, scoped, tag = 'scoped memory for set_decoder_forward.3']
    #allocation36 [shape = 'u8[8192]{0}', space=vmem, size = 0x2000, scoped, tag = 'input window, operand 25, single buffered']
    #allocation37 [shape = 'u8[512]{0}', space=vmem, size = 0x400, scoped, tag = 'input window, operand 26, single buffered']
    #allocation38 [shape = 's32[1]{0}', space=sflag, size = 0x4, scoped, tag = 'scoped memory for set_decoder_forward.3']
    #allocation39 [shape = 'u8[512]{0}', space=vmem, size = 0x400, scoped, tag = 'input window, operand 28, single buffered']
    #allocation40 [shape = 'u8[512]{0}', space=vmem, size = 0x400, scoped, tag = 'input window, operand 29, single buffered']
    #allocation41 [shape = 's32[1]{0}', space=sflag, size = 0x4, scoped, tag = 'scoped memory for set_decoder_forward.3']
    #allocation42 [shape = 'u8[512]{0}', space=vmem, size = 0x400, scoped, tag = 'input window, operand 30, single buffered']
    %68 = vsyncpa [#allocation3], 0
    %69 = vsyncpa [#allocation5], 0
    %70 = vsyncpa [#allocation8], 0
    %71 = vsyncpa [#allocation11], 0
    %72 = vsyncpa [#allocation14], 0
    %73 = vsyncpa [#allocation17], 0
    %74 = vsyncpa [#allocation20], 0
    %75 = vsyncpa [#allocation23], 0
    %76 = vsyncpa [#allocation26], 0
    %77 = vsyncpa [#allocation29], 0
    %78 = vsyncpa [#allocation32], 0
    %79 = vsyncpa [#allocation35], 0
    %80 = vsyncpa [#allocation38], 0
    %81 = vsyncpa [#allocation41], 0
    loop: start=0, step=1, limit=4
    $region2: #{set_decoder_forward.3} parent=1 // loop_pre_header
      _
    $region3: #{set_decoder_forward.3} parent=1 // loop_header
      %s83 = sphi 0, %s87
      %p84 = scmp.ge.s32.totalorder %s83, 4
      %s91 = sphi 0, %s91
      %s93 = sphi 0, %s91
      %s94 = sphi 0, %s93
      %s108 = sphi 0, %s94
      %s114 = sphi 0, %s116
      %s117 = sphi 0, %s114
      %s118 = sphi 0, %s117
      %s134 = sphi 0, %s118
      %s140 = sphi 0, %s142
      %s143 = sphi 0, %s140
      %s144 = sphi 0, %s143
      %s160 = sphi 0, %s144
      %s164 = sphi 0, %s164
      %s166 = sphi 0, %s164
      %s167 = sphi 0, %s166
      %s181 = sphi 0, %s167
      %s185 = sphi 0, %s185
      %s187 = sphi 0, %s185
      %s188 = sphi 0, %s187
      %s202 = sphi 0, %s188
      %s206 = sphi 0, %s206
      %s208 = sphi 0, %s206
      %s209 = sphi 0, %s208
      %s223 = sphi 0, %s209
      %s227 = sphi 0, %s227
      %s229 = sphi 0, %s227
      %s230 = sphi 0, %s229
      %s244 = sphi 0, %s230
      %s248 = sphi 0, %s248
      %s250 = sphi 0, %s248
      %s251 = sphi 0, %s250
      %s265 = sphi 0, %s251
      %s269 = sphi 0, %s269
      %s271 = sphi 0, %s269
      %s272 = sphi 0, %s271
      %s286 = sphi 0, %s272
      %s290 = sphi 0, %s290
      %s292 = sphi 0, %s290
      %s293 = sphi 0, %s292
      %s307 = sphi 0, %s293
      %s311 = sphi 0, %s311
      %s313 = sphi 0, %s311
      %s314 = sphi 0, %s313
      %s328 = sphi 0, %s314
      %s332 = sphi 0, %s332
      %s334 = sphi 0, %s332
      %s335 = sphi 0, %s334
      %s349 = sphi 0, %s335
      %s353 = sphi 0, %s353
      %s355 = sphi 0, %s353
      %s356 = sphi 0, %s355
      %s370 = sphi 0, %s356
      %s374 = sphi 0, %s374
      %s376 = sphi 0, %s374
      %s377 = sphi 0, %s376
      %s391 = sphi 0, %s377
      %s395 = sphi 0, %s395
      %s397 = sphi 0, %s395
      %s398 = sphi 0, %s397
      %s412 = sphi 0, %s398
      %s416 = sphi 0, %s416
      %s418 = sphi 0, %s416
      %s419 = sphi 0, %s418
      %s433 = sphi 0, %s419
      %s437 = sphi 0, %s437
      %s439 = sphi 0, %s437
      %s440 = sphi 0, %s439
      %s454 = sphi 0, %s440
      %s458 = sphi 0, %s458
      %s460 = sphi 0, %s458
      %s461 = sphi 0, %s460
      %s475 = sphi 0, %s461
      %s479 = sphi 0, %s479
      %s481 = sphi 0, %s479
      %s482 = sphi 0, %s481
      %s496 = sphi 0, %s482
      %s500 = sphi 0, %s500
      %s502 = sphi 0, %s500
      %s503 = sphi 0, %s502
      %s517 = sphi 0, %s503
      %s521 = sphi 0, %s521
      %s523 = sphi 0, %s521
      %s524 = sphi 0, %s523
      %s538 = sphi 0, %s524
      %s542 = sphi 0, %s542
      %s544 = sphi 0, %s542
      %s545 = sphi 0, %s544
      %s559 = sphi 0, %s545
      %s563 = sphi 0, %s563
      %s565 = sphi 0, %s563
      %s566 = sphi 0, %s565
      %s580 = sphi 0, %s566
      %s584 = sphi 0, %s584
      %s586 = sphi 0, %s584
      %s587 = sphi 0, %s586
      %s601 = sphi 0, %s587
      %s605 = sphi 0, %s605
      %s607 = sphi 0, %s605
      %s608 = sphi 0, %s607
      %s622 = sphi 0, %s608
      %s626 = sphi 0, %s626
      %s628 = sphi 0, %s626
      %s629 = sphi 0, %s628
      %s643 = sphi 0, %s629
      %s647 = sphi 0, %s647
      %s649 = sphi 0, %s647
      %s650 = sphi 0, %s649
      %s664 = sphi 0, %s650
      %s668 = sphi 0, %s668
      %s670 = sphi 0, %s668
      %s671 = sphi 0, %s670
      %s685 = sphi 0, %s671
      %s689 = sphi 0, %s689
      %s691 = sphi 0, %s689
      %s692 = sphi 0, %s691
      %s706 = sphi 0, %s692
      %s710 = sphi 0, %s710
      %s712 = sphi 0, %s710
      %s713 = sphi 0, %s712
      %s727 = sphi 0, %s713
      %s731 = sphi 0, %s731
      %s733 = sphi 0, %s731
      %s734 = sphi 0, %s733
      %s748 = sphi 0, %s734
      %s754 = sphi 0, %s756
      %s757 = sphi 0, %s754
      %s758 = sphi 0, %s757
      %s774 = sphi 0, %s758
    $region4: #{set_decoder_forward.3} parent=1 // loop_header_branch
      %86 = sbr.rel (%p84) target = $region8
    $region5: #{set_decoder_forward.3} parent=1 // loop_body
      %s88 = ssub.s32 %s83, 1
      %s89 = ssub.s32 %s83, 2
      %s90 = sadd.s32 %s83, 1
      %s92 = sadd.s32 %s91, 1
      %p95 = scmp.eq.s32.totalorder %s83, 1
      %p96 = scmp.ne.s32.totalorder %s91, %s93
      %p97 = scmp.eq.s32.totalorder %s83, 0
      %p98 = por %p96, %p97
      %p99 = scmp.ne.s32.totalorder %s91, %s93
      %p100 = scmp.eq.s32.totalorder %s88, 1
      %p101 = por %p99, %p100
      %p102 = scmp.ne.s32.totalorder %s93, %s94
      %p103 = scmp.eq.s32.totalorder %s88, 0
      %p104 = por %p102, %p103
      %p105 = scmp.ne.s32.totalorder %s93, %s94
      %p106 = scmp.eq.s32.totalorder %s89, 1
      %p107 = por %p105, %p106
      %p109 = scmp.ne.s32.totalorder %s94, %s108
      %p110 = scmp.eq.s32.totalorder %s89, 0
      %p111 = por %p109, %p110
      %s112 = ssub.s32 %s83, %s90
      %p113 = scmp.eq.s32.totalorder %s112, 0
      %s115 = sadd.s32 %s114, 1
      %s116 = scalar_select %p113, %s114, %s115
      %p119 = pneg %p113
      %p120 = scmp.eq.s32.totalorder %s83, 1
      %p121 = por %p119, %p120
      %p122 = scmp.ne.s32.totalorder %s114, %s117
      %p123 = scmp.eq.s32.totalorder %s83, 0
      %p124 = por %p122, %p123
      %p125 = scmp.ne.s32.totalorder %s114, %s117
      %p126 = scmp.eq.s32.totalorder %s88, 1
      %p127 = por %p125, %p126
      %p128 = scmp.ne.s32.totalorder %s117, %s118
      %p129 = scmp.eq.s32.totalorder %s88, 0
      %p130 = por %p128, %p129
      %p131 = scmp.ne.s32.totalorder %s117, %s118
      %p132 = scmp.eq.s32.totalorder %s89, 1
      %p133 = por %p131, %p132
      %p135 = scmp.ne.s32.totalorder %s118, %s134
      %p136 = scmp.eq.s32.totalorder %s89, 0
      %p137 = por %p135, %p136
      %s138 = ssub.s32 %s83, %s90
      %p139 = scmp.eq.s32.totalorder %s138, 0
      %s141 = sadd.s32 %s140, 1
      %s142 = scalar_select %p139, %s140, %s141
      %p145 = pneg %p139
      %p146 = scmp.eq.s32.totalorder %s83, 1
      %p147 = por %p145, %p146
      %p148 = scmp.ne.s32.totalorder %s140, %s143
      %p149 = scmp.eq.s32.totalorder %s83, 0
      %p150 = por %p148, %p149
      %p151 = scmp.ne.s32.totalorder %s140, %s143
      %p152 = scmp.eq.s32.totalorder %s88, 1
      %p153 = por %p151, %p152
      %p154 = scmp.ne.s32.totalorder %s143, %s144
      %p155 = scmp.eq.s32.totalorder %s88, 0
      %p156 = por %p154, %p155
      %p157 = scmp.ne.s32.totalorder %s143, %s144
      %p158 = scmp.eq.s32.totalorder %s89, 1
      %p159 = por %p157, %p158
      %p161 = scmp.ne.s32.totalorder %s144, %s160
      %p162 = scmp.eq.s32.totalorder %s89, 0
      %p163 = por %p161, %p162
      %s165 = sadd.s32 %s164, 1
      %p168 = scmp.eq.s32.totalorder %s83, 1
      %p169 = scmp.ne.s32.totalorder %s164, %s166
      %p170 = scmp.eq.s32.totalorder %s83, 0
      %p171 = por %p169, %p170
      %p172 = scmp.ne.s32.totalorder %s164, %s166
      %p173 = scmp.eq.s32.totalorder %s88, 1
      %p174 = por %p172, %p173
      %p175 = scmp.ne.s32.totalorder %s166, %s167
      %p176 = scmp.eq.s32.totalorder %s88, 0
      %p177 = por %p175, %p176
      %p178 = scmp.ne.s32.totalorder %s166, %s167
      %p179 = scmp.eq.s32.totalorder %s89, 1
      %p180 = por %p178, %p179
      %p182 = scmp.ne.s32.totalorder %s167, %s181
      %p183 = scmp.eq.s32.totalorder %s89, 0
      %p184 = por %p182, %p183
      %s186 = sadd.s32 %s185, 1
      %p189 = scmp.eq.s32.totalorder %s83, 1
      %p190 = scmp.ne.s32.totalorder %s185, %s187
      %p191 = scmp.eq.s32.totalorder %s83, 0
      %p192 = por %p190, %p191
      %p193 = scmp.ne.s32.totalorder %s185, %s187
      %p194 = scmp.eq.s32.totalorder %s88, 1
      %p195 = por %p193, %p194
      %p196 = scmp.ne.s32.totalorder %s187, %s188
      %p197 = scmp.eq.s32.totalorder %s88, 0
      %p198 = por %p196, %p197
      %p199 = scmp.ne.s32.totalorder %s187, %s188
      %p200 = scmp.eq.s32.totalorder %s89, 1
      %p201 = por %p199, %p200
      %p203 = scmp.ne.s32.totalorder %s188, %s202
      %p204 = scmp.eq.s32.totalorder %s89, 0
      %p205 = por %p203, %p204
      %s207 = sadd.s32 %s206, 1
      %p210 = scmp.eq.s32.totalorder %s83, 1
      %p211 = scmp.ne.s32.totalorder %s206, %s208
      %p212 = scmp.eq.s32.totalorder %s83, 0
      %p213 = por %p211, %p212
      %p214 = scmp.ne.s32.totalorder %s206, %s208
      %p215 = scmp.eq.s32.totalorder %s88, 1
      %p216 = por %p214, %p215
      %p217 = scmp.ne.s32.totalorder %s208, %s209
      %p218 = scmp.eq.s32.totalorder %s88, 0
      %p219 = por %p217, %p218
      %p220 = scmp.ne.s32.totalorder %s208, %s209
      %p221 = scmp.eq.s32.totalorder %s89, 1
      %p222 = por %p220, %p221
      %p224 = scmp.ne.s32.totalorder %s209, %s223
      %p225 = scmp.eq.s32.totalorder %s89, 0
      %p226 = por %p224, %p225
      %s228 = sadd.s32 %s227, 1
      %p231 = scmp.eq.s32.totalorder %s83, 1
      %p232 = scmp.ne.s32.totalorder %s227, %s229
      %p233 = scmp.eq.s32.totalorder %s83, 0
      %p234 = por %p232, %p233
      %p235 = scmp.ne.s32.totalorder %s227, %s229
      %p236 = scmp.eq.s32.totalorder %s88, 1
      %p237 = por %p235, %p236
      %p238 = scmp.ne.s32.totalorder %s229, %s230
      %p239 = scmp.eq.s32.totalorder %s88, 0
      %p240 = por %p238, %p239
      %p241 = scmp.ne.s32.totalorder %s229, %s230
      %p242 = scmp.eq.s32.totalorder %s89, 1
      %p243 = por %p241, %p242
      %p245 = scmp.ne.s32.totalorder %s230, %s244
      %p246 = scmp.eq.s32.totalorder %s89, 0
      %p247 = por %p245, %p246
      %s249 = sadd.s32 %s248, 1
      %p252 = scmp.eq.s32.totalorder %s83, 1
      %p253 = scmp.ne.s32.totalorder %s248, %s250
      %p254 = scmp.eq.s32.totalorder %s83, 0
      %p255 = por %p253, %p254
      %p256 = scmp.ne.s32.totalorder %s248, %s250
      %p257 = scmp.eq.s32.totalorder %s88, 1
      %p258 = por %p256, %p257
      %p259 = scmp.ne.s32.totalorder %s250, %s251
      %p260 = scmp.eq.s32.totalorder %s88, 0
      %p261 = por %p259, %p260
      %p262 = scmp.ne.s32.totalorder %s250, %s251
      %p263 = scmp.eq.s32.totalorder %s89, 1
      %p264 = por %p262, %p263
      %p266 = scmp.ne.s32.totalorder %s251, %s265
      %p267 = scmp.eq.s32.totalorder %s89, 0
      %p268 = por %p266, %p267
      %s270 = sadd.s32 %s269, 1
      %p273 = scmp.eq.s32.totalorder %s83, 1
      %p274 = scmp.ne.s32.totalorder %s269, %s271
      %p275 = scmp.eq.s32.totalorder %s83, 0
      %p276 = por %p274, %p275
      %p277 = scmp.ne.s32.totalorder %s269, %s271
      %p278 = scmp.eq.s32.totalorder %s88, 1
      %p279 = por %p277, %p278
      %p280 = scmp.ne.s32.totalorder %s271, %s272
      %p281 = scmp.eq.s32.totalorder %s88, 0
      %p282 = por %p280, %p281
      %p283 = scmp.ne.s32.totalorder %s271, %s272
      %p284 = scmp.eq.s32.totalorder %s89, 1
      %p285 = por %p283, %p284
      %p287 = scmp.ne.s32.totalorder %s272, %s286
      %p288 = scmp.eq.s32.totalorder %s89, 0
      %p289 = por %p287, %p288
      %s291 = sadd.s32 %s290, 1
      %p294 = scmp.eq.s32.totalorder %s83, 1
      %p295 = scmp.ne.s32.totalorder %s290, %s292
      %p296 = scmp.eq.s32.totalorder %s83, 0
      %p297 = por %p295, %p296
      %p298 = scmp.ne.s32.totalorder %s290, %s292
      %p299 = scmp.eq.s32.totalorder %s88, 1
      %p300 = por %p298, %p299
      %p301 = scmp.ne.s32.totalorder %s292, %s293
      %p302 = scmp.eq.s32.totalorder %s88, 0
      %p303 = por %p301, %p302
      %p304 = scmp.ne.s32.totalorder %s292, %s293
      %p305 = scmp.eq.s32.totalorder %s89, 1
      %p306 = por %p304, %p305
      %p308 = scmp.ne.s32.totalorder %s293, %s307
      %p309 = scmp.eq.s32.totalorder %s89, 0
      %p310 = por %p308, %p309
      %s312 = sadd.s32 %s311, 1
      %p315 = scmp.eq.s32.totalorder %s83, 1
      %p316 = scmp.ne.s32.totalorder %s311, %s313
      %p317 = scmp.eq.s32.totalorder %s83, 0
      %p318 = por %p316, %p317
      %p319 = scmp.ne.s32.totalorder %s311, %s313
      %p320 = scmp.eq.s32.totalorder %s88, 1
      %p321 = por %p319, %p320
      %p322 = scmp.ne.s32.totalorder %s313, %s314
      %p323 = scmp.eq.s32.totalorder %s88, 0
      %p324 = por %p322, %p323
      %p325 = scmp.ne.s32.totalorder %s313, %s314
      %p326 = scmp.eq.s32.totalorder %s89, 1
      %p327 = por %p325, %p326
      %p329 = scmp.ne.s32.totalorder %s314, %s328
      %p330 = scmp.eq.s32.totalorder %s89, 0
      %p331 = por %p329, %p330
      %s333 = sadd.s32 %s332, 1
      %p336 = scmp.eq.s32.totalorder %s83, 1
      %p337 = scmp.ne.s32.totalorder %s332, %s334
      %p338 = scmp.eq.s32.totalorder %s83, 0
      %p339 = por %p337, %p338
      %p340 = scmp.ne.s32.totalorder %s332, %s334
      %p341 = scmp.eq.s32.totalorder %s88, 1
      %p342 = por %p340, %p341
      %p343 = scmp.ne.s32.totalorder %s334, %s335
      %p344 = scmp.eq.s32.totalorder %s88, 0
      %p345 = por %p343, %p344
      %p346 = scmp.ne.s32.totalorder %s334, %s335
      %p347 = scmp.eq.s32.totalorder %s89, 1
      %p348 = por %p346, %p347
      %p350 = scmp.ne.s32.totalorder %s335, %s349
      %p351 = scmp.eq.s32.totalorder %s89, 0
      %p352 = por %p350, %p351
      %s354 = sadd.s32 %s353, 1
      %p357 = scmp.eq.s32.totalorder %s83, 1
      %p358 = scmp.ne.s32.totalorder %s353, %s355
      %p359 = scmp.eq.s32.totalorder %s83, 0
      %p360 = por %p358, %p359
      %p361 = scmp.ne.s32.totalorder %s353, %s355
      %p362 = scmp.eq.s32.totalorder %s88, 1
      %p363 = por %p361, %p362
      %p364 = scmp.ne.s32.totalorder %s355, %s356
      %p365 = scmp.eq.s32.totalorder %s88, 0
      %p366 = por %p364, %p365
      %p367 = scmp.ne.s32.totalorder %s355, %s356
      %p368 = scmp.eq.s32.totalorder %s89, 1
      %p369 = por %p367, %p368
      %p371 = scmp.ne.s32.totalorder %s356, %s370
      %p372 = scmp.eq.s32.totalorder %s89, 0
      %p373 = por %p371, %p372
      %s375 = sadd.s32 %s374, 1
      %p378 = scmp.eq.s32.totalorder %s83, 1
      %p379 = scmp.ne.s32.totalorder %s374, %s376
      %p380 = scmp.eq.s32.totalorder %s83, 0
      %p381 = por %p379, %p380
      %p382 = scmp.ne.s32.totalorder %s374, %s376
      %p383 = scmp.eq.s32.totalorder %s88, 1
      %p384 = por %p382, %p383
      %p385 = scmp.ne.s32.totalorder %s376, %s377
      %p386 = scmp.eq.s32.totalorder %s88, 0
      %p387 = por %p385, %p386
      %p388 = scmp.ne.s32.totalorder %s376, %s377
      %p389 = scmp.eq.s32.totalorder %s89, 1
      %p390 = por %p388, %p389
      %p392 = scmp.ne.s32.totalorder %s377, %s391
      %p393 = scmp.eq.s32.totalorder %s89, 0
      %p394 = por %p392, %p393
      %s396 = sadd.s32 %s395, 1
      %p399 = scmp.eq.s32.totalorder %s83, 1
      %p400 = scmp.ne.s32.totalorder %s395, %s397
      %p401 = scmp.eq.s32.totalorder %s83, 0
      %p402 = por %p400, %p401
      %p403 = scmp.ne.s32.totalorder %s395, %s397
      %p404 = scmp.eq.s32.totalorder %s88, 1
      %p405 = por %p403, %p404
      %p406 = scmp.ne.s32.totalorder %s397, %s398
      %p407 = scmp.eq.s32.totalorder %s88, 0
      %p408 = por %p406, %p407
      %p409 = scmp.ne.s32.totalorder %s397, %s398
      %p410 = scmp.eq.s32.totalorder %s89, 1
      %p411 = por %p409, %p410
      %p413 = scmp.ne.s32.totalorder %s398, %s412
      %p414 = scmp.eq.s32.totalorder %s89, 0
      %p415 = por %p413, %p414
      %s417 = sadd.s32 %s416, 1
      %p420 = scmp.eq.s32.totalorder %s83, 1
      %p421 = scmp.ne.s32.totalorder %s416, %s418
      %p422 = scmp.eq.s32.totalorder %s83, 0
      %p423 = por %p421, %p422
      %p424 = scmp.ne.s32.totalorder %s416, %s418
      %p425 = scmp.eq.s32.totalorder %s88, 1
      %p426 = por %p424, %p425
      %p427 = scmp.ne.s32.totalorder %s418, %s419
      %p428 = scmp.eq.s32.totalorder %s88, 0
      %p429 = por %p427, %p428
      %p430 = scmp.ne.s32.totalorder %s418, %s419
      %p431 = scmp.eq.s32.totalorder %s89, 1
      %p432 = por %p430, %p431
      %p434 = scmp.ne.s32.totalorder %s419, %s433
      %p435 = scmp.eq.s32.totalorder %s89, 0
      %p436 = por %p434, %p435
      %s438 = sadd.s32 %s437, 1
      %p441 = scmp.eq.s32.totalorder %s83, 1
      %p442 = scmp.ne.s32.totalorder %s437, %s439
      %p443 = scmp.eq.s32.totalorder %s83, 0
      %p444 = por %p442, %p443
      %p445 = scmp.ne.s32.totalorder %s437, %s439
      %p446 = scmp.eq.s32.totalorder %s88, 1
      %p447 = por %p445, %p446
      %p448 = scmp.ne.s32.totalorder %s439, %s440
      %p449 = scmp.eq.s32.totalorder %s88, 0
      %p450 = por %p448, %p449
      %p451 = scmp.ne.s32.totalorder %s439, %s440
      %p452 = scmp.eq.s32.totalorder %s89, 1
      %p453 = por %p451, %p452
      %p455 = scmp.ne.s32.totalorder %s440, %s454
      %p456 = scmp.eq.s32.totalorder %s89, 0
      %p457 = por %p455, %p456
      %s459 = sadd.s32 %s458, 1
      %p462 = scmp.eq.s32.totalorder %s83, 1
      %p463 = scmp.ne.s32.totalorder %s458, %s460
      %p464 = scmp.eq.s32.totalorder %s83, 0
      %p465 = por %p463, %p464
      %p466 = scmp.ne.s32.totalorder %s458, %s460
      %p467 = scmp.eq.s32.totalorder %s88, 1
      %p468 = por %p466, %p467
      %p469 = scmp.ne.s32.totalorder %s460, %s461
      %p470 = scmp.eq.s32.totalorder %s88, 0
      %p471 = por %p469, %p470
      %p472 = scmp.ne.s32.totalorder %s460, %s461
      %p473 = scmp.eq.s32.totalorder %s89, 1
      %p474 = por %p472, %p473
      %p476 = scmp.ne.s32.totalorder %s461, %s475
      %p477 = scmp.eq.s32.totalorder %s89, 0
      %p478 = por %p476, %p477
      %s480 = sadd.s32 %s479, 1
      %p483 = scmp.eq.s32.totalorder %s83, 1
      %p484 = scmp.ne.s32.totalorder %s479, %s481
      %p485 = scmp.eq.s32.totalorder %s83, 0
      %p486 = por %p484, %p485
      %p487 = scmp.ne.s32.totalorder %s479, %s481
      %p488 = scmp.eq.s32.totalorder %s88, 1
      %p489 = por %p487, %p488
      %p490 = scmp.ne.s32.totalorder %s481, %s482
      %p491 = scmp.eq.s32.totalorder %s88, 0
      %p492 = por %p490, %p491
      %p493 = scmp.ne.s32.totalorder %s481, %s482
      %p494 = scmp.eq.s32.totalorder %s89, 1
      %p495 = por %p493, %p494
      %p497 = scmp.ne.s32.totalorder %s482, %s496
      %p498 = scmp.eq.s32.totalorder %s89, 0
      %p499 = por %p497, %p498
      %s501 = sadd.s32 %s500, 1
      %p504 = scmp.eq.s32.totalorder %s83, 1
      %p505 = scmp.ne.s32.totalorder %s500, %s502
      %p506 = scmp.eq.s32.totalorder %s83, 0
      %p507 = por %p505, %p506
      %p508 = scmp.ne.s32.totalorder %s500, %s502
      %p509 = scmp.eq.s32.totalorder %s88, 1
      %p510 = por %p508, %p509
      %p511 = scmp.ne.s32.totalorder %s502, %s503
      %p512 = scmp.eq.s32.totalorder %s88, 0
      %p513 = por %p511, %p512
      %p514 = scmp.ne.s32.totalorder %s502, %s503
      %p515 = scmp.eq.s32.totalorder %s89, 1
      %p516 = por %p514, %p515
      %p518 = scmp.ne.s32.totalorder %s503, %s517
      %p519 = scmp.eq.s32.totalorder %s89, 0
      %p520 = por %p518, %p519
      %s522 = sadd.s32 %s521, 1
      %p525 = scmp.eq.s32.totalorder %s83, 1
      %p526 = scmp.ne.s32.totalorder %s521, %s523
      %p527 = scmp.eq.s32.totalorder %s83, 0
      %p528 = por %p526, %p527
      %p529 = scmp.ne.s32.totalorder %s521, %s523
      %p530 = scmp.eq.s32.totalorder %s88, 1
      %p531 = por %p529, %p530
      %p532 = scmp.ne.s32.totalorder %s523, %s524
      %p533 = scmp.eq.s32.totalorder %s88, 0
      %p534 = por %p532, %p533
      %p535 = scmp.ne.s32.totalorder %s523, %s524
      %p536 = scmp.eq.s32.totalorder %s89, 1
      %p537 = por %p535, %p536
      %p539 = scmp.ne.s32.totalorder %s524, %s538
      %p540 = scmp.eq.s32.totalorder %s89, 0
      %p541 = por %p539, %p540
      %s543 = sadd.s32 %s542, 1
      %p546 = scmp.eq.s32.totalorder %s83, 1
      %p547 = scmp.ne.s32.totalorder %s542, %s544
      %p548 = scmp.eq.s32.totalorder %s83, 0
      %p549 = por %p547, %p548
      %p550 = scmp.ne.s32.totalorder %s542, %s544
      %p551 = scmp.eq.s32.totalorder %s88, 1
      %p552 = por %p550, %p551
      %p553 = scmp.ne.s32.totalorder %s544, %s545
      %p554 = scmp.eq.s32.totalorder %s88, 0
      %p555 = por %p553, %p554
      %p556 = scmp.ne.s32.totalorder %s544, %s545
      %p557 = scmp.eq.s32.totalorder %s89, 1
      %p558 = por %p556, %p557
      %p560 = scmp.ne.s32.totalorder %s545, %s559
      %p561 = scmp.eq.s32.totalorder %s89, 0
      %p562 = por %p560, %p561
      %s564 = sadd.s32 %s563, 1
      %p567 = scmp.eq.s32.totalorder %s83, 1
      %p568 = scmp.ne.s32.totalorder %s563, %s565
      %p569 = scmp.eq.s32.totalorder %s83, 0
      %p570 = por %p568, %p569
      %p571 = scmp.ne.s32.totalorder %s563, %s565
      %p572 = scmp.eq.s32.totalorder %s88, 1
      %p573 = por %p571, %p572
      %p574 = scmp.ne.s32.totalorder %s565, %s566
      %p575 = scmp.eq.s32.totalorder %s88, 0
      %p576 = por %p574, %p575
      %p577 = scmp.ne.s32.totalorder %s565, %s566
      %p578 = scmp.eq.s32.totalorder %s89, 1
      %p579 = por %p577, %p578
      %p581 = scmp.ne.s32.totalorder %s566, %s580
      %p582 = scmp.eq.s32.totalorder %s89, 0
      %p583 = por %p581, %p582
      %s585 = sadd.s32 %s584, 1
      %p588 = scmp.eq.s32.totalorder %s83, 1
      %p589 = scmp.ne.s32.totalorder %s584, %s586
      %p590 = scmp.eq.s32.totalorder %s83, 0
      %p591 = por %p589, %p590
      %p592 = scmp.ne.s32.totalorder %s584, %s586
      %p593 = scmp.eq.s32.totalorder %s88, 1
      %p594 = por %p592, %p593
      %p595 = scmp.ne.s32.totalorder %s586, %s587
      %p596 = scmp.eq.s32.totalorder %s88, 0
      %p597 = por %p595, %p596
      %p598 = scmp.ne.s32.totalorder %s586, %s587
      %p599 = scmp.eq.s32.totalorder %s89, 1
      %p600 = por %p598, %p599
      %p602 = scmp.ne.s32.totalorder %s587, %s601
      %p603 = scmp.eq.s32.totalorder %s89, 0
      %p604 = por %p602, %p603
      %s606 = sadd.s32 %s605, 1
      %p609 = scmp.eq.s32.totalorder %s83, 1
      %p610 = scmp.ne.s32.totalorder %s605, %s607
      %p611 = scmp.eq.s32.totalorder %s83, 0
      %p612 = por %p610, %p611
      %p613 = scmp.ne.s32.totalorder %s605, %s607
      %p614 = scmp.eq.s32.totalorder %s88, 1
      %p615 = por %p613, %p614
      %p616 = scmp.ne.s32.totalorder %s607, %s608
      %p617 = scmp.eq.s32.totalorder %s88, 0
      %p618 = por %p616, %p617
      %p619 = scmp.ne.s32.totalorder %s607, %s608
      %p620 = scmp.eq.s32.totalorder %s89, 1
      %p621 = por %p619, %p620
      %p623 = scmp.ne.s32.totalorder %s608, %s622
      %p624 = scmp.eq.s32.totalorder %s89, 0
      %p625 = por %p623, %p624
      %s627 = sadd.s32 %s626, 1
      %p630 = scmp.eq.s32.totalorder %s83, 1
      %p631 = scmp.ne.s32.totalorder %s626, %s628
      %p632 = scmp.eq.s32.totalorder %s83, 0
      %p633 = por %p631, %p632
      %p634 = scmp.ne.s32.totalorder %s626, %s628
      %p635 = scmp.eq.s32.totalorder %s88, 1
      %p636 = por %p634, %p635
      %p637 = scmp.ne.s32.totalorder %s628, %s629
      %p638 = scmp.eq.s32.totalorder %s88, 0
      %p639 = por %p637, %p638
      %p640 = scmp.ne.s32.totalorder %s628, %s629
      %p641 = scmp.eq.s32.totalorder %s89, 1
      %p642 = por %p640, %p641
      %p644 = scmp.ne.s32.totalorder %s629, %s643
      %p645 = scmp.eq.s32.totalorder %s89, 0
      %p646 = por %p644, %p645
      %s648 = sadd.s32 %s647, 1
      %p651 = scmp.eq.s32.totalorder %s83, 1
      %p652 = scmp.ne.s32.totalorder %s647, %s649
      %p653 = scmp.eq.s32.totalorder %s83, 0
      %p654 = por %p652, %p653
      %p655 = scmp.ne.s32.totalorder %s647, %s649
      %p656 = scmp.eq.s32.totalorder %s88, 1
      %p657 = por %p655, %p656
      %p658 = scmp.ne.s32.totalorder %s649, %s650
      %p659 = scmp.eq.s32.totalorder %s88, 0
      %p660 = por %p658, %p659
      %p661 = scmp.ne.s32.totalorder %s649, %s650
      %p662 = scmp.eq.s32.totalorder %s89, 1
      %p663 = por %p661, %p662
      %p665 = scmp.ne.s32.totalorder %s650, %s664
      %p666 = scmp.eq.s32.totalorder %s89, 0
      %p667 = por %p665, %p666
      %s669 = sadd.s32 %s668, 1
      %p672 = scmp.eq.s32.totalorder %s83, 1
      %p673 = scmp.ne.s32.totalorder %s668, %s670
      %p674 = scmp.eq.s32.totalorder %s83, 0
      %p675 = por %p673, %p674
      %p676 = scmp.ne.s32.totalorder %s668, %s670
      %p677 = scmp.eq.s32.totalorder %s88, 1
      %p678 = por %p676, %p677
      %p679 = scmp.ne.s32.totalorder %s670, %s671
      %p680 = scmp.eq.s32.totalorder %s88, 0
      %p681 = por %p679, %p680
      %p682 = scmp.ne.s32.totalorder %s670, %s671
      %p683 = scmp.eq.s32.totalorder %s89, 1
      %p684 = por %p682, %p683
      %p686 = scmp.ne.s32.totalorder %s671, %s685
      %p687 = scmp.eq.s32.totalorder %s89, 0
      %p688 = por %p686, %p687
      %s690 = sadd.s32 %s689, 1
      %p693 = scmp.eq.s32.totalorder %s83, 1
      %p694 = scmp.ne.s32.totalorder %s689, %s691
      %p695 = scmp.eq.s32.totalorder %s83, 0
      %p696 = por %p694, %p695
      %p697 = scmp.ne.s32.totalorder %s689, %s691
      %p698 = scmp.eq.s32.totalorder %s88, 1
      %p699 = por %p697, %p698
      %p700 = scmp.ne.s32.totalorder %s691, %s692
      %p701 = scmp.eq.s32.totalorder %s88, 0
      %p702 = por %p700, %p701
      %p703 = scmp.ne.s32.totalorder %s691, %s692
      %p704 = scmp.eq.s32.totalorder %s89, 1
      %p705 = por %p703, %p704
      %p707 = scmp.ne.s32.totalorder %s692, %s706
      %p708 = scmp.eq.s32.totalorder %s89, 0
      %p709 = por %p707, %p708
      %s711 = sadd.s32 %s710, 1
      %p714 = scmp.eq.s32.totalorder %s83, 1
      %p715 = scmp.ne.s32.totalorder %s710, %s712
      %p716 = scmp.eq.s32.totalorder %s83, 0
      %p717 = por %p715, %p716
      %p718 = scmp.ne.s32.totalorder %s710, %s712
      %p719 = scmp.eq.s32.totalorder %s88, 1
      %p720 = por %p718, %p719
      %p721 = scmp.ne.s32.totalorder %s712, %s713
      %p722 = scmp.eq.s32.totalorder %s88, 0
      %p723 = por %p721, %p722
      %p724 = scmp.ne.s32.totalorder %s712, %s713
      %p725 = scmp.eq.s32.totalorder %s89, 1
      %p726 = por %p724, %p725
      %p728 = scmp.ne.s32.totalorder %s713, %s727
      %p729 = scmp.eq.s32.totalorder %s89, 0
      %p730 = por %p728, %p729
      %s732 = sadd.s32 %s731, 1
      %p735 = scmp.eq.s32.totalorder %s83, 1
      %p736 = scmp.ne.s32.totalorder %s731, %s733
      %p737 = scmp.eq.s32.totalorder %s83, 0
      %p738 = por %p736, %p737
      %p739 = scmp.ne.s32.totalorder %s731, %s733
      %p740 = scmp.eq.s32.totalorder %s88, 1
      %p741 = por %p739, %p740
      %p742 = scmp.ne.s32.totalorder %s733, %s734
      %p743 = scmp.eq.s32.totalorder %s88, 0
      %p744 = por %p742, %p743
      %p745 = scmp.ne.s32.totalorder %s733, %s734
      %p746 = scmp.eq.s32.totalorder %s89, 1
      %p747 = por %p745, %p746
      %p749 = scmp.ne.s32.totalorder %s734, %s748
      %p750 = scmp.eq.s32.totalorder %s89, 0
      %p751 = por %p749, %p750
      %s752 = ssub.s32 %s83, %s90
      %p753 = scmp.eq.s32.totalorder %s752, 0
      %s755 = sadd.s32 %s754, 1
      %s756 = scalar_select %p753, %s754, %s755
      %p759 = pneg %p753
      %p760 = scmp.eq.s32.totalorder %s83, 1
      %p761 = por %p759, %p760
      %p762 = scmp.ne.s32.totalorder %s754, %s757
      %p763 = scmp.eq.s32.totalorder %s83, 0
      %p764 = por %p762, %p763
      %p765 = scmp.ne.s32.totalorder %s754, %s757
      %p766 = scmp.eq.s32.totalorder %s88, 1
      %p767 = por %p765, %p766
      %p768 = scmp.ne.s32.totalorder %s757, %s758
      %p769 = scmp.eq.s32.totalorder %s88, 0
      %p770 = por %p768, %p769
      %p771 = scmp.ne.s32.totalorder %s757, %s758
      %p772 = scmp.eq.s32.totalorder %s89, 1
      %p773 = por %p771, %p772
      %p775 = scmp.ne.s32.totalorder %s758, %s774
      %p776 = scmp.eq.s32.totalorder %s89, 0
      %p777 = por %p775, %p776
      %p778 = scmp.le.s32.totalorder 1, %s83
      %p779 = scmp.lt.s32.totalorder %s83, 3
      %p780 = pnand %p778, %p779
      %p781 = pneg %p780
      // Predicated region
      $region9: #{set_decoder_forward.3} parent=5 // pred_check
        _
      $region10: #{set_decoder_forward.3} parent=5 // pred_check_branch
        %783 = sbr.rel (%p780) target = $region12
      $region11: #{set_decoder_forward.3} parent=5 // pred_region
        %s784 = ssub.s32 %s83, 1
        // Predicated region
        $region13: #{set_decoder_forward.3} parent=11 // pred_check
          %p785 = pneg %p104
        $region14: #{set_decoder_forward.3} parent=11 // pred_check_branch
          %787 = sbr.rel (%p785) target = $region16
        $region15: #{set_decoder_forward.3} parent=11 // pred_region
          %789 = vsyncadd [#allocation3], 0
          %s790 = sshll.u32 %s1, 4
          %s791 = int_to_ptr.hbm [resolvable:$true] %s790
          %s792 = sshll.u32 [#allocation2], 4
          %s793 = int_to_ptr.vmem [resolvable:$true] %s792
          %798 = dma.hbm_to_vmem [thread:$0]  %s791, 256, %s793, [#allocation3], 128, 128, 8
        $region16: #{set_decoder_forward.3} parent=11 // pred_fallthru
          _
        // Predicated region
        $region17: #{set_decoder_forward.3} parent=11 // pred_check
          %p799 = pneg %p177
        $region18: #{set_decoder_forward.3} parent=11 // pred_check_branch
          %801 = sbr.rel (%p799) target = $region20
        $region19: #{set_decoder_forward.3} parent=11 // pred_region
          _
        $region20: #{set_decoder_forward.3} parent=11 // pred_fallthru
          _
        // Predicated region
        $region21: #{set_decoder_forward.3} parent=11 // pred_check
          %p802 = pneg %p198
        $region22: #{set_decoder_forward.3} parent=11 // pred_check_branch
          %804 = sbr.rel (%p802) target = $region24
        $region23: #{set_decoder_forward.3} parent=11 // pred_region
          %806 = vsyncadd [#allocation5], 0
          %s808 = sshll.u32 %s9, 4
          %s809 = int_to_ptr.hbm [resolvable:$true] %s808
          %s810 = sshll.u32 [#allocation4], 4
          %s811 = int_to_ptr.vmem [resolvable:$true] %s810
          %813 = dma.hbm_to_vmem [thread:$0]  %s809, 16, %s811, [#allocation5]
        $region24: #{set_decoder_forward.3} parent=11 // pred_fallthru
          _
        // Predicated region
        $region25: #{set_decoder_forward.3} parent=11 // pred_check
          %p814 = pneg %p219
        $region26: #{set_decoder_forward.3} parent=11 // pred_check_branch
          %816 = sbr.rel (%p814) target = $region28
        $region27: #{set_decoder_forward.3} parent=11 // pred_region
          %818 = vsyncadd [#allocation5], 0
          %s819 = sshll.u32 %s11, 4
          %s820 = int_to_ptr.hbm [resolvable:$true] %s819
          %s821 = sshll.u32 [#allocation6], 4
          %s822 = int_to_ptr.vmem [resolvable:$true] %s821
          %827 = dma.hbm_to_vmem [thread:$0]  %s820, 256, %s822, [#allocation5], 64, 64, 4
        $region28: #{set_decoder_forward.3} parent=11 // pred_fallthru
          _
        // Predicated region
        $region29: #{set_decoder_forward.3} parent=11 // pred_check
          %p828 = pneg %p240
        $region30: #{set_decoder_forward.3} parent=11 // pred_check_branch
          %830 = sbr.rel (%p828) target = $region32
        $region31: #{set_decoder_forward.3} parent=11 // pred_region
          %832 = vsyncadd [#allocation8], 0
          %s834 = sshll.u32 %s13, 4
          %s835 = int_to_ptr.hbm [resolvable:$true] %s834
          %s836 = sshll.u32 [#allocation7], 4
          %s837 = int_to_ptr.vmem [resolvable:$true] %s836
          %839 = dma.hbm_to_vmem [thread:$0]  %s835, 16, %s837, [#allocation8]
        $region32: #{set_decoder_forward.3} parent=11 // pred_fallthru
          _
        // Predicated region
        $region33: #{set_decoder_forward.3} parent=11 // pred_check
          %p840 = pneg %p261
        $region34: #{set_decoder_forward.3} parent=11 // pred_check_branch
          %842 = sbr.rel (%p840) target = $region36
        $region35: #{set_decoder_forward.3} parent=11 // pred_region
          %844 = vsyncadd [#allocation8], 0
          %s845 = sshll.u32 %s15, 4
          %s846 = int_to_ptr.hbm [resolvable:$true] %s845
          %s847 = sshll.u32 [#allocation9], 4
          %s848 = int_to_ptr.vmem [resolvable:$true] %s847
          %853 = dma.hbm_to_vmem [thread:$0]  %s846, 256, %s848, [#allocation8], 64, 64, 4
        $region36: #{set_decoder_forward.3} parent=11 // pred_fallthru
          _
        // Predicated region
        $region37: #{set_decoder_forward.3} parent=11 // pred_check
          %p854 = pneg %p282
        $region38: #{set_decoder_forward.3} parent=11 // pred_check_branch
          %856 = sbr.rel (%p854) target = $region40
        $region39: #{set_decoder_forward.3} parent=11 // pred_region
          %858 = vsyncadd [#allocation11], 0
          %s860 = sshll.u32 %s17, 4
          %s861 = int_to_ptr.hbm [resolvable:$true] %s860
          %s862 = sshll.u32 [#allocation10], 4
          %s863 = int_to_ptr.vmem [resolvable:$true] %s862
          %865 = dma.hbm_to_vmem [thread:$0]  %s861, 16, %s863, [#allocation11]
        $region40: #{set_decoder_forward.3} parent=11 // pred_fallthru
          _
        // Predicated region
        $region41: #{set_decoder_forward.3} parent=11 // pred_check
          %p866 = pneg %p303
        $region42: #{set_decoder_forward.3} parent=11 // pred_check_branch
          %868 = sbr.rel (%p866) target = $region44
        $region43: #{set_decoder_forward.3} parent=11 // pred_region
          %870 = vsyncadd [#allocation11], 0
          %s871 = sshll.u32 %s19, 4
          %s872 = int_to_ptr.hbm [resolvable:$true] %s871
          %s873 = sshll.u32 [#allocation12], 4
          %s874 = int_to_ptr.vmem [resolvable:$true] %s873
          %879 = dma.hbm_to_vmem [thread:$0]  %s872, 256, %s874, [#allocation11], 64, 64, 4
        $region44: #{set_decoder_forward.3} parent=11 // pred_fallthru
          _
        // Predicated region
        $region45: #{set_decoder_forward.3} parent=11 // pred_check
          %p880 = pneg %p324
        $region46: #{set_decoder_forward.3} parent=11 // pred_check_branch
          %882 = sbr.rel (%p880) target = $region48
        $region47: #{set_decoder_forward.3} parent=11 // pred_region
          %884 = vsyncadd [#allocation14], 0
          %s886 = sshll.u32 %s21, 4
          %s887 = int_to_ptr.hbm [resolvable:$true] %s886
          %s888 = sshll.u32 [#allocation13], 4
          %s889 = int_to_ptr.vmem [resolvable:$true] %s888
          %891 = dma.hbm_to_vmem [thread:$0]  %s887, 16, %s889, [#allocation14]
        $region48: #{set_decoder_forward.3} parent=11 // pred_fallthru
          _
        // Predicated region
        $region49: #{set_decoder_forward.3} parent=11 // pred_check
          %p892 = pneg %p345
        $region50: #{set_decoder_forward.3} parent=11 // pred_check_branch
          %894 = sbr.rel (%p892) target = $region52
        $region51: #{set_decoder_forward.3} parent=11 // pred_region
          %896 = vsyncadd [#allocation14], 0
          %s897 = sshll.u32 %s23, 4
          %s898 = int_to_ptr.hbm [resolvable:$true] %s897
          %s899 = sshll.u32 [#allocation15], 4
          %s900 = int_to_ptr.vmem [resolvable:$true] %s899
          %905 = dma.hbm_to_vmem [thread:$0]  %s898, 256, %s900, [#allocation14], 64, 64, 4
        $region52: #{set_decoder_forward.3} parent=11 // pred_fallthru
          _
        // Predicated region
        $region53: #{set_decoder_forward.3} parent=11 // pred_check
          %p906 = pneg %p366
        $region54: #{set_decoder_forward.3} parent=11 // pred_check_branch
          %908 = sbr.rel (%p906) target = $region56
        $region55: #{set_decoder_forward.3} parent=11 // pred_region
          %910 = vsyncadd [#allocation17], 0
          %s912 = sshll.u32 %s25, 4
          %s913 = int_to_ptr.hbm [resolvable:$true] %s912
          %s914 = sshll.u32 [#allocation16], 4
          %s915 = int_to_ptr.vmem [resolvable:$true] %s914
          %917 = dma.hbm_to_vmem [thread:$0]  %s913, 16, %s915, [#allocation17]
        $region56: #{set_decoder_forward.3} parent=11 // pred_fallthru
          _
        // Predicated region
        $region57: #{set_decoder_forward.3} parent=11 // pred_check
          %p918 = pneg %p387
        $region58: #{set_decoder_forward.3} parent=11 // pred_check_branch
          %920 = sbr.rel (%p918) target = $region60
        $region59: #{set_decoder_forward.3} parent=11 // pred_region
          %922 = vsyncadd [#allocation17], 0
          %s924 = sshll.u32 %s27, 4
          %s925 = int_to_ptr.hbm [resolvable:$true] %s924
          %s926 = sshll.u32 [#allocation18], 4
          %s927 = int_to_ptr.vmem [resolvable:$true] %s926
          %929 = dma.hbm_to_vmem [thread:$0]  %s925, 16, %s927, [#allocation17]
        $region60: #{set_decoder_forward.3} parent=11 // pred_fallthru
          _
        // Predicated region
        $region61: #{set_decoder_forward.3} parent=11 // pred_check
          %p930 = pneg %p408
        $region62: #{set_decoder_forward.3} parent=11 // pred_check_branch
          %932 = sbr.rel (%p930) target = $region64
        $region63: #{set_decoder_forward.3} parent=11 // pred_region
          %934 = vsyncadd [#allocation20], 0
          %s936 = sshll.u32 %s29, 4
          %s937 = int_to_ptr.hbm [resolvable:$true] %s936
          %s938 = sshll.u32 [#allocation19], 4
          %s939 = int_to_ptr.vmem [resolvable:$true] %s938
          %941 = dma.hbm_to_vmem [thread:$0]  %s937, 16, %s939, [#allocation20]
        $region64: #{set_decoder_forward.3} parent=11 // pred_fallthru
          _
        // Predicated region
        $region65: #{set_decoder_forward.3} parent=11 // pred_check
          %p942 = pneg %p429
        $region66: #{set_decoder_forward.3} parent=11 // pred_check_branch
          %944 = sbr.rel (%p942) target = $region68
        $region67: #{set_decoder_forward.3} parent=11 // pred_region
          %946 = vsyncadd [#allocation20], 0
          %s947 = sshll.u32 %s31, 4
          %s948 = int_to_ptr.hbm [resolvable:$true] %s947
          %s949 = sshll.u32 [#allocation21], 4
          %s950 = int_to_ptr.vmem [resolvable:$true] %s949
          %955 = dma.hbm_to_vmem [thread:$0]  %s948, 256, %s950, [#allocation20], 64, 64, 4
        $region68: #{set_decoder_forward.3} parent=11 // pred_fallthru
          _
        // Predicated region
        $region69: #{set_decoder_forward.3} parent=11 // pred_check
          %p956 = pneg %p450
        $region70: #{set_decoder_forward.3} parent=11 // pred_check_branch
          %958 = sbr.rel (%p956) target = $region72
        $region71: #{set_decoder_forward.3} parent=11 // pred_region
          %960 = vsyncadd [#allocation23], 0
          %s962 = sshll.u32 %s33, 4
          %s963 = int_to_ptr.hbm [resolvable:$true] %s962
          %s964 = sshll.u32 [#allocation22], 4
          %s965 = int_to_ptr.vmem [resolvable:$true] %s964
          %967 = dma.hbm_to_vmem [thread:$0]  %s963, 16, %s965, [#allocation23]
        $region72: #{set_decoder_forward.3} parent=11 // pred_fallthru
          _
        // Predicated region
        $region73: #{set_decoder_forward.3} parent=11 // pred_check
          %p968 = pneg %p471
        $region74: #{set_decoder_forward.3} parent=11 // pred_check_branch
          %970 = sbr.rel (%p968) target = $region76
        $region75: #{set_decoder_forward.3} parent=11 // pred_region
          %972 = vsyncadd [#allocation23], 0
          %s973 = sshll.u32 %s35, 4
          %s974 = int_to_ptr.hbm [resolvable:$true] %s973
          %s975 = sshll.u32 [#allocation24], 4
          %s976 = int_to_ptr.vmem [resolvable:$true] %s975
          %981 = dma.hbm_to_vmem [thread:$0]  %s974, 256, %s976, [#allocation23], 64, 64, 4
        $region76: #{set_decoder_forward.3} parent=11 // pred_fallthru
          _
        // Predicated region
        $region77: #{set_decoder_forward.3} parent=11 // pred_check
          %p982 = pneg %p492
        $region78: #{set_decoder_forward.3} parent=11 // pred_check_branch
          %984 = sbr.rel (%p982) target = $region80
        $region79: #{set_decoder_forward.3} parent=11 // pred_region
          %986 = vsyncadd [#allocation26], 0
          %s988 = sshll.u32 %s37, 4
          %s989 = int_to_ptr.hbm [resolvable:$true] %s988
          %s990 = sshll.u32 [#allocation25], 4
          %s991 = int_to_ptr.vmem [resolvable:$true] %s990
          %993 = dma.hbm_to_vmem [thread:$0]  %s989, 16, %s991, [#allocation26]
        $region80: #{set_decoder_forward.3} parent=11 // pred_fallthru
          _
        // Predicated region
        $region81: #{set_decoder_forward.3} parent=11 // pred_check
          %p994 = pneg %p513
        $region82: #{set_decoder_forward.3} parent=11 // pred_check_branch
          %996 = sbr.rel (%p994) target = $region84
        $region83: #{set_decoder_forward.3} parent=11 // pred_region
          %998 = vsyncadd [#allocation26], 0
          %s999 = sshll.u32 %s39, 4
          %s1000 = int_to_ptr.hbm [resolvable:$true] %s999
          %s1001 = sshll.u32 [#allocation27], 4
          %s1002 = int_to_ptr.vmem [resolvable:$true] %s1001
          %1007 = dma.hbm_to_vmem [thread:$0]  %s1000, 256, %s1002, [#allocation26], 64, 64, 4
        $region84: #{set_decoder_forward.3} parent=11 // pred_fallthru
          _
        // Predicated region
        $region85: #{set_decoder_forward.3} parent=11 // pred_check
          %p1008 = pneg %p534
        $region86: #{set_decoder_forward.3} parent=11 // pred_check_branch
          %1010 = sbr.rel (%p1008) target = $region88
        $region87: #{set_decoder_forward.3} parent=11 // pred_region
          %1012 = vsyncadd [#allocation29], 0
          %s1014 = sshll.u32 %s41, 4
          %s1015 = int_to_ptr.hbm [resolvable:$true] %s1014
          %s1016 = sshll.u32 [#allocation28], 4
          %s1017 = int_to_ptr.vmem [resolvable:$true] %s1016
          %1019 = dma.hbm_to_vmem [thread:$0]  %s1015, 16, %s1017, [#allocation29]
        $region88: #{set_decoder_forward.3} parent=11 // pred_fallthru
          _
        // Predicated region
        $region89: #{set_decoder_forward.3} parent=11 // pred_check
          %p1020 = pneg %p555
        $region90: #{set_decoder_forward.3} parent=11 // pred_check_branch
          %1022 = sbr.rel (%p1020) target = $region92
        $region91: #{set_decoder_forward.3} parent=11 // pred_region
          %1024 = vsyncadd [#allocation29], 0
          %s1025 = sshll.u32 %s43, 4
          %s1026 = int_to_ptr.hbm [resolvable:$true] %s1025
          %s1027 = sshll.u32 [#allocation30], 4
          %s1028 = int_to_ptr.vmem [resolvable:$true] %s1027
          %1033 = dma.hbm_to_vmem [thread:$0]  %s1026, 256, %s1028, [#allocation29], 64, 64, 4
        $region92: #{set_decoder_forward.3} parent=11 // pred_fallthru
          _
        // Predicated region
        $region93: #{set_decoder_forward.3} parent=11 // pred_check
          %p1034 = pneg %p576
        $region94: #{set_decoder_forward.3} parent=11 // pred_check_branch
          %1036 = sbr.rel (%p1034) target = $region96
        $region95: #{set_decoder_forward.3} parent=11 // pred_region
          %1038 = vsyncadd [#allocation32], 0
          %s1040 = sshll.u32 %s45, 4
          %s1041 = int_to_ptr.hbm [resolvable:$true] %s1040
          %s1042 = sshll.u32 [#allocation31], 4
          %s1043 = int_to_ptr.vmem [resolvable:$true] %s1042
          %1045 = dma.hbm_to_vmem [thread:$0]  %s1041, 16, %s1043, [#allocation32]
        $region96: #{set_decoder_forward.3} parent=11 // pred_fallthru
          _
        // Predicated region
        $region97: #{set_decoder_forward.3} parent=11 // pred_check
          %p1046 = pneg %p597
        $region98: #{set_decoder_forward.3} parent=11 // pred_check_branch
          %1048 = sbr.rel (%p1046) target = $region100
        $region99: #{set_decoder_forward.3} parent=11 // pred_region
          %1050 = vsyncadd [#allocation32], 0
          %s1052 = sshll.u32 %s47, 4
          %s1053 = int_to_ptr.hbm [resolvable:$true] %s1052
          %s1054 = sshll.u32 [#allocation33], 4
          %s1055 = int_to_ptr.vmem [resolvable:$true] %s1054
          %1057 = dma.hbm_to_vmem [thread:$0]  %s1053, 16, %s1055, [#allocation32]
        $region100: #{set_decoder_forward.3} parent=11 // pred_fallthru
          _
        // Predicated region
        $region101: #{set_decoder_forward.3} parent=11 // pred_check
          %p1058 = pneg %p618
        $region102: #{set_decoder_forward.3} parent=11 // pred_check_branch
          %1060 = sbr.rel (%p1058) target = $region104
        $region103: #{set_decoder_forward.3} parent=11 // pred_region
          %1062 = vsyncadd [#allocation35], 0
          %s1064 = sshll.u32 %s49, 4
          %s1065 = int_to_ptr.hbm [resolvable:$true] %s1064
          %s1066 = sshll.u32 [#allocation34], 4
          %s1067 = int_to_ptr.vmem [resolvable:$true] %s1066
          %1069 = dma.hbm_to_vmem [thread:$0]  %s1065, 16, %s1067, [#allocation35]
        $region104: #{set_decoder_forward.3} parent=11 // pred_fallthru
          _
        // Predicated region
        $region105: #{set_decoder_forward.3} parent=11 // pred_check
          %p1070 = pneg %p639
        $region106: #{set_decoder_forward.3} parent=11 // pred_check_branch
          %1072 = sbr.rel (%p1070) target = $region108
        $region107: #{set_decoder_forward.3} parent=11 // pred_region
          %1074 = vsyncadd [#allocation35], 0
          %s1075 = sshll.u32 %s51, 4
          %s1076 = int_to_ptr.hbm [resolvable:$true] %s1075
          %s1077 = sshll.u32 [#allocation36], 4
          %s1078 = int_to_ptr.vmem [resolvable:$true] %s1077
          %1083 = dma.hbm_to_vmem [thread:$0]  %s1076, 256, %s1078, [#allocation35], 64, 64, 4
        $region108: #{set_decoder_forward.3} parent=11 // pred_fallthru
          _
        // Predicated region
        $region109: #{set_decoder_forward.3} parent=11 // pred_check
          %p1084 = pneg %p660
        $region110: #{set_decoder_forward.3} parent=11 // pred_check_branch
          %1086 = sbr.rel (%p1084) target = $region112
        $region111: #{set_decoder_forward.3} parent=11 // pred_region
          %1088 = vsyncadd [#allocation38], 0
          %s1090 = sshll.u32 %s53, 4
          %s1091 = int_to_ptr.hbm [resolvable:$true] %s1090
          %s1092 = sshll.u32 [#allocation37], 4
          %s1093 = int_to_ptr.vmem [resolvable:$true] %s1092
          %1095 = dma.hbm_to_vmem [thread:$0]  %s1091, 16, %s1093, [#allocation38]
        $region112: #{set_decoder_forward.3} parent=11 // pred_fallthru
          _
        // Predicated region
        $region113: #{set_decoder_forward.3} parent=11 // pred_check
          %p1096 = pneg %p681
        $region114: #{set_decoder_forward.3} parent=11 // pred_check_branch
          %1098 = sbr.rel (%p1096) target = $region116
        $region115: #{set_decoder_forward.3} parent=11 // pred_region
          _
        $region116: #{set_decoder_forward.3} parent=11 // pred_fallthru
          _
        // Predicated region
        $region117: #{set_decoder_forward.3} parent=11 // pred_check
          %p1099 = pneg %p702
        $region118: #{set_decoder_forward.3} parent=11 // pred_check_branch
          %1101 = sbr.rel (%p1099) target = $region120
        $region119: #{set_decoder_forward.3} parent=11 // pred_region
          %1103 = vsyncadd [#allocation38], 0
          %s1105 = sshll.u32 %s57, 4
          %s1106 = int_to_ptr.hbm [resolvable:$true] %s1105
          %s1107 = sshll.u32 [#allocation39], 4
          %s1108 = int_to_ptr.vmem [resolvable:$true] %s1107
          %1110 = dma.hbm_to_vmem [thread:$0]  %s1106, 16, %s1108, [#allocation38]
        $region120: #{set_decoder_forward.3} parent=11 // pred_fallthru
          _
        // Predicated region
        $region121: #{set_decoder_forward.3} parent=11 // pred_check
          %p1111 = pneg %p723
        $region122: #{set_decoder_forward.3} parent=11 // pred_check_branch
          %1113 = sbr.rel (%p1111) target = $region124
        $region123: #{set_decoder_forward.3} parent=11 // pred_region
          %1115 = vsyncadd [#allocation41], 0
          %s1117 = sshll.u32 %s59, 4
          %s1118 = int_to_ptr.hbm [resolvable:$true] %s1117
          %s1119 = sshll.u32 [#allocation40], 4
          %s1120 = int_to_ptr.vmem [resolvable:$true] %s1119
          %1122 = dma.hbm_to_vmem [thread:$0]  %s1118, 16, %s1120, [#allocation41]
        $region124: #{set_decoder_forward.3} parent=11 // pred_fallthru
          _
        // Predicated region
        $region125: #{set_decoder_forward.3} parent=11 // pred_check
          %p1123 = pneg %p744
        $region126: #{set_decoder_forward.3} parent=11 // pred_check_branch
          %1125 = sbr.rel (%p1123) target = $region128
        $region127: #{set_decoder_forward.3} parent=11 // pred_region
          %1127 = vsyncadd [#allocation41], 0
          %s1129 = sshll.u32 %s61, 4
          %s1130 = int_to_ptr.hbm [resolvable:$true] %s1129
          %s1131 = sshll.u32 [#allocation42], 4
          %s1132 = int_to_ptr.vmem [resolvable:$true] %s1131
          %1134 = dma.hbm_to_vmem [thread:$0]  %s1130, 16, %s1132, [#allocation41]
        $region128: #{set_decoder_forward.3} parent=11 // pred_fallthru
          _
      $region12: #{set_decoder_forward.3} parent=5 // pred_fallthru
        _
      %p1135 = scmp.lt.s32.totalorder %s83, 2
      // Predicated region
      $region129: #{set_decoder_forward.3} parent=5 // pred_check
        %p1136 = pneg %p1135
      $region130: #{set_decoder_forward.3} parent=5 // pred_check_branch
        %1138 = sbr.rel (%p1136) target = $region132
      $region131: #{set_decoder_forward.3} parent=5 // pred_region
        // Predicated region
        $region133: #{set_decoder_forward.3} parent=131 // pred_check
          %p1139 = pneg %p124
        $region134: #{set_decoder_forward.3} parent=131 // pred_check_branch
          %1141 = sbr.rel (%p1139) target = $region136
        $region135: #{set_decoder_forward.3} parent=131 // pred_region
          %p1142 = scmp.lt.s32.totalorder %s83, 1
          %s1143 = scalar_select %p1142, %s83, 1
          %s1144 = smul.addr %s1143, 2
          %s1145 = smul.addr %s1144, 8
          %s1146 = scalar_lea.vmem %s3, %s1145
        $region136: #{set_decoder_forward.3} parent=131 // pred_fallthru
          _
        // Predicated region
        $region137: #{set_decoder_forward.3} parent=131 // pred_check
          %p1147 = pneg %p150
        $region138: #{set_decoder_forward.3} parent=131 // pred_check_branch
          %1149 = sbr.rel (%p1147) target = $region140
        $region139: #{set_decoder_forward.3} parent=131 // pred_region
          %p1150 = scmp.lt.s32.totalorder %s83, 1
          %s1151 = scalar_select %p1150, %s83, 1
          %s1152 = smul.addr %s1151, 2
          %s1153 = smul.addr %s1152, 8
          %s1154 = scalar_lea.vmem %s5, %s1153
        $region140: #{set_decoder_forward.3} parent=131 // pred_fallthru
          _
      $region132: #{set_decoder_forward.3} parent=5 // pred_fallthru
        _
      %p1155 = scmp.le.s32.totalorder 1, %s83
      %p1156 = scmp.lt.s32.totalorder %s83, 3
      %p1157 = pnand %p1155, %p1156
      %p1158 = pneg %p1157
      // Predicated region
      $region141: #{set_decoder_forward.3} parent=5 // pred_check
        _
      $region142: #{set_decoder_forward.3} parent=5 // pred_check_branch
        %1160 = sbr.rel (%p1157) target = $region144
      $region143: #{set_decoder_forward.3} parent=5 // pred_region
        %s1161 = ssub.s32 %s83, 1
        // Predicated region
        $region145: #{set_decoder_forward.3} parent=143 // pred_check
          %p1162 = pneg %p104
        $region146: #{set_decoder_forward.3} parent=143 // pred_check_branch
          %1164 = sbr.rel (%p1162) target = $region148
        $region147: #{set_decoder_forward.3} parent=143 // pred_region
          %1166 = dma.done [#allocation3], 256
        $region148: #{set_decoder_forward.3} parent=143 // pred_fallthru
          _
        // Predicated region
        $region149: #{set_decoder_forward.3} parent=143 // pred_check
          %p1167 = pneg %p198
        $region150: #{set_decoder_forward.3} parent=143 // pred_check_branch
          %1169 = sbr.rel (%p1167) target = $region152
        $region151: #{set_decoder_forward.3} parent=143 // pred_region
          %1171 = dma.done [#allocation5], 16
        $region152: #{set_decoder_forward.3} parent=143 // pred_fallthru
          _
        // Predicated region
        $region153: #{set_decoder_forward.3} parent=143 // pred_check
          %p1172 = pneg %p219
        $region154: #{set_decoder_forward.3} parent=143 // pred_check_branch
          %1174 = sbr.rel (%p1172) target = $region156
        $region155: #{set_decoder_forward.3} parent=143 // pred_region
          %1176 = dma.done [#allocation5], 256
        $region156: #{set_decoder_forward.3} parent=143 // pred_fallthru
          _
        // Predicated region
        $region157: #{set_decoder_forward.3} parent=143 // pred_check
          %p1177 = pneg %p240
        $region158: #{set_decoder_forward.3} parent=143 // pred_check_branch
          %1179 = sbr.rel (%p1177) target = $region160
        $region159: #{set_decoder_forward.3} parent=143 // pred_region
          %1181 = dma.done [#allocation8], 16
        $region160: #{set_decoder_forward.3} parent=143 // pred_fallthru
          _
        // Predicated region
        $region161: #{set_decoder_forward.3} parent=143 // pred_check
          %p1182 = pneg %p261
        $region162: #{set_decoder_forward.3} parent=143 // pred_check_branch
          %1184 = sbr.rel (%p1182) target = $region164
        $region163: #{set_decoder_forward.3} parent=143 // pred_region
          %1186 = dma.done [#allocation8], 256
        $region164: #{set_decoder_forward.3} parent=143 // pred_fallthru
          _
        // Predicated region
        $region165: #{set_decoder_forward.3} parent=143 // pred_check
          %p1187 = pneg %p282
        $region166: #{set_decoder_forward.3} parent=143 // pred_check_branch
          %1189 = sbr.rel (%p1187) target = $region168
        $region167: #{set_decoder_forward.3} parent=143 // pred_region
          %1191 = dma.done [#allocation11], 16
        $region168: #{set_decoder_forward.3} parent=143 // pred_fallthru
          _
        // Predicated region
        $region169: #{set_decoder_forward.3} parent=143 // pred_check
          %p1192 = pneg %p303
        $region170: #{set_decoder_forward.3} parent=143 // pred_check_branch
          %1194 = sbr.rel (%p1192) target = $region172
        $region171: #{set_decoder_forward.3} parent=143 // pred_region
          %1196 = dma.done [#allocation11], 256
        $region172: #{set_decoder_forward.3} parent=143 // pred_fallthru
          _
        // Predicated region
        $region173: #{set_decoder_forward.3} parent=143 // pred_check
          %p1197 = pneg %p324
        $region174: #{set_decoder_forward.3} parent=143 // pred_check_branch
          %1199 = sbr.rel (%p1197) target = $region176
        $region175: #{set_decoder_forward.3} parent=143 // pred_region
          %1201 = dma.done [#allocation14], 16
        $region176: #{set_decoder_forward.3} parent=143 // pred_fallthru
          _
        // Predicated region
        $region177: #{set_decoder_forward.3} parent=143 // pred_check
          %p1202 = pneg %p345
        $region178: #{set_decoder_forward.3} parent=143 // pred_check_branch
          %1204 = sbr.rel (%p1202) target = $region180
        $region179: #{set_decoder_forward.3} parent=143 // pred_region
          %1206 = dma.done [#allocation14], 256
        $region180: #{set_decoder_forward.3} parent=143 // pred_fallthru
          _
        // Predicated region
        $region181: #{set_decoder_forward.3} parent=143 // pred_check
          %p1207 = pneg %p366
        $region182: #{set_decoder_forward.3} parent=143 // pred_check_branch
          %1209 = sbr.rel (%p1207) target = $region184
        $region183: #{set_decoder_forward.3} parent=143 // pred_region
          %1211 = dma.done [#allocation17], 16
        $region184: #{set_decoder_forward.3} parent=143 // pred_fallthru
          _
        // Predicated region
        $region185: #{set_decoder_forward.3} parent=143 // pred_check
          %p1212 = pneg %p387
        $region186: #{set_decoder_forward.3} parent=143 // pred_check_branch
          %1214 = sbr.rel (%p1212) target = $region188
        $region187: #{set_decoder_forward.3} parent=143 // pred_region
          %1216 = dma.done [#allocation17], 16
        $region188: #{set_decoder_forward.3} parent=143 // pred_fallthru
          _
        // Predicated region
        $region189: #{set_decoder_forward.3} parent=143 // pred_check
          %p1217 = pneg %p408
        $region190: #{set_decoder_forward.3} parent=143 // pred_check_branch
          %1219 = sbr.rel (%p1217) target = $region192
        $region191: #{set_decoder_forward.3} parent=143 // pred_region
          %1221 = dma.done [#allocation20], 16
        $region192: #{set_decoder_forward.3} parent=143 // pred_fallthru
          _
        // Predicated region
        $region193: #{set_decoder_forward.3} parent=143 // pred_check
          %p1222 = pneg %p429
        $region194: #{set_decoder_forward.3} parent=143 // pred_check_branch
          %1224 = sbr.rel (%p1222) target = $region196
        $region195: #{set_decoder_forward.3} parent=143 // pred_region
          %1226 = dma.done [#allocation20], 256
        $region196: #{set_decoder_forward.3} parent=143 // pred_fallthru
          _
        // Predicated region
        $region197: #{set_decoder_forward.3} parent=143 // pred_check
          %p1227 = pneg %p450
        $region198: #{set_decoder_forward.3} parent=143 // pred_check_branch
          %1229 = sbr.rel (%p1227) target = $region200
        $region199: #{set_decoder_forward.3} parent=143 // pred_region
          %1231 = dma.done [#allocation23], 16
        $region200: #{set_decoder_forward.3} parent=143 // pred_fallthru
          _
        // Predicated region
        $region201: #{set_decoder_forward.3} parent=143 // pred_check
          %p1232 = pneg %p471
        $region202: #{set_decoder_forward.3} parent=143 // pred_check_branch
          %1234 = sbr.rel (%p1232) target = $region204
        $region203: #{set_decoder_forward.3} parent=143 // pred_region
          %1236 = dma.done [#allocation23], 256
        $region204: #{set_decoder_forward.3} parent=143 // pred_fallthru
          _
        // Predicated region
        $region205: #{set_decoder_forward.3} parent=143 // pred_check
          %p1237 = pneg %p492
        $region206: #{set_decoder_forward.3} parent=143 // pred_check_branch
          %1239 = sbr.rel (%p1237) target = $region208
        $region207: #{set_decoder_forward.3} parent=143 // pred_region
          %1241 = dma.done [#allocation26], 16
        $region208: #{set_decoder_forward.3} parent=143 // pred_fallthru
          _
        // Predicated region
        $region209: #{set_decoder_forward.3} parent=143 // pred_check
          %p1242 = pneg %p513
        $region210: #{set_decoder_forward.3} parent=143 // pred_check_branch
          %1244 = sbr.rel (%p1242) target = $region212
        $region211: #{set_decoder_forward.3} parent=143 // pred_region
          %1246 = dma.done [#allocation26], 256
        $region212: #{set_decoder_forward.3} parent=143 // pred_fallthru
          _
        // Predicated region
        $region213: #{set_decoder_forward.3} parent=143 // pred_check
          %p1247 = pneg %p534
        $region214: #{set_decoder_forward.3} parent=143 // pred_check_branch
          %1249 = sbr.rel (%p1247) target = $region216
        $region215: #{set_decoder_forward.3} parent=143 // pred_region
          %1251 = dma.done [#allocation29], 16
        $region216: #{set_decoder_forward.3} parent=143 // pred_fallthru
          _
        // Predicated region
        $region217: #{set_decoder_forward.3} parent=143 // pred_check
          %p1252 = pneg %p555
        $region218: #{set_decoder_forward.3} parent=143 // pred_check_branch
          %1254 = sbr.rel (%p1252) target = $region220
        $region219: #{set_decoder_forward.3} parent=143 // pred_region
          %1256 = dma.done [#allocation29], 256
        $region220: #{set_decoder_forward.3} parent=143 // pred_fallthru
          _
        // Predicated region
        $region221: #{set_decoder_forward.3} parent=143 // pred_check
          %p1257 = pneg %p576
        $region222: #{set_decoder_forward.3} parent=143 // pred_check_branch
          %1259 = sbr.rel (%p1257) target = $region224
        $region223: #{set_decoder_forward.3} parent=143 // pred_region
          %1261 = dma.done [#allocation32], 16
        $region224: #{set_decoder_forward.3} parent=143 // pred_fallthru
          _
        // Predicated region
        $region225: #{set_decoder_forward.3} parent=143 // pred_check
          %p1262 = pneg %p597
        $region226: #{set_decoder_forward.3} parent=143 // pred_check_branch
          %1264 = sbr.rel (%p1262) target = $region228
        $region227: #{set_decoder_forward.3} parent=143 // pred_region
          %1266 = dma.done [#allocation32], 16
        $region228: #{set_decoder_forward.3} parent=143 // pred_fallthru
          _
        // Predicated region
        $region229: #{set_decoder_forward.3} parent=143 // pred_check
          %p1267 = pneg %p618
        $region230: #{set_decoder_forward.3} parent=143 // pred_check_branch
          %1269 = sbr.rel (%p1267) target = $region232
        $region231: #{set_decoder_forward.3} parent=143 // pred_region
          %1271 = dma.done [#allocation35], 16
        $region232: #{set_decoder_forward.3} parent=143 // pred_fallthru
          _
        // Predicated region
        $region233: #{set_decoder_forward.3} parent=143 // pred_check
          %p1272 = pneg %p639
        $region234: #{set_decoder_forward.3} parent=143 // pred_check_branch
          %1274 = sbr.rel (%p1272) target = $region236
        $region235: #{set_decoder_forward.3} parent=143 // pred_region
          %1276 = dma.done [#allocation35], 256
        $region236: #{set_decoder_forward.3} parent=143 // pred_fallthru
          _
        // Predicated region
        $region237: #{set_decoder_forward.3} parent=143 // pred_check
          %p1277 = pneg %p660
        $region238: #{set_decoder_forward.3} parent=143 // pred_check_branch
          %1279 = sbr.rel (%p1277) target = $region240
        $region239: #{set_decoder_forward.3} parent=143 // pred_region
          %1281 = dma.done [#allocation38], 16
        $region240: #{set_decoder_forward.3} parent=143 // pred_fallthru
          _
        // Predicated region
        $region241: #{set_decoder_forward.3} parent=143 // pred_check
          %p1282 = pneg %p702
        $region242: #{set_decoder_forward.3} parent=143 // pred_check_branch
          %1284 = sbr.rel (%p1282) target = $region244
        $region243: #{set_decoder_forward.3} parent=143 // pred_region
          %1286 = dma.done [#allocation38], 16
        $region244: #{set_decoder_forward.3} parent=143 // pred_fallthru
          _
        // Predicated region
        $region245: #{set_decoder_forward.3} parent=143 // pred_check
          %p1287 = pneg %p723
        $region246: #{set_decoder_forward.3} parent=143 // pred_check_branch
          %1289 = sbr.rel (%p1287) target = $region248
        $region247: #{set_decoder_forward.3} parent=143 // pred_region
          %1291 = dma.done [#allocation41], 16
        $region248: #{set_decoder_forward.3} parent=143 // pred_fallthru
          _
        // Predicated region
        $region249: #{set_decoder_forward.3} parent=143 // pred_check
          %p1292 = pneg %p744
        $region250: #{set_decoder_forward.3} parent=143 // pred_check_branch
          %1294 = sbr.rel (%p1292) target = $region252
        $region251: #{set_decoder_forward.3} parent=143 // pred_region
          %1296 = dma.done [#allocation41], 16
        $region252: #{set_decoder_forward.3} parent=143 // pred_fallthru
          _
        %p1297 = pneg %p104
        %p1298 = pneg %p101
        %p1299 = scmp.lt.s32.totalorder %s88, 1
        %s1300 = scalar_select %p1299, %s88, 1
        %s1301 = smul.addr %s1300, 2
        %s1302 = smul.addr %s1301, 8
        %s1303 = scalar_lea.vmem %s3, %s1302
        %p1304 = pneg %p130
        %p1305 = pneg %p127
        %p1306 = scmp.lt.s32.totalorder %s88, 1
        %s1307 = scalar_select %p1306, %s88, 1
        %s1308 = smul.addr %s1307, 2
        %s1309 = smul.addr %s1308, 8
        %s1310 = scalar_lea.vmem %s5, %s1309
        %p1311 = pneg %p156
        %p1312 = pneg %p153
        %p1313 = pneg %p177
        %p1314 = pneg %p174
        %p1315 = pneg %p198
        %p1316 = pneg %p195
        %p1317 = pneg %p219
        %p1318 = pneg %p216
        %p1319 = pneg %p240
        %p1320 = pneg %p237
        %p1321 = pneg %p261
        %p1322 = pneg %p258
        %p1323 = pneg %p282
        %p1324 = pneg %p279
        %p1325 = pneg %p303
        %p1326 = pneg %p300
        %p1327 = pneg %p324
        %p1328 = pneg %p321
        %p1329 = pneg %p345
        %p1330 = pneg %p342
        %p1331 = pneg %p366
        %p1332 = pneg %p363
        %p1333 = pneg %p387
        %p1334 = pneg %p384
        %p1335 = pneg %p408
        %p1336 = pneg %p405
        %p1337 = pneg %p429
        %p1338 = pneg %p426
        %p1339 = pneg %p450
        %p1340 = pneg %p447
        %p1341 = pneg %p471
        %p1342 = pneg %p468
        %p1343 = pneg %p492
        %p1344 = pneg %p489
        %p1345 = pneg %p513
        %p1346 = pneg %p510
        %p1347 = pneg %p534
        %p1348 = pneg %p531
        %p1349 = pneg %p555
        %p1350 = pneg %p552
        %p1351 = pneg %p576
        %p1352 = pneg %p573
        %p1353 = pneg %p597
        %p1354 = pneg %p594
        %p1355 = pneg %p618
        %p1356 = pneg %p615
        %p1357 = pneg %p639
        %p1358 = pneg %p636
        %p1359 = pneg %p660
        %p1360 = pneg %p657
        %p1361 = pneg %p681
        %p1362 = pneg %p678
        %p1363 = pneg %p702
        %p1364 = pneg %p699
        %p1365 = pneg %p723
        %p1366 = pneg %p720
        %p1367 = pneg %p744
        %p1368 = pneg %p741
        %p1369 = pneg %p770
        %p1370 = pneg %p767
        %p1371 = scmp.lt.s32.totalorder %s88, 1
        %s1372 = scalar_select %p1371, %s88, 1
        %s1373 = smul.addr %s1372, 2
        %s1374 = smul.addr %s1373, 8
        %s1375 = scalar_lea.vmem %s63, %s1374
        %p1376 = scmp.lt.s32.totalorder %s88, 1
        %s1377 = scalar_select %p1376, %s88, 1
        %s1378 = smul.addr %s1377, 2
        %s1379 = smul.addr %s1378, 8
        %s1380 = scalar_lea.vmem %s3, %s1379
        %p1381 = scmp.lt.s32.totalorder %s88, 1
        %s1382 = scalar_select %p1381, %s88, 1
        %s1383 = smul.addr %s1382, 2
        %s1384 = smul.addr %s1383, 8
        %s1385 = scalar_lea.vmem %s5, %s1384
        %p1386 = scmp.lt.s32.totalorder %s88, 1
        %s1387 = scalar_select %p1386, %s88, 1
        %s1388 = smul.addr %s1387, 2
        %s1389 = smul.addr %s1388, 8
        %s1390 = scalar_lea.vmem %s63, %s1389
        %v1392 = vld [vmem:[#allocation2] sm:$0xff]
        %v1393 = vld [vmem:[#allocation2 + $0x8] sm:$0xff]
        %v1394 = vld [vmem:[%s7] sm:$0x1]
        %v1395 = vld [vmem:[#allocation4] sm:$0x1]
        %vm1396 = vcmask 261120
        %v1397 = vsel %vm1396, %v1392, 0.0
        %1398 = vadd.xlane.f32.xlu0 %v1397
        %v1399 = vpop.xlane.xlu0 %1398
        %v1400 = vsel %vm1396, %v1393, 0.0
        %1401 = vadd.xlane.f32.xlu0 %v1400
        %v1402 = vpop.xlane.xlu0 %1401
        %v1403 = vrcp.pop 32.0
        %v1404 = vmul.f32 32.0, %v1403
        %v1405 = vsub.f32 1.0, %v1404
        %v1406 = vmul.f32 %v1403, %v1405
        %v1407 = vadd.f32 %v1403, %v1406
        %vm1408 = vweird.f32 %v1403
        %v1409 = vsel %vm1408, %v1403, %v1407
        %v1410 = vmul.f32 %v1399, %v1409
        %v1411 = vmul.f32 %v1402, %v1409
        %v1412 = vsub.f32 %v1392, %v1410
        %v1413 = vsub.f32 %v1393, %v1411
        %v1414 = vmul.f32 %v1412, %v1412
        %v1415 = vmul.f32 %v1413, %v1413
        %v1416 = vsel %vm1396, %v1414, 0.0
        %1417 = vadd.xlane.f32.xlu0 %v1416
        %v1418 = vpop.xlane.xlu0 %1417
        %v1419 = vsel %vm1396, %v1415, 0.0
        %1420 = vadd.xlane.f32.xlu0 %v1419
        %v1421 = vpop.xlane.xlu0 %1420
        %v1422 = vmul.f32 %v1418, %v1409
        %v1423 = vmul.f32 %v1421, %v1409
        %v1424 = vadd.f32 %v1422, 1e-12
        %v1425 = vadd.f32 %v1423, 1e-12
        %v1426 = vrsqrt.pop %v1424
        %v1427 = vmul.f32 %v1426, %v1424
        %v1428 = vmul.f32 %v1427, %v1426
        %v1429 = vmul.f32 0.5, %v1428
        %v1430 = vsub.f32 1.5, %v1429
        %v1431 = vmul.f32 %v1426, %v1430
        %vm1432 = vweird.f32 %v1424
        %vm1433 = vweird.f32 %v1426
        %vm1434 = vmor %vm1432, %vm1433
        %v1435 = vsel %vm1434, %v1426, %v1431
        %v1436 = vrsqrt.pop %v1425
        %v1437 = vmul.f32 %v1436, %v1425
        %v1438 = vmul.f32 %v1437, %v1436
        %v1439 = vmul.f32 0.5, %v1438
        %v1440 = vsub.f32 1.5, %v1439
        %v1441 = vmul.f32 %v1436, %v1440
        %vm1442 = vweird.f32 %v1425
        %vm1443 = vweird.f32 %v1436
        %vm1444 = vmor %vm1442, %vm1443
        %v1445 = vsel %vm1444, %v1436, %v1441
        %v1446 = vmul.f32 %v1412, %v1435
        %v1447 = vmul.f32 %v1413, %v1445
        %v1449 = vperm.slane %v1394, 0
        %v1451 = vmul.f32 %v1446, %v1449
        %v1452 = vmul.f32 %v1447, %v1449
        %v1454 = vperm.slane %v1395, 0
        %v1456 = vadd.f32 %v1451, %v1454
        %v1457 = vadd.f32 %v1452, %v1454
        %v1458 = vld [vmem:[%s1380] sm:$0xff]
        %v1459 = vld [vmem:[%s1380 + $0x8] sm:$0xff]
        %v1460 = vld [vmem:[%s1385] sm:$0xff]
        %v1461 = vld [vmem:[%s1385 + $0x8] sm:$0xff]
        %v1462 = vsub.f32 1.0, %v1460
        %v1463 = vsub.f32 1.0, %v1461
        %v1464 = vmul.f32 %v1462, -10000.0
        %v1465 = vmul.f32 %v1463, -10000.0
        %v1466 = vld [vmem:[#allocation6] sm:$0xf]
        %v1467 = vld [vmem:[#allocation6 + $0x4] sm:$0xf]
        %v1468 = vld [vmem:[#allocation6 + $0x8] sm:$0xf]
        %v1469 = vld [vmem:[#allocation6 + $0xc] sm:$0xf]
        %v1470 = vld [vmem:[#allocation7] sm:$0x1]
        %v1471 = vld [vmem:[#allocation9] sm:$0xf]
        %v1472 = vld [vmem:[#allocation9 + $0x4] sm:$0xf]
        %v1473 = vld [vmem:[#allocation9 + $0x8] sm:$0xf]
        %v1474 = vld [vmem:[#allocation9 + $0xc] sm:$0xf]
        %v1475 = vld [vmem:[#allocation10] sm:$0x1]
        %v1476 = vld [vmem:[#allocation12] sm:$0xf]
        %v1477 = vld [vmem:[#allocation12 + $0x4] sm:$0xf]
        %v1478 = vld [vmem:[#allocation12 + $0x8] sm:$0xf]
        %v1479 = vld [vmem:[#allocation12 + $0xc] sm:$0xf]
        %v1480 = vld [vmem:[#allocation13] sm:$0x1]
        %v1481 = vld [vmem:[#allocation15] sm:$0xf]
        %v1482 = vld [vmem:[#allocation15 + $0x4] sm:$0xf]
        %v1483 = vld [vmem:[#allocation15 + $0x8] sm:$0xf]
        %v1484 = vld [vmem:[#allocation15 + $0xc] sm:$0xf]
        %v1485 = vld [vmem:[#allocation16] sm:$0x1]
        %v1486 = vld [vmem:[#allocation18] sm:$0x1]
        %v1487 = vld [vmem:[#allocation19] sm:$0x1]
        %v1488 = vpack.c.bf16 %v1457, %v1456
        %v1490 = vperm.slane %v1470, 0
        %v1496 = vunpack.c.l.b16 %v1466
        %v1497 = vunpack.c.l.b16 %v1467
        %v1498 = vunpack.c.l.b16 %v1468
        %v1499 = vunpack.c.l.b16 %v1469
        %v1500 = vpack.c.b16 %v1497, %v1496
        %v1501 = vpack.c.b16 %v1499, %v1498
        %v1505 = vsel %vm1396, %v1488, 0
        %1507 = vmatpush.bf16.msra.mxu0 0
        %1508 = vmatpush.bf16.msra.mxu0 0
        %1509 = vmatpush.bf16.msra.mxu0 0
        %1510 = vmatpush.bf16.msra.mxu0 0
        %1511 = vmatpush.bf16.msra.mxu0 0
        %1512 = vmatpush.bf16.msra.mxu0 0
        %1513 = vmatpush.bf16.msra.mxu0 %v1501
        %1514 = vmatpush.bf16.msra.mxu0 %v1500
        %1515 = vmatmul.bf16.gmra.mxu0 %v1505
        %v1516 = vpop.f32.mrf.mxu0
        %v1517 = vadd.f32 %v1490, %v1516
        %v1518 = vpop.f32.mrf.mxu0
        %v1519 = vadd.f32 %v1490, %v1518
        %1520 = vdwg.mxu0
        %v1522 = vperm.slane %v1475, 0
        %v1528 = vunpack.c.l.b16 %v1471
        %v1529 = vunpack.c.l.b16 %v1472
        %v1530 = vunpack.c.l.b16 %v1473
        %v1531 = vunpack.c.l.b16 %v1474
        %v1532 = vpack.c.b16 %v1529, %v1528
        %v1533 = vpack.c.b16 %v1531, %v1530
        %1536 = vmatpush.bf16.msra.mxu0 0
        %1537 = vmatpush.bf16.msra.mxu0 0
        %1538 = vmatpush.bf16.msra.mxu0 0
        %1539 = vmatpush.bf16.msra.mxu0 0
        %1540 = vmatpush.bf16.msra.mxu0 0
        %1541 = vmatpush.bf16.msra.mxu0 0
        %1542 = vmatpush.bf16.msra.mxu0 %v1533
        %1543 = vmatpush.bf16.msra.mxu0 %v1532
        %1544 = vmatmul.bf16.gmra.mxu0 %v1505
        %v1545 = vpop.f32.mrf.mxu0
        %v1546 = vadd.f32 %v1522, %v1545
        %v1547 = vpop.f32.mrf.mxu0
        %v1548 = vadd.f32 %v1522, %v1547
        %1549 = vdwg.mxu0
        %v1551 = vperm.slane %v1480, 0
        %v1557 = vunpack.c.l.b16 %v1476
        %v1558 = vunpack.c.l.b16 %v1477
        %v1559 = vunpack.c.l.b16 %v1478
        %v1560 = vunpack.c.l.b16 %v1479
        %v1561 = vpack.c.b16 %v1558, %v1557
        %v1562 = vpack.c.b16 %v1560, %v1559
        %1565 = vmatpush.bf16.msra.mxu0 0
        %1566 = vmatpush.bf16.msra.mxu0 0
        %1567 = vmatpush.bf16.msra.mxu0 0
        %1568 = vmatpush.bf16.msra.mxu0 0
        %1569 = vmatpush.bf16.msra.mxu0 0
        %1570 = vmatpush.bf16.msra.mxu0 0
        %1571 = vmatpush.bf16.msra.mxu0 %v1562
        %1572 = vmatpush.bf16.msra.mxu0 %v1561
        %1573 = vmatmul.bf16.gmra.mxu0 %v1505
        %v1574 = vpop.f32.mrf.mxu0
        %v1575 = vadd.f32 %v1551, %v1574
        %v1576 = vpop.f32.mrf.mxu0
        %v1577 = vadd.f32 %v1551, %v1576
        %1578 = vdwg.mxu0
        %v1579 = vpack.c.bf16 %v1519, %v1517
        %v1580 = vpack.c.bf16 %v1548, %v1546
        %v1581 = vpack.c.bf16 %v1577, %v1575
        %vm1582 = vcmask 64512
        %v1584 = vsel %vm1582, %v1579, 0
        %v1587 = vsel %vm1582, %v1580, 0
        %1589 = vmatpush.bf16.xpose.msra.mxu0 0
        %1590 = vmatpush.bf16.xpose.msra.mxu0 0
        %1591 = vmatpush.bf16.xpose.msra.mxu0 0
        %1592 = vmatpush.bf16.xpose.msra.mxu0 0
        %1593 = vmatpush.bf16.xpose.msra.mxu0 0
        %1594 = vmatpush.bf16.xpose.msra.mxu0 0
        %1595 = vmatpush.bf16.xpose.msra.mxu0 0
        %1596 = vmatpush.bf16.xpose.msra.mxu0 %v1587
        %1597 = vmatmul.bf16.gmra.mxu0 %v1584
        %v1598 = vpop.f32.mrf.mxu0
        %v1599 = vadd.f32 0.0, %v1598
        %v1600 = vpop.f32.mrf.mxu0
        %v1601 = vadd.f32 0.0, %v1600
        %1602 = vdwg.mxu0
        %v1603 = vmul.f32 %v1599, 0.35355338
        %v1604 = vmul.f32 %v1601, 0.35355338
        %vm1605 = vcmask 130048
        %v1606 = vsel %vm1605, %v1603, -inf
        %1607 = vmax.xlane.f32.xlu0 %v1606
        %v1608 = vpop.xlane.xlu0 %1607
        %v1609 = vsel %vm1605, %v1604, -inf
        %1610 = vmax.xlane.f32.xlu0 %v1609
        %v1611 = vpop.xlane.xlu0 %1610
        %v1612 = vsub.f32 %v1603, %v1608
        %v1613 = vsub.f32 %v1604, %v1611
        %v1614 = vmul.f32 %v1612, 1.442695
        %v1615 = vpow.pop %v1614
        %v1616 = vmul.f32 %v1613, 1.442695
        %v1617 = vpow.pop %v1616
        %v1618 = vsel %vm1605, %v1615, 0.0
        %1619 = vadd.xlane.f32.xlu0 %v1618
        %v1620 = vpop.xlane.xlu0 %1619
        %v1621 = vsel %vm1605, %v1617, 0.0
        %1622 = vadd.xlane.f32.xlu0 %v1621
        %v1623 = vpop.xlane.xlu0 %1622
        %v1624 = vrcp.pop %v1620
        %v1625 = vrcp.pop %v1623
        %v1626 = vmul.f32 %v1615, %v1624
        %v1627 = vmul.f32 %v1617, %v1625
        %v1628 = vpack.c.bf16 %v1627, %v1626
        %v1630 = vsel %vm1605, %v1628, 0
        %1632 = vmatpush.bf16.msra.mxu0 0
        %1633 = vmatpush.bf16.msra.mxu0 0
        %1634 = vmatpush.bf16.msra.mxu0 0
        %1635 = vmatpush.bf16.msra.mxu0 0
        %1636 = vmatpush.bf16.msra.mxu0 0
        %1637 = vmatpush.bf16.msra.mxu0 0
        %1638 = vmatpush.bf16.msra.mxu0 0
        %1639 = vmatpush.bf16.msra.mxu0 %v1581
        %1640 = vmatmul.bf16.gmra.mxu0 %v1630
        %v1641 = vpop.f32.mrf.mxu0
        %v1642 = vadd.f32 0.0, %v1641
        %v1643 = vpop.f32.mrf.mxu0
        %v1644 = vadd.f32 0.0, %v1643
        %1645 = vdwg.mxu0
        %1647 = vrot.lane.b32.xlu0 %v1579, 120
        %v1648 = vpop.permute.xlu0 %1647
        %1650 = vrot.lane.b32.xlu0 %v1580, 120
        %v1651 = vpop.permute.xlu0 %1650
        %v1653 = vsel %vm1582, %v1648, 0
        %v1656 = vsel %vm1582, %v1651, 0
        %1658 = vmatpush.bf16.xpose.msra.mxu0 0
        %1659 = vmatpush.bf16.xpose.msra.mxu0 0
        %1660 = vmatpush.bf16.xpose.msra.mxu0 0
        %1661 = vmatpush.bf16.xpose.msra.mxu0 0
        %1662 = vmatpush.bf16.xpose.msra.mxu0 0
        %1663 = vmatpush.bf16.xpose.msra.mxu0 0
        %1664 = vmatpush.bf16.xpose.msra.mxu0 0
        %1665 = vmatpush.bf16.xpose.msra.mxu0 %v1656
        %1666 = vmatmul.bf16.gmra.mxu0 %v1653
        %v1667 = vpop.f32.mrf.mxu0
        %v1668 = vadd.f32 0.0, %v1667
        %v1669 = vpop.f32.mrf.mxu0
        %v1670 = vadd.f32 0.0, %v1669
        %1671 = vdwg.mxu0
        %v1672 = vmul.f32 %v1668, 0.35355338
        %v1673 = vmul.f32 %v1670, 0.35355338
        %v1674 = vsel %vm1605, %v1672, -inf
        %1675 = vmax.xlane.f32.xlu0 %v1674
        %v1676 = vpop.xlane.xlu0 %1675
        %v1677 = vsel %vm1605, %v1673, -inf
        %1678 = vmax.xlane.f32.xlu0 %v1677
        %v1679 = vpop.xlane.xlu0 %1678
        %v1680 = vsub.f32 %v1672, %v1676
        %v1681 = vsub.f32 %v1673, %v1679
        %v1682 = vmul.f32 %v1680, 1.442695
        %v1683 = vpow.pop %v1682
        %v1684 = vmul.f32 %v1681, 1.442695
        %v1685 = vpow.pop %v1684
        %v1686 = vsel %vm1605, %v1683, 0.0
        %1687 = vadd.xlane.f32.xlu0 %v1686
        %v1688 = vpop.xlane.xlu0 %1687
        %v1689 = vsel %vm1605, %v1685, 0.0
        %1690 = vadd.xlane.f32.xlu0 %v1689
        %v1691 = vpop.xlane.xlu0 %1690
        %v1692 = vrcp.pop %v1688
        %v1693 = vrcp.pop %v1691
        %v1694 = vmul.f32 %v1683, %v1692
        %v1695 = vmul.f32 %v1685, %v1693
        %v1696 = vpack.c.bf16 %v1695, %v1694
        %1698 = vrot.lane.b32.xlu0 %v1581, 120
        %v1699 = vpop.permute.xlu0 %1698
        %v1702 = vsel %vm1605, %v1696, 0
        %1704 = vmatpush.bf16.msra.mxu0 0
        %1705 = vmatpush.bf16.msra.mxu0 0
        %1706 = vmatpush.bf16.msra.mxu0 0
        %1707 = vmatpush.bf16.msra.mxu0 0
        %1708 = vmatpush.bf16.msra.mxu0 0
        %1709 = vmatpush.bf16.msra.mxu0 0
        %1710 = vmatpush.bf16.msra.mxu0 0
        %1711 = vmatpush.bf16.msra.mxu0 %v1699
        %1712 = vmatmul.bf16.gmra.mxu0 %v1702
        %v1713 = vpop.f32.mrf.mxu0
        %v1714 = vadd.f32 0.0, %v1713
        %v1715 = vpop.f32.mrf.mxu0
        %v1716 = vadd.f32 0.0, %v1715
        %1717 = vdwg.mxu0
        %1718 = vrot.lane.b32.xlu0 %v1579, 112
        %v1719 = vpop.permute.xlu0 %1718
        %1720 = vrot.lane.b32.xlu0 %v1580, 112
        %v1721 = vpop.permute.xlu0 %1720
        %v1723 = vsel %vm1582, %v1719, 0
        %v1726 = vsel %vm1582, %v1721, 0
        %1728 = vmatpush.bf16.xpose.msra.mxu0 0
        %1729 = vmatpush.bf16.xpose.msra.mxu0 0
        %1730 = vmatpush.bf16.xpose.msra.mxu0 0
        %1731 = vmatpush.bf16.xpose.msra.mxu0 0
        %1732 = vmatpush.bf16.xpose.msra.mxu0 0
        %1733 = vmatpush.bf16.xpose.msra.mxu0 0
        %1734 = vmatpush.bf16.xpose.msra.mxu0 0
        %1735 = vmatpush.bf16.xpose.msra.mxu0 %v1726
        %1736 = vmatmul.bf16.gmra.mxu0 %v1723
        %v1737 = vpop.f32.mrf.mxu0
        %v1738 = vadd.f32 0.0, %v1737
        %v1739 = vpop.f32.mrf.mxu0
        %v1740 = vadd.f32 0.0, %v1739
        %1741 = vdwg.mxu0
        %v1742 = vmul.f32 %v1738, 0.35355338
        %v1743 = vmul.f32 %v1740, 0.35355338
        %v1744 = vsel %vm1605, %v1742, -inf
        %1745 = vmax.xlane.f32.xlu0 %v1744
        %v1746 = vpop.xlane.xlu0 %1745
        %v1747 = vsel %vm1605, %v1743, -inf
        %1748 = vmax.xlane.f32.xlu0 %v1747
        %v1749 = vpop.xlane.xlu0 %1748
        %v1750 = vsub.f32 %v1742, %v1746
        %v1751 = vsub.f32 %v1743, %v1749
        %v1752 = vmul.f32 %v1750, 1.442695
        %v1753 = vpow.pop %v1752
        %v1754 = vmul.f32 %v1751, 1.442695
        %v1755 = vpow.pop %v1754
        %v1756 = vsel %vm1605, %v1753, 0.0
        %1757 = vadd.xlane.f32.xlu0 %v1756
        %v1758 = vpop.xlane.xlu0 %1757
        %v1759 = vsel %vm1605, %v1755, 0.0
        %1760 = vadd.xlane.f32.xlu0 %v1759
        %v1761 = vpop.xlane.xlu0 %1760
        %v1762 = vrcp.pop %v1758
        %v1763 = vrcp.pop %v1761
        %v1764 = vmul.f32 %v1753, %v1762
        %v1765 = vmul.f32 %v1755, %v1763
        %v1766 = vpack.c.bf16 %v1765, %v1764
        %1767 = vrot.lane.b32.xlu0 %v1581, 112
        %v1768 = vpop.permute.xlu0 %1767
        %v1771 = vsel %vm1605, %v1766, 0
        %1773 = vmatpush.bf16.msra.mxu0 0
        %1774 = vmatpush.bf16.msra.mxu0 0
        %1775 = vmatpush.bf16.msra.mxu0 0
        %1776 = vmatpush.bf16.msra.mxu0 0
        %1777 = vmatpush.bf16.msra.mxu0 0
        %1778 = vmatpush.bf16.msra.mxu0 0
        %1779 = vmatpush.bf16.msra.mxu0 0
        %1780 = vmatpush.bf16.msra.mxu0 %v1768
        %1781 = vmatmul.bf16.gmra.mxu0 %v1771
        %v1782 = vpop.f32.mrf.mxu0
        %v1783 = vadd.f32 0.0, %v1782
        %v1784 = vpop.f32.mrf.mxu0
        %v1785 = vadd.f32 0.0, %v1784
        %1786 = vdwg.mxu0
        %1787 = vrot.lane.b32.xlu0 %v1579, 104
        %v1788 = vpop.permute.xlu0 %1787
        %1789 = vrot.lane.b32.xlu0 %v1580, 104
        %v1790 = vpop.permute.xlu0 %1789
        %v1792 = vsel %vm1582, %v1788, 0
        %v1795 = vsel %vm1582, %v1790, 0
        %1797 = vmatpush.bf16.xpose.msra.mxu0 0
        %1798 = vmatpush.bf16.xpose.msra.mxu0 0
        %1799 = vmatpush.bf16.xpose.msra.mxu0 0
        %1800 = vmatpush.bf16.xpose.msra.mxu0 0
        %1801 = vmatpush.bf16.xpose.msra.mxu0 0
        %1802 = vmatpush.bf16.xpose.msra.mxu0 0
        %1803 = vmatpush.bf16.xpose.msra.mxu0 0
        %1804 = vmatpush.bf16.xpose.msra.mxu0 %v1795
        %1805 = vmatmul.bf16.gmra.mxu0 %v1792
        %v1806 = vpop.f32.mrf.mxu0
        %v1807 = vadd.f32 0.0, %v1806
        %v1808 = vpop.f32.mrf.mxu0
        %v1809 = vadd.f32 0.0, %v1808
        %1810 = vdwg.mxu0
        %v1811 = vmul.f32 %v1807, 0.35355338
        %v1812 = vmul.f32 %v1809, 0.35355338
        %v1813 = vsel %vm1605, %v1811, -inf
        %1814 = vmax.xlane.f32.xlu0 %v1813
        %v1815 = vpop.xlane.xlu0 %1814
        %v1816 = vsel %vm1605, %v1812, -inf
        %1817 = vmax.xlane.f32.xlu0 %v1816
        %v1818 = vpop.xlane.xlu0 %1817
        %v1819 = vsub.f32 %v1811, %v1815
        %v1820 = vsub.f32 %v1812, %v1818
        %v1821 = vmul.f32 %v1819, 1.442695
        %v1822 = vpow.pop %v1821
        %v1823 = vmul.f32 %v1820, 1.442695
        %v1824 = vpow.pop %v1823
        %v1825 = vsel %vm1605, %v1822, 0.0
        %1826 = vadd.xlane.f32.xlu0 %v1825
        %v1827 = vpop.xlane.xlu0 %1826
        %v1828 = vsel %vm1605, %v1824, 0.0
        %1829 = vadd.xlane.f32.xlu0 %v1828
        %v1830 = vpop.xlane.xlu0 %1829
        %v1831 = vrcp.pop %v1827
        %v1832 = vrcp.pop %v1830
        %v1833 = vmul.f32 %v1822, %v1831
        %v1834 = vmul.f32 %v1824, %v1832
        %v1835 = vpack.c.bf16 %v1834, %v1833
        %1836 = vrot.lane.b32.xlu0 %v1581, 104
        %v1837 = vpop.permute.xlu0 %1836
        %v1840 = vsel %vm1605, %v1835, 0
        %1842 = vmatpush.bf16.msra.mxu0 0
        %1843 = vmatpush.bf16.msra.mxu0 0
        %1844 = vmatpush.bf16.msra.mxu0 0
        %1845 = vmatpush.bf16.msra.mxu0 0
        %1846 = vmatpush.bf16.msra.mxu0 0
        %1847 = vmatpush.bf16.msra.mxu0 0
        %1848 = vmatpush.bf16.msra.mxu0 0
        %1849 = vmatpush.bf16.msra.mxu0 %v1837
        %1850 = vmatmul.bf16.gmra.mxu0 %v1840
        %v1851 = vpop.f32.mrf.mxu0
        %v1852 = vadd.f32 0.0, %v1851
        %v1853 = vpop.f32.mrf.mxu0
        %v1854 = vadd.f32 0.0, %v1853
        %1855 = vdwg.mxu0
        %1858 = vrot.lane.b32.xlu0 %v1714, 8
        %v1859 = vpop.permute.xlu0 %1858
        %1860 = vrot.lane.b32.xlu0 %v1716, 8
        %v1861 = vpop.permute.xlu0 %1860
        %1866 = vrot.lane.b32.xlu0 %v1783, 16
        %v1867 = vpop.permute.xlu0 %1866
        %1868 = vrot.lane.b32.xlu0 %v1785, 16
        %v1869 = vpop.permute.xlu0 %1868
        %1874 = vrot.lane.b32.xlu0 %v1852, 24
        %v1875 = vpop.permute.xlu0 %1874
        %1876 = vrot.lane.b32.xlu0 %v1854, 24
        %v1877 = vpop.permute.xlu0 %1876
        %v1880 = vsel %vm1582, %v1642, %v1859
        %v1881 = vsel %vm1582, %v1644, %v1861
        %v1882 = vsel %vm1605, %v1880, %v1867
        %v1883 = vsel %vm1605, %v1881, %v1869
        %vm1884 = vcmask 195584
        %v1885 = vsel %vm1884, %v1882, %v1875
        %v1886 = vsel %vm1884, %v1883, %v1877
        %v1887 = vpack.c.bf16 %v1886, %v1885
        %v1889 = vperm.slane %v1485, 0
        %v1895 = vunpack.c.l.b16 %v1481
        %v1896 = vunpack.c.l.b16 %v1482
        %v1897 = vunpack.c.l.b16 %v1483
        %v1898 = vunpack.c.l.b16 %v1484
        %v1899 = vpack.c.b16 %v1896, %v1895
        %v1900 = vpack.c.b16 %v1898, %v1897
        %v1904 = vsel %vm1396, %v1887, 0
        %1906 = vmatpush.bf16.msra.mxu0 0
        %1907 = vmatpush.bf16.msra.mxu0 0
        %1908 = vmatpush.bf16.msra.mxu0 0
        %1909 = vmatpush.bf16.msra.mxu0 0
        %1910 = vmatpush.bf16.msra.mxu0 0
        %1911 = vmatpush.bf16.msra.mxu0 0
        %1912 = vmatpush.bf16.msra.mxu0 %v1900
        %1913 = vmatpush.bf16.msra.mxu0 %v1899
        %1914 = vmatmul.bf16.gmra.mxu0 %v1904
        %v1915 = vpop.f32.mrf.mxu0
        %v1916 = vadd.f32 %v1889, %v1915
        %v1917 = vpop.f32.mrf.mxu0
        %v1918 = vadd.f32 %v1889, %v1917
        %1919 = vdwg.mxu0
        %v1920 = vadd.f32 %v1916, %v1456
        %v1921 = vadd.f32 %v1918, %v1457
        %v1922 = vsel %vm1396, %v1920, 0.0
        %1923 = vadd.xlane.f32.xlu0 %v1922
        %v1924 = vpop.xlane.xlu0 %1923
        %v1925 = vsel %vm1396, %v1921, 0.0
        %1926 = vadd.xlane.f32.xlu0 %v1925
        %v1927 = vpop.xlane.xlu0 %1926
        %v1928 = vmul.f32 %v1924, %v1409
        %v1929 = vmul.f32 %v1927, %v1409
        %v1930 = vsub.f32 %v1920, %v1928
        %v1931 = vsub.f32 %v1921, %v1929
        %v1932 = vmul.f32 %v1930, %v1930
        %v1933 = vmul.f32 %v1931, %v1931
        %v1934 = vsel %vm1396, %v1932, 0.0
        %1935 = vadd.xlane.f32.xlu0 %v1934
        %v1936 = vpop.xlane.xlu0 %1935
        %v1937 = vsel %vm1396, %v1933, 0.0
        %1938 = vadd.xlane.f32.xlu0 %v1937
        %v1939 = vpop.xlane.xlu0 %1938
        %v1940 = vmul.f32 %v1936, %v1409
        %v1941 = vmul.f32 %v1939, %v1409
        %v1942 = vadd.f32 %v1940, 1e-12
        %v1943 = vadd.f32 %v1941, 1e-12
        %v1944 = vrsqrt.pop %v1942
        %v1945 = vmul.f32 %v1944, %v1942
        %v1946 = vmul.f32 %v1945, %v1944
        %v1947 = vmul.f32 0.5, %v1946
        %v1948 = vsub.f32 1.5, %v1947
        %v1949 = vmul.f32 %v1944, %v1948
        %vm1950 = vweird.f32 %v1942
        %vm1951 = vweird.f32 %v1944
        %vm1952 = vmor %vm1950, %vm1951
        %v1953 = vsel %vm1952, %v1944, %v1949
        %v1954 = vrsqrt.pop %v1943
        %v1955 = vmul.f32 %v1954, %v1943
        %v1956 = vmul.f32 %v1955, %v1954
        %v1957 = vmul.f32 0.5, %v1956
        %v1958 = vsub.f32 1.5, %v1957
        %v1959 = vmul.f32 %v1954, %v1958
        %vm1960 = vweird.f32 %v1943
        %vm1961 = vweird.f32 %v1954
        %vm1962 = vmor %vm1960, %vm1961
        %v1963 = vsel %vm1962, %v1954, %v1959
        %v1964 = vmul.f32 %v1930, %v1953
        %v1965 = vmul.f32 %v1931, %v1963
        %v1967 = vperm.slane %v1486, 0
        %v1969 = vmul.f32 %v1964, %v1967
        %v1970 = vmul.f32 %v1965, %v1967
        %v1972 = vperm.slane %v1487, 0
        %v1974 = vadd.f32 %v1969, %v1972
        %v1975 = vadd.f32 %v1970, %v1972
        %v1976 = vld [vmem:[#allocation21] sm:$0xf]
        %v1977 = vld [vmem:[#allocation21 + $0x4] sm:$0xf]
        %v1978 = vld [vmem:[#allocation21 + $0x8] sm:$0xf]
        %v1979 = vld [vmem:[#allocation21 + $0xc] sm:$0xf]
        %v1980 = vld [vmem:[#allocation22] sm:$0x1]
        %v1981 = vld [vmem:[#allocation24] sm:$0xf]
        %v1982 = vld [vmem:[#allocation24 + $0x4] sm:$0xf]
        %v1983 = vld [vmem:[#allocation24 + $0x8] sm:$0xf]
        %v1984 = vld [vmem:[#allocation24 + $0xc] sm:$0xf]
        %v1985 = vld [vmem:[#allocation25] sm:$0x1]
        %v1986 = vld [vmem:[#allocation27] sm:$0xf]
        %v1987 = vld [vmem:[#allocation27 + $0x4] sm:$0xf]
        %v1988 = vld [vmem:[#allocation27 + $0x8] sm:$0xf]
        %v1989 = vld [vmem:[#allocation27 + $0xc] sm:$0xf]
        %v1990 = vld [vmem:[#allocation28] sm:$0x1]
        %v1991 = vld [vmem:[#allocation30] sm:$0xf]
        %v1992 = vld [vmem:[#allocation30 + $0x4] sm:$0xf]
        %v1993 = vld [vmem:[#allocation30 + $0x8] sm:$0xf]
        %v1994 = vld [vmem:[#allocation30 + $0xc] sm:$0xf]
        %v1995 = vld [vmem:[#allocation31] sm:$0x1]
        %v1996 = vld [vmem:[#allocation33] sm:$0x1]
        %v1997 = vld [vmem:[#allocation34] sm:$0x1]
        %v1998 = vpack.c.bf16 %v1975, %v1974
        %v1999 = vpack.c.bf16 %v1459, %v1458
        %v2001 = vperm.slane %v1980, 0
        %v2007 = vunpack.c.l.b16 %v1976
        %v2008 = vunpack.c.l.b16 %v1977
        %v2009 = vunpack.c.l.b16 %v1978
        %v2010 = vunpack.c.l.b16 %v1979
        %v2011 = vpack.c.b16 %v2008, %v2007
        %v2012 = vpack.c.b16 %v2010, %v2009
        %v2016 = vsel %vm1396, %v1998, 0
        %2018 = vmatpush.bf16.msra.mxu0 0
        %2019 = vmatpush.bf16.msra.mxu0 0
        %2020 = vmatpush.bf16.msra.mxu0 0
        %2021 = vmatpush.bf16.msra.mxu0 0
        %2022 = vmatpush.bf16.msra.mxu0 0
        %2023 = vmatpush.bf16.msra.mxu0 0
        %2024 = vmatpush.bf16.msra.mxu0 %v2012
        %2025 = vmatpush.bf16.msra.mxu0 %v2011
        %2026 = vmatmul.bf16.gmra.mxu0 %v2016
        %v2027 = vpop.f32.mrf.mxu0
        %v2028 = vadd.f32 %v2001, %v2027
        %v2029 = vpop.f32.mrf.mxu0
        %v2030 = vadd.f32 %v2001, %v2029
        %2031 = vdwg.mxu0
        %v2033 = vperm.slane %v1985, 0
        %v2039 = vunpack.c.l.b16 %v1981
        %v2040 = vunpack.c.l.b16 %v1982
        %v2041 = vunpack.c.l.b16 %v1983
        %v2042 = vunpack.c.l.b16 %v1984
        %v2043 = vpack.c.b16 %v2040, %v2039
        %v2044 = vpack.c.b16 %v2042, %v2041
        %v2048 = vsel %vm1396, %v1999, 0
        %2050 = vmatpush.bf16.msra.mxu0 0
        %2051 = vmatpush.bf16.msra.mxu0 0
        %2052 = vmatpush.bf16.msra.mxu0 0
        %2053 = vmatpush.bf16.msra.mxu0 0
        %2054 = vmatpush.bf16.msra.mxu0 0
        %2055 = vmatpush.bf16.msra.mxu0 0
        %2056 = vmatpush.bf16.msra.mxu0 %v2044
        %2057 = vmatpush.bf16.msra.mxu0 %v2043
        %2058 = vmatmul.bf16.gmra.mxu0 %v2048
        %v2059 = vpop.f32.mrf.mxu0
        %v2060 = vadd.f32 %v2033, %v2059
        %v2061 = vpop.f32.mrf.mxu0
        %v2062 = vadd.f32 %v2033, %v2061
        %2063 = vdwg.mxu0
        %v2065 = vperm.slane %v1990, 0
        %v2071 = vunpack.c.l.b16 %v1986
        %v2072 = vunpack.c.l.b16 %v1987
        %v2073 = vunpack.c.l.b16 %v1988
        %v2074 = vunpack.c.l.b16 %v1989
        %v2075 = vpack.c.b16 %v2072, %v2071
        %v2076 = vpack.c.b16 %v2074, %v2073
        %2079 = vmatpush.bf16.msra.mxu0 0
        %2080 = vmatpush.bf16.msra.mxu0 0
        %2081 = vmatpush.bf16.msra.mxu0 0
        %2082 = vmatpush.bf16.msra.mxu0 0
        %2083 = vmatpush.bf16.msra.mxu0 0
        %2084 = vmatpush.bf16.msra.mxu0 0
        %2085 = vmatpush.bf16.msra.mxu0 %v2076
        %2086 = vmatpush.bf16.msra.mxu0 %v2075
        %2087 = vmatmul.bf16.gmra.mxu0 %v2048
        %v2088 = vpop.f32.mrf.mxu0
        %v2089 = vadd.f32 %v2065, %v2088
        %v2090 = vpop.f32.mrf.mxu0
        %v2091 = vadd.f32 %v2065, %v2090
        %2092 = vdwg.mxu0
        %v2093 = vpack.c.bf16 %v2030, %v2028
        %v2094 = vpack.c.bf16 %v2062, %v2060
        %v2095 = vpack.c.bf16 %v2091, %v2089
        %v2097 = vsel %vm1582, %v2093, 0
        %v2100 = vsel %vm1582, %v2094, 0
        %2102 = vmatpush.bf16.xpose.msra.mxu0 0
        %2103 = vmatpush.bf16.xpose.msra.mxu0 0
        %2104 = vmatpush.bf16.xpose.msra.mxu0 0
        %2105 = vmatpush.bf16.xpose.msra.mxu0 0
        %2106 = vmatpush.bf16.xpose.msra.mxu0 0
        %2107 = vmatpush.bf16.xpose.msra.mxu0 0
        %2108 = vmatpush.bf16.xpose.msra.mxu0 0
        %2109 = vmatpush.bf16.xpose.msra.mxu0 %v2100
        %2110 = vmatmul.bf16.gmra.mxu0 %v2097
        %v2111 = vpop.f32.mrf.mxu0
        %v2112 = vadd.f32 0.0, %v2111
        %v2113 = vpop.f32.mrf.mxu0
        %v2114 = vadd.f32 0.0, %v2113
        %2115 = vdwg.mxu0
        %v2116 = vmul.f32 %v2112, 0.35355338
        %v2117 = vmul.f32 %v2114, 0.35355338
        %v2118 = vadd.f32 %v2116, %v1464
        %v2119 = vadd.f32 %v2117, %v1465
        %v2120 = vsel %vm1605, %v2118, -inf
        %2121 = vmax.xlane.f32.xlu0 %v2120
        %v2122 = vpop.xlane.xlu0 %2121
        %v2123 = vsel %vm1605, %v2119, -inf
        %2124 = vmax.xlane.f32.xlu0 %v2123
        %v2125 = vpop.xlane.xlu0 %2124
        %v2126 = vsub.f32 %v2118, %v2122
        %v2127 = vsub.f32 %v2119, %v2125
        %v2128 = vmul.f32 %v2126, 1.442695
        %v2129 = vpow.pop %v2128
        %v2130 = vmul.f32 %v2127, 1.442695
        %v2131 = vpow.pop %v2130
        %v2132 = vsel %vm1605, %v2129, 0.0
        %2133 = vadd.xlane.f32.xlu0 %v2132
        %v2134 = vpop.xlane.xlu0 %2133
        %v2135 = vsel %vm1605, %v2131, 0.0
        %2136 = vadd.xlane.f32.xlu0 %v2135
        %v2137 = vpop.xlane.xlu0 %2136
        %v2138 = vrcp.pop %v2134
        %v2139 = vrcp.pop %v2137
        %v2140 = vmul.f32 %v2129, %v2138
        %v2141 = vmul.f32 %v2131, %v2139
        %v2142 = vpack.c.bf16 %v2141, %v2140
        %v2144 = vsel %vm1605, %v2142, 0
        %2146 = vmatpush.bf16.msra.mxu0 0
        %2147 = vmatpush.bf16.msra.mxu0 0
        %2148 = vmatpush.bf16.msra.mxu0 0
        %2149 = vmatpush.bf16.msra.mxu0 0
        %2150 = vmatpush.bf16.msra.mxu0 0
        %2151 = vmatpush.bf16.msra.mxu0 0
        %2152 = vmatpush.bf16.msra.mxu0 0
        %2153 = vmatpush.bf16.msra.mxu0 %v2095
        %2154 = vmatmul.bf16.gmra.mxu0 %v2144
        %v2155 = vpop.f32.mrf.mxu0
        %v2156 = vadd.f32 0.0, %v2155
        %v2157 = vpop.f32.mrf.mxu0
        %v2158 = vadd.f32 0.0, %v2157
        %2159 = vdwg.mxu0
        %2161 = vrot.lane.b32.xlu0 %v2093, 120
        %v2162 = vpop.permute.xlu0 %2161
        %2164 = vrot.lane.b32.xlu0 %v2094, 120
        %v2165 = vpop.permute.xlu0 %2164
        %v2167 = vsel %vm1582, %v2162, 0
        %v2170 = vsel %vm1582, %v2165, 0
        %2172 = vmatpush.bf16.xpose.msra.mxu0 0
        %2173 = vmatpush.bf16.xpose.msra.mxu0 0
        %2174 = vmatpush.bf16.xpose.msra.mxu0 0
        %2175 = vmatpush.bf16.xpose.msra.mxu0 0
        %2176 = vmatpush.bf16.xpose.msra.mxu0 0
        %2177 = vmatpush.bf16.xpose.msra.mxu0 0
        %2178 = vmatpush.bf16.xpose.msra.mxu0 0
        %2179 = vmatpush.bf16.xpose.msra.mxu0 %v2170
        %2180 = vmatmul.bf16.gmra.mxu0 %v2167
        %v2181 = vpop.f32.mrf.mxu0
        %v2182 = vadd.f32 0.0, %v2181
        %v2183 = vpop.f32.mrf.mxu0
        %v2184 = vadd.f32 0.0, %v2183
        %2185 = vdwg.mxu0
        %v2186 = vmul.f32 %v2182, 0.35355338
        %v2187 = vmul.f32 %v2184, 0.35355338
        %v2188 = vadd.f32 %v2186, %v1464
        %v2189 = vadd.f32 %v2187, %v1465
        %v2190 = vsel %vm1605, %v2188, -inf
        %2191 = vmax.xlane.f32.xlu0 %v2190
        %v2192 = vpop.xlane.xlu0 %2191
        %v2193 = vsel %vm1605, %v2189, -inf
        %2194 = vmax.xlane.f32.xlu0 %v2193
        %v2195 = vpop.xlane.xlu0 %2194
        %v2196 = vsub.f32 %v2188, %v2192
        %v2197 = vsub.f32 %v2189, %v2195
        %v2198 = vmul.f32 %v2196, 1.442695
        %v2199 = vpow.pop %v2198
        %v2200 = vmul.f32 %v2197, 1.442695
        %v2201 = vpow.pop %v2200
        %v2202 = vsel %vm1605, %v2199, 0.0
        %2203 = vadd.xlane.f32.xlu0 %v2202
        %v2204 = vpop.xlane.xlu0 %2203
        %v2205 = vsel %vm1605, %v2201, 0.0
        %2206 = vadd.xlane.f32.xlu0 %v2205
        %v2207 = vpop.xlane.xlu0 %2206
        %v2208 = vrcp.pop %v2204
        %v2209 = vrcp.pop %v2207
        %v2210 = vmul.f32 %v2199, %v2208
        %v2211 = vmul.f32 %v2201, %v2209
        %v2212 = vpack.c.bf16 %v2211, %v2210
        %2214 = vrot.lane.b32.xlu0 %v2095, 120
        %v2215 = vpop.permute.xlu0 %2214
        %v2218 = vsel %vm1605, %v2212, 0
        %2220 = vmatpush.bf16.msra.mxu0 0
        %2221 = vmatpush.bf16.msra.mxu0 0
        %2222 = vmatpush.bf16.msra.mxu0 0
        %2223 = vmatpush.bf16.msra.mxu0 0
        %2224 = vmatpush.bf16.msra.mxu0 0
        %2225 = vmatpush.bf16.msra.mxu0 0
        %2226 = vmatpush.bf16.msra.mxu0 0
        %2227 = vmatpush.bf16.msra.mxu0 %v2215
        %2228 = vmatmul.bf16.gmra.mxu0 %v2218
        %v2229 = vpop.f32.mrf.mxu0
        %v2230 = vadd.f32 0.0, %v2229
        %v2231 = vpop.f32.mrf.mxu0
        %v2232 = vadd.f32 0.0, %v2231
        %2233 = vdwg.mxu0
        %2234 = vrot.lane.b32.xlu0 %v2093, 112
        %v2235 = vpop.permute.xlu0 %2234
        %2236 = vrot.lane.b32.xlu0 %v2094, 112
        %v2237 = vpop.permute.xlu0 %2236
        %v2239 = vsel %vm1582, %v2235, 0
        %v2242 = vsel %vm1582, %v2237, 0
        %2244 = vmatpush.bf16.xpose.msra.mxu0 0
        %2245 = vmatpush.bf16.xpose.msra.mxu0 0
        %2246 = vmatpush.bf16.xpose.msra.mxu0 0
        %2247 = vmatpush.bf16.xpose.msra.mxu0 0
        %2248 = vmatpush.bf16.xpose.msra.mxu0 0
        %2249 = vmatpush.bf16.xpose.msra.mxu0 0
        %2250 = vmatpush.bf16.xpose.msra.mxu0 0
        %2251 = vmatpush.bf16.xpose.msra.mxu0 %v2242
        %2252 = vmatmul.bf16.gmra.mxu0 %v2239
        %v2253 = vpop.f32.mrf.mxu0
        %v2254 = vadd.f32 0.0, %v2253
        %v2255 = vpop.f32.mrf.mxu0
        %v2256 = vadd.f32 0.0, %v2255
        %2257 = vdwg.mxu0
        %v2258 = vmul.f32 %v2254, 0.35355338
        %v2259 = vmul.f32 %v2256, 0.35355338
        %v2260 = vadd.f32 %v2258, %v1464
        %v2261 = vadd.f32 %v2259, %v1465
        %v2262 = vsel %vm1605, %v2260, -inf
        %2263 = vmax.xlane.f32.xlu0 %v2262
        %v2264 = vpop.xlane.xlu0 %2263
        %v2265 = vsel %vm1605, %v2261, -inf
        %2266 = vmax.xlane.f32.xlu0 %v2265
        %v2267 = vpop.xlane.xlu0 %2266
        %v2268 = vsub.f32 %v2260, %v2264
        %v2269 = vsub.f32 %v2261, %v2267
        %v2270 = vmul.f32 %v2268, 1.442695
        %v2271 = vpow.pop %v2270
        %v2272 = vmul.f32 %v2269, 1.442695
        %v2273 = vpow.pop %v2272
        %v2274 = vsel %vm1605, %v2271, 0.0
        %2275 = vadd.xlane.f32.xlu0 %v2274
        %v2276 = vpop.xlane.xlu0 %2275
        %v2277 = vsel %vm1605, %v2273, 0.0
        %2278 = vadd.xlane.f32.xlu0 %v2277
        %v2279 = vpop.xlane.xlu0 %2278
        %v2280 = vrcp.pop %v2276
        %v2281 = vrcp.pop %v2279
        %v2282 = vmul.f32 %v2271, %v2280
        %v2283 = vmul.f32 %v2273, %v2281
        %v2284 = vpack.c.bf16 %v2283, %v2282
        %2285 = vrot.lane.b32.xlu0 %v2095, 112
        %v2286 = vpop.permute.xlu0 %2285
        %v2289 = vsel %vm1605, %v2284, 0
        %2291 = vmatpush.bf16.msra.mxu0 0
        %2292 = vmatpush.bf16.msra.mxu0 0
        %2293 = vmatpush.bf16.msra.mxu0 0
        %2294 = vmatpush.bf16.msra.mxu0 0
        %2295 = vmatpush.bf16.msra.mxu0 0
        %2296 = vmatpush.bf16.msra.mxu0 0
        %2297 = vmatpush.bf16.msra.mxu0 0
        %2298 = vmatpush.bf16.msra.mxu0 %v2286
        %2299 = vmatmul.bf16.gmra.mxu0 %v2289
        %v2300 = vpop.f32.mrf.mxu0
        %v2301 = vadd.f32 0.0, %v2300
        %v2302 = vpop.f32.mrf.mxu0
        %v2303 = vadd.f32 0.0, %v2302
        %2304 = vdwg.mxu0
        %2305 = vrot.lane.b32.xlu0 %v2093, 104
        %v2306 = vpop.permute.xlu0 %2305
        %2307 = vrot.lane.b32.xlu0 %v2094, 104
        %v2308 = vpop.permute.xlu0 %2307
        %v2310 = vsel %vm1582, %v2306, 0
        %v2313 = vsel %vm1582, %v2308, 0
        %2315 = vmatpush.bf16.xpose.msra.mxu0 0
        %2316 = vmatpush.bf16.xpose.msra.mxu0 0
        %2317 = vmatpush.bf16.xpose.msra.mxu0 0
        %2318 = vmatpush.bf16.xpose.msra.mxu0 0
        %2319 = vmatpush.bf16.xpose.msra.mxu0 0
        %2320 = vmatpush.bf16.xpose.msra.mxu0 0
        %2321 = vmatpush.bf16.xpose.msra.mxu0 0
        %2322 = vmatpush.bf16.xpose.msra.mxu0 %v2313
        %2323 = vmatmul.bf16.gmra.mxu0 %v2310
        %v2324 = vpop.f32.mrf.mxu0
        %v2325 = vadd.f32 0.0, %v2324
        %v2326 = vpop.f32.mrf.mxu0
        %v2327 = vadd.f32 0.0, %v2326
        %2328 = vdwg.mxu0
        %v2329 = vmul.f32 %v2325, 0.35355338
        %v2330 = vmul.f32 %v2327, 0.35355338
        %v2331 = vadd.f32 %v2329, %v1464
        %v2332 = vadd.f32 %v2330, %v1465
        %v2333 = vsel %vm1605, %v2331, -inf
        %2334 = vmax.xlane.f32.xlu0 %v2333
        %v2335 = vpop.xlane.xlu0 %2334
        %v2336 = vsel %vm1605, %v2332, -inf
        %2337 = vmax.xlane.f32.xlu0 %v2336
        %v2338 = vpop.xlane.xlu0 %2337
        %v2339 = vsub.f32 %v2331, %v2335
        %v2340 = vsub.f32 %v2332, %v2338
        %v2341 = vmul.f32 %v2339, 1.442695
        %v2342 = vpow.pop %v2341
        %v2343 = vmul.f32 %v2340, 1.442695
        %v2344 = vpow.pop %v2343
        %v2345 = vsel %vm1605, %v2342, 0.0
        %2346 = vadd.xlane.f32.xlu0 %v2345
        %v2347 = vpop.xlane.xlu0 %2346
        %v2348 = vsel %vm1605, %v2344, 0.0
        %2349 = vadd.xlane.f32.xlu0 %v2348
        %v2350 = vpop.xlane.xlu0 %2349
        %v2351 = vrcp.pop %v2347
        %v2352 = vrcp.pop %v2350
        %v2353 = vmul.f32 %v2342, %v2351
        %v2354 = vmul.f32 %v2344, %v2352
        %v2355 = vpack.c.bf16 %v2354, %v2353
        %2356 = vrot.lane.b32.xlu0 %v2095, 104
        %v2357 = vpop.permute.xlu0 %2356
        %v2360 = vsel %vm1605, %v2355, 0
        %2362 = vmatpush.bf16.msra.mxu0 0
        %2363 = vmatpush.bf16.msra.mxu0 0
        %2364 = vmatpush.bf16.msra.mxu0 0
        %2365 = vmatpush.bf16.msra.mxu0 0
        %2366 = vmatpush.bf16.msra.mxu0 0
        %2367 = vmatpush.bf16.msra.mxu0 0
        %2368 = vmatpush.bf16.msra.mxu0 0
        %2369 = vmatpush.bf16.msra.mxu0 %v2357
        %2370 = vmatmul.bf16.gmra.mxu0 %v2360
        %v2371 = vpop.f32.mrf.mxu0
        %v2372 = vadd.f32 0.0, %v2371
        %v2373 = vpop.f32.mrf.mxu0
        %v2374 = vadd.f32 0.0, %v2373
        %2375 = vdwg.mxu0
        %2378 = vrot.lane.b32.xlu0 %v2230, 8
        %v2379 = vpop.permute.xlu0 %2378
        %2380 = vrot.lane.b32.xlu0 %v2232, 8
        %v2381 = vpop.permute.xlu0 %2380
        %2386 = vrot.lane.b32.xlu0 %v2301, 16
        %v2387 = vpop.permute.xlu0 %2386
        %2388 = vrot.lane.b32.xlu0 %v2303, 16
        %v2389 = vpop.permute.xlu0 %2388
        %2394 = vrot.lane.b32.xlu0 %v2372, 24
        %v2395 = vpop.permute.xlu0 %2394
        %2396 = vrot.lane.b32.xlu0 %v2374, 24
        %v2397 = vpop.permute.xlu0 %2396
        %v2400 = vsel %vm1582, %v2156, %v2379
        %v2401 = vsel %vm1582, %v2158, %v2381
        %v2402 = vsel %vm1605, %v2400, %v2387
        %v2403 = vsel %vm1605, %v2401, %v2389
        %v2404 = vsel %vm1884, %v2402, %v2395
        %v2405 = vsel %vm1884, %v2403, %v2397
        %v2406 = vpack.c.bf16 %v2405, %v2404
        %v2408 = vperm.slane %v1995, 0
        %v2414 = vunpack.c.l.b16 %v1991
        %v2415 = vunpack.c.l.b16 %v1992
        %v2416 = vunpack.c.l.b16 %v1993
        %v2417 = vunpack.c.l.b16 %v1994
        %v2418 = vpack.c.b16 %v2415, %v2414
        %v2419 = vpack.c.b16 %v2417, %v2416
        %v2423 = vsel %vm1396, %v2406, 0
        %2425 = vmatpush.bf16.msra.mxu0 0
        %2426 = vmatpush.bf16.msra.mxu0 0
        %2427 = vmatpush.bf16.msra.mxu0 0
        %2428 = vmatpush.bf16.msra.mxu0 0
        %2429 = vmatpush.bf16.msra.mxu0 0
        %2430 = vmatpush.bf16.msra.mxu0 0
        %2431 = vmatpush.bf16.msra.mxu0 %v2419
        %2432 = vmatpush.bf16.msra.mxu0 %v2418
        %2433 = vmatmul.bf16.gmra.mxu0 %v2423
        %v2434 = vpop.f32.mrf.mxu0
        %v2435 = vadd.f32 %v2408, %v2434
        %v2436 = vpop.f32.mrf.mxu0
        %v2437 = vadd.f32 %v2408, %v2436
        %2438 = vdwg.mxu0
        %v2439 = vadd.f32 %v2435, %v1974
        %v2440 = vadd.f32 %v2437, %v1975
        %v2441 = vsel %vm1396, %v2439, 0.0
        %2442 = vadd.xlane.f32.xlu0 %v2441
        %v2443 = vpop.xlane.xlu0 %2442
        %v2444 = vsel %vm1396, %v2440, 0.0
        %2445 = vadd.xlane.f32.xlu0 %v2444
        %v2446 = vpop.xlane.xlu0 %2445
        %v2447 = vmul.f32 %v2443, %v1409
        %v2448 = vmul.f32 %v2446, %v1409
        %v2449 = vsub.f32 %v2439, %v2447
        %v2450 = vsub.f32 %v2440, %v2448
        %v2451 = vmul.f32 %v2449, %v2449
        %v2452 = vmul.f32 %v2450, %v2450
        %v2453 = vsel %vm1396, %v2451, 0.0
        %2454 = vadd.xlane.f32.xlu0 %v2453
        %v2455 = vpop.xlane.xlu0 %2454
        %v2456 = vsel %vm1396, %v2452, 0.0
        %2457 = vadd.xlane.f32.xlu0 %v2456
        %v2458 = vpop.xlane.xlu0 %2457
        %v2459 = vmul.f32 %v2455, %v1409
        %v2460 = vmul.f32 %v2458, %v1409
        %v2461 = vadd.f32 %v2459, 1e-12
        %v2462 = vadd.f32 %v2460, 1e-12
        %v2463 = vrsqrt.pop %v2461
        %v2464 = vmul.f32 %v2463, %v2461
        %v2465 = vmul.f32 %v2464, %v2463
        %v2466 = vmul.f32 0.5, %v2465
        %v2467 = vsub.f32 1.5, %v2466
        %v2468 = vmul.f32 %v2463, %v2467
        %vm2469 = vweird.f32 %v2461
        %vm2470 = vweird.f32 %v2463
        %vm2471 = vmor %vm2469, %vm2470
        %v2472 = vsel %vm2471, %v2463, %v2468
        %v2473 = vrsqrt.pop %v2462
        %v2474 = vmul.f32 %v2473, %v2462
        %v2475 = vmul.f32 %v2474, %v2473
        %v2476 = vmul.f32 0.5, %v2475
        %v2477 = vsub.f32 1.5, %v2476
        %v2478 = vmul.f32 %v2473, %v2477
        %vm2479 = vweird.f32 %v2462
        %vm2480 = vweird.f32 %v2473
        %vm2481 = vmor %vm2479, %vm2480
        %v2482 = vsel %vm2481, %v2473, %v2478
        %v2483 = vmul.f32 %v2449, %v2472
        %v2484 = vmul.f32 %v2450, %v2482
        %v2486 = vperm.slane %v1996, 0
        %v2488 = vmul.f32 %v2483, %v2486
        %v2489 = vmul.f32 %v2484, %v2486
        %v2491 = vperm.slane %v1997, 0
        %v2493 = vadd.f32 %v2488, %v2491
        %v2494 = vadd.f32 %v2489, %v2491
        %v2495 = vld [vmem:[#allocation36] sm:$0xf]
        %v2496 = vld [vmem:[#allocation36 + $0x4] sm:$0xf]
        %v2497 = vld [vmem:[#allocation36 + $0x8] sm:$0xf]
        %v2498 = vld [vmem:[#allocation36 + $0xc] sm:$0xf]
        %v2499 = vld [vmem:[#allocation37] sm:$0x1]
        %v2500 = vld [vmem:[%s55] sm:$0xf]
        %v2501 = vld [vmem:[%s55 + $0x4] sm:$0xf]
        %v2502 = vld [vmem:[%s55 + $0x8] sm:$0xf]
        %v2503 = vld [vmem:[%s55 + $0xc] sm:$0xf]
        %v2504 = vld [vmem:[%s55 + $0x10] sm:$0xf]
        %v2505 = vld [vmem:[%s55 + $0x14] sm:$0xf]
        %v2506 = vld [vmem:[%s55 + $0x18] sm:$0xf]
        %v2507 = vld [vmem:[%s55 + $0x1c] sm:$0xf]
        %v2508 = vld [vmem:[#allocation39] sm:$0x1]
        %v2509 = vld [vmem:[#allocation40] sm:$0x1]
        %v2510 = vld [vmem:[#allocation42] sm:$0x1]
        %v2511 = vpack.c.bf16 %v2494, %v2493
        %v2513 = vperm.slane %v2499, 0
        %v2519 = vunpack.c.l.b16 %v2495
        %v2520 = vunpack.c.l.b16 %v2496
        %v2521 = vunpack.c.l.b16 %v2497
        %v2522 = vunpack.c.l.b16 %v2498
        %v2523 = vpack.c.b16 %v2520, %v2519
        %v2524 = vpack.c.b16 %v2522, %v2521
        %v2528 = vsel %vm1396, %v2511, 0
        %2530 = vmatpush.bf16.msra.mxu0 0
        %2531 = vmatpush.bf16.msra.mxu0 0
        %2532 = vmatpush.bf16.msra.mxu0 0
        %2533 = vmatpush.bf16.msra.mxu0 0
        %2534 = vmatpush.bf16.msra.mxu0 0
        %2535 = vmatpush.bf16.msra.mxu0 0
        %2536 = vmatpush.bf16.msra.mxu0 %v2524
        %2537 = vmatpush.bf16.msra.mxu0 %v2523
        %2538 = vmatmul.bf16.gmra.mxu0 %v2528
        %v2539 = vpop.f32.mrf.mxu0
        %v2540 = vadd.f32 %v2513, %v2539
        %v2541 = vpop.f32.mrf.mxu0
        %v2542 = vadd.f32 %v2513, %v2541
        %2543 = vdwg.mxu0
        %v2544 = vmul.f32 %v2540, 0.5
        %v2545 = vmul.f32 %v2542, 0.5
        %v2546 = vmul.f32 %v2540, 0.70710677
        %v2547 = vmul.f32 %v2542, 0.70710677
        %v2548 = vmax.f32 %v2546, -3.832507
        %v2549 = vmax.f32 %v2547, -3.832507
        %v2550 = vmin.f32 %v2548, 3.832507
        %v2551 = vmin.f32 %v2549, 3.832507
        %v2552 = vmul.f32 %v2550, %v2550
        %v2553 = vmul.f32 %v2551, %v2551
        %v2554 = vmul.f32 %v2552, -2.7261424e-10
        %v2555 = vmul.f32 %v2553, -2.7261424e-10
        %v2556 = vadd.f32 %v2554, 2.7706815e-08
        %v2557 = vadd.f32 %v2555, 2.7706815e-08
        %v2558 = vmul.f32 %v2552, %v2556
        %v2559 = vmul.f32 %v2553, %v2557
        %v2560 = vadd.f32 %v2558, -2.101024e-06
        %v2561 = vadd.f32 %v2559, -2.101024e-06
        %v2562 = vmul.f32 %v2552, %v2560
        %v2563 = vmul.f32 %v2553, %v2561
        %v2564 = vadd.f32 %v2562, -5.6925062e-05
        %v2565 = vadd.f32 %v2563, -5.6925062e-05
        %v2566 = vmul.f32 %v2552, %v2564
        %v2567 = vmul.f32 %v2553, %v2565
        %v2568 = vadd.f32 %v2566, -0.00073499064
        %v2569 = vadd.f32 %v2567, -0.00073499064
        %v2570 = vmul.f32 %v2552, %v2568
        %v2571 = vmul.f32 %v2553, %v2569
        %v2572 = vadd.f32 %v2570, -0.0029546
        %v2573 = vadd.f32 %v2571, -0.0029546
        %v2574 = vmul.f32 %v2552, %v2572
        %v2575 = vmul.f32 %v2553, %v2573
        %v2576 = vadd.f32 %v2574, -0.016096033
        %v2577 = vadd.f32 %v2575, -0.016096033
        %v2578 = vmul.f32 %v2550, %v2576
        %v2579 = vmul.f32 %v2551, %v2577
        %v2580 = vmul.f32 %v2552, -1.45660715e-05
        %v2581 = vmul.f32 %v2553, -1.45660715e-05
        %v2582 = vadd.f32 %v2580, -0.00021337405
        %v2583 = vadd.f32 %v2581, -0.00021337405
        %v2584 = vmul.f32 %v2552, %v2582
        %v2585 = vmul.f32 %v2553, %v2583
        %v2586 = vadd.f32 %v2584, -0.001682827
        %v2587 = vadd.f32 %v2585, -0.001682827
        %v2588 = vmul.f32 %v2552, %v2586
        %v2589 = vmul.f32 %v2553, %v2587
        %v2590 = vadd.f32 %v2588, -0.0073733293
        %v2591 = vadd.f32 %v2589, -0.0073733293
        %v2592 = vmul.f32 %v2552, %v2590
        %v2593 = vmul.f32 %v2553, %v2591
        %v2594 = vadd.f32 %v2592, -0.014264739
        %v2595 = vadd.f32 %v2593, -0.014264739
        %v2596 = vrcp.pop %v2594
        %v2597 = vmul.f32 %v2594, %v2596
        %v2598 = vsub.f32 1.0, %v2597
        %v2599 = vmul.f32 %v2596, %v2598
        %v2600 = vadd.f32 %v2596, %v2599
        %vm2601 = vweird.f32 %v2594
        %vm2602 = vweird.f32 %v2596
        %vm2603 = vmor %vm2601, %vm2602
        %v2604 = vsel %vm2603, %v2596, %v2600
        %v2605 = vand.u32 2147483647, %v2594
        %vm2606 = vcmp.eq.f32.partialorder %v2605, 8.507059e+37
        %v2607 = vand.u32 %v2594, 2147483648
        %v2608 = vor.u32 1.1754944e-38, %v2607
        %v2609 = vsel %vm2606, %v2608, %v2604
        %v2610 = vmul.f32 %v2578, %v2609
        %v2611 = vrcp.pop %v2595
        %v2612 = vmul.f32 %v2595, %v2611
        %v2613 = vsub.f32 1.0, %v2612
        %v2614 = vmul.f32 %v2611, %v2613
        %v2615 = vadd.f32 %v2611, %v2614
        %vm2616 = vweird.f32 %v2595
        %vm2617 = vweird.f32 %v2611
        %vm2618 = vmor %vm2616, %vm2617
        %v2619 = vsel %vm2618, %v2611, %v2615
        %v2620 = vand.u32 2147483647, %v2595
        %vm2621 = vcmp.eq.f32.partialorder %v2620, 8.507059e+37
        %v2622 = vand.u32 %v2595, 2147483648
        %v2623 = vor.u32 1.1754944e-38, %v2622
        %v2624 = vsel %vm2621, %v2623, %v2619
        %v2625 = vmul.f32 %v2579, %v2624
        %v2626 = vadd.f32 %v2610, 1.0
        %v2627 = vadd.f32 %v2625, 1.0
        %v2628 = vmul.f32 %v2544, %v2626
        %v2629 = vmul.f32 %v2545, %v2627
        %v2630 = vpack.c.bf16 %v2629, %v2628
        %v2632 = vperm.slane %v2508, 0
        %v2642 = vunpack.c.l.b16 %v2500
        %v2643 = vunpack.c.l.b16 %v2501
        %v2644 = vunpack.c.l.b16 %v2502
        %v2645 = vunpack.c.l.b16 %v2503
        %v2646 = vunpack.c.l.b16 %v2504
        %v2647 = vunpack.c.l.b16 %v2505
        %v2648 = vunpack.c.l.b16 %v2506
        %v2649 = vunpack.c.l.b16 %v2507
        %v2650 = vpack.c.b16 %v2643, %v2642
        %v2651 = vpack.c.b16 %v2645, %v2644
        %v2652 = vpack.c.b16 %v2647, %v2646
        %v2653 = vpack.c.b16 %v2649, %v2648
        %vm2658 = vcmask 523264
        %v2660 = vsel %vm2658, %v2630, 0
        %2662 = vmatpush.bf16.msra.mxu0 0
        %2663 = vmatpush.bf16.msra.mxu0 0
        %2664 = vmatpush.bf16.msra.mxu0 0
        %2665 = vmatpush.bf16.msra.mxu0 0
        %2666 = vmatpush.bf16.msra.mxu0 %v2653
        %2667 = vmatpush.bf16.msra.mxu0 %v2652
        %2668 = vmatpush.bf16.msra.mxu0 %v2651
        %2669 = vmatpush.bf16.msra.mxu0 %v2650
        %2670 = vmatmul.bf16.gmra.mxu0 %v2660
        %v2671 = vpop.f32.mrf.mxu0
        %v2672 = vadd.f32 %v2632, %v2671
        %v2673 = vpop.f32.mrf.mxu0
        %v2674 = vadd.f32 %v2632, %v2673
        %2675 = vdwg.mxu0
        %v2676 = vadd.f32 %v2672, %v2493
        %v2677 = vadd.f32 %v2674, %v2494
        %v2678 = vsel %vm1396, %v2676, 0.0
        %2679 = vadd.xlane.f32.xlu0 %v2678
        %v2680 = vpop.xlane.xlu0 %2679
        %v2681 = vsel %vm1396, %v2677, 0.0
        %2682 = vadd.xlane.f32.xlu0 %v2681
        %v2683 = vpop.xlane.xlu0 %2682
        %v2684 = vmul.f32 %v2680, %v1409
        %v2685 = vmul.f32 %v2683, %v1409
        %v2686 = vsub.f32 %v2676, %v2684
        %v2687 = vsub.f32 %v2677, %v2685
        %v2688 = vmul.f32 %v2686, %v2686
        %v2689 = vmul.f32 %v2687, %v2687
        %v2690 = vsel %vm1396, %v2688, 0.0
        %2691 = vadd.xlane.f32.xlu0 %v2690
        %v2692 = vpop.xlane.xlu0 %2691
        %v2693 = vsel %vm1396, %v2689, 0.0
        %2694 = vadd.xlane.f32.xlu0 %v2693
        %v2695 = vpop.xlane.xlu0 %2694
        %v2696 = vmul.f32 %v2692, %v1409
        %v2697 = vmul.f32 %v2695, %v1409
        %v2698 = vadd.f32 %v2696, 1e-12
        %v2699 = vadd.f32 %v2697, 1e-12
        %v2700 = vrsqrt.pop %v2698
        %v2701 = vmul.f32 %v2700, %v2698
        %v2702 = vmul.f32 %v2701, %v2700
        %v2703 = vmul.f32 0.5, %v2702
        %v2704 = vsub.f32 1.5, %v2703
        %v2705 = vmul.f32 %v2700, %v2704
        %vm2706 = vweird.f32 %v2698
        %vm2707 = vweird.f32 %v2700
        %vm2708 = vmor %vm2706, %vm2707
        %v2709 = vsel %vm2708, %v2700, %v2705
        %v2710 = vrsqrt.pop %v2699
        %v2711 = vmul.f32 %v2710, %v2699
        %v2712 = vmul.f32 %v2711, %v2710
        %v2713 = vmul.f32 0.5, %v2712
        %v2714 = vsub.f32 1.5, %v2713
        %v2715 = vmul.f32 %v2710, %v2714
        %vm2716 = vweird.f32 %v2699
        %vm2717 = vweird.f32 %v2710
        %vm2718 = vmor %vm2716, %vm2717
        %v2719 = vsel %vm2718, %v2710, %v2715
        %v2720 = vmul.f32 %v2686, %v2709
        %v2721 = vmul.f32 %v2687, %v2719
        %v2723 = vperm.slane %v2509, 0
        %v2725 = vmul.f32 %v2720, %v2723
        %v2726 = vmul.f32 %v2721, %v2723
        %v2728 = vperm.slane %v2510, 0
        %v2730 = vadd.f32 %v2725, %v2728
        %v2731 = vadd.f32 %v2726, %v2728
        %2732 = vst.msk [vmem:[%s1390] sm:$0xff] %vm1396, %v2730
        %2733 = vst.msk [vmem:[%s1390 + $0x8] sm:$0xff] %vm1396, %v2731
        %p2734 = scmp.lt.s32.totalorder %s88, 1
        %s2735 = scalar_select %p2734, %s88, 1
        %s2736 = smul.addr %s2735, 2
        %s2737 = smul.addr %s2736, 8
        %s2738 = scalar_lea.vmem %s63, %s2737
        // Predicated region
        $region253: #{set_decoder_forward.3} parent=143 // pred_check
          %p2739 = pneg %p767
        $region254: #{set_decoder_forward.3} parent=143 // pred_check_branch
          %2741 = sbr.rel (%p2739) target = $region256
        $region255: #{set_decoder_forward.3} parent=143 // pred_region
          _
        $region256: #{set_decoder_forward.3} parent=143 // pred_fallthru
          _
      $region144: #{set_decoder_forward.3} parent=5 // pred_fallthru
        _
      %p2742 = scmp.le.s32.totalorder 2, %s83
      // Predicated region
      $region257: #{set_decoder_forward.3} parent=5 // pred_check
        %p2743 = pneg %p2742
      $region258: #{set_decoder_forward.3} parent=5 // pred_check_branch
        %2745 = sbr.rel (%p2743) target = $region260
      $region259: #{set_decoder_forward.3} parent=5 // pred_region
        %s2746 = ssub.s32 %s83, 2
        // Predicated region
        $region261: #{set_decoder_forward.3} parent=259 // pred_check
          %p2747 = pneg %p773
        $region262: #{set_decoder_forward.3} parent=259 // pred_check_branch
          %2749 = sbr.rel (%p2747) target = $region264
        $region263: #{set_decoder_forward.3} parent=259 // pred_region
          %p2750 = scmp.lt.s32.totalorder %s89, 1
          %s2751 = scalar_select %p2750, %s89, 1
          %s2752 = smul.addr %s2751, 2
          %s2753 = smul.addr %s2752, 8
          %s2754 = scalar_lea.vmem %s63, %s2753
        $region264: #{set_decoder_forward.3} parent=259 // pred_fallthru
          _
      $region260: #{set_decoder_forward.3} parent=5 // pred_fallthru
        _
    $region6: #{set_decoder_forward.3} parent=1 // loop_footer
      %s87 = sadd.s32 1, %s83
    $region7: #{set_decoder_forward.3} parent=1 // loop_footer_branch
      %82 = sbr.rel target = $region3
    $region8: #{set_decoder_forward.3} parent=1 // loop_exit
      _
    %2755 = vsyncpa [#allocation3], 1
    %s2756 = scalar_lea.sflag [#allocation3], 1
    %2757 = vsyncpa %s2756, 1
    %2758 = vsyncpa [#allocation5], 1
    %2759 = vsyncpa [#allocation8], 1
    %2760 = vsyncpa [#allocation11], 1
    %2761 = vsyncpa [#allocation14], 1
    %2762 = vsyncpa [#allocation17], 1
    %2763 = vsyncpa [#allocation20], 1
    %2764 = vsyncpa [#allocation23], 1
    %2765 = vsyncpa [#allocation26], 1
    %2766 = vsyncpa [#allocation29], 1
    %2767 = vsyncpa [#allocation32], 1
    %2768 = vsyncpa [#allocation35], 1
    %2769 = vsyncpa [#allocation38], 1
    %2770 = vsyncpa [#allocation41], 1

</llo_original>
